<compile_context>
chip_gen: v5e
topology: v5e:2x2
jax: 0.10.0
libtpu: 0.0.40
codegen_flags: <defaults>
</compile_context>

<pallas_src>
import math
import numpy as np
import jax
import jax.numpy as jnp
from jax import lax
from jax.experimental import pallas as pl
from jax.experimental.pallas import tpu as pltpu

# ----------------------------- static configuration --------------------------
B = 2
Z, HLAT, WLON = 2, 8, 8            # data_size (plevel, lat, lon)
C = 32                             # token dim
NUM_HEADS = 4
HEAD_DIM = C // NUM_HEADS
WINDOW = (2, 4, 4)                 # (wz, wh, ww), each even (module requirement)
SHIFT = tuple(w // 2 for w in WINDOW)
DEPTH = 2                          # blocks alternate roll=False / roll=True
LAM = False
EPS = 1e-5
SCALE = HEAD_DIM ** (-0.5)

WZ, WH, WW = WINDOW
ZW, HW, WWN = Z // WZ, HLAT // WH, WLON // WW
N_TOK = WZ * WH * WW               # tokens per window
NW_TOTAL = ZW * HW * WWN           # windows per batch element
NW_ZH = ZW * HW                    # "num_windows" used by the earth-specific bias
L = Z * HLAT * WLON                # tokens per batch element
BIAS_TABLE = (2 * WW - 1) * WH * WH * WZ * WZ
GELU_C = math.sqrt(2.0 / math.pi)
NEG_MASK = -1e9                    # cross-window logits -> exp() underflows to exactly 0


# ---------------------- host-side (setup-time) index / mask builders ---------
def define_3d_earth_position_index(window_size):
    wz, wh, ww = window_size
    coords_zi = np.arange(wz)
    coords_zj = -np.arange(wz) * wz
    coords_hi = np.arange(wh)
    coords_hj = -np.arange(wh) * wh
    coords_w = np.arange(ww)
    c1 = np.stack(np.meshgrid(coords_zi, coords_hi, coords_w, indexing="ij"))
    c2 = np.stack(np.meshgrid(coords_zj, coords_hj, coords_w, indexing="ij"))
    f1 = c1.reshape(3, -1)
    f2 = c2.reshape(3, -1)
    coords = f1[:, :, None] - f2[:, None, :]
    coords = np.transpose(coords, (1, 2, 0)).copy()
    coords[:, :, 2] += ww - 1
    coords[:, :, 1] *= 2 * ww - 1
    coords[:, :, 0] *= (2 * ww - 1) * wh * wh
    return coords.sum(-1).reshape(-1)


def generate_3d_attention_mask(pad_z, pad_h, pad_w, window_size, shift_size, lam=False):
    wz, wh, ww = window_size
    sz, sh, sw = shift_size
    am = np.zeros((pad_z, pad_h, pad_w), np.float32)
    z_slices = ((0, -sz), (-sz, None))
    h_slices = ((0, -sh), (-sh, None))
    w_slices = ((0, -sw), (-sw, None)) if lam else ((0, None),)
    cnt = 0
    for zs in z_slices:
        for hs in h_slices:
            for ws in w_slices:
                am[zs[0]:zs[1], hs[0]:hs[1], ws[0]:ws[1]] = cnt
                cnt += 1
    am = am.reshape(pad_z // wz, wz, pad_h // wh, wh, pad_w // ww, ww)
    n_windows = (pad_z // wz) * (pad_h // wh) * (pad_w // ww)
    am = np.transpose(am, (0, 2, 4, 1, 3, 5)).reshape(n_windows, -1)
    mask = am[:, None, :] - am[:, :, None]
    return np.where(mask != 0, -100.0, 0.0).astype(np.float32)


POS_IDX = define_3d_earth_position_index(WINDOW)                       # (N_TOK*N_TOK,)
MASK = generate_3d_attention_mask(Z, HLAT, WLON, WINDOW, SHIFT, LAM)   # (NW_TOTAL, N, N)
ZH_INDEX = np.arange(NW_TOTAL) // WWN                                  # window -> (z,h) bias slot


def make_window_bias(esb, roll):
    """Per-window earth-specific bias (+ shift mask for rolled), (NW_TOTAL, heads, N, N)."""
    esb_np = np.asarray(esb)
    b = esb_np[POS_IDX].reshape(N_TOK, N_TOK, NW_ZH, NUM_HEADS)
    b = np.transpose(b, (2, 3, 0, 1))          # (NW_ZH, heads, N, N)
    bf = b[ZH_INDEX]                            # (NW_TOTAL, heads, N, N)
    if roll:
        bf = bf + MASK[:, None, :, :]
    return bf


def token_window_map(roll):
    """For each token (z,h,w raster order): its window index and in-window position,
    under the optional cyclic shift (roll by -SHIFT before window partition)."""
    z, h, w = np.meshgrid(np.arange(Z), np.arange(HLAT), np.arange(WLON), indexing="ij")
    if roll:
        z = (z - SHIFT[0]) % Z
        h = (h - SHIFT[1]) % HLAT
        w = (w - SHIFT[2]) % WLON
    win = (z // WZ) * (HW * WWN) + (h // WH) * WWN + (w // WW)
    pos = (z % WZ) * (WH * WW) + (h % WH) * WW + (w % WW)
    return win.reshape(-1), pos.reshape(-1)


def make_token_bias(esb, roll):
    """Full-token (heads, L, L) additive bias in TOKEN order: earth-specific bias
    (+ -100 shift mask) for same-window pairs, -1e9 for cross-window pairs.
    This folds the window-partition permute and the roll into the mask, so the
    kernel never permutes activations."""
    wb = np.transpose(make_window_bias(esb, roll), (1, 0, 2, 3))   # (heads, NW, N, N)
    win, pos = token_window_map(roll)
    bt = wb[:, win[:, None], pos[:, None], pos[None, :]]           # (heads, L, L)
    same = (win[:, None] == win[None, :])
    return np.where(same[None, :, :], bt, NEG_MASK).astype(np.float32)


# ------------------------------- Pallas kernel --------------------------------
def _ln(y, g, b):
    mu = jnp.mean(y, axis=-1, keepdims=True)
    var = jnp.mean((y - mu) ** 2, axis=-1, keepdims=True)
    return (y - mu) * lax.rsqrt(var + EPS) * g + b


def _layer_kernel(x_ref, bias_ref, wqkv_ref, bqkv_ref, wo_ref, bo_ref,
                  wm1_ref, bm1_ref, wm2_ref, bm2_ref, lnp_ref, o_ref):
    """Both EarthSpecificBlocks, back to back, on one batch element, in token order.

    x_ref block : (1, L, C) tokens in raster (z,h,w) order.
    bias_ref    : (DEPTH, heads, L, L) bf16 full-token bias (window structure,
                  roll and shift mask folded in, cross-window = -1e9).
    All weights are stacked over the DEPTH blocks on a leading axis.
    """
    x = x_ref[0]                                                        # (L, C) f32

    for blk in range(DEPTH):                                            # static unroll
        wo = wo_ref[blk]                                                # (C, C)
        lnp = lnp_ref[blk]                                              # (4, C): g1,b1,g2,b2

        # ---- QKV projection (attention scale pre-folded into the Q columns) ----
        qkv = jnp.dot(x, wqkv_ref[blk],
                      preferred_element_type=jnp.float32) + bqkv_ref[blk]   # (L, 3C)

        # ---- full-token multi-head attention; head-concat folded into out-proj ----
        acc = jnp.zeros((L, C), jnp.float32)
        for h in range(NUM_HEADS):                                      # static unroll
            q = qkv[:, h * HEAD_DIM:(h + 1) * HEAD_DIM]
            k = qkv[:, C + h * HEAD_DIM:C + (h + 1) * HEAD_DIM]
            v = qkv[:, 2 * C + h * HEAD_DIM:2 * C + (h + 1) * HEAD_DIM]
            s = jnp.einsum("qd,kd->qk", q, k,
                           preferred_element_type=jnp.float32)          # (L, L) 128-lane dense
            s = s + bias_ref[blk, h].astype(jnp.float32)
            s = s - jnp.max(s, axis=-1, keepdims=True)
            p = jnp.exp(s)                                              # cross-window -> exactly 0
            att = p * pl.reciprocal(jnp.sum(p, axis=-1, keepdims=True), approx=True)
            oh = jnp.dot(att, v, preferred_element_type=jnp.float32)    # (L, HEAD_DIM)
            acc = acc + jnp.dot(oh, wo[h * HEAD_DIM:(h + 1) * HEAD_DIM, :],
                                preferred_element_type=jnp.float32)
        attn = acc + bo_ref[blk]                                        # (L, C)

        # ---- residual + post-LayerNorm (norm1), as in EarthSpecificBlock ----
        y1 = x + _ln(attn, lnp[0:1], lnp[1:2])

        # ---- MLP (tanh-GELU on the EUP) + post-LayerNorm (norm2) + residual ----
        # TODO(synk): PyTorch GELU uses exact erf; tanh approximation matches to ~3e-4 abs.
        hmid = jnp.dot(y1, wm1_ref[blk],
                       preferred_element_type=jnp.float32) + bm1_ref[blk]
        hmid = 0.5 * hmid * (1.0 + jnp.tanh(GELU_C * (hmid + 0.044715 * hmid * hmid * hmid)))
        y2 = jnp.dot(hmid, wm2_ref[blk],
                     preferred_element_type=jnp.float32) + bm2_ref[blk]
        x = y1 + _ln(y2, lnp[2:3], lnp[3:4])

    o_ref[0] = x


# ------------------------------- Pallas wrapper --------------------------------
def fused_layer(x, pp):
    def const(shape):
        return pl.BlockSpec(shape, lambda b, _s=shape: (0,) * len(_s))

    return pl.pallas_call(
        _layer_kernel,
        out_shape=jax.ShapeDtypeStruct((B, L, C), jnp.float32),
        grid=(B,),
        in_specs=[
            pl.BlockSpec((1, L, C), lambda b: (b, 0, 0)),      # x (per batch element)
            const((DEPTH, NUM_HEADS, L, L)),                   # bias (bf16)
            const((DEPTH, C, 3 * C)),                          # wqkv
            const((DEPTH, 1, 3 * C)),                          # bqkv
            const((DEPTH, C, C)),                              # wo
            const((DEPTH, 1, C)),                              # bo
            const((DEPTH, C, 4 * C)),                          # wm1
            const((DEPTH, 1, 4 * C)),                          # bm1
            const((DEPTH, 4 * C, C)),                          # wm2
            const((DEPTH, 1, C)),                              # bm2
            const((DEPTH, 4, C)),                              # LN gamma/beta (g1,b1,g2,b2)
        ],
        out_specs=pl.BlockSpec((1, L, C), lambda b: (b, 0, 0)),
        # Batch elements are independent -> v7x's two TensorCores each take one;
        # neutral (one extra ~0.35us grid step) on single-TC v5e/v6e.
        compiler_params=pltpu.CompilerParams(dimension_semantics=("parallel",)),
    )(x, pp["bias"], pp["wqkv"], pp["bqkv"], pp["wo"], pp["bo"],
      pp["wm1"], pp["bm1"], pp["wm2"], pp["bm2"], pp["lnp"])


@jax.jit
def layer_forward(x, prepared):
    # The whole EarthSpecificLayer is one pallas_call: no XLA reshape / transpose /
    # roll ops and no HBM round-trip of activations between the two blocks.
    return fused_layer(x, prepared)


# --------------------------------- parameters ----------------------------------
def init_block_params(key):
    ks = jax.random.split(key, 10)
    f32 = jnp.float32
    return dict(
        wqkv=jax.random.normal(ks[0], (C, 3 * C), f32) * 0.02,
        bqkv=jax.random.normal(ks[1], (3 * C,), f32) * 0.02,
        wo=jax.random.normal(ks[2], (C, C), f32) * 0.02,
        bo=jax.random.normal(ks[3], (C,), f32) * 0.02,
        esb=jax.random.truncated_normal(ks[4], -2.0, 2.0,
                                        (BIAS_TABLE, NW_ZH, NUM_HEADS), f32) * 0.02,
        g1=jnp.ones((C,), f32), b1=jnp.zeros((C,), f32),
        g2=jnp.ones((C,), f32), b2=jnp.zeros((C,), f32),
        wm1=jax.random.normal(ks[5], (C, 4 * C), f32) * 0.02,
        bm1=jax.random.normal(ks[6], (4 * C,), f32) * 0.02,
        wm2=jax.random.normal(ks[7], (4 * C, C), f32) * 0.02,
        bm2=jax.random.normal(ks[8], (C,), f32) * 0.02,
    )


def prepare_layer_params(params):
    """Precompute everything that depends only on the parameters:
      * the full-token (heads, L, L) bias per block (earth-specific bias gather,
        window block structure, roll + shift mask, cross-window -1e9), stored bf16;
      * the attention scale folded into the Q columns of wqkv / bqkv;
      * all per-block weights stacked on a leading DEPTH axis so the single fused
        kernel can index them with a static block index."""
    f32 = jnp.float32
    col_scale = jnp.concatenate([jnp.full((C,), SCALE, f32), jnp.ones((2 * C,), f32)])
    bias = np.stack([make_token_bias(p["esb"], roll=(i % 2 == 1))
                     for i, p in enumerate(params)])                    # (DEPTH, H, L, L)
    return dict(
        bias=jnp.asarray(bias).astype(jnp.bfloat16),
        wqkv=jnp.stack([p["wqkv"] * col_scale for p in params]),
        bqkv=jnp.stack([(p["bqkv"] * col_scale).reshape(1, -1) for p in params]),
        wo=jnp.stack([p["wo"] for p in params]),
        bo=jnp.stack([p["bo"].reshape(1, -1) for p in params]),
        wm1=jnp.stack([p["wm1"] for p in params]),
        bm1=jnp.stack([p["bm1"].reshape(1, -1) for p in params]),
        wm2=jnp.stack([p["wm2"] for p in params]),
        bm2=jnp.stack([p["bm2"].reshape(1, -1) for p in params]),
        lnp=jnp.stack([jnp.stack([p["g1"], p["b1"], p["g2"], p["b2"]]) for p in params]),
    )


# ------------------------------ pure-JAX reference -----------------------------
HI = lax.Precision.HIGHEST


def _ref_ln(y, g, b):
    mu = jnp.mean(y, axis=-1, keepdims=True)
    var = jnp.mean((y - mu) ** 2, axis=-1, keepdims=True)
    return (y - mu) / jnp.sqrt(var + EPS) * g + b


def ref_block(x, p, roll):
    shortcut = x
    xr = x.reshape(B, Z, HLAT, WLON, C)
    if roll:
        xr = jnp.roll(xr, (-SHIFT[0], -SHIFT[1], -SHIFT[2]), axis=(1, 2, 3))
    xw = xr.reshape(B, ZW, WZ, HW, WH, WWN, WW, C)
    xw = jnp.transpose(xw, (0, 1, 3, 5, 2, 4, 6, 7)).reshape(-1, N_TOK, C)
    m = xw.shape[0]
    qkv = (jnp.einsum("mnc,ck->mnk", xw, p["wqkv"], precision=HI) + p["bqkv"])
    qkv = qkv.reshape(m, N_TOK, 3, NUM_HEADS, HEAD_DIM)
    q, k, v = qkv[:, :, 0] * SCALE, qkv[:, :, 1], qkv[:, :, 2]
    att = jnp.einsum("mihd,mjhd->mhij", q, k, precision=HI)
    bias_w = jnp.asarray(make_window_bias(p["esb"], roll))
    att = att + bias_w[jnp.arange(m) % NW_TOTAL]
    att = jax.nn.softmax(att, axis=-1)
    o = jnp.einsum("mhij,mjhd->mihd", att, v, precision=HI).reshape(m, N_TOK, C)
    o = jnp.einsum("mnc,ck->mnk", o, p["wo"], precision=HI) + p["bo"]
    xa = o.reshape(B, ZW, HW, WWN, WZ, WH, WW, C)
    xa = jnp.transpose(xa, (0, 1, 4, 2, 5, 3, 6, 7)).reshape(B, Z, HLAT, WLON, C)
    if roll:
        xa = jnp.roll(xa, SHIFT, axis=(1, 2, 3))
    xa = xa.reshape(B, L, C)
    x1 = shortcut + _ref_ln(xa, p["g1"], p["b1"])
    h = jnp.einsum("blc,ck->blk", x1, p["wm1"], precision=HI) + p["bm1"]
    h = jax.nn.gelu(h, approximate=False)
    y = jnp.einsum("blk,kc->blc", h, p["wm2"], precision=HI) + p["bm2"]
    return x1 + _ref_ln(y, p["g2"], p["b2"])


def ref_layer(x, params):
    for i in range(DEPTH):
        x = ref_block(x, params[i], roll=(i % 2 == 1))
    return x


# ------------------------------------ main --------------------------------------
if __name__ == "__main__":
    key = jax.random.PRNGKey(0)
    kx, kp = jax.random.split(key)
    x = jax.random.normal(kx, (B, L, C), jnp.float32)          # (2, 128, 32)
    params = [init_block_params(k) for k in jax.random.split(kp, DEPTH)]
    prepared = prepare_layer_params(params)

    out = jax.block_until_ready(layer_forward(x, prepared))
    ref = jax.block_until_ready(ref_layer(x, params))

    assert out.shape == (B, L, C), out.shape
    np.testing.assert_allclose(np.asarray(out), np.asarray(ref), atol=1e-2, rtol=1e-2)
    print("KERNEL_OK")
</pallas_src>

<mosaic_0001>
module attributes {stable_mosaic.version = 11 : i64} {
  func.func @_layer_kernel(%arg0: i32, %arg1: memref<1x128x32xf32, #tpu.memory_space<vmem>>, %arg2: memref<2x4x128x128xbf16, #tpu.memory_space<vmem>>, %arg3: memref<2x32x96xf32, #tpu.memory_space<vmem>>, %arg4: memref<2x1x96xf32, #tpu.memory_space<vmem>>, %arg5: memref<2x32x32xf32, #tpu.memory_space<vmem>>, %arg6: memref<2x1x32xf32, #tpu.memory_space<vmem>>, %arg7: memref<2x32x128xf32, #tpu.memory_space<vmem>>, %arg8: memref<2x1x128xf32, #tpu.memory_space<vmem>>, %arg9: memref<2x128x32xf32, #tpu.memory_space<vmem>>, %arg10: memref<2x1x32xf32, #tpu.memory_space<vmem>>, %arg11: memref<2x4x32xf32, #tpu.memory_space<vmem>>, %arg12: memref<1x128x32xf32, #tpu.memory_space<vmem>>) attributes {dimension_semantics = [#tpu.dimension_semantics<parallel>], iteration_bounds = array<i64: 2>, scalar_prefetch = 0 : i64, scratch_operands = 0 : i64, tpu.core_type = #tpu.core_type<tc>, window_params = [{transform_indices = @transform_0, window_bounds = array<i64: 1, 128, 32>}, {pipeline_mode = #tpu.pipeline_mode<synchronous>, transform_indices = @transform_1, window_bounds = array<i64: 2, 4, 128, 128>}, {pipeline_mode = #tpu.pipeline_mode<synchronous>, transform_indices = @transform_2, window_bounds = array<i64: 2, 32, 96>}, {pipeline_mode = #tpu.pipeline_mode<synchronous>, transform_indices = @transform_3, window_bounds = array<i64: 2, 1, 96>}, {pipeline_mode = #tpu.pipeline_mode<synchronous>, transform_indices = @transform_4, window_bounds = array<i64: 2, 32, 32>}, {pipeline_mode = #tpu.pipeline_mode<synchronous>, transform_indices = @transform_5, window_bounds = array<i64: 2, 1, 32>}, {pipeline_mode = #tpu.pipeline_mode<synchronous>, transform_indices = @transform_6, window_bounds = array<i64: 2, 32, 128>}, {pipeline_mode = #tpu.pipeline_mode<synchronous>, transform_indices = @transform_7, window_bounds = array<i64: 2, 1, 128>}, {pipeline_mode = #tpu.pipeline_mode<synchronous>, transform_indices = @transform_8, window_bounds = array<i64: 2, 128, 32>}, {pipeline_mode = #tpu.pipeline_mode<synchronous>, transform_indices = @transform_9, window_bounds = array<i64: 2, 1, 32>}, {pipeline_mode = #tpu.pipeline_mode<synchronous>, transform_indices = @transform_10, window_bounds = array<i64: 2, 4, 32>}, {transform_indices = @transform_11, window_bounds = array<i64: 1, 128, 32>}]} {
    %c0 = arith.constant 0 : index
    %c0_0 = arith.constant 0 : index
    %c0_1 = arith.constant 0 : index
    %0 = vector.load %arg1[%c0, %c0_0, %c0_1] : memref<1x128x32xf32, #tpu.memory_space<vmem>>, vector<1x128x32xf32>
    %1 = vector.shape_cast %0 : vector<1x128x32xf32> to vector<128x32xf32>
    %c0_2 = arith.constant 0 : index
    %c0_3 = arith.constant 0 : index
    %c0_4 = arith.constant 0 : index
    %2 = vector.load %arg5[%c0_2, %c0_3, %c0_4] : memref<2x32x32xf32, #tpu.memory_space<vmem>>, vector<1x32x32xf32>
    %3 = vector.shape_cast %2 : vector<1x32x32xf32> to vector<32x32xf32>
    %c0_5 = arith.constant 0 : index
    %c0_6 = arith.constant 0 : index
    %c0_7 = arith.constant 0 : index
    %4 = vector.load %arg11[%c0_5, %c0_6, %c0_7] : memref<2x4x32xf32, #tpu.memory_space<vmem>>, vector<1x4x32xf32>
    %5 = vector.shape_cast %4 : vector<1x4x32xf32> to vector<4x32xf32>
    %c0_8 = arith.constant 0 : index
    %c0_9 = arith.constant 0 : index
    %c0_10 = arith.constant 0 : index
    %6 = vector.load %arg3[%c0_8, %c0_9, %c0_10] : memref<2x32x96xf32, #tpu.memory_space<vmem>>, vector<1x32x96xf32>
    %7 = vector.shape_cast %6 : vector<1x32x96xf32> to vector<32x96xf32>
    %cst = arith.constant dense<0.000000e+00> : vector<128x96xf32>
    %8 = tpu.matmul %1, %7, %cst {dimension_numbers = #tpu.dot_dimension_numbers<[1], [0], [0], [1], [0, 0, 1, 1], [], []>} : vector<128x32xf32>, vector<32x96xf32>, vector<128x96xf32> -> vector<128x96xf32>
    %c0_11 = arith.constant 0 : index
    %c0_12 = arith.constant 0 : index
    %c0_13 = arith.constant 0 : index
    %9 = vector.load %arg4[%c0_11, %c0_12, %c0_13] : memref<2x1x96xf32, #tpu.memory_space<vmem>>, vector<1x1x96xf32>
    %10 = vector.shape_cast %9 : vector<1x1x96xf32> to vector<1x96xf32>
    %11 = vector.broadcast %10 : vector<1x96xf32> to vector<128x96xf32>
    %12 = arith.addf %8, %11 : vector<128x96xf32>
    %cst_14 = arith.constant 0.000000e+00 : f32
    %13 = vector.broadcast %cst_14 : f32 to vector<128x32xf32>
    %14 = vector.extract_strided_slice %12 {offsets = [0, 0], sizes = [128, 8], strides = [1, 1]} : vector<128x96xf32> to vector<128x8xf32>
    %15 = vector.extract_strided_slice %12 {offsets = [0, 32], sizes = [128, 8], strides = [1, 1]} : vector<128x96xf32> to vector<128x8xf32>
    %16 = vector.extract_strided_slice %12 {offsets = [0, 64], sizes = [128, 8], strides = [1, 1]} : vector<128x96xf32> to vector<128x8xf32>
    "tpu.trace_start"() <{level = 10 : i32, message = "qd,kd->qk"}> : () -> ()
    %cst_15 = arith.constant dense<0.000000e+00> : vector<128x128xf32>
    %17 = tpu.matmul %14, %15, %cst_15 {dimension_numbers = #tpu.dot_dimension_numbers<[1], [1], [0], [0], [0, 0, 1, 0], [], []>} : vector<128x8xf32>, vector<128x8xf32>, vector<128x128xf32> -> vector<128x128xf32>
    "tpu.trace_stop"() : () -> ()
    %c0_16 = arith.constant 0 : index
    %c0_17 = arith.constant 0 : index
    %c0_18 = arith.constant 0 : index
    %c0_19 = arith.constant 0 : index
    %18 = vector.load %arg2[%c0_16, %c0_17, %c0_18, %c0_19] : memref<2x4x128x128xbf16, #tpu.memory_space<vmem>>, vector<1x1x128x128xbf16>
    %19 = vector.shape_cast %18 : vector<1x1x128x128xbf16> to vector<128x128xbf16>
    %20 = arith.extf %19 : vector<128x128xbf16> to vector<128x128xf32>
    %21 = arith.addf %17, %20 : vector<128x128xf32>
    %cst_20 = arith.constant dense<0xFF800000> : vector<128xf32>
    %22 = vector.multi_reduction <maximumf>, %21, %cst_20 [1] : vector<128x128xf32> to vector<128xf32>
    %23 = vector.shape_cast %22 : vector<128xf32> to vector<128x1xf32>
    %24 = vector.broadcast %23 : vector<128x1xf32> to vector<128x128xf32>
    %25 = arith.subf %21, %24 : vector<128x128xf32>
    %26 = math.exp %25 : vector<128x128xf32>
    %cst_21 = arith.constant dense<0.000000e+00> : vector<128xf32>
    %27 = vector.multi_reduction <add>, %26, %cst_21 [1] : vector<128x128xf32> to vector<128xf32>
    %28 = vector.shape_cast %27 : vector<128xf32> to vector<128x1xf32>
    %29 = tpu.reciprocal %28 {approx = true} : vector<128x1xf32> -> vector<128x1xf32>
    %30 = vector.broadcast %29 : vector<128x1xf32> to vector<128x128xf32>
    %31 = arith.mulf %26, %30 : vector<128x128xf32>
    %cst_22 = arith.constant dense<0.000000e+00> : vector<128x8xf32>
    %32 = tpu.matmul %31, %16, %cst_22 {dimension_numbers = #tpu.dot_dimension_numbers<[1], [0], [0], [1], [0, 0, 1, 1], [], []>} : vector<128x128xf32>, vector<128x8xf32>, vector<128x8xf32> -> vector<128x8xf32>
    %33 = vector.extract_strided_slice %3 {offsets = [0, 0], sizes = [8, 32], strides = [1, 1]} : vector<32x32xf32> to vector<8x32xf32>
    %cst_23 = arith.constant dense<0.000000e+00> : vector<128x32xf32>
    %34 = tpu.matmul %32, %33, %cst_23 {dimension_numbers = #tpu.dot_dimension_numbers<[1], [0], [0], [1], [0, 0, 1, 1], [], []>} : vector<128x8xf32>, vector<8x32xf32>, vector<128x32xf32> -> vector<128x32xf32>
    %35 = arith.addf %13, %34 : vector<128x32xf32>
    %36 = vector.extract_strided_slice %12 {offsets = [0, 8], sizes = [128, 8], strides = [1, 1]} : vector<128x96xf32> to vector<128x8xf32>
    %37 = vector.extract_strided_slice %12 {offsets = [0, 40], sizes = [128, 8], strides = [1, 1]} : vector<128x96xf32> to vector<128x8xf32>
    %38 = vector.extract_strided_slice %12 {offsets = [0, 72], sizes = [128, 8], strides = [1, 1]} : vector<128x96xf32> to vector<128x8xf32>
    "tpu.trace_start"() <{level = 10 : i32, message = "qd,kd->qk"}> : () -> ()
    %cst_24 = arith.constant dense<0.000000e+00> : vector<128x128xf32>
    %39 = tpu.matmul %36, %37, %cst_24 {dimension_numbers = #tpu.dot_dimension_numbers<[1], [1], [0], [0], [0, 0, 1, 0], [], []>} : vector<128x8xf32>, vector<128x8xf32>, vector<128x128xf32> -> vector<128x128xf32>
    "tpu.trace_stop"() : () -> ()
    %c0_25 = arith.constant 0 : index
    %c1 = arith.constant 1 : index
    %c0_26 = arith.constant 0 : index
    %c0_27 = arith.constant 0 : index
    %40 = vector.load %arg2[%c0_25, %c1, %c0_26, %c0_27] : memref<2x4x128x128xbf16, #tpu.memory_space<vmem>>, vector<1x1x128x128xbf16>
    %41 = vector.shape_cast %40 : vector<1x1x128x128xbf16> to vector<128x128xbf16>
    %42 = arith.extf %41 : vector<128x128xbf16> to vector<128x128xf32>
    %43 = arith.addf %39, %42 : vector<128x128xf32>
    %cst_28 = arith.constant dense<0xFF800000> : vector<128xf32>
    %44 = vector.multi_reduction <maximumf>, %43, %cst_28 [1] : vector<128x128xf32> to vector<128xf32>
    %45 = vector.shape_cast %44 : vector<128xf32> to vector<128x1xf32>
    %46 = vector.broadcast %45 : vector<128x1xf32> to vector<128x128xf32>
    %47 = arith.subf %43, %46 : vector<128x128xf32>
    %48 = math.exp %47 : vector<128x128xf32>
    %cst_29 = arith.constant dense<0.000000e+00> : vector<128xf32>
    %49 = vector.multi_reduction <add>, %48, %cst_29 [1] : vector<128x128xf32> to vector<128xf32>
    %50 = vector.shape_cast %49 : vector<128xf32> to vector<128x1xf32>
    %51 = tpu.reciprocal %50 {approx = true} : vector<128x1xf32> -> vector<128x1xf32>
    %52 = vector.broadcast %51 : vector<128x1xf32> to vector<128x128xf32>
    %53 = arith.mulf %48, %52 : vector<128x128xf32>
    %cst_30 = arith.constant dense<0.000000e+00> : vector<128x8xf32>
    %54 = tpu.matmul %53, %38, %cst_30 {dimension_numbers = #tpu.dot_dimension_numbers<[1], [0], [0], [1], [0, 0, 1, 1], [], []>} : vector<128x128xf32>, vector<128x8xf32>, vector<128x8xf32> -> vector<128x8xf32>
    %55 = vector.extract_strided_slice %3 {offsets = [8, 0], sizes = [8, 32], strides = [1, 1]} : vector<32x32xf32> to vector<8x32xf32>
    %cst_31 = arith.constant dense<0.000000e+00> : vector<128x32xf32>
    %56 = tpu.matmul %54, %55, %cst_31 {dimension_numbers = #tpu.dot_dimension_numbers<[1], [0], [0], [1], [0, 0, 1, 1], [], []>} : vector<128x8xf32>, vector<8x32xf32>, vector<128x32xf32> -> vector<128x32xf32>
    %57 = arith.addf %35, %56 : vector<128x32xf32>
    %58 = vector.extract_strided_slice %12 {offsets = [0, 16], sizes = [128, 8], strides = [1, 1]} : vector<128x96xf32> to vector<128x8xf32>
    %59 = vector.extract_strided_slice %12 {offsets = [0, 48], sizes = [128, 8], strides = [1, 1]} : vector<128x96xf32> to vector<128x8xf32>
    %60 = vector.extract_strided_slice %12 {offsets = [0, 80], sizes = [128, 8], strides = [1, 1]} : vector<128x96xf32> to vector<128x8xf32>
    "tpu.trace_start"() <{level = 10 : i32, message = "qd,kd->qk"}> : () -> ()
    %cst_32 = arith.constant dense<0.000000e+00> : vector<128x128xf32>
    %61 = tpu.matmul %58, %59, %cst_32 {dimension_numbers = #tpu.dot_dimension_numbers<[1], [1], [0], [0], [0, 0, 1, 0], [], []>} : vector<128x8xf32>, vector<128x8xf32>, vector<128x128xf32> -> vector<128x128xf32>
    "tpu.trace_stop"() : () -> ()
    %c0_33 = arith.constant 0 : index
    %c2 = arith.constant 2 : index
    %c0_34 = arith.constant 0 : index
    %c0_35 = arith.constant 0 : index
    %62 = vector.load %arg2[%c0_33, %c2, %c0_34, %c0_35] : memref<2x4x128x128xbf16, #tpu.memory_space<vmem>>, vector<1x1x128x128xbf16>
    %63 = vector.shape_cast %62 : vector<1x1x128x128xbf16> to vector<128x128xbf16>
    %64 = arith.extf %63 : vector<128x128xbf16> to vector<128x128xf32>
    %65 = arith.addf %61, %64 : vector<128x128xf32>
    %cst_36 = arith.constant dense<0xFF800000> : vector<128xf32>
    %66 = vector.multi_reduction <maximumf>, %65, %cst_36 [1] : vector<128x128xf32> to vector<128xf32>
    %67 = vector.shape_cast %66 : vector<128xf32> to vector<128x1xf32>
    %68 = vector.broadcast %67 : vector<128x1xf32> to vector<128x128xf32>
    %69 = arith.subf %65, %68 : vector<128x128xf32>
    %70 = math.exp %69 : vector<128x128xf32>
    %cst_37 = arith.constant dense<0.000000e+00> : vector<128xf32>
    %71 = vector.multi_reduction <add>, %70, %cst_37 [1] : vector<128x128xf32> to vector<128xf32>
    %72 = vector.shape_cast %71 : vector<128xf32> to vector<128x1xf32>
    %73 = tpu.reciprocal %72 {approx = true} : vector<128x1xf32> -> vector<128x1xf32>
    %74 = vector.broadcast %73 : vector<128x1xf32> to vector<128x128xf32>
    %75 = arith.mulf %70, %74 : vector<128x128xf32>
    %cst_38 = arith.constant dense<0.000000e+00> : vector<128x8xf32>
    %76 = tpu.matmul %75, %60, %cst_38 {dimension_numbers = #tpu.dot_dimension_numbers<[1], [0], [0], [1], [0, 0, 1, 1], [], []>} : vector<128x128xf32>, vector<128x8xf32>, vector<128x8xf32> -> vector<128x8xf32>
    %77 = vector.extract_strided_slice %3 {offsets = [16, 0], sizes = [8, 32], strides = [1, 1]} : vector<32x32xf32> to vector<8x32xf32>
    %cst_39 = arith.constant dense<0.000000e+00> : vector<128x32xf32>
    %78 = tpu.matmul %76, %77, %cst_39 {dimension_numbers = #tpu.dot_dimension_numbers<[1], [0], [0], [1], [0, 0, 1, 1], [], []>} : vector<128x8xf32>, vector<8x32xf32>, vector<128x32xf32> -> vector<128x32xf32>
    %79 = arith.addf %57, %78 : vector<128x32xf32>
    %80 = vector.extract_strided_slice %12 {offsets = [0, 24], sizes = [128, 8], strides = [1, 1]} : vector<128x96xf32> to vector<128x8xf32>
    %81 = vector.extract_strided_slice %12 {offsets = [0, 56], sizes = [128, 8], strides = [1, 1]} : vector<128x96xf32> to vector<128x8xf32>
    %82 = vector.extract_strided_slice %12 {offsets = [0, 88], sizes = [128, 8], strides = [1, 1]} : vector<128x96xf32> to vector<128x8xf32>
    "tpu.trace_start"() <{level = 10 : i32, message = "qd,kd->qk"}> : () -> ()
    %cst_40 = arith.constant dense<0.000000e+00> : vector<128x128xf32>
    %83 = tpu.matmul %80, %81, %cst_40 {dimension_numbers = #tpu.dot_dimension_numbers<[1], [1], [0], [0], [0, 0, 1, 0], [], []>} : vector<128x8xf32>, vector<128x8xf32>, vector<128x128xf32> -> vector<128x128xf32>
    "tpu.trace_stop"() : () -> ()
    %c0_41 = arith.constant 0 : index
    %c3 = arith.constant 3 : index
    %c0_42 = arith.constant 0 : index
    %c0_43 = arith.constant 0 : index
    %84 = vector.load %arg2[%c0_41, %c3, %c0_42, %c0_43] : memref<2x4x128x128xbf16, #tpu.memory_space<vmem>>, vector<1x1x128x128xbf16>
    %85 = vector.shape_cast %84 : vector<1x1x128x128xbf16> to vector<128x128xbf16>
    %86 = arith.extf %85 : vector<128x128xbf16> to vector<128x128xf32>
    %87 = arith.addf %83, %86 : vector<128x128xf32>
    %cst_44 = arith.constant dense<0xFF800000> : vector<128xf32>
    %88 = vector.multi_reduction <maximumf>, %87, %cst_44 [1] : vector<128x128xf32> to vector<128xf32>
    %89 = vector.shape_cast %88 : vector<128xf32> to vector<128x1xf32>
    %90 = vector.broadcast %89 : vector<128x1xf32> to vector<128x128xf32>
    %91 = arith.subf %87, %90 : vector<128x128xf32>
    %92 = math.exp %91 : vector<128x128xf32>
    %cst_45 = arith.constant dense<0.000000e+00> : vector<128xf32>
    %93 = vector.multi_reduction <add>, %92, %cst_45 [1] : vector<128x128xf32> to vector<128xf32>
    %94 = vector.shape_cast %93 : vector<128xf32> to vector<128x1xf32>
    %95 = tpu.reciprocal %94 {approx = true} : vector<128x1xf32> -> vector<128x1xf32>
    %96 = vector.broadcast %95 : vector<128x1xf32> to vector<128x128xf32>
    %97 = arith.mulf %92, %96 : vector<128x128xf32>
    %cst_46 = arith.constant dense<0.000000e+00> : vector<128x8xf32>
    %98 = tpu.matmul %97, %82, %cst_46 {dimension_numbers = #tpu.dot_dimension_numbers<[1], [0], [0], [1], [0, 0, 1, 1], [], []>} : vector<128x128xf32>, vector<128x8xf32>, vector<128x8xf32> -> vector<128x8xf32>
    %99 = vector.extract_strided_slice %3 {offsets = [24, 0], sizes = [8, 32], strides = [1, 1]} : vector<32x32xf32> to vector<8x32xf32>
    %cst_47 = arith.constant dense<0.000000e+00> : vector<128x32xf32>
    %100 = tpu.matmul %98, %99, %cst_47 {dimension_numbers = #tpu.dot_dimension_numbers<[1], [0], [0], [1], [0, 0, 1, 1], [], []>} : vector<128x8xf32>, vector<8x32xf32>, vector<128x32xf32> -> vector<128x32xf32>
    %101 = arith.addf %79, %100 : vector<128x32xf32>
    %c0_48 = arith.constant 0 : index
    %c0_49 = arith.constant 0 : index
    %c0_50 = arith.constant 0 : index
    %102 = vector.load %arg6[%c0_48, %c0_49, %c0_50] : memref<2x1x32xf32, #tpu.memory_space<vmem>>, vector<1x1x32xf32>
    %103 = vector.shape_cast %102 : vector<1x1x32xf32> to vector<1x32xf32>
    %104 = vector.broadcast %103 : vector<1x32xf32> to vector<128x32xf32>
    %105 = arith.addf %101, %104 : vector<128x32xf32>
    %106 = vector.extract_strided_slice %5 {offsets = [0, 0], sizes = [1, 32], strides = [1, 1]} : vector<4x32xf32> to vector<1x32xf32>
    %107 = vector.extract_strided_slice %5 {offsets = [1, 0], sizes = [1, 32], strides = [1, 1]} : vector<4x32xf32> to vector<1x32xf32>
    %cst_51 = arith.constant dense<0.000000e+00> : vector<128xf32>
    %108 = vector.multi_reduction <add>, %105, %cst_51 [1] : vector<128x32xf32> to vector<128xf32>
    %109 = vector.shape_cast %108 : vector<128xf32> to vector<128x1xf32>
    %cst_52 = arith.constant 3.200000e+01 : f32
    %110 = vector.broadcast %cst_52 : f32 to vector<128x1xf32>
    %111 = arith.divf %109, %110 : vector<128x1xf32>
    %112 = vector.broadcast %111 : vector<128x1xf32> to vector<128x32xf32>
    %113 = arith.subf %105, %112 : vector<128x32xf32>
    %114 = arith.mulf %113, %113 : vector<128x32xf32>
    %cst_53 = arith.constant dense<0.000000e+00> : vector<128xf32>
    %115 = vector.multi_reduction <add>, %114, %cst_53 [1] : vector<128x32xf32> to vector<128xf32>
    %116 = vector.shape_cast %115 : vector<128xf32> to vector<128x1xf32>
    %cst_54 = arith.constant 3.200000e+01 : f32
    %117 = vector.broadcast %cst_54 : f32 to vector<128x1xf32>
    %118 = arith.divf %116, %117 : vector<128x1xf32>
    %119 = vector.broadcast %111 : vector<128x1xf32> to vector<128x32xf32>
    %120 = arith.subf %105, %119 : vector<128x32xf32>
    %cst_55 = arith.constant 9.99999974E-6 : f32
    %121 = vector.broadcast %cst_55 : f32 to vector<128x1xf32>
    %122 = arith.addf %118, %121 : vector<128x1xf32>
    %123 = math.rsqrt %122 : vector<128x1xf32>
    %124 = vector.broadcast %123 : vector<128x1xf32> to vector<128x32xf32>
    %125 = arith.mulf %120, %124 : vector<128x32xf32>
    %126 = vector.broadcast %106 : vector<1x32xf32> to vector<128x32xf32>
    %127 = arith.mulf %125, %126 : vector<128x32xf32>
    %128 = vector.broadcast %107 : vector<1x32xf32> to vector<128x32xf32>
    %129 = arith.addf %127, %128 : vector<128x32xf32>
    %130 = arith.addf %1, %129 : vector<128x32xf32>
    %c0_56 = arith.constant 0 : index
    %c0_57 = arith.constant 0 : index
    %c0_58 = arith.constant 0 : index
    %131 = vector.load %arg7[%c0_56, %c0_57, %c0_58] : memref<2x32x128xf32, #tpu.memory_space<vmem>>, vector<1x32x128xf32>
    %132 = vector.shape_cast %131 : vector<1x32x128xf32> to vector<32x128xf32>
    %cst_59 = arith.constant dense<0.000000e+00> : vector<128x128xf32>
    %133 = tpu.matmul %130, %132, %cst_59 {dimension_numbers = #tpu.dot_dimension_numbers<[1], [0], [0], [1], [0, 0, 1, 1], [], []>} : vector<128x32xf32>, vector<32x128xf32>, vector<128x128xf32> -> vector<128x128xf32>
    %c0_60 = arith.constant 0 : index
    %c0_61 = arith.constant 0 : index
    %c0_62 = arith.constant 0 : index
    %134 = vector.load %arg8[%c0_60, %c0_61, %c0_62] : memref<2x1x128xf32, #tpu.memory_space<vmem>>, vector<1x1x128xf32>
    %135 = vector.shape_cast %134 : vector<1x1x128xf32> to vector<1x128xf32>
    %136 = vector.broadcast %135 : vector<1x128xf32> to vector<128x128xf32>
    %137 = arith.addf %133, %136 : vector<128x128xf32>
    %cst_63 = arith.constant 5.000000e-01 : f32
    %138 = vector.broadcast %cst_63 : f32 to vector<128x128xf32>
    %139 = arith.mulf %138, %137 : vector<128x128xf32>
    %cst_64 = arith.constant 4.471500e-02 : f32
    %140 = vector.broadcast %cst_64 : f32 to vector<128x128xf32>
    %141 = arith.mulf %140, %137 : vector<128x128xf32>
    %142 = arith.mulf %141, %137 : vector<128x128xf32>
    %143 = arith.mulf %142, %137 : vector<128x128xf32>
    %144 = arith.addf %137, %143 : vector<128x128xf32>
    %cst_65 = arith.constant 0.797884583 : f32
    %145 = vector.broadcast %cst_65 : f32 to vector<128x128xf32>
    %146 = arith.mulf %145, %144 : vector<128x128xf32>
    %147 = math.tanh %146 : vector<128x128xf32>
    %cst_66 = arith.constant 1.000000e+00 : f32
    %148 = vector.broadcast %cst_66 : f32 to vector<128x128xf32>
    %149 = arith.addf %148, %147 : vector<128x128xf32>
    %150 = arith.mulf %139, %149 : vector<128x128xf32>
    %c0_67 = arith.constant 0 : index
    %c0_68 = arith.constant 0 : index
    %c0_69 = arith.constant 0 : index
    %151 = vector.load %arg9[%c0_67, %c0_68, %c0_69] : memref<2x128x32xf32, #tpu.memory_space<vmem>>, vector<1x128x32xf32>
    %152 = vector.shape_cast %151 : vector<1x128x32xf32> to vector<128x32xf32>
    %cst_70 = arith.constant dense<0.000000e+00> : vector<128x32xf32>
    %153 = tpu.matmul %150, %152, %cst_70 {dimension_numbers = #tpu.dot_dimension_numbers<[1], [0], [0], [1], [0, 0, 1, 1], [], []>} : vector<128x128xf32>, vector<128x32xf32>, vector<128x32xf32> -> vector<128x32xf32>
    %c0_71 = arith.constant 0 : index
    %c0_72 = arith.constant 0 : index
    %c0_73 = arith.constant 0 : index
    %154 = vector.load %arg10[%c0_71, %c0_72, %c0_73] : memref<2x1x32xf32, #tpu.memory_space<vmem>>, vector<1x1x32xf32>
    %155 = vector.shape_cast %154 : vector<1x1x32xf32> to vector<1x32xf32>
    %156 = vector.broadcast %155 : vector<1x32xf32> to vector<128x32xf32>
    %157 = arith.addf %153, %156 : vector<128x32xf32>
    %158 = vector.extract_strided_slice %5 {offsets = [2, 0], sizes = [1, 32], strides = [1, 1]} : vector<4x32xf32> to vector<1x32xf32>
    %159 = vector.extract_strided_slice %5 {offsets = [3, 0], sizes = [1, 32], strides = [1, 1]} : vector<4x32xf32> to vector<1x32xf32>
    %cst_74 = arith.constant dense<0.000000e+00> : vector<128xf32>
    %160 = vector.multi_reduction <add>, %157, %cst_74 [1] : vector<128x32xf32> to vector<128xf32>
    %161 = vector.shape_cast %160 : vector<128xf32> to vector<128x1xf32>
    %cst_75 = arith.constant 3.200000e+01 : f32
    %162 = vector.broadcast %cst_75 : f32 to vector<128x1xf32>
    %163 = arith.divf %161, %162 : vector<128x1xf32>
    %164 = vector.broadcast %163 : vector<128x1xf32> to vector<128x32xf32>
    %165 = arith.subf %157, %164 : vector<128x32xf32>
    %166 = arith.mulf %165, %165 : vector<128x32xf32>
    %cst_76 = arith.constant dense<0.000000e+00> : vector<128xf32>
    %167 = vector.multi_reduction <add>, %166, %cst_76 [1] : vector<128x32xf32> to vector<128xf32>
    %168 = vector.shape_cast %167 : vector<128xf32> to vector<128x1xf32>
    %cst_77 = arith.constant 3.200000e+01 : f32
    %169 = vector.broadcast %cst_77 : f32 to vector<128x1xf32>
    %170 = arith.divf %168, %169 : vector<128x1xf32>
    %171 = vector.broadcast %163 : vector<128x1xf32> to vector<128x32xf32>
    %172 = arith.subf %157, %171 : vector<128x32xf32>
    %cst_78 = arith.constant 9.99999974E-6 : f32
    %173 = vector.broadcast %cst_78 : f32 to vector<128x1xf32>
    %174 = arith.addf %170, %173 : vector<128x1xf32>
    %175 = math.rsqrt %174 : vector<128x1xf32>
    %176 = vector.broadcast %175 : vector<128x1xf32> to vector<128x32xf32>
    %177 = arith.mulf %172, %176 : vector<128x32xf32>
    %178 = vector.broadcast %158 : vector<1x32xf32> to vector<128x32xf32>
    %179 = arith.mulf %177, %178 : vector<128x32xf32>
    %180 = vector.broadcast %159 : vector<1x32xf32> to vector<128x32xf32>
    %181 = arith.addf %179, %180 : vector<128x32xf32>
    %182 = arith.addf %130, %181 : vector<128x32xf32>
    %c1_79 = arith.constant 1 : index
    %c0_80 = arith.constant 0 : index
    %c0_81 = arith.constant 0 : index
    %183 = vector.load %arg5[%c1_79, %c0_80, %c0_81] : memref<2x32x32xf32, #tpu.memory_space<vmem>>, vector<1x32x32xf32>
    %184 = vector.shape_cast %183 : vector<1x32x32xf32> to vector<32x32xf32>
    %c1_82 = arith.constant 1 : index
    %c0_83 = arith.constant 0 : index
    %c0_84 = arith.constant 0 : index
    %185 = vector.load %arg11[%c1_82, %c0_83, %c0_84] : memref<2x4x32xf32, #tpu.memory_space<vmem>>, vector<1x4x32xf32>
    %186 = vector.shape_cast %185 : vector<1x4x32xf32> to vector<4x32xf32>
    %c1_85 = arith.constant 1 : index
    %c0_86 = arith.constant 0 : index
    %c0_87 = arith.constant 0 : index
    %187 = vector.load %arg3[%c1_85, %c0_86, %c0_87] : memref<2x32x96xf32, #tpu.memory_space<vmem>>, vector<1x32x96xf32>
    %188 = vector.shape_cast %187 : vector<1x32x96xf32> to vector<32x96xf32>
    %cst_88 = arith.constant dense<0.000000e+00> : vector<128x96xf32>
    %189 = tpu.matmul %182, %188, %cst_88 {dimension_numbers = #tpu.dot_dimension_numbers<[1], [0], [0], [1], [0, 0, 1, 1], [], []>} : vector<128x32xf32>, vector<32x96xf32>, vector<128x96xf32> -> vector<128x96xf32>
    %c1_89 = arith.constant 1 : index
    %c0_90 = arith.constant 0 : index
    %c0_91 = arith.constant 0 : index
    %190 = vector.load %arg4[%c1_89, %c0_90, %c0_91] : memref<2x1x96xf32, #tpu.memory_space<vmem>>, vector<1x1x96xf32>
    %191 = vector.shape_cast %190 : vector<1x1x96xf32> to vector<1x96xf32>
    %192 = vector.broadcast %191 : vector<1x96xf32> to vector<128x96xf32>
    %193 = arith.addf %189, %192 : vector<128x96xf32>
    %cst_92 = arith.constant 0.000000e+00 : f32
    %194 = vector.broadcast %cst_92 : f32 to vector<128x32xf32>
    %195 = vector.extract_strided_slice %193 {offsets = [0, 0], sizes = [128, 8], strides = [1, 1]} : vector<128x96xf32> to vector<128x8xf32>
    %196 = vector.extract_strided_slice %193 {offsets = [0, 32], sizes = [128, 8], strides = [1, 1]} : vector<128x96xf32> to vector<128x8xf32>
    %197 = vector.extract_strided_slice %193 {offsets = [0, 64], sizes = [128, 8], strides = [1, 1]} : vector<128x96xf32> to vector<128x8xf32>
    "tpu.trace_start"() <{level = 10 : i32, message = "qd,kd->qk"}> : () -> ()
    %cst_93 = arith.constant dense<0.000000e+00> : vector<128x128xf32>
    %198 = tpu.matmul %195, %196, %cst_93 {dimension_numbers = #tpu.dot_dimension_numbers<[1], [1], [0], [0], [0, 0, 1, 0], [], []>} : vector<128x8xf32>, vector<128x8xf32>, vector<128x128xf32> -> vector<128x128xf32>
    "tpu.trace_stop"() : () -> ()
    %c1_94 = arith.constant 1 : index
    %c0_95 = arith.constant 0 : index
    %c0_96 = arith.constant 0 : index
    %c0_97 = arith.constant 0 : index
    %199 = vector.load %arg2[%c1_94, %c0_95, %c0_96, %c0_97] : memref<2x4x128x128xbf16, #tpu.memory_space<vmem>>, vector<1x1x128x128xbf16>
    %200 = vector.shape_cast %199 : vector<1x1x128x128xbf16> to vector<128x128xbf16>
    %201 = arith.extf %200 : vector<128x128xbf16> to vector<128x128xf32>
    %202 = arith.addf %198, %201 : vector<128x128xf32>
    %cst_98 = arith.constant dense<0xFF800000> : vector<128xf32>
    %203 = vector.multi_reduction <maximumf>, %202, %cst_98 [1] : vector<128x128xf32> to vector<128xf32>
    %204 = vector.shape_cast %203 : vector<128xf32> to vector<128x1xf32>
    %205 = vector.broadcast %204 : vector<128x1xf32> to vector<128x128xf32>
    %206 = arith.subf %202, %205 : vector<128x128xf32>
    %207 = math.exp %206 : vector<128x128xf32>
    %cst_99 = arith.constant dense<0.000000e+00> : vector<128xf32>
    %208 = vector.multi_reduction <add>, %207, %cst_99 [1] : vector<128x128xf32> to vector<128xf32>
    %209 = vector.shape_cast %208 : vector<128xf32> to vector<128x1xf32>
    %210 = tpu.reciprocal %209 {approx = true} : vector<128x1xf32> -> vector<128x1xf32>
    %211 = vector.broadcast %210 : vector<128x1xf32> to vector<128x128xf32>
    %212 = arith.mulf %207, %211 : vector<128x128xf32>
    %cst_100 = arith.constant dense<0.000000e+00> : vector<128x8xf32>
    %213 = tpu.matmul %212, %197, %cst_100 {dimension_numbers = #tpu.dot_dimension_numbers<[1], [0], [0], [1], [0, 0, 1, 1], [], []>} : vector<128x128xf32>, vector<128x8xf32>, vector<128x8xf32> -> vector<128x8xf32>
    %214 = vector.extract_strided_slice %184 {offsets = [0, 0], sizes = [8, 32], strides = [1, 1]} : vector<32x32xf32> to vector<8x32xf32>
    %cst_101 = arith.constant dense<0.000000e+00> : vector<128x32xf32>
    %215 = tpu.matmul %213, %214, %cst_101 {dimension_numbers = #tpu.dot_dimension_numbers<[1], [0], [0], [1], [0, 0, 1, 1], [], []>} : vector<128x8xf32>, vector<8x32xf32>, vector<128x32xf32> -> vector<128x32xf32>
    %216 = arith.addf %194, %215 : vector<128x32xf32>
    %217 = vector.extract_strided_slice %193 {offsets = [0, 8], sizes = [128, 8], strides = [1, 1]} : vector<128x96xf32> to vector<128x8xf32>
    %218 = vector.extract_strided_slice %193 {offsets = [0, 40], sizes = [128, 8], strides = [1, 1]} : vector<128x96xf32> to vector<128x8xf32>
    %219 = vector.extract_strided_slice %193 {offsets = [0, 72], sizes = [128, 8], strides = [1, 1]} : vector<128x96xf32> to vector<128x8xf32>
    "tpu.trace_start"() <{level = 10 : i32, message = "qd,kd->qk"}> : () -> ()
    %cst_102 = arith.constant dense<0.000000e+00> : vector<128x128xf32>
    %220 = tpu.matmul %217, %218, %cst_102 {dimension_numbers = #tpu.dot_dimension_numbers<[1], [1], [0], [0], [0, 0, 1, 0], [], []>} : vector<128x8xf32>, vector<128x8xf32>, vector<128x128xf32> -> vector<128x128xf32>
    "tpu.trace_stop"() : () -> ()
    %c1_103 = arith.constant 1 : index
    %c1_104 = arith.constant 1 : index
    %c0_105 = arith.constant 0 : index
    %c0_106 = arith.constant 0 : index
    %221 = vector.load %arg2[%c1_103, %c1_104, %c0_105, %c0_106] : memref<2x4x128x128xbf16, #tpu.memory_space<vmem>>, vector<1x1x128x128xbf16>
    %222 = vector.shape_cast %221 : vector<1x1x128x128xbf16> to vector<128x128xbf16>
    %223 = arith.extf %222 : vector<128x128xbf16> to vector<128x128xf32>
    %224 = arith.addf %220, %223 : vector<128x128xf32>
    %cst_107 = arith.constant dense<0xFF800000> : vector<128xf32>
    %225 = vector.multi_reduction <maximumf>, %224, %cst_107 [1] : vector<128x128xf32> to vector<128xf32>
    %226 = vector.shape_cast %225 : vector<128xf32> to vector<128x1xf32>
    %227 = vector.broadcast %226 : vector<128x1xf32> to vector<128x128xf32>
    %228 = arith.subf %224, %227 : vector<128x128xf32>
    %229 = math.exp %228 : vector<128x128xf32>
    %cst_108 = arith.constant dense<0.000000e+00> : vector<128xf32>
    %230 = vector.multi_reduction <add>, %229, %cst_108 [1] : vector<128x128xf32> to vector<128xf32>
    %231 = vector.shape_cast %230 : vector<128xf32> to vector<128x1xf32>
    %232 = tpu.reciprocal %231 {approx = true} : vector<128x1xf32> -> vector<128x1xf32>
    %233 = vector.broadcast %232 : vector<128x1xf32> to vector<128x128xf32>
    %234 = arith.mulf %229, %233 : vector<128x128xf32>
    %cst_109 = arith.constant dense<0.000000e+00> : vector<128x8xf32>
    %235 = tpu.matmul %234, %219, %cst_109 {dimension_numbers = #tpu.dot_dimension_numbers<[1], [0], [0], [1], [0, 0, 1, 1], [], []>} : vector<128x128xf32>, vector<128x8xf32>, vector<128x8xf32> -> vector<128x8xf32>
    %236 = vector.extract_strided_slice %184 {offsets = [8, 0], sizes = [8, 32], strides = [1, 1]} : vector<32x32xf32> to vector<8x32xf32>
    %cst_110 = arith.constant dense<0.000000e+00> : vector<128x32xf32>
    %237 = tpu.matmul %235, %236, %cst_110 {dimension_numbers = #tpu.dot_dimension_numbers<[1], [0], [0], [1], [0, 0, 1, 1], [], []>} : vector<128x8xf32>, vector<8x32xf32>, vector<128x32xf32> -> vector<128x32xf32>
    %238 = arith.addf %216, %237 : vector<128x32xf32>
    %239 = vector.extract_strided_slice %193 {offsets = [0, 16], sizes = [128, 8], strides = [1, 1]} : vector<128x96xf32> to vector<128x8xf32>
    %240 = vector.extract_strided_slice %193 {offsets = [0, 48], sizes = [128, 8], strides = [1, 1]} : vector<128x96xf32> to vector<128x8xf32>
    %241 = vector.extract_strided_slice %193 {offsets = [0, 80], sizes = [128, 8], strides = [1, 1]} : vector<128x96xf32> to vector<128x8xf32>
    "tpu.trace_start"() <{level = 10 : i32, message = "qd,kd->qk"}> : () -> ()
    %cst_111 = arith.constant dense<0.000000e+00> : vector<128x128xf32>
    %242 = tpu.matmul %239, %240, %cst_111 {dimension_numbers = #tpu.dot_dimension_numbers<[1], [1], [0], [0], [0, 0, 1, 0], [], []>} : vector<128x8xf32>, vector<128x8xf32>, vector<128x128xf32> -> vector<128x128xf32>
    "tpu.trace_stop"() : () -> ()
    %c1_112 = arith.constant 1 : index
    %c2_113 = arith.constant 2 : index
    %c0_114 = arith.constant 0 : index
    %c0_115 = arith.constant 0 : index
    %243 = vector.load %arg2[%c1_112, %c2_113, %c0_114, %c0_115] : memref<2x4x128x128xbf16, #tpu.memory_space<vmem>>, vector<1x1x128x128xbf16>
    %244 = vector.shape_cast %243 : vector<1x1x128x128xbf16> to vector<128x128xbf16>
    %245 = arith.extf %244 : vector<128x128xbf16> to vector<128x128xf32>
    %246 = arith.addf %242, %245 : vector<128x128xf32>
    %cst_116 = arith.constant dense<0xFF800000> : vector<128xf32>
    %247 = vector.multi_reduction <maximumf>, %246, %cst_116 [1] : vector<128x128xf32> to vector<128xf32>
    %248 = vector.shape_cast %247 : vector<128xf32> to vector<128x1xf32>
    %249 = vector.broadcast %248 : vector<128x1xf32> to vector<128x128xf32>
    %250 = arith.subf %246, %249 : vector<128x128xf32>
    %251 = math.exp %250 : vector<128x128xf32>
    %cst_117 = arith.constant dense<0.000000e+00> : vector<128xf32>
    %252 = vector.multi_reduction <add>, %251, %cst_117 [1] : vector<128x128xf32> to vector<128xf32>
    %253 = vector.shape_cast %252 : vector<128xf32> to vector<128x1xf32>
    %254 = tpu.reciprocal %253 {approx = true} : vector<128x1xf32> -> vector<128x1xf32>
    %255 = vector.broadcast %254 : vector<128x1xf32> to vector<128x128xf32>
    %256 = arith.mulf %251, %255 : vector<128x128xf32>
    %cst_118 = arith.constant dense<0.000000e+00> : vector<128x8xf32>
    %257 = tpu.matmul %256, %241, %cst_118 {dimension_numbers = #tpu.dot_dimension_numbers<[1], [0], [0], [1], [0, 0, 1, 1], [], []>} : vector<128x128xf32>, vector<128x8xf32>, vector<128x8xf32> -> vector<128x8xf32>
    %258 = vector.extract_strided_slice %184 {offsets = [16, 0], sizes = [8, 32], strides = [1, 1]} : vector<32x32xf32> to vector<8x32xf32>
    %cst_119 = arith.constant dense<0.000000e+00> : vector<128x32xf32>
    %259 = tpu.matmul %257, %258, %cst_119 {dimension_numbers = #tpu.dot_dimension_numbers<[1], [0], [0], [1], [0, 0, 1, 1], [], []>} : vector<128x8xf32>, vector<8x32xf32>, vector<128x32xf32> -> vector<128x32xf32>
    %260 = arith.addf %238, %259 : vector<128x32xf32>
    %261 = vector.extract_strided_slice %193 {offsets = [0, 24], sizes = [128, 8], strides = [1, 1]} : vector<128x96xf32> to vector<128x8xf32>
    %262 = vector.extract_strided_slice %193 {offsets = [0, 56], sizes = [128, 8], strides = [1, 1]} : vector<128x96xf32> to vector<128x8xf32>
    %263 = vector.extract_strided_slice %193 {offsets = [0, 88], sizes = [128, 8], strides = [1, 1]} : vector<128x96xf32> to vector<128x8xf32>
    "tpu.trace_start"() <{level = 10 : i32, message = "qd,kd->qk"}> : () -> ()
    %cst_120 = arith.constant dense<0.000000e+00> : vector<128x128xf32>
    %264 = tpu.matmul %261, %262, %cst_120 {dimension_numbers = #tpu.dot_dimension_numbers<[1], [1], [0], [0], [0, 0, 1, 0], [], []>} : vector<128x8xf32>, vector<128x8xf32>, vector<128x128xf32> -> vector<128x128xf32>
    "tpu.trace_stop"() : () -> ()
    %c1_121 = arith.constant 1 : index
    %c3_122 = arith.constant 3 : index
    %c0_123 = arith.constant 0 : index
    %c0_124 = arith.constant 0 : index
    %265 = vector.load %arg2[%c1_121, %c3_122, %c0_123, %c0_124] : memref<2x4x128x128xbf16, #tpu.memory_space<vmem>>, vector<1x1x128x128xbf16>
    %266 = vector.shape_cast %265 : vector<1x1x128x128xbf16> to vector<128x128xbf16>
    %267 = arith.extf %266 : vector<128x128xbf16> to vector<128x128xf32>
    %268 = arith.addf %264, %267 : vector<128x128xf32>
    %cst_125 = arith.constant dense<0xFF800000> : vector<128xf32>
    %269 = vector.multi_reduction <maximumf>, %268, %cst_125 [1] : vector<128x128xf32> to vector<128xf32>
    %270 = vector.shape_cast %269 : vector<128xf32> to vector<128x1xf32>
    %271 = vector.broadcast %270 : vector<128x1xf32> to vector<128x128xf32>
    %272 = arith.subf %268, %271 : vector<128x128xf32>
    %273 = math.exp %272 : vector<128x128xf32>
    %cst_126 = arith.constant dense<0.000000e+00> : vector<128xf32>
    %274 = vector.multi_reduction <add>, %273, %cst_126 [1] : vector<128x128xf32> to vector<128xf32>
    %275 = vector.shape_cast %274 : vector<128xf32> to vector<128x1xf32>
    %276 = tpu.reciprocal %275 {approx = true} : vector<128x1xf32> -> vector<128x1xf32>
    %277 = vector.broadcast %276 : vector<128x1xf32> to vector<128x128xf32>
    %278 = arith.mulf %273, %277 : vector<128x128xf32>
    %cst_127 = arith.constant dense<0.000000e+00> : vector<128x8xf32>
    %279 = tpu.matmul %278, %263, %cst_127 {dimension_numbers = #tpu.dot_dimension_numbers<[1], [0], [0], [1], [0, 0, 1, 1], [], []>} : vector<128x128xf32>, vector<128x8xf32>, vector<128x8xf32> -> vector<128x8xf32>
    %280 = vector.extract_strided_slice %184 {offsets = [24, 0], sizes = [8, 32], strides = [1, 1]} : vector<32x32xf32> to vector<8x32xf32>
    %cst_128 = arith.constant dense<0.000000e+00> : vector<128x32xf32>
    %281 = tpu.matmul %279, %280, %cst_128 {dimension_numbers = #tpu.dot_dimension_numbers<[1], [0], [0], [1], [0, 0, 1, 1], [], []>} : vector<128x8xf32>, vector<8x32xf32>, vector<128x32xf32> -> vector<128x32xf32>
    %282 = arith.addf %260, %281 : vector<128x32xf32>
    %c1_129 = arith.constant 1 : index
    %c0_130 = arith.constant 0 : index
    %c0_131 = arith.constant 0 : index
    %283 = vector.load %arg6[%c1_129, %c0_130, %c0_131] : memref<2x1x32xf32, #tpu.memory_space<vmem>>, vector<1x1x32xf32>
    %284 = vector.shape_cast %283 : vector<1x1x32xf32> to vector<1x32xf32>
    %285 = vector.broadcast %284 : vector<1x32xf32> to vector<128x32xf32>
    %286 = arith.addf %282, %285 : vector<128x32xf32>
    %287 = vector.extract_strided_slice %186 {offsets = [0, 0], sizes = [1, 32], strides = [1, 1]} : vector<4x32xf32> to vector<1x32xf32>
    %288 = vector.extract_strided_slice %186 {offsets = [1, 0], sizes = [1, 32], strides = [1, 1]} : vector<4x32xf32> to vector<1x32xf32>
    %cst_132 = arith.constant dense<0.000000e+00> : vector<128xf32>
    %289 = vector.multi_reduction <add>, %286, %cst_132 [1] : vector<128x32xf32> to vector<128xf32>
    %290 = vector.shape_cast %289 : vector<128xf32> to vector<128x1xf32>
    %cst_133 = arith.constant 3.200000e+01 : f32
    %291 = vector.broadcast %cst_133 : f32 to vector<128x1xf32>
    %292 = arith.divf %290, %291 : vector<128x1xf32>
    %293 = vector.broadcast %292 : vector<128x1xf32> to vector<128x32xf32>
    %294 = arith.subf %286, %293 : vector<128x32xf32>
    %295 = arith.mulf %294, %294 : vector<128x32xf32>
    %cst_134 = arith.constant dense<0.000000e+00> : vector<128xf32>
    %296 = vector.multi_reduction <add>, %295, %cst_134 [1] : vector<128x32xf32> to vector<128xf32>
    %297 = vector.shape_cast %296 : vector<128xf32> to vector<128x1xf32>
    %cst_135 = arith.constant 3.200000e+01 : f32
    %298 = vector.broadcast %cst_135 : f32 to vector<128x1xf32>
    %299 = arith.divf %297, %298 : vector<128x1xf32>
    %300 = vector.broadcast %292 : vector<128x1xf32> to vector<128x32xf32>
    %301 = arith.subf %286, %300 : vector<128x32xf32>
    %cst_136 = arith.constant 9.99999974E-6 : f32
    %302 = vector.broadcast %cst_136 : f32 to vector<128x1xf32>
    %303 = arith.addf %299, %302 : vector<128x1xf32>
    %304 = math.rsqrt %303 : vector<128x1xf32>
    %305 = vector.broadcast %304 : vector<128x1xf32> to vector<128x32xf32>
    %306 = arith.mulf %301, %305 : vector<128x32xf32>
    %307 = vector.broadcast %287 : vector<1x32xf32> to vector<128x32xf32>
    %308 = arith.mulf %306, %307 : vector<128x32xf32>
    %309 = vector.broadcast %288 : vector<1x32xf32> to vector<128x32xf32>
    %310 = arith.addf %308, %309 : vector<128x32xf32>
    %311 = arith.addf %182, %310 : vector<128x32xf32>
    %c1_137 = arith.constant 1 : index
    %c0_138 = arith.constant 0 : index
    %c0_139 = arith.constant 0 : index
    %312 = vector.load %arg7[%c1_137, %c0_138, %c0_139] : memref<2x32x128xf32, #tpu.memory_space<vmem>>, vector<1x32x128xf32>
    %313 = vector.shape_cast %312 : vector<1x32x128xf32> to vector<32x128xf32>
    %cst_140 = arith.constant dense<0.000000e+00> : vector<128x128xf32>
    %314 = tpu.matmul %311, %313, %cst_140 {dimension_numbers = #tpu.dot_dimension_numbers<[1], [0], [0], [1], [0, 0, 1, 1], [], []>} : vector<128x32xf32>, vector<32x128xf32>, vector<128x128xf32> -> vector<128x128xf32>
    %c1_141 = arith.constant 1 : index
    %c0_142 = arith.constant 0 : index
    %c0_143 = arith.constant 0 : index
    %315 = vector.load %arg8[%c1_141, %c0_142, %c0_143] : memref<2x1x128xf32, #tpu.memory_space<vmem>>, vector<1x1x128xf32>
    %316 = vector.shape_cast %315 : vector<1x1x128xf32> to vector<1x128xf32>
    %317 = vector.broadcast %316 : vector<1x128xf32> to vector<128x128xf32>
    %318 = arith.addf %314, %317 : vector<128x128xf32>
    %cst_144 = arith.constant 5.000000e-01 : f32
    %319 = vector.broadcast %cst_144 : f32 to vector<128x128xf32>
    %320 = arith.mulf %319, %318 : vector<128x128xf32>
    %cst_145 = arith.constant 4.471500e-02 : f32
    %321 = vector.broadcast %cst_145 : f32 to vector<128x128xf32>
    %322 = arith.mulf %321, %318 : vector<128x128xf32>
    %323 = arith.mulf %322, %318 : vector<128x128xf32>
    %324 = arith.mulf %323, %318 : vector<128x128xf32>
    %325 = arith.addf %318, %324 : vector<128x128xf32>
    %cst_146 = arith.constant 0.797884583 : f32
    %326 = vector.broadcast %cst_146 : f32 to vector<128x128xf32>
    %327 = arith.mulf %326, %325 : vector<128x128xf32>
    %328 = math.tanh %327 : vector<128x128xf32>
    %cst_147 = arith.constant 1.000000e+00 : f32
    %329 = vector.broadcast %cst_147 : f32 to vector<128x128xf32>
    %330 = arith.addf %329, %328 : vector<128x128xf32>
    %331 = arith.mulf %320, %330 : vector<128x128xf32>
    %c1_148 = arith.constant 1 : index
    %c0_149 = arith.constant 0 : index
    %c0_150 = arith.constant 0 : index
    %332 = vector.load %arg9[%c1_148, %c0_149, %c0_150] : memref<2x128x32xf32, #tpu.memory_space<vmem>>, vector<1x128x32xf32>
    %333 = vector.shape_cast %332 : vector<1x128x32xf32> to vector<128x32xf32>
    %cst_151 = arith.constant dense<0.000000e+00> : vector<128x32xf32>
    %334 = tpu.matmul %331, %333, %cst_151 {dimension_numbers = #tpu.dot_dimension_numbers<[1], [0], [0], [1], [0, 0, 1, 1], [], []>} : vector<128x128xf32>, vector<128x32xf32>, vector<128x32xf32> -> vector<128x32xf32>
    %c1_152 = arith.constant 1 : index
    %c0_153 = arith.constant 0 : index
    %c0_154 = arith.constant 0 : index
    %335 = vector.load %arg10[%c1_152, %c0_153, %c0_154] : memref<2x1x32xf32, #tpu.memory_space<vmem>>, vector<1x1x32xf32>
    %336 = vector.shape_cast %335 : vector<1x1x32xf32> to vector<1x32xf32>
    %337 = vector.broadcast %336 : vector<1x32xf32> to vector<128x32xf32>
    %338 = arith.addf %334, %337 : vector<128x32xf32>
    %339 = vector.extract_strided_slice %186 {offsets = [2, 0], sizes = [1, 32], strides = [1, 1]} : vector<4x32xf32> to vector<1x32xf32>
    %340 = vector.extract_strided_slice %186 {offsets = [3, 0], sizes = [1, 32], strides = [1, 1]} : vector<4x32xf32> to vector<1x32xf32>
    %cst_155 = arith.constant dense<0.000000e+00> : vector<128xf32>
    %341 = vector.multi_reduction <add>, %338, %cst_155 [1] : vector<128x32xf32> to vector<128xf32>
    %342 = vector.shape_cast %341 : vector<128xf32> to vector<128x1xf32>
    %cst_156 = arith.constant 3.200000e+01 : f32
    %343 = vector.broadcast %cst_156 : f32 to vector<128x1xf32>
    %344 = arith.divf %342, %343 : vector<128x1xf32>
    %345 = vector.broadcast %344 : vector<128x1xf32> to vector<128x32xf32>
    %346 = arith.subf %338, %345 : vector<128x32xf32>
    %347 = arith.mulf %346, %346 : vector<128x32xf32>
    %cst_157 = arith.constant dense<0.000000e+00> : vector<128xf32>
    %348 = vector.multi_reduction <add>, %347, %cst_157 [1] : vector<128x32xf32> to vector<128xf32>
    %349 = vector.shape_cast %348 : vector<128xf32> to vector<128x1xf32>
    %cst_158 = arith.constant 3.200000e+01 : f32
    %350 = vector.broadcast %cst_158 : f32 to vector<128x1xf32>
    %351 = arith.divf %349, %350 : vector<128x1xf32>
    %352 = vector.broadcast %344 : vector<128x1xf32> to vector<128x32xf32>
    %353 = arith.subf %338, %352 : vector<128x32xf32>
    %cst_159 = arith.constant 9.99999974E-6 : f32
    %354 = vector.broadcast %cst_159 : f32 to vector<128x1xf32>
    %355 = arith.addf %351, %354 : vector<128x1xf32>
    %356 = math.rsqrt %355 : vector<128x1xf32>
    %357 = vector.broadcast %356 : vector<128x1xf32> to vector<128x32xf32>
    %358 = arith.mulf %353, %357 : vector<128x32xf32>
    %359 = vector.broadcast %339 : vector<1x32xf32> to vector<128x32xf32>
    %360 = arith.mulf %358, %359 : vector<128x32xf32>
    %361 = vector.broadcast %340 : vector<1x32xf32> to vector<128x32xf32>
    %362 = arith.addf %360, %361 : vector<128x32xf32>
    %363 = arith.addf %311, %362 : vector<128x32xf32>
    %c0_160 = arith.constant 0 : index
    %c0_161 = arith.constant 0 : index
    %c0_162 = arith.constant 0 : index
    %364 = vector.load %arg12[%c0_160, %c0_161, %c0_162] : memref<1x128x32xf32, #tpu.memory_space<vmem>>, vector<1x128x32xf32>
    %365 = vector.shape_cast %364 : vector<1x128x32xf32> to vector<128x32xf32>
    %366 = vector.shape_cast %363 : vector<128x32xf32> to vector<1x128x32xf32>
    tpu.vector_store %arg12[%c0_160, %c0_161, %c0_162], %366 {strides = array<i32>} : memref<1x128x32xf32, #tpu.memory_space<vmem>>, vector<1x128x32xf32>,
    return
  }
  func.func @transform_0(%arg0: i32) -> (i32, i32, i32) {
    %c0_i32 = arith.constant 0 : i32
    %c0_i32_0 = arith.constant 0 : i32
    %c0_i32_1 = arith.constant 0 : i32
    return %arg0, %c0_i32, %c0_i32_0 : i32, i32, i32
  }
  func.func @transform_1(%arg0: i32) -> (i32, i32, i32, i32) {
    %c0_i32 = arith.constant 0 : i32
    %c0_i32_0 = arith.constant 0 : i32
    %c0_i32_1 = arith.constant 0 : i32
    %c0_i32_2 = arith.constant 0 : i32
    %c0_i32_3 = arith.constant 0 : i32
    return %c0_i32, %c0_i32_0, %c0_i32_1, %c0_i32_2 : i32, i32, i32, i32
  }
  func.func @transform_2(%arg0: i32) -> (i32, i32, i32) {
    %c0_i32 = arith.constant 0 : i32
    %c0_i32_0 = arith.constant 0 : i32
    %c0_i32_1 = arith.constant 0 : i32
    %c0_i32_2 = arith.constant 0 : i32
    return %c0_i32, %c0_i32_0, %c0_i32_1 : i32, i32, i32
  }
  func.func @transform_3(%arg0: i32) -> (i32, i32, i32) {
    %c0_i32 = arith.constant 0 : i32
    %c0_i32_0 = arith.constant 0 : i32
    %c0_i32_1 = arith.constant 0 : i32
    %c0_i32_2 = arith.constant 0 : i32
    return %c0_i32, %c0_i32_0, %c0_i32_1 : i32, i32, i32
  }
  func.func @transform_4(%arg0: i32) -> (i32, i32, i32) {
    %c0_i32 = arith.constant 0 : i32
    %c0_i32_0 = arith.constant 0 : i32
    %c0_i32_1 = arith.constant 0 : i32
    %c0_i32_2 = arith.constant 0 : i32
    return %c0_i32, %c0_i32_0, %c0_i32_1 : i32, i32, i32
  }
  func.func @transform_5(%arg0: i32) -> (i32, i32, i32) {
    %c0_i32 = arith.constant 0 : i32
    %c0_i32_0 = arith.constant 0 : i32
    %c0_i32_1 = arith.constant 0 : i32
    %c0_i32_2 = arith.constant 0 : i32
    return %c0_i32, %c0_i32_0, %c0_i32_1 : i32, i32, i32
  }
  func.func @transform_6(%arg0: i32) -> (i32, i32, i32) {
    %c0_i32 = arith.constant 0 : i32
    %c0_i32_0 = arith.constant 0 : i32
    %c0_i32_1 = arith.constant 0 : i32
    %c0_i32_2 = arith.constant 0 : i32
    return %c0_i32, %c0_i32_0, %c0_i32_1 : i32, i32, i32
  }
  func.func @transform_7(%arg0: i32) -> (i32, i32, i32) {
    %c0_i32 = arith.constant 0 : i32
    %c0_i32_0 = arith.constant 0 : i32
    %c0_i32_1 = arith.constant 0 : i32
    %c0_i32_2 = arith.constant 0 : i32
    return %c0_i32, %c0_i32_0, %c0_i32_1 : i32, i32, i32
  }
  func.func @transform_8(%arg0: i32) -> (i32, i32, i32) {
    %c0_i32 = arith.constant 0 : i32
    %c0_i32_0 = arith.constant 0 : i32
    %c0_i32_1 = arith.constant 0 : i32
    %c0_i32_2 = arith.constant 0 : i32
    return %c0_i32, %c0_i32_0, %c0_i32_1 : i32, i32, i32
  }
  func.func @transform_9(%arg0: i32) -> (i32, i32, i32) {
    %c0_i32 = arith.constant 0 : i32
    %c0_i32_0 = arith.constant 0 : i32
    %c0_i32_1 = arith.constant 0 : i32
    %c0_i32_2 = arith.constant 0 : i32
    return %c0_i32, %c0_i32_0, %c0_i32_1 : i32, i32, i32
  }
  func.func @transform_10(%arg0: i32) -> (i32, i32, i32) {
    %c0_i32 = arith.constant 0 : i32
    %c0_i32_0 = arith.constant 0 : i32
    %c0_i32_1 = arith.constant 0 : i32
    %c0_i32_2 = arith.constant 0 : i32
    return %c0_i32, %c0_i32_0, %c0_i32_1 : i32, i32, i32
  }
  func.func @transform_11(%arg0: i32) -> (i32, i32, i32) {
    %c0_i32 = arith.constant 0 : i32
    %c0_i32_0 = arith.constant 0 : i32
    %c0_i32_1 = arith.constant 0 : i32
    return %arg0, %c0_i32, %c0_i32_0 : i32, i32, i32
  }
}

</mosaic_0001>

<llo_original>
// kernel: layer_forward.1
$region0: #{layer_forward.1}
  #allocation0 [shape = 'u32[]', space=smem, size = 0x4, offset = 0x4, fixed_abs, tag = 'smem constant byte address 0x4 - core index']
  #allocation1 [shape = 'u32[72,128]{1,0:T(1,128)}', space=vmem, size = 0x9000, scoped, tag = 'internal scratch']
  %s0 = inlined_call_operand.vmem [shape: f32[2,128,32], index: 0, kind: input, shape index: {}]
  %s1 = inlined_call_operand.vmem [shape: bf16[2,4,128,128], index: 1, kind: input, shape index: {}]
  %s2 = inlined_call_operand.vmem [shape: f32[2,32,96], index: 2, kind: input, shape index: {}]
  %s3 = inlined_call_operand.hbm [shape: f32[2,1,96], index: 3, kind: input, shape index: {}]
  %s4 = inlined_call_operand.hbm [shape: f32[2,32,32], index: 4, kind: input, shape index: {}]
  %s5 = inlined_call_operand.hbm [shape: f32[2,1,32], index: 5, kind: input, shape index: {}]
  %s6 = inlined_call_operand.hbm [shape: f32[2,32,128], index: 6, kind: input, shape index: {}]
  %s7 = inlined_call_operand.hbm [shape: f32[2,1,128], index: 7, kind: input, shape index: {}]
  %s8 = inlined_call_operand.vmem [shape: f32[2,128,32], index: 8, kind: input, shape index: {}]
  %s9 = inlined_call_operand.hbm [shape: f32[2,1,32], index: 9, kind: input, shape index: {}]
  %s10 = inlined_call_operand.hbm [shape: f32[2,4,32], index: 10, kind: input, shape index: {}]
  %s11 = inlined_call_operand.vmem [shape: f32[2,128,32], index: 11, kind: output, shape index: {}]
  %s12 = sld [smem:[#allocation0]]
  $region105: #{layer_forward.1} parent=0
    _
  %s14 = ssub.s32 1, %s12
  %s15 = scalar_select 0, %s14, %s12
  $region1: #{layer_forward.1} parent=0
    #allocation2 [shape = 'u8[1024]{0}', space=vmem, size = 0x400, scoped, tag = 'input window, operand 3, single buffered']
    #allocation3 [shape = 's32[2]{0}', space=sflag, size = 0x8, scoped, tag = 'scoped memory for layer_forward.1']
    #allocation4 [shape = 'u8[32768]{0}', space=vmem, size = 0x8000, scoped, tag = 'input window, operand 4, single buffered']
    #allocation5 [shape = 's32[1]{0}', space=sflag, size = 0x4, scoped, tag = 'scoped memory for layer_forward.1']
    #allocation6 [shape = 'u8[1024]{0}', space=vmem, size = 0x400, scoped, tag = 'input window, operand 5, single buffered']
    #allocation7 [shape = 'u8[32768]{0}', space=vmem, size = 0x8000, scoped, tag = 'input window, operand 6, single buffered']
    #allocation8 [shape = 's32[1]{0}', space=sflag, size = 0x4, scoped, tag = 'scoped memory for layer_forward.1']
    #allocation9 [shape = 'u8[1024]{0}', space=vmem, size = 0x400, scoped, tag = 'input window, operand 7, single buffered']
    #allocation10 [shape = 'u8[1024]{0}', space=vmem, size = 0x400, scoped, tag = 'input window, operand 9, single buffered']
    #allocation11 [shape = 's32[1]{0}', space=sflag, size = 0x4, scoped, tag = 'scoped memory for layer_forward.1']
    #allocation12 [shape = 'u8[4096]{0}', space=vmem, size = 0x1000, scoped, tag = 'input window, operand 10, single buffered']
    %16 = vsyncpa [#allocation3], 0
    %17 = vsyncpa [#allocation5], 0
    %18 = vsyncpa [#allocation8], 0
    %19 = vsyncpa [#allocation11], 0
    loop: start=0, step=1, limit=4
    $region2: #{layer_forward.1} parent=1 // loop_pre_header
      _
    $region3: #{layer_forward.1} parent=1 // loop_header
      %s21 = sphi 0, %s25
      %p22 = scmp.ge.s32.totalorder %s21, 4
      %s31 = sphi 0, %s33
      %s34 = sphi 0, %s31
      %s35 = sphi 0, %s34
      %s51 = sphi 0, %s35
      %s55 = sphi 0, %s55
      %s57 = sphi 0, %s55
      %s58 = sphi 0, %s57
      %s72 = sphi 0, %s58
      %s76 = sphi 0, %s76
      %s78 = sphi 0, %s76
      %s79 = sphi 0, %s78
      %s93 = sphi 0, %s79
      %s97 = sphi 0, %s97
      %s99 = sphi 0, %s97
      %s100 = sphi 0, %s99
      %s114 = sphi 0, %s100
      %s118 = sphi 0, %s118
      %s120 = sphi 0, %s118
      %s121 = sphi 0, %s120
      %s135 = sphi 0, %s121
      %s139 = sphi 0, %s139
      %s141 = sphi 0, %s139
      %s142 = sphi 0, %s141
      %s156 = sphi 0, %s142
      %s160 = sphi 0, %s160
      %s162 = sphi 0, %s160
      %s163 = sphi 0, %s162
      %s177 = sphi 0, %s163
      %s181 = sphi 0, %s181
      %s183 = sphi 0, %s181
      %s184 = sphi 0, %s183
      %s198 = sphi 0, %s184
      %s202 = sphi 0, %s202
      %s204 = sphi 0, %s202
      %s205 = sphi 0, %s204
      %s219 = sphi 0, %s205
      %s223 = sphi 0, %s223
      %s225 = sphi 0, %s223
      %s226 = sphi 0, %s225
      %s240 = sphi 0, %s226
      %s244 = sphi 0, %s244
      %s246 = sphi 0, %s244
      %s247 = sphi 0, %s246
      %s261 = sphi 0, %s247
      %s267 = sphi 0, %s269
      %s270 = sphi 0, %s267
      %s271 = sphi 0, %s270
      %s287 = sphi 0, %s271
    $region4: #{layer_forward.1} parent=1 // loop_header_branch
      %24 = sbr.rel (%p22) target = $region8
    $region5: #{layer_forward.1} parent=1 // loop_body
      %s26 = ssub.s32 %s21, 1
      %s27 = ssub.s32 %s21, 2
      %s28 = sadd.s32 %s21, 1
      %s29 = ssub.s32 %s21, %s28
      %p30 = scmp.eq.s32.totalorder %s29, 0
      %s32 = sadd.s32 %s31, 1
      %s33 = scalar_select %p30, %s31, %s32
      %p36 = pneg %p30
      %p37 = scmp.eq.s32.totalorder %s21, 1
      %p38 = por %p36, %p37
      %p39 = scmp.ne.s32.totalorder %s31, %s34
      %p40 = scmp.eq.s32.totalorder %s21, 0
      %p41 = por %p39, %p40
      %p42 = scmp.ne.s32.totalorder %s31, %s34
      %p43 = scmp.eq.s32.totalorder %s26, 1
      %p44 = por %p42, %p43
      %p45 = scmp.ne.s32.totalorder %s34, %s35
      %p46 = scmp.eq.s32.totalorder %s26, 0
      %p47 = por %p45, %p46
      %p48 = scmp.ne.s32.totalorder %s34, %s35
      %p49 = scmp.eq.s32.totalorder %s27, 1
      %p50 = por %p48, %p49
      %p52 = scmp.ne.s32.totalorder %s35, %s51
      %p53 = scmp.eq.s32.totalorder %s27, 0
      %p54 = por %p52, %p53
      %s56 = sadd.s32 %s55, 1
      %p59 = scmp.eq.s32.totalorder %s21, 1
      %p60 = scmp.ne.s32.totalorder %s55, %s57
      %p61 = scmp.eq.s32.totalorder %s21, 0
      %p62 = por %p60, %p61
      %p63 = scmp.ne.s32.totalorder %s55, %s57
      %p64 = scmp.eq.s32.totalorder %s26, 1
      %p65 = por %p63, %p64
      %p66 = scmp.ne.s32.totalorder %s57, %s58
      %p67 = scmp.eq.s32.totalorder %s26, 0
      %p68 = por %p66, %p67
      %p69 = scmp.ne.s32.totalorder %s57, %s58
      %p70 = scmp.eq.s32.totalorder %s27, 1
      %p71 = por %p69, %p70
      %p73 = scmp.ne.s32.totalorder %s58, %s72
      %p74 = scmp.eq.s32.totalorder %s27, 0
      %p75 = por %p73, %p74
      %s77 = sadd.s32 %s76, 1
      %p80 = scmp.eq.s32.totalorder %s21, 1
      %p81 = scmp.ne.s32.totalorder %s76, %s78
      %p82 = scmp.eq.s32.totalorder %s21, 0
      %p83 = por %p81, %p82
      %p84 = scmp.ne.s32.totalorder %s76, %s78
      %p85 = scmp.eq.s32.totalorder %s26, 1
      %p86 = por %p84, %p85
      %p87 = scmp.ne.s32.totalorder %s78, %s79
      %p88 = scmp.eq.s32.totalorder %s26, 0
      %p89 = por %p87, %p88
      %p90 = scmp.ne.s32.totalorder %s78, %s79
      %p91 = scmp.eq.s32.totalorder %s27, 1
      %p92 = por %p90, %p91
      %p94 = scmp.ne.s32.totalorder %s79, %s93
      %p95 = scmp.eq.s32.totalorder %s27, 0
      %p96 = por %p94, %p95
      %s98 = sadd.s32 %s97, 1
      %p101 = scmp.eq.s32.totalorder %s21, 1
      %p102 = scmp.ne.s32.totalorder %s97, %s99
      %p103 = scmp.eq.s32.totalorder %s21, 0
      %p104 = por %p102, %p103
      %p105 = scmp.ne.s32.totalorder %s97, %s99
      %p106 = scmp.eq.s32.totalorder %s26, 1
      %p107 = por %p105, %p106
      %p108 = scmp.ne.s32.totalorder %s99, %s100
      %p109 = scmp.eq.s32.totalorder %s26, 0
      %p110 = por %p108, %p109
      %p111 = scmp.ne.s32.totalorder %s99, %s100
      %p112 = scmp.eq.s32.totalorder %s27, 1
      %p113 = por %p111, %p112
      %p115 = scmp.ne.s32.totalorder %s100, %s114
      %p116 = scmp.eq.s32.totalorder %s27, 0
      %p117 = por %p115, %p116
      %s119 = sadd.s32 %s118, 1
      %p122 = scmp.eq.s32.totalorder %s21, 1
      %p123 = scmp.ne.s32.totalorder %s118, %s120
      %p124 = scmp.eq.s32.totalorder %s21, 0
      %p125 = por %p123, %p124
      %p126 = scmp.ne.s32.totalorder %s118, %s120
      %p127 = scmp.eq.s32.totalorder %s26, 1
      %p128 = por %p126, %p127
      %p129 = scmp.ne.s32.totalorder %s120, %s121
      %p130 = scmp.eq.s32.totalorder %s26, 0
      %p131 = por %p129, %p130
      %p132 = scmp.ne.s32.totalorder %s120, %s121
      %p133 = scmp.eq.s32.totalorder %s27, 1
      %p134 = por %p132, %p133
      %p136 = scmp.ne.s32.totalorder %s121, %s135
      %p137 = scmp.eq.s32.totalorder %s27, 0
      %p138 = por %p136, %p137
      %s140 = sadd.s32 %s139, 1
      %p143 = scmp.eq.s32.totalorder %s21, 1
      %p144 = scmp.ne.s32.totalorder %s139, %s141
      %p145 = scmp.eq.s32.totalorder %s21, 0
      %p146 = por %p144, %p145
      %p147 = scmp.ne.s32.totalorder %s139, %s141
      %p148 = scmp.eq.s32.totalorder %s26, 1
      %p149 = por %p147, %p148
      %p150 = scmp.ne.s32.totalorder %s141, %s142
      %p151 = scmp.eq.s32.totalorder %s26, 0
      %p152 = por %p150, %p151
      %p153 = scmp.ne.s32.totalorder %s141, %s142
      %p154 = scmp.eq.s32.totalorder %s27, 1
      %p155 = por %p153, %p154
      %p157 = scmp.ne.s32.totalorder %s142, %s156
      %p158 = scmp.eq.s32.totalorder %s27, 0
      %p159 = por %p157, %p158
      %s161 = sadd.s32 %s160, 1
      %p164 = scmp.eq.s32.totalorder %s21, 1
      %p165 = scmp.ne.s32.totalorder %s160, %s162
      %p166 = scmp.eq.s32.totalorder %s21, 0
      %p167 = por %p165, %p166
      %p168 = scmp.ne.s32.totalorder %s160, %s162
      %p169 = scmp.eq.s32.totalorder %s26, 1
      %p170 = por %p168, %p169
      %p171 = scmp.ne.s32.totalorder %s162, %s163
      %p172 = scmp.eq.s32.totalorder %s26, 0
      %p173 = por %p171, %p172
      %p174 = scmp.ne.s32.totalorder %s162, %s163
      %p175 = scmp.eq.s32.totalorder %s27, 1
      %p176 = por %p174, %p175
      %p178 = scmp.ne.s32.totalorder %s163, %s177
      %p179 = scmp.eq.s32.totalorder %s27, 0
      %p180 = por %p178, %p179
      %s182 = sadd.s32 %s181, 1
      %p185 = scmp.eq.s32.totalorder %s21, 1
      %p186 = scmp.ne.s32.totalorder %s181, %s183
      %p187 = scmp.eq.s32.totalorder %s21, 0
      %p188 = por %p186, %p187
      %p189 = scmp.ne.s32.totalorder %s181, %s183
      %p190 = scmp.eq.s32.totalorder %s26, 1
      %p191 = por %p189, %p190
      %p192 = scmp.ne.s32.totalorder %s183, %s184
      %p193 = scmp.eq.s32.totalorder %s26, 0
      %p194 = por %p192, %p193
      %p195 = scmp.ne.s32.totalorder %s183, %s184
      %p196 = scmp.eq.s32.totalorder %s27, 1
      %p197 = por %p195, %p196
      %p199 = scmp.ne.s32.totalorder %s184, %s198
      %p200 = scmp.eq.s32.totalorder %s27, 0
      %p201 = por %p199, %p200
      %s203 = sadd.s32 %s202, 1
      %p206 = scmp.eq.s32.totalorder %s21, 1
      %p207 = scmp.ne.s32.totalorder %s202, %s204
      %p208 = scmp.eq.s32.totalorder %s21, 0
      %p209 = por %p207, %p208
      %p210 = scmp.ne.s32.totalorder %s202, %s204
      %p211 = scmp.eq.s32.totalorder %s26, 1
      %p212 = por %p210, %p211
      %p213 = scmp.ne.s32.totalorder %s204, %s205
      %p214 = scmp.eq.s32.totalorder %s26, 0
      %p215 = por %p213, %p214
      %p216 = scmp.ne.s32.totalorder %s204, %s205
      %p217 = scmp.eq.s32.totalorder %s27, 1
      %p218 = por %p216, %p217
      %p220 = scmp.ne.s32.totalorder %s205, %s219
      %p221 = scmp.eq.s32.totalorder %s27, 0
      %p222 = por %p220, %p221
      %s224 = sadd.s32 %s223, 1
      %p227 = scmp.eq.s32.totalorder %s21, 1
      %p228 = scmp.ne.s32.totalorder %s223, %s225
      %p229 = scmp.eq.s32.totalorder %s21, 0
      %p230 = por %p228, %p229
      %p231 = scmp.ne.s32.totalorder %s223, %s225
      %p232 = scmp.eq.s32.totalorder %s26, 1
      %p233 = por %p231, %p232
      %p234 = scmp.ne.s32.totalorder %s225, %s226
      %p235 = scmp.eq.s32.totalorder %s26, 0
      %p236 = por %p234, %p235
      %p237 = scmp.ne.s32.totalorder %s225, %s226
      %p238 = scmp.eq.s32.totalorder %s27, 1
      %p239 = por %p237, %p238
      %p241 = scmp.ne.s32.totalorder %s226, %s240
      %p242 = scmp.eq.s32.totalorder %s27, 0
      %p243 = por %p241, %p242
      %s245 = sadd.s32 %s244, 1
      %p248 = scmp.eq.s32.totalorder %s21, 1
      %p249 = scmp.ne.s32.totalorder %s244, %s246
      %p250 = scmp.eq.s32.totalorder %s21, 0
      %p251 = por %p249, %p250
      %p252 = scmp.ne.s32.totalorder %s244, %s246
      %p253 = scmp.eq.s32.totalorder %s26, 1
      %p254 = por %p252, %p253
      %p255 = scmp.ne.s32.totalorder %s246, %s247
      %p256 = scmp.eq.s32.totalorder %s26, 0
      %p257 = por %p255, %p256
      %p258 = scmp.ne.s32.totalorder %s246, %s247
      %p259 = scmp.eq.s32.totalorder %s27, 1
      %p260 = por %p258, %p259
      %p262 = scmp.ne.s32.totalorder %s247, %s261
      %p263 = scmp.eq.s32.totalorder %s27, 0
      %p264 = por %p262, %p263
      %s265 = ssub.s32 %s21, %s28
      %p266 = scmp.eq.s32.totalorder %s265, 0
      %s268 = sadd.s32 %s267, 1
      %s269 = scalar_select %p266, %s267, %s268
      %p272 = pneg %p266
      %p273 = scmp.eq.s32.totalorder %s21, 1
      %p274 = por %p272, %p273
      %p275 = scmp.ne.s32.totalorder %s267, %s270
      %p276 = scmp.eq.s32.totalorder %s21, 0
      %p277 = por %p275, %p276
      %p278 = scmp.ne.s32.totalorder %s267, %s270
      %p279 = scmp.eq.s32.totalorder %s26, 1
      %p280 = por %p278, %p279
      %p281 = scmp.ne.s32.totalorder %s270, %s271
      %p282 = scmp.eq.s32.totalorder %s26, 0
      %p283 = por %p281, %p282
      %p284 = scmp.ne.s32.totalorder %s270, %s271
      %p285 = scmp.eq.s32.totalorder %s27, 1
      %p286 = por %p284, %p285
      %p288 = scmp.ne.s32.totalorder %s271, %s287
      %p289 = scmp.eq.s32.totalorder %s27, 0
      %p290 = por %p288, %p289
      %p291 = scmp.le.s32.totalorder 1, %s21
      %p292 = scmp.lt.s32.totalorder %s21, 3
      %p293 = pnand %p291, %p292
      %p294 = pneg %p293
      // Predicated region
      $region9: #{layer_forward.1} parent=5 // pred_check
        _
      $region10: #{layer_forward.1} parent=5 // pred_check_branch
        %296 = sbr.rel (%p293) target = $region12
      $region11: #{layer_forward.1} parent=5 // pred_region
        %s297 = ssub.s32 %s21, 1
        // Predicated region
        $region13: #{layer_forward.1} parent=11 // pred_check
          %p298 = pneg %p68
        $region14: #{layer_forward.1} parent=11 // pred_check_branch
          %300 = sbr.rel (%p298) target = $region16
        $region15: #{layer_forward.1} parent=11 // pred_region
          _
        $region16: #{layer_forward.1} parent=11 // pred_fallthru
          _
        // Predicated region
        $region17: #{layer_forward.1} parent=11 // pred_check
          %p301 = pneg %p89
        $region18: #{layer_forward.1} parent=11 // pred_check_branch
          %303 = sbr.rel (%p301) target = $region20
        $region19: #{layer_forward.1} parent=11 // pred_region
          _
        $region20: #{layer_forward.1} parent=11 // pred_fallthru
          _
        // Predicated region
        $region21: #{layer_forward.1} parent=11 // pred_check
          %p304 = pneg %p110
        $region22: #{layer_forward.1} parent=11 // pred_check_branch
          %306 = sbr.rel (%p304) target = $region24
        $region23: #{layer_forward.1} parent=11 // pred_region
          %308 = vsyncadd [#allocation3], 0
          %s309 = sshll.u32 %s3, 4
          %s310 = int_to_ptr.hbm [resolvable:$true] %s309
          %s311 = sshll.u32 [#allocation2], 4
          %s312 = int_to_ptr.vmem [resolvable:$true] %s311
          %317 = dma.hbm_to_vmem [thread:$0]  %s310, 32, %s312, [#allocation3], 16, 16, 1
        $region24: #{layer_forward.1} parent=11 // pred_fallthru
          _
        // Predicated region
        $region25: #{layer_forward.1} parent=11 // pred_check
          %p318 = pneg %p131
        $region26: #{layer_forward.1} parent=11 // pred_check_branch
          %320 = sbr.rel (%p318) target = $region28
        $region27: #{layer_forward.1} parent=11 // pred_region
          %322 = vsyncadd [#allocation5], 0
          %s323 = sshll.u32 %s4, 4
          %s324 = int_to_ptr.hbm [resolvable:$true] %s323
          %s325 = sshll.u32 [#allocation4], 4
          %s326 = int_to_ptr.vmem [resolvable:$true] %s325
          %331 = dma.hbm_to_vmem [thread:$0]  %s324, 1024, %s326, [#allocation5], 128, 128, 8
        $region28: #{layer_forward.1} parent=11 // pred_fallthru
          _
        // Predicated region
        $region29: #{layer_forward.1} parent=11 // pred_check
          %p332 = pneg %p152
        $region30: #{layer_forward.1} parent=11 // pred_check_branch
          %334 = sbr.rel (%p332) target = $region32
        $region31: #{layer_forward.1} parent=11 // pred_region
          %336 = vsyncadd [#allocation5], 0
          %s337 = sshll.u32 %s5, 4
          %s338 = int_to_ptr.hbm [resolvable:$true] %s337
          %s339 = sshll.u32 [#allocation6], 4
          %s340 = int_to_ptr.vmem [resolvable:$true] %s339
          %345 = dma.hbm_to_vmem [thread:$0]  %s338, 32, %s340, [#allocation5], 16, 16, 1
        $region32: #{layer_forward.1} parent=11 // pred_fallthru
          _
        // Predicated region
        $region33: #{layer_forward.1} parent=11 // pred_check
          %p346 = pneg %p173
        $region34: #{layer_forward.1} parent=11 // pred_check_branch
          %348 = sbr.rel (%p346) target = $region36
        $region35: #{layer_forward.1} parent=11 // pred_region
          %350 = vsyncadd [#allocation8], 0
          %s351 = sshll.u32 %s6, 4
          %s352 = int_to_ptr.hbm [resolvable:$true] %s351
          %s353 = sshll.u32 [#allocation7], 4
          %s354 = int_to_ptr.vmem [resolvable:$true] %s353
          %359 = dma.hbm_to_vmem [thread:$0]  %s352, 1024, %s354, [#allocation8], 128, 128, 8
        $region36: #{layer_forward.1} parent=11 // pred_fallthru
          _
        // Predicated region
        $region37: #{layer_forward.1} parent=11 // pred_check
          %p360 = pneg %p194
        $region38: #{layer_forward.1} parent=11 // pred_check_branch
          %362 = sbr.rel (%p360) target = $region40
        $region39: #{layer_forward.1} parent=11 // pred_region
          %364 = vsyncadd [#allocation8], 0
          %s365 = sshll.u32 %s7, 4
          %s366 = int_to_ptr.hbm [resolvable:$true] %s365
          %s367 = sshll.u32 [#allocation9], 4
          %s368 = int_to_ptr.vmem [resolvable:$true] %s367
          %373 = dma.hbm_to_vmem [thread:$0]  %s366, 32, %s368, [#allocation8], 16, 16, 1
        $region40: #{layer_forward.1} parent=11 // pred_fallthru
          _
        // Predicated region
        $region41: #{layer_forward.1} parent=11 // pred_check
          %p374 = pneg %p215
        $region42: #{layer_forward.1} parent=11 // pred_check_branch
          %376 = sbr.rel (%p374) target = $region44
        $region43: #{layer_forward.1} parent=11 // pred_region
          _
        $region44: #{layer_forward.1} parent=11 // pred_fallthru
          _
        // Predicated region
        $region45: #{layer_forward.1} parent=11 // pred_check
          %p377 = pneg %p236
        $region46: #{layer_forward.1} parent=11 // pred_check_branch
          %379 = sbr.rel (%p377) target = $region48
        $region47: #{layer_forward.1} parent=11 // pred_region
          %381 = vsyncadd [#allocation11], 0
          %s382 = sshll.u32 %s9, 4
          %s383 = int_to_ptr.hbm [resolvable:$true] %s382
          %s384 = sshll.u32 [#allocation10], 4
          %s385 = int_to_ptr.vmem [resolvable:$true] %s384
          %390 = dma.hbm_to_vmem [thread:$0]  %s383, 32, %s385, [#allocation11], 16, 16, 1
        $region48: #{layer_forward.1} parent=11 // pred_fallthru
          _
        // Predicated region
        $region49: #{layer_forward.1} parent=11 // pred_check
          %p391 = pneg %p257
        $region50: #{layer_forward.1} parent=11 // pred_check_branch
          %393 = sbr.rel (%p391) target = $region52
        $region51: #{layer_forward.1} parent=11 // pred_region
          %395 = vsyncadd [#allocation11], 0
          %s396 = sshll.u32 %s10, 4
          %s397 = int_to_ptr.hbm [resolvable:$true] %s396
          %s398 = sshll.u32 [#allocation12], 4
          %s399 = int_to_ptr.vmem [resolvable:$true] %s398
          %404 = dma.hbm_to_vmem [thread:$0]  %s397, 128, %s399, [#allocation11], 64, 64, 4
        $region52: #{layer_forward.1} parent=11 // pred_fallthru
          _
      $region12: #{layer_forward.1} parent=5 // pred_fallthru
        _
      %p405 = scmp.lt.s32.totalorder %s21, 2
      // Predicated region
      $region53: #{layer_forward.1} parent=5 // pred_check
        %p406 = pneg %p405
      $region54: #{layer_forward.1} parent=5 // pred_check_branch
        %408 = sbr.rel (%p406) target = $region56
      $region55: #{layer_forward.1} parent=5 // pred_region
        // Predicated region
        $region57: #{layer_forward.1} parent=55 // pred_check
          %p409 = pneg %p41
        $region58: #{layer_forward.1} parent=55 // pred_check_branch
          %411 = sbr.rel (%p409) target = $region60
        $region59: #{layer_forward.1} parent=55 // pred_region
          %p412 = scmp.lt.s32.totalorder %s21, 1
          %s413 = scalar_select %p412, %s21, 1
          %s414 = smul.addr %s413, 16
          %s415 = smul.addr %s414, 8
          %s416 = scalar_lea.vmem %s0, %s415
        $region60: #{layer_forward.1} parent=55 // pred_fallthru
          _
      $region56: #{layer_forward.1} parent=5 // pred_fallthru
        _
      %p417 = scmp.le.s32.totalorder 1, %s21
      %p418 = scmp.lt.s32.totalorder %s21, 3
      %p419 = pnand %p417, %p418
      %p420 = pneg %p419
      // Predicated region
      $region61: #{layer_forward.1} parent=5 // pred_check
        _
      $region62: #{layer_forward.1} parent=5 // pred_check_branch
        %422 = sbr.rel (%p419) target = $region64
      $region63: #{layer_forward.1} parent=5 // pred_region
        %s423 = ssub.s32 %s21, 1
        // Predicated region
        $region65: #{layer_forward.1} parent=63 // pred_check
          %p424 = pneg %p110
        $region66: #{layer_forward.1} parent=63 // pred_check_branch
          %426 = sbr.rel (%p424) target = $region68
        $region67: #{layer_forward.1} parent=63 // pred_region
          %428 = dma.done [#allocation3], 32
        $region68: #{layer_forward.1} parent=63 // pred_fallthru
          _
        // Predicated region
        $region69: #{layer_forward.1} parent=63 // pred_check
          %p429 = pneg %p131
        $region70: #{layer_forward.1} parent=63 // pred_check_branch
          %431 = sbr.rel (%p429) target = $region72
        $region71: #{layer_forward.1} parent=63 // pred_region
          %433 = dma.done [#allocation5], 1024
        $region72: #{layer_forward.1} parent=63 // pred_fallthru
          _
        // Predicated region
        $region73: #{layer_forward.1} parent=63 // pred_check
          %p434 = pneg %p152
        $region74: #{layer_forward.1} parent=63 // pred_check_branch
          %436 = sbr.rel (%p434) target = $region76
        $region75: #{layer_forward.1} parent=63 // pred_region
          %438 = dma.done [#allocation5], 32
        $region76: #{layer_forward.1} parent=63 // pred_fallthru
          _
        // Predicated region
        $region77: #{layer_forward.1} parent=63 // pred_check
          %p439 = pneg %p173
        $region78: #{layer_forward.1} parent=63 // pred_check_branch
          %441 = sbr.rel (%p439) target = $region80
        $region79: #{layer_forward.1} parent=63 // pred_region
          %443 = dma.done [#allocation8], 1024
        $region80: #{layer_forward.1} parent=63 // pred_fallthru
          _
        // Predicated region
        $region81: #{layer_forward.1} parent=63 // pred_check
          %p444 = pneg %p194
        $region82: #{layer_forward.1} parent=63 // pred_check_branch
          %446 = sbr.rel (%p444) target = $region84
        $region83: #{layer_forward.1} parent=63 // pred_region
          %448 = dma.done [#allocation8], 32
        $region84: #{layer_forward.1} parent=63 // pred_fallthru
          _
        // Predicated region
        $region85: #{layer_forward.1} parent=63 // pred_check
          %p449 = pneg %p236
        $region86: #{layer_forward.1} parent=63 // pred_check_branch
          %451 = sbr.rel (%p449) target = $region88
        $region87: #{layer_forward.1} parent=63 // pred_region
          %453 = dma.done [#allocation11], 32
        $region88: #{layer_forward.1} parent=63 // pred_fallthru
          _
        // Predicated region
        $region89: #{layer_forward.1} parent=63 // pred_check
          %p454 = pneg %p257
        $region90: #{layer_forward.1} parent=63 // pred_check_branch
          %456 = sbr.rel (%p454) target = $region92
        $region91: #{layer_forward.1} parent=63 // pred_region
          %458 = dma.done [#allocation11], 128
        $region92: #{layer_forward.1} parent=63 // pred_fallthru
          _
        %p459 = scmp.lt.s32.totalorder %s26, 1
        %s460 = scalar_select %p459, %s26, 1
        %s461 = smul.addr %s460, 16
        %s462 = smul.addr %s461, 8
        %s463 = scalar_lea.vmem %s0, %s462
        %p464 = pneg %p47
        %p465 = pneg %p44
        %p466 = pneg %p68
        %p467 = pneg %p65
        %p468 = pneg %p89
        %p469 = pneg %p86
        %p470 = pneg %p110
        %p471 = pneg %p107
        %p472 = pneg %p131
        %p473 = pneg %p128
        %p474 = pneg %p152
        %p475 = pneg %p149
        %p476 = pneg %p173
        %p477 = pneg %p170
        %p478 = pneg %p194
        %p479 = pneg %p191
        %p480 = pneg %p215
        %p481 = pneg %p212
        %p482 = pneg %p236
        %p483 = pneg %p233
        %p484 = pneg %p257
        %p485 = pneg %p254
        %p486 = pneg %p283
        %p487 = pneg %p280
        %p488 = scmp.lt.s32.totalorder %s26, 1
        %s489 = scalar_select %p488, %s26, 1
        %s490 = smul.addr %s489, 16
        %s491 = smul.addr %s490, 8
        %s492 = scalar_lea.vmem %s11, %s491
        %p493 = scmp.lt.s32.totalorder %s26, 1
        %s494 = scalar_select %p493, %s26, 1
        %s495 = smul.addr %s494, 16
        %s496 = smul.addr %s495, 8
        %s497 = scalar_lea.vmem %s0, %s496
        %p498 = scmp.lt.s32.totalorder %s26, 1
        %s499 = scalar_select %p498, %s26, 1
        %s500 = smul.addr %s499, 16
        %s501 = smul.addr %s500, 8
        %s502 = scalar_lea.vmem %s11, %s501
        %v503 = vld [vmem:[%s497] sm:$0xff]
        %v504 = vld [vmem:[%s497 + $0x8] sm:$0xff]
        %v505 = vld [vmem:[%s497 + $0x10] sm:$0xff]
        %v506 = vld [vmem:[%s497 + $0x18] sm:$0xff]
        %v507 = vld [vmem:[%s497 + $0x20] sm:$0xff]
        %v508 = vld [vmem:[%s497 + $0x28] sm:$0xff]
        %v509 = vld [vmem:[%s497 + $0x30] sm:$0xff]
        %v510 = vld [vmem:[%s497 + $0x38] sm:$0xff]
        %v511 = vld [vmem:[%s497 + $0x40] sm:$0xff]
        %v512 = vld [vmem:[%s497 + $0x48] sm:$0xff]
        %v513 = vld [vmem:[%s497 + $0x50] sm:$0xff]
        %v514 = vld [vmem:[%s497 + $0x58] sm:$0xff]
        %v515 = vld [vmem:[%s497 + $0x60] sm:$0xff]
        %v516 = vld [vmem:[%s497 + $0x68] sm:$0xff]
        %v517 = vld [vmem:[%s497 + $0x70] sm:$0xff]
        %v518 = vld [vmem:[%s497 + $0x78] sm:$0xff]
        %v519 = vld [vmem:[#allocation4] sm:$0xff]
        %v520 = vld [vmem:[#allocation4 + $0x8] sm:$0xff]
        %v521 = vld [vmem:[#allocation4 + $0x10] sm:$0xff]
        %v522 = vld [vmem:[#allocation4 + $0x18] sm:$0xff]
        %v523 = vld [vmem:[#allocation12] sm:$0xf]
        %v524 = vld [vmem:[%s2] sm:$0xff]
        %v525 = vld [vmem:[%s2 + $0x8] sm:$0xff]
        %v526 = vld [vmem:[%s2 + $0x10] sm:$0xff]
        %v527 = vld [vmem:[%s2 + $0x18] sm:$0xff]
        %v528 = vld [vmem:[#allocation2] sm:$0x1]
        %v530 = vperm.slane %v528, 0
        %vm532 = vcmask 261120
        %v534 = vsel %vm532, %v503, 0
        %v537 = vsel %vm532, %v504, 0
        %v540 = vsel %vm532, %v505, 0
        %v543 = vsel %vm532, %v506, 0
        %v546 = vsel %vm532, %v507, 0
        %v549 = vsel %vm532, %v508, 0
        %v552 = vsel %vm532, %v509, 0
        %v555 = vsel %vm532, %v510, 0
        %v558 = vsel %vm532, %v511, 0
        %v561 = vsel %vm532, %v512, 0
        %v564 = vsel %vm532, %v513, 0
        %v567 = vsel %vm532, %v514, 0
        %v570 = vsel %vm532, %v515, 0
        %v573 = vsel %vm532, %v516, 0
        %v576 = vsel %vm532, %v517, 0
        %v579 = vsel %vm532, %v518, 0
        %581 = vmatpush.msra.mxu0 0.0
        %582 = vmatpush.msra.mxu0 0.0
        %583 = vmatpush.msra.mxu0 0.0
        %584 = vmatpush.msra.mxu0 0.0
        %585 = vmatpush.msra.mxu0 0.0
        %586 = vmatpush.msra.mxu0 0.0
        %587 = vmatpush.msra.mxu0 0.0
        %588 = vmatpush.msra.mxu0 0.0
        %589 = vmatpush.msra.mxu0 0.0
        %590 = vmatpush.msra.mxu0 0.0
        %591 = vmatpush.msra.mxu0 0.0
        %592 = vmatpush.msra.mxu0 0.0
        %593 = vmatpush.msra.mxu0 %v527
        %594 = vmatpush.msra.mxu0 %v526
        %595 = vmatpush.msra.mxu0 %v525
        %596 = vmatpush.msra.mxu0 %v524
        %597 = vmatmul.f32.gmra.mxu0 %v534
        %v598 = vpop.f32.mrf.mxu0
        %v599 = vadd.f32 %v530, %v598
        %600 = vmatmul.f32.gmra.mxu0 %v537
        %v601 = vpop.f32.mrf.mxu0
        %v602 = vadd.f32 %v530, %v601
        %603 = vmatmul.f32.gmra.mxu0 %v540
        %v604 = vpop.f32.mrf.mxu0
        %v605 = vadd.f32 %v530, %v604
        %606 = vmatmul.f32.gmra.mxu0 %v543
        %v607 = vpop.f32.mrf.mxu0
        %v608 = vadd.f32 %v530, %v607
        %609 = vmatmul.f32.gmra.mxu0 %v546
        %v610 = vpop.f32.mrf.mxu0
        %v611 = vadd.f32 %v530, %v610
        %612 = vmatmul.f32.gmra.mxu0 %v549
        %v613 = vpop.f32.mrf.mxu0
        %v614 = vadd.f32 %v530, %v613
        %615 = vmatmul.f32.gmra.mxu0 %v552
        %v616 = vpop.f32.mrf.mxu0
        %v617 = vadd.f32 %v530, %v616
        %618 = vmatmul.f32.gmra.mxu0 %v555
        %v619 = vpop.f32.mrf.mxu0
        %v620 = vadd.f32 %v530, %v619
        %621 = vmatmul.f32.gmra.mxu0 %v558
        %v622 = vpop.f32.mrf.mxu0
        %v623 = vadd.f32 %v530, %v622
        %624 = vmatmul.f32.gmra.mxu0 %v561
        %v625 = vpop.f32.mrf.mxu0
        %v626 = vadd.f32 %v530, %v625
        %627 = vmatmul.f32.gmra.mxu0 %v564
        %v628 = vpop.f32.mrf.mxu0
        %v629 = vadd.f32 %v530, %v628
        %630 = vmatmul.f32.gmra.mxu0 %v567
        %v631 = vpop.f32.mrf.mxu0
        %v632 = vadd.f32 %v530, %v631
        %633 = vmatmul.f32.gmra.mxu0 %v570
        %v634 = vpop.f32.mrf.mxu0
        %v635 = vadd.f32 %v530, %v634
        %636 = vmatmul.f32.gmra.mxu0 %v573
        %v637 = vpop.f32.mrf.mxu0
        %v638 = vadd.f32 %v530, %v637
        %639 = vmatmul.f32.gmra.mxu0 %v576
        %v640 = vpop.f32.mrf.mxu0
        %v641 = vadd.f32 %v530, %v640
        %642 = vmatmul.f32.gmra.mxu0 %v579
        %v643 = vpop.f32.mrf.mxu0
        %v644 = vadd.f32 %v530, %v643
        %645 = vdwg.mxu0
        %v646 = vld [vmem:[%s1] sm:$0xf]
        %v647 = vld [vmem:[%s1 + $0x4] sm:$0xf]
        %v648 = vld [vmem:[%s1 + $0x8] sm:$0xf]
        %v649 = vld [vmem:[%s1 + $0xc] sm:$0xf]
        %v650 = vld [vmem:[%s1 + $0x10] sm:$0xf]
        %v651 = vld [vmem:[%s1 + $0x14] sm:$0xf]
        %v652 = vld [vmem:[%s1 + $0x18] sm:$0xf]
        %v653 = vld [vmem:[%s1 + $0x1c] sm:$0xf]
        %v654 = vld [vmem:[%s1 + $0x20] sm:$0xf]
        %v655 = vld [vmem:[%s1 + $0x24] sm:$0xf]
        %v656 = vld [vmem:[%s1 + $0x28] sm:$0xf]
        %v657 = vld [vmem:[%s1 + $0x2c] sm:$0xf]
        %v658 = vld [vmem:[%s1 + $0x30] sm:$0xf]
        %v659 = vld [vmem:[%s1 + $0x34] sm:$0xf]
        %v660 = vld [vmem:[%s1 + $0x38] sm:$0xf]
        %v661 = vld [vmem:[%s1 + $0x3c] sm:$0xf]
        %v662 = vunpack.c.l.bf16 %v646
        %v663 = vunpack.c.l.bf16 %v647
        %v664 = vunpack.c.l.bf16 %v648
        %v665 = vunpack.c.l.bf16 %v649
        %v666 = vunpack.c.l.bf16 %v650
        %v667 = vunpack.c.l.bf16 %v651
        %v668 = vunpack.c.l.bf16 %v652
        %v669 = vunpack.c.l.bf16 %v653
        %v670 = vunpack.c.l.bf16 %v654
        %v671 = vunpack.c.l.bf16 %v655
        %v672 = vunpack.c.l.bf16 %v656
        %v673 = vunpack.c.l.bf16 %v657
        %v674 = vunpack.c.l.bf16 %v658
        %v675 = vunpack.c.l.bf16 %v659
        %v676 = vunpack.c.l.bf16 %v660
        %v677 = vunpack.c.l.bf16 %v661
        %694 = vrot.lane.b32.xlu0 %v599, 96
        %v695 = vpop.permute.xlu0 %694
        %696 = vrot.lane.b32.xlu0 %v602, 96
        %v697 = vpop.permute.xlu0 %696
        %698 = vrot.lane.b32.xlu0 %v605, 96
        %v699 = vpop.permute.xlu0 %698
        %700 = vrot.lane.b32.xlu0 %v608, 96
        %v701 = vpop.permute.xlu0 %700
        %702 = vrot.lane.b32.xlu0 %v611, 96
        %v703 = vpop.permute.xlu0 %702
        %704 = vrot.lane.b32.xlu0 %v614, 96
        %v705 = vpop.permute.xlu0 %704
        %706 = vrot.lane.b32.xlu0 %v617, 96
        %v707 = vpop.permute.xlu0 %706
        %708 = vrot.lane.b32.xlu0 %v620, 96
        %v709 = vpop.permute.xlu0 %708
        %710 = vrot.lane.b32.xlu0 %v623, 96
        %v711 = vpop.permute.xlu0 %710
        %712 = vrot.lane.b32.xlu0 %v626, 96
        %v713 = vpop.permute.xlu0 %712
        %714 = vrot.lane.b32.xlu0 %v629, 96
        %v715 = vpop.permute.xlu0 %714
        %716 = vrot.lane.b32.xlu0 %v632, 96
        %v717 = vpop.permute.xlu0 %716
        %718 = vrot.lane.b32.xlu0 %v635, 96
        %v719 = vpop.permute.xlu0 %718
        %720 = vrot.lane.b32.xlu0 %v638, 96
        %v721 = vpop.permute.xlu0 %720
        %722 = vrot.lane.b32.xlu0 %v641, 96
        %v723 = vpop.permute.xlu0 %722
        %724 = vrot.lane.b32.xlu0 %v644, 96
        %v725 = vpop.permute.xlu0 %724
        %vm726 = vcmask 64512
        %v727 = vsel %vm726, %v599, 0
        %v729 = vsel %vm726, %v602, 0
        %v731 = vsel %vm726, %v605, 0
        %v733 = vsel %vm726, %v608, 0
        %v735 = vsel %vm726, %v611, 0
        %v737 = vsel %vm726, %v614, 0
        %v739 = vsel %vm726, %v617, 0
        %v741 = vsel %vm726, %v620, 0
        %v743 = vsel %vm726, %v623, 0
        %v745 = vsel %vm726, %v626, 0
        %v747 = vsel %vm726, %v629, 0
        %v749 = vsel %vm726, %v632, 0
        %v751 = vsel %vm726, %v635, 0
        %v753 = vsel %vm726, %v638, 0
        %v755 = vsel %vm726, %v641, 0
        %v757 = vsel %vm726, %v644, 0
        %v759 = vsel %vm726, %v695, 0
        %v761 = vsel %vm726, %v697, 0
        %v763 = vsel %vm726, %v699, 0
        %v765 = vsel %vm726, %v701, 0
        %v767 = vsel %vm726, %v703, 0
        %v769 = vsel %vm726, %v705, 0
        %v771 = vsel %vm726, %v707, 0
        %v773 = vsel %vm726, %v709, 0
        %v775 = vsel %vm726, %v711, 0
        %v777 = vsel %vm726, %v713, 0
        %v779 = vsel %vm726, %v715, 0
        %v781 = vsel %vm726, %v717, 0
        %v783 = vsel %vm726, %v719, 0
        %v785 = vsel %vm726, %v721, 0
        %v787 = vsel %vm726, %v723, 0
        %v789 = vsel %vm726, %v725, 0
        %791 = vmatpush.xpose.msra.mxu0 %v789
        %792 = vmatpush.xpose.msra.mxu0 %v787
        %793 = vmatpush.xpose.msra.mxu0 %v785
        %794 = vmatpush.xpose.msra.mxu0 %v783
        %795 = vmatpush.xpose.msra.mxu0 %v781
        %796 = vmatpush.xpose.msra.mxu0 %v779
        %797 = vmatpush.xpose.msra.mxu0 %v777
        %798 = vmatpush.xpose.msra.mxu0 %v775
        %799 = vmatpush.xpose.msra.mxu0 %v773
        %800 = vmatpush.xpose.msra.mxu0 %v771
        %801 = vmatpush.xpose.msra.mxu0 %v769
        %802 = vmatpush.xpose.msra.mxu0 %v767
        %803 = vmatpush.xpose.msra.mxu0 %v765
        %804 = vmatpush.xpose.msra.mxu0 %v763
        %805 = vmatpush.xpose.msra.mxu0 %v761
        %806 = vmatpush.xpose.msra.mxu0 %v759
        %807 = vmatmul.f32.gmra.mxu0 %v727
        %v808 = vpop.f32.mrf.mxu0
        %v809 = vadd.f32 %v662, %v808
        %810 = vmatmul.f32.gmra.mxu0 %v729
        %v811 = vpop.f32.mrf.mxu0
        %v812 = vadd.f32 %v663, %v811
        %813 = vmatmul.f32.gmra.mxu0 %v731
        %v814 = vpop.f32.mrf.mxu0
        %v815 = vadd.f32 %v664, %v814
        %816 = vmatmul.f32.gmra.mxu0 %v733
        %v817 = vpop.f32.mrf.mxu0
        %v818 = vadd.f32 %v665, %v817
        %819 = vmatmul.f32.gmra.mxu0 %v735
        %v820 = vpop.f32.mrf.mxu0
        %v821 = vadd.f32 %v666, %v820
        %822 = vmatmul.f32.gmra.mxu0 %v737
        %v823 = vpop.f32.mrf.mxu0
        %v824 = vadd.f32 %v667, %v823
        %825 = vmatmul.f32.gmra.mxu0 %v739
        %v826 = vpop.f32.mrf.mxu0
        %v827 = vadd.f32 %v668, %v826
        %828 = vmatmul.f32.gmra.mxu0 %v741
        %v829 = vpop.f32.mrf.mxu0
        %v830 = vadd.f32 %v669, %v829
        %831 = vmatmul.f32.gmra.mxu0 %v743
        %v832 = vpop.f32.mrf.mxu0
        %v833 = vadd.f32 %v670, %v832
        %834 = vmatmul.f32.gmra.mxu0 %v745
        %v835 = vpop.f32.mrf.mxu0
        %v836 = vadd.f32 %v671, %v835
        %837 = vmatmul.f32.gmra.mxu0 %v747
        %v838 = vpop.f32.mrf.mxu0
        %v839 = vadd.f32 %v672, %v838
        %840 = vmatmul.f32.gmra.mxu0 %v749
        %v841 = vpop.f32.mrf.mxu0
        %v842 = vadd.f32 %v673, %v841
        %843 = vmatmul.f32.gmra.mxu0 %v751
        %v844 = vpop.f32.mrf.mxu0
        %v845 = vadd.f32 %v674, %v844
        %846 = vmatmul.f32.gmra.mxu0 %v753
        %v847 = vpop.f32.mrf.mxu0
        %v848 = vadd.f32 %v675, %v847
        %849 = vmatmul.f32.gmra.mxu0 %v755
        %v850 = vpop.f32.mrf.mxu0
        %v851 = vadd.f32 %v676, %v850
        %852 = vmatmul.f32.gmra.mxu0 %v757
        %v853 = vpop.f32.mrf.mxu0
        %v854 = vadd.f32 %v677, %v853
        %855 = vdwg.mxu0
        %856 = vmax.xlane.f32.xlu0 %v809
        %v857 = vpop.xlane.xlu0 %856
        %858 = vmax.xlane.f32.xlu0 %v812
        %v859 = vpop.xlane.xlu0 %858
        %860 = vmax.xlane.f32.xlu0 %v815
        %v861 = vpop.xlane.xlu0 %860
        %862 = vmax.xlane.f32.xlu0 %v818
        %v863 = vpop.xlane.xlu0 %862
        %864 = vmax.xlane.f32.xlu0 %v821
        %v865 = vpop.xlane.xlu0 %864
        %866 = vmax.xlane.f32.xlu0 %v824
        %v867 = vpop.xlane.xlu0 %866
        %868 = vmax.xlane.f32.xlu0 %v827
        %v869 = vpop.xlane.xlu0 %868
        %870 = vmax.xlane.f32.xlu0 %v830
        %v871 = vpop.xlane.xlu0 %870
        %872 = vmax.xlane.f32.xlu0 %v833
        %v873 = vpop.xlane.xlu0 %872
        %874 = vmax.xlane.f32.xlu0 %v836
        %v875 = vpop.xlane.xlu0 %874
        %876 = vmax.xlane.f32.xlu0 %v839
        %v877 = vpop.xlane.xlu0 %876
        %878 = vmax.xlane.f32.xlu0 %v842
        %v879 = vpop.xlane.xlu0 %878
        %880 = vmax.xlane.f32.xlu0 %v845
        %v881 = vpop.xlane.xlu0 %880
        %882 = vmax.xlane.f32.xlu0 %v848
        %v883 = vpop.xlane.xlu0 %882
        %884 = vmax.xlane.f32.xlu0 %v851
        %v885 = vpop.xlane.xlu0 %884
        %886 = vmax.xlane.f32.xlu0 %v854
        %v887 = vpop.xlane.xlu0 %886
        %v888 = vsub.f32 %v809, %v857
        %v889 = vsub.f32 %v812, %v859
        %v890 = vsub.f32 %v815, %v861
        %v891 = vsub.f32 %v818, %v863
        %v892 = vsub.f32 %v821, %v865
        %v893 = vsub.f32 %v824, %v867
        %v894 = vsub.f32 %v827, %v869
        %v895 = vsub.f32 %v830, %v871
        %v896 = vsub.f32 %v833, %v873
        %v897 = vsub.f32 %v836, %v875
        %v898 = vsub.f32 %v839, %v877
        %v899 = vsub.f32 %v842, %v879
        %v900 = vsub.f32 %v845, %v881
        %v901 = vsub.f32 %v848, %v883
        %v902 = vsub.f32 %v851, %v885
        %v903 = vsub.f32 %v854, %v887
        %v904 = vmul.f32 %v888, 1.442695
        %v905 = vpow.pop %v904
        %v906 = vmul.f32 %v889, 1.442695
        %v907 = vpow.pop %v906
        %v908 = vmul.f32 %v890, 1.442695
        %v909 = vpow.pop %v908
        %v910 = vmul.f32 %v891, 1.442695
        %v911 = vpow.pop %v910
        %v912 = vmul.f32 %v892, 1.442695
        %v913 = vpow.pop %v912
        %v914 = vmul.f32 %v893, 1.442695
        %v915 = vpow.pop %v914
        %v916 = vmul.f32 %v894, 1.442695
        %v917 = vpow.pop %v916
        %v918 = vmul.f32 %v895, 1.442695
        %v919 = vpow.pop %v918
        %v920 = vmul.f32 %v896, 1.442695
        %v921 = vpow.pop %v920
        %v922 = vmul.f32 %v897, 1.442695
        %v923 = vpow.pop %v922
        %v924 = vmul.f32 %v898, 1.442695
        %v925 = vpow.pop %v924
        %v926 = vmul.f32 %v899, 1.442695
        %v927 = vpow.pop %v926
        %v928 = vmul.f32 %v900, 1.442695
        %v929 = vpow.pop %v928
        %v930 = vmul.f32 %v901, 1.442695
        %v931 = vpow.pop %v930
        %v932 = vmul.f32 %v902, 1.442695
        %v933 = vpow.pop %v932
        %v934 = vmul.f32 %v903, 1.442695
        %v935 = vpow.pop %v934
        %936 = vadd.xlane.f32.xlu0 %v905
        %v937 = vpop.xlane.xlu0 %936
        %938 = vadd.xlane.f32.xlu0 %v907
        %v939 = vpop.xlane.xlu0 %938
        %940 = vadd.xlane.f32.xlu0 %v909
        %v941 = vpop.xlane.xlu0 %940
        %942 = vadd.xlane.f32.xlu0 %v911
        %v943 = vpop.xlane.xlu0 %942
        %944 = vadd.xlane.f32.xlu0 %v913
        %v945 = vpop.xlane.xlu0 %944
        %946 = vadd.xlane.f32.xlu0 %v915
        %v947 = vpop.xlane.xlu0 %946
        %948 = vadd.xlane.f32.xlu0 %v917
        %v949 = vpop.xlane.xlu0 %948
        %950 = vadd.xlane.f32.xlu0 %v919
        %v951 = vpop.xlane.xlu0 %950
        %952 = vadd.xlane.f32.xlu0 %v921
        %v953 = vpop.xlane.xlu0 %952
        %954 = vadd.xlane.f32.xlu0 %v923
        %v955 = vpop.xlane.xlu0 %954
        %956 = vadd.xlane.f32.xlu0 %v925
        %v957 = vpop.xlane.xlu0 %956
        %958 = vadd.xlane.f32.xlu0 %v927
        %v959 = vpop.xlane.xlu0 %958
        %960 = vadd.xlane.f32.xlu0 %v929
        %v961 = vpop.xlane.xlu0 %960
        %962 = vadd.xlane.f32.xlu0 %v931
        %v963 = vpop.xlane.xlu0 %962
        %964 = vadd.xlane.f32.xlu0 %v933
        %v965 = vpop.xlane.xlu0 %964
        %966 = vadd.xlane.f32.xlu0 %v935
        %v967 = vpop.xlane.xlu0 %966
        %v968 = vrcp.pop %v937
        %v969 = vrcp.pop %v939
        %v970 = vrcp.pop %v941
        %v971 = vrcp.pop %v943
        %v972 = vrcp.pop %v945
        %v973 = vrcp.pop %v947
        %v974 = vrcp.pop %v949
        %v975 = vrcp.pop %v951
        %v976 = vrcp.pop %v953
        %v977 = vrcp.pop %v955
        %v978 = vrcp.pop %v957
        %v979 = vrcp.pop %v959
        %v980 = vrcp.pop %v961
        %v981 = vrcp.pop %v963
        %v982 = vrcp.pop %v965
        %v983 = vrcp.pop %v967
        %v984 = vmul.f32 %v905, %v968
        %v985 = vmul.f32 %v907, %v969
        %v986 = vmul.f32 %v909, %v970
        %v987 = vmul.f32 %v911, %v971
        %v988 = vmul.f32 %v913, %v972
        %v989 = vmul.f32 %v915, %v973
        %v990 = vmul.f32 %v917, %v974
        %v991 = vmul.f32 %v919, %v975
        %v992 = vmul.f32 %v921, %v976
        %v993 = vmul.f32 %v923, %v977
        %v994 = vmul.f32 %v925, %v978
        %v995 = vmul.f32 %v927, %v979
        %v996 = vmul.f32 %v929, %v980
        %v997 = vmul.f32 %v931, %v981
        %v998 = vmul.f32 %v933, %v982
        %v999 = vmul.f32 %v935, %v983
        %1000 = vrot.lane.b32.xlu0 %v599, 64
        %v1001 = vpop.permute.xlu0 %1000
        %1002 = vrot.lane.b32.xlu0 %v602, 64
        %v1003 = vpop.permute.xlu0 %1002
        %1004 = vrot.lane.b32.xlu0 %v605, 64
        %v1005 = vpop.permute.xlu0 %1004
        %1006 = vrot.lane.b32.xlu0 %v608, 64
        %v1007 = vpop.permute.xlu0 %1006
        %1008 = vrot.lane.b32.xlu0 %v611, 64
        %v1009 = vpop.permute.xlu0 %1008
        %1010 = vrot.lane.b32.xlu0 %v614, 64
        %v1011 = vpop.permute.xlu0 %1010
        %1012 = vrot.lane.b32.xlu0 %v617, 64
        %v1013 = vpop.permute.xlu0 %1012
        %1014 = vrot.lane.b32.xlu0 %v620, 64
        %v1015 = vpop.permute.xlu0 %1014
        %1016 = vrot.lane.b32.xlu0 %v623, 64
        %v1017 = vpop.permute.xlu0 %1016
        %1018 = vrot.lane.b32.xlu0 %v626, 64
        %v1019 = vpop.permute.xlu0 %1018
        %1020 = vrot.lane.b32.xlu0 %v629, 64
        %v1021 = vpop.permute.xlu0 %1020
        %1022 = vrot.lane.b32.xlu0 %v632, 64
        %v1023 = vpop.permute.xlu0 %1022
        %1024 = vrot.lane.b32.xlu0 %v635, 64
        %v1025 = vpop.permute.xlu0 %1024
        %1026 = vrot.lane.b32.xlu0 %v638, 64
        %v1027 = vpop.permute.xlu0 %1026
        %1028 = vrot.lane.b32.xlu0 %v641, 64
        %v1029 = vpop.permute.xlu0 %1028
        %1030 = vrot.lane.b32.xlu0 %v644, 64
        %v1031 = vpop.permute.xlu0 %1030
        %1048 = vmatpush.msra.mxu0 %v1031
        %1049 = vmatpush.msra.mxu0 %v1029
        %1050 = vmatpush.msra.mxu0 %v1027
        %1051 = vmatpush.msra.mxu0 %v1025
        %1052 = vmatpush.msra.mxu0 %v1023
        %1053 = vmatpush.msra.mxu0 %v1021
        %1054 = vmatpush.msra.mxu0 %v1019
        %1055 = vmatpush.msra.mxu0 %v1017
        %1056 = vmatpush.msra.mxu0 %v1015
        %1057 = vmatpush.msra.mxu0 %v1013
        %1058 = vmatpush.msra.mxu0 %v1011
        %1059 = vmatpush.msra.mxu0 %v1009
        %1060 = vmatpush.msra.mxu0 %v1007
        %1061 = vmatpush.msra.mxu0 %v1005
        %1062 = vmatpush.msra.mxu0 %v1003
        %1063 = vmatpush.msra.mxu0 %v1001
        %1064 = vmatmul.f32.gmra.mxu0 %v984
        %v1065 = vpop.f32.mrf.mxu0
        %v1066 = vadd.f32 0.0, %v1065
        %1067 = vmatmul.f32.gmra.mxu0 %v985
        %v1068 = vpop.f32.mrf.mxu0
        %v1069 = vadd.f32 0.0, %v1068
        %1070 = vmatmul.f32.gmra.mxu0 %v986
        %v1071 = vpop.f32.mrf.mxu0
        %v1072 = vadd.f32 0.0, %v1071
        %1073 = vmatmul.f32.gmra.mxu0 %v987
        %v1074 = vpop.f32.mrf.mxu0
        %v1075 = vadd.f32 0.0, %v1074
        %1076 = vmatmul.f32.gmra.mxu0 %v988
        %v1077 = vpop.f32.mrf.mxu0
        %v1078 = vadd.f32 0.0, %v1077
        %1079 = vmatmul.f32.gmra.mxu0 %v989
        %v1080 = vpop.f32.mrf.mxu0
        %v1081 = vadd.f32 0.0, %v1080
        %1082 = vmatmul.f32.gmra.mxu0 %v990
        %v1083 = vpop.f32.mrf.mxu0
        %v1084 = vadd.f32 0.0, %v1083
        %1085 = vmatmul.f32.gmra.mxu0 %v991
        %v1086 = vpop.f32.mrf.mxu0
        %v1087 = vadd.f32 0.0, %v1086
        %1088 = vmatmul.f32.gmra.mxu0 %v992
        %v1089 = vpop.f32.mrf.mxu0
        %v1090 = vadd.f32 0.0, %v1089
        %1091 = vmatmul.f32.gmra.mxu0 %v993
        %v1092 = vpop.f32.mrf.mxu0
        %v1093 = vadd.f32 0.0, %v1092
        %1094 = vmatmul.f32.gmra.mxu0 %v994
        %v1095 = vpop.f32.mrf.mxu0
        %v1096 = vadd.f32 0.0, %v1095
        %1097 = vmatmul.f32.gmra.mxu0 %v995
        %v1098 = vpop.f32.mrf.mxu0
        %v1099 = vadd.f32 0.0, %v1098
        %1100 = vmatmul.f32.gmra.mxu0 %v996
        %v1101 = vpop.f32.mrf.mxu0
        %v1102 = vadd.f32 0.0, %v1101
        %1103 = vmatmul.f32.gmra.mxu0 %v997
        %v1104 = vpop.f32.mrf.mxu0
        %v1105 = vadd.f32 0.0, %v1104
        %1106 = vmatmul.f32.gmra.mxu0 %v998
        %v1107 = vpop.f32.mrf.mxu0
        %v1108 = vadd.f32 0.0, %v1107
        %1109 = vmatmul.f32.gmra.mxu0 %v999
        %v1110 = vpop.f32.mrf.mxu0
        %v1111 = vadd.f32 0.0, %v1110
        %1112 = vdwg.mxu0
        %s1113 = scalar_lea.vmem %s1, 64
        %v1114 = vld [vmem:[%s1113] sm:$0xf]
        %v1115 = vld [vmem:[%s1113 + $0x4] sm:$0xf]
        %v1116 = vld [vmem:[%s1113 + $0x8] sm:$0xf]
        %v1117 = vld [vmem:[%s1113 + $0xc] sm:$0xf]
        %v1118 = vld [vmem:[%s1113 + $0x10] sm:$0xf]
        %v1119 = vld [vmem:[%s1113 + $0x14] sm:$0xf]
        %v1120 = vld [vmem:[%s1113 + $0x18] sm:$0xf]
        %v1121 = vld [vmem:[%s1113 + $0x1c] sm:$0xf]
        %v1122 = vld [vmem:[%s1113 + $0x20] sm:$0xf]
        %v1123 = vld [vmem:[%s1113 + $0x24] sm:$0xf]
        %v1124 = vld [vmem:[%s1113 + $0x28] sm:$0xf]
        %v1125 = vld [vmem:[%s1113 + $0x2c] sm:$0xf]
        %v1126 = vld [vmem:[%s1113 + $0x30] sm:$0xf]
        %v1127 = vld [vmem:[%s1113 + $0x34] sm:$0xf]
        %v1128 = vld [vmem:[%s1113 + $0x38] sm:$0xf]
        %v1129 = vld [vmem:[%s1113 + $0x3c] sm:$0xf]
        %v1130 = vunpack.c.l.bf16 %v1114
        %v1131 = vunpack.c.l.bf16 %v1115
        %v1132 = vunpack.c.l.bf16 %v1116
        %v1133 = vunpack.c.l.bf16 %v1117
        %v1134 = vunpack.c.l.bf16 %v1118
        %v1135 = vunpack.c.l.bf16 %v1119
        %v1136 = vunpack.c.l.bf16 %v1120
        %v1137 = vunpack.c.l.bf16 %v1121
        %v1138 = vunpack.c.l.bf16 %v1122
        %v1139 = vunpack.c.l.bf16 %v1123
        %v1140 = vunpack.c.l.bf16 %v1124
        %v1141 = vunpack.c.l.bf16 %v1125
        %v1142 = vunpack.c.l.bf16 %v1126
        %v1143 = vunpack.c.l.bf16 %v1127
        %v1144 = vunpack.c.l.bf16 %v1128
        %v1145 = vunpack.c.l.bf16 %v1129
        %1146 = vrot.lane.b32.xlu0 %v599, 120
        %v1147 = vpop.permute.xlu0 %1146
        %1148 = vrot.lane.b32.xlu0 %v602, 120
        %v1149 = vpop.permute.xlu0 %1148
        %1150 = vrot.lane.b32.xlu0 %v605, 120
        %v1151 = vpop.permute.xlu0 %1150
        %1152 = vrot.lane.b32.xlu0 %v608, 120
        %v1153 = vpop.permute.xlu0 %1152
        %1154 = vrot.lane.b32.xlu0 %v611, 120
        %v1155 = vpop.permute.xlu0 %1154
        %1156 = vrot.lane.b32.xlu0 %v614, 120
        %v1157 = vpop.permute.xlu0 %1156
        %1158 = vrot.lane.b32.xlu0 %v617, 120
        %v1159 = vpop.permute.xlu0 %1158
        %1160 = vrot.lane.b32.xlu0 %v620, 120
        %v1161 = vpop.permute.xlu0 %1160
        %1162 = vrot.lane.b32.xlu0 %v623, 120
        %v1163 = vpop.permute.xlu0 %1162
        %1164 = vrot.lane.b32.xlu0 %v626, 120
        %v1165 = vpop.permute.xlu0 %1164
        %1166 = vrot.lane.b32.xlu0 %v629, 120
        %v1167 = vpop.permute.xlu0 %1166
        %1168 = vrot.lane.b32.xlu0 %v632, 120
        %v1169 = vpop.permute.xlu0 %1168
        %1170 = vrot.lane.b32.xlu0 %v635, 120
        %v1171 = vpop.permute.xlu0 %1170
        %1172 = vrot.lane.b32.xlu0 %v638, 120
        %v1173 = vpop.permute.xlu0 %1172
        %1174 = vrot.lane.b32.xlu0 %v641, 120
        %v1175 = vpop.permute.xlu0 %1174
        %1176 = vrot.lane.b32.xlu0 %v644, 120
        %v1177 = vpop.permute.xlu0 %1176
        %1178 = vrot.lane.b32.xlu0 %v599, 88
        %v1179 = vpop.permute.xlu0 %1178
        %1180 = vrot.lane.b32.xlu0 %v602, 88
        %v1181 = vpop.permute.xlu0 %1180
        %1182 = vrot.lane.b32.xlu0 %v605, 88
        %v1183 = vpop.permute.xlu0 %1182
        %1184 = vrot.lane.b32.xlu0 %v608, 88
        %v1185 = vpop.permute.xlu0 %1184
        %1186 = vrot.lane.b32.xlu0 %v611, 88
        %v1187 = vpop.permute.xlu0 %1186
        %1188 = vrot.lane.b32.xlu0 %v614, 88
        %v1189 = vpop.permute.xlu0 %1188
        %1190 = vrot.lane.b32.xlu0 %v617, 88
        %v1191 = vpop.permute.xlu0 %1190
        %1192 = vrot.lane.b32.xlu0 %v620, 88
        %v1193 = vpop.permute.xlu0 %1192
        %1194 = vrot.lane.b32.xlu0 %v623, 88
        %v1195 = vpop.permute.xlu0 %1194
        %1196 = vrot.lane.b32.xlu0 %v626, 88
        %v1197 = vpop.permute.xlu0 %1196
        %1198 = vrot.lane.b32.xlu0 %v629, 88
        %v1199 = vpop.permute.xlu0 %1198
        %1200 = vrot.lane.b32.xlu0 %v632, 88
        %v1201 = vpop.permute.xlu0 %1200
        %1202 = vrot.lane.b32.xlu0 %v635, 88
        %v1203 = vpop.permute.xlu0 %1202
        %1204 = vrot.lane.b32.xlu0 %v638, 88
        %v1205 = vpop.permute.xlu0 %1204
        %1206 = vrot.lane.b32.xlu0 %v641, 88
        %v1207 = vpop.permute.xlu0 %1206
        %1208 = vrot.lane.b32.xlu0 %v644, 88
        %v1209 = vpop.permute.xlu0 %1208
        %v1210 = vsel %vm726, %v1147, 0
        %v1212 = vsel %vm726, %v1149, 0
        %v1214 = vsel %vm726, %v1151, 0
        %v1216 = vsel %vm726, %v1153, 0
        %v1218 = vsel %vm726, %v1155, 0
        %v1220 = vsel %vm726, %v1157, 0
        %v1222 = vsel %vm726, %v1159, 0
        %v1224 = vsel %vm726, %v1161, 0
        %v1226 = vsel %vm726, %v1163, 0
        %v1228 = vsel %vm726, %v1165, 0
        %v1230 = vsel %vm726, %v1167, 0
        %v1232 = vsel %vm726, %v1169, 0
        %v1234 = vsel %vm726, %v1171, 0
        %v1236 = vsel %vm726, %v1173, 0
        %v1238 = vsel %vm726, %v1175, 0
        %v1240 = vsel %vm726, %v1177, 0
        %v1242 = vsel %vm726, %v1179, 0
        %v1244 = vsel %vm726, %v1181, 0
        %v1246 = vsel %vm726, %v1183, 0
        %v1248 = vsel %vm726, %v1185, 0
        %v1250 = vsel %vm726, %v1187, 0
        %v1252 = vsel %vm726, %v1189, 0
        %v1254 = vsel %vm726, %v1191, 0
        %v1256 = vsel %vm726, %v1193, 0
        %v1258 = vsel %vm726, %v1195, 0
        %v1260 = vsel %vm726, %v1197, 0
        %v1262 = vsel %vm726, %v1199, 0
        %v1264 = vsel %vm726, %v1201, 0
        %v1266 = vsel %vm726, %v1203, 0
        %v1268 = vsel %vm726, %v1205, 0
        %v1270 = vsel %vm726, %v1207, 0
        %v1272 = vsel %vm726, %v1209, 0
        %1274 = vmatpush.xpose.msra.mxu0 %v1272
        %1275 = vmatpush.xpose.msra.mxu0 %v1270
        %1276 = vmatpush.xpose.msra.mxu0 %v1268
        %1277 = vmatpush.xpose.msra.mxu0 %v1266
        %1278 = vmatpush.xpose.msra.mxu0 %v1264
        %1279 = vmatpush.xpose.msra.mxu0 %v1262
        %1280 = vmatpush.xpose.msra.mxu0 %v1260
        %1281 = vmatpush.xpose.msra.mxu0 %v1258
        %1282 = vmatpush.xpose.msra.mxu0 %v1256
        %1283 = vmatpush.xpose.msra.mxu0 %v1254
        %1284 = vmatpush.xpose.msra.mxu0 %v1252
        %1285 = vmatpush.xpose.msra.mxu0 %v1250
        %1286 = vmatpush.xpose.msra.mxu0 %v1248
        %1287 = vmatpush.xpose.msra.mxu0 %v1246
        %1288 = vmatpush.xpose.msra.mxu0 %v1244
        %1289 = vmatpush.xpose.msra.mxu0 %v1242
        %1290 = vmatmul.f32.gmra.mxu0 %v1210
        %v1291 = vpop.f32.mrf.mxu0
        %v1292 = vadd.f32 %v1130, %v1291
        %1293 = vmatmul.f32.gmra.mxu0 %v1212
        %v1294 = vpop.f32.mrf.mxu0
        %v1295 = vadd.f32 %v1131, %v1294
        %1296 = vmatmul.f32.gmra.mxu0 %v1214
        %v1297 = vpop.f32.mrf.mxu0
        %v1298 = vadd.f32 %v1132, %v1297
        %1299 = vmatmul.f32.gmra.mxu0 %v1216
        %v1300 = vpop.f32.mrf.mxu0
        %v1301 = vadd.f32 %v1133, %v1300
        %1302 = vmatmul.f32.gmra.mxu0 %v1218
        %v1303 = vpop.f32.mrf.mxu0
        %v1304 = vadd.f32 %v1134, %v1303
        %1305 = vmatmul.f32.gmra.mxu0 %v1220
        %v1306 = vpop.f32.mrf.mxu0
        %v1307 = vadd.f32 %v1135, %v1306
        %1308 = vmatmul.f32.gmra.mxu0 %v1222
        %v1309 = vpop.f32.mrf.mxu0
        %v1310 = vadd.f32 %v1136, %v1309
        %1311 = vmatmul.f32.gmra.mxu0 %v1224
        %v1312 = vpop.f32.mrf.mxu0
        %v1313 = vadd.f32 %v1137, %v1312
        %1314 = vmatmul.f32.gmra.mxu0 %v1226
        %v1315 = vpop.f32.mrf.mxu0
        %v1316 = vadd.f32 %v1138, %v1315
        %1317 = vmatmul.f32.gmra.mxu0 %v1228
        %v1318 = vpop.f32.mrf.mxu0
        %v1319 = vadd.f32 %v1139, %v1318
        %1320 = vmatmul.f32.gmra.mxu0 %v1230
        %v1321 = vpop.f32.mrf.mxu0
        %v1322 = vadd.f32 %v1140, %v1321
        %1323 = vmatmul.f32.gmra.mxu0 %v1232
        %v1324 = vpop.f32.mrf.mxu0
        %v1325 = vadd.f32 %v1141, %v1324
        %1326 = vmatmul.f32.gmra.mxu0 %v1234
        %v1327 = vpop.f32.mrf.mxu0
        %v1328 = vadd.f32 %v1142, %v1327
        %1329 = vmatmul.f32.gmra.mxu0 %v1236
        %v1330 = vpop.f32.mrf.mxu0
        %v1331 = vadd.f32 %v1143, %v1330
        %1332 = vmatmul.f32.gmra.mxu0 %v1238
        %v1333 = vpop.f32.mrf.mxu0
        %v1334 = vadd.f32 %v1144, %v1333
        %1335 = vmatmul.f32.gmra.mxu0 %v1240
        %v1336 = vpop.f32.mrf.mxu0
        %v1337 = vadd.f32 %v1145, %v1336
        %1338 = vdwg.mxu0
        %1339 = vmax.xlane.f32.xlu0 %v1292
        %v1340 = vpop.xlane.xlu0 %1339
        %1341 = vmax.xlane.f32.xlu0 %v1295
        %v1342 = vpop.xlane.xlu0 %1341
        %1343 = vmax.xlane.f32.xlu0 %v1298
        %v1344 = vpop.xlane.xlu0 %1343
        %1345 = vmax.xlane.f32.xlu0 %v1301
        %v1346 = vpop.xlane.xlu0 %1345
        %1347 = vmax.xlane.f32.xlu0 %v1304
        %v1348 = vpop.xlane.xlu0 %1347
        %1349 = vmax.xlane.f32.xlu0 %v1307
        %v1350 = vpop.xlane.xlu0 %1349
        %1351 = vmax.xlane.f32.xlu0 %v1310
        %v1352 = vpop.xlane.xlu0 %1351
        %1353 = vmax.xlane.f32.xlu0 %v1313
        %v1354 = vpop.xlane.xlu0 %1353
        %1355 = vmax.xlane.f32.xlu0 %v1316
        %v1356 = vpop.xlane.xlu0 %1355
        %1357 = vmax.xlane.f32.xlu0 %v1319
        %v1358 = vpop.xlane.xlu0 %1357
        %1359 = vmax.xlane.f32.xlu0 %v1322
        %v1360 = vpop.xlane.xlu0 %1359
        %1361 = vmax.xlane.f32.xlu0 %v1325
        %v1362 = vpop.xlane.xlu0 %1361
        %1363 = vmax.xlane.f32.xlu0 %v1328
        %v1364 = vpop.xlane.xlu0 %1363
        %1365 = vmax.xlane.f32.xlu0 %v1331
        %v1366 = vpop.xlane.xlu0 %1365
        %1367 = vmax.xlane.f32.xlu0 %v1334
        %v1368 = vpop.xlane.xlu0 %1367
        %1369 = vmax.xlane.f32.xlu0 %v1337
        %v1370 = vpop.xlane.xlu0 %1369
        %v1371 = vsub.f32 %v1292, %v1340
        %v1372 = vsub.f32 %v1295, %v1342
        %v1373 = vsub.f32 %v1298, %v1344
        %v1374 = vsub.f32 %v1301, %v1346
        %v1375 = vsub.f32 %v1304, %v1348
        %v1376 = vsub.f32 %v1307, %v1350
        %v1377 = vsub.f32 %v1310, %v1352
        %v1378 = vsub.f32 %v1313, %v1354
        %v1379 = vsub.f32 %v1316, %v1356
        %v1380 = vsub.f32 %v1319, %v1358
        %v1381 = vsub.f32 %v1322, %v1360
        %v1382 = vsub.f32 %v1325, %v1362
        %v1383 = vsub.f32 %v1328, %v1364
        %v1384 = vsub.f32 %v1331, %v1366
        %v1385 = vsub.f32 %v1334, %v1368
        %v1386 = vsub.f32 %v1337, %v1370
        %v1387 = vmul.f32 %v1371, 1.442695
        %v1388 = vpow.pop %v1387
        %v1389 = vmul.f32 %v1372, 1.442695
        %v1390 = vpow.pop %v1389
        %v1391 = vmul.f32 %v1373, 1.442695
        %v1392 = vpow.pop %v1391
        %v1393 = vmul.f32 %v1374, 1.442695
        %v1394 = vpow.pop %v1393
        %v1395 = vmul.f32 %v1375, 1.442695
        %v1396 = vpow.pop %v1395
        %v1397 = vmul.f32 %v1376, 1.442695
        %v1398 = vpow.pop %v1397
        %v1399 = vmul.f32 %v1377, 1.442695
        %v1400 = vpow.pop %v1399
        %v1401 = vmul.f32 %v1378, 1.442695
        %v1402 = vpow.pop %v1401
        %v1403 = vmul.f32 %v1379, 1.442695
        %v1404 = vpow.pop %v1403
        %v1405 = vmul.f32 %v1380, 1.442695
        %v1406 = vpow.pop %v1405
        %v1407 = vmul.f32 %v1381, 1.442695
        %v1408 = vpow.pop %v1407
        %v1409 = vmul.f32 %v1382, 1.442695
        %v1410 = vpow.pop %v1409
        %v1411 = vmul.f32 %v1383, 1.442695
        %v1412 = vpow.pop %v1411
        %v1413 = vmul.f32 %v1384, 1.442695
        %v1414 = vpow.pop %v1413
        %v1415 = vmul.f32 %v1385, 1.442695
        %v1416 = vpow.pop %v1415
        %v1417 = vmul.f32 %v1386, 1.442695
        %v1418 = vpow.pop %v1417
        %1419 = vadd.xlane.f32.xlu0 %v1388
        %v1420 = vpop.xlane.xlu0 %1419
        %1421 = vadd.xlane.f32.xlu0 %v1390
        %v1422 = vpop.xlane.xlu0 %1421
        %1423 = vadd.xlane.f32.xlu0 %v1392
        %v1424 = vpop.xlane.xlu0 %1423
        %1425 = vadd.xlane.f32.xlu0 %v1394
        %v1426 = vpop.xlane.xlu0 %1425
        %1427 = vadd.xlane.f32.xlu0 %v1396
        %v1428 = vpop.xlane.xlu0 %1427
        %1429 = vadd.xlane.f32.xlu0 %v1398
        %v1430 = vpop.xlane.xlu0 %1429
        %1431 = vadd.xlane.f32.xlu0 %v1400
        %v1432 = vpop.xlane.xlu0 %1431
        %1433 = vadd.xlane.f32.xlu0 %v1402
        %v1434 = vpop.xlane.xlu0 %1433
        %1435 = vadd.xlane.f32.xlu0 %v1404
        %v1436 = vpop.xlane.xlu0 %1435
        %1437 = vadd.xlane.f32.xlu0 %v1406
        %v1438 = vpop.xlane.xlu0 %1437
        %1439 = vadd.xlane.f32.xlu0 %v1408
        %v1440 = vpop.xlane.xlu0 %1439
        %1441 = vadd.xlane.f32.xlu0 %v1410
        %v1442 = vpop.xlane.xlu0 %1441
        %1443 = vadd.xlane.f32.xlu0 %v1412
        %v1444 = vpop.xlane.xlu0 %1443
        %1445 = vadd.xlane.f32.xlu0 %v1414
        %v1446 = vpop.xlane.xlu0 %1445
        %1447 = vadd.xlane.f32.xlu0 %v1416
        %v1448 = vpop.xlane.xlu0 %1447
        %1449 = vadd.xlane.f32.xlu0 %v1418
        %v1450 = vpop.xlane.xlu0 %1449
        %v1451 = vrcp.pop %v1420
        %v1452 = vrcp.pop %v1422
        %v1453 = vrcp.pop %v1424
        %v1454 = vrcp.pop %v1426
        %v1455 = vrcp.pop %v1428
        %v1456 = vrcp.pop %v1430
        %v1457 = vrcp.pop %v1432
        %v1458 = vrcp.pop %v1434
        %v1459 = vrcp.pop %v1436
        %v1460 = vrcp.pop %v1438
        %v1461 = vrcp.pop %v1440
        %v1462 = vrcp.pop %v1442
        %v1463 = vrcp.pop %v1444
        %v1464 = vrcp.pop %v1446
        %v1465 = vrcp.pop %v1448
        %v1466 = vrcp.pop %v1450
        %v1467 = vmul.f32 %v1388, %v1451
        %v1468 = vmul.f32 %v1390, %v1452
        %v1469 = vmul.f32 %v1392, %v1453
        %v1470 = vmul.f32 %v1394, %v1454
        %v1471 = vmul.f32 %v1396, %v1455
        %v1472 = vmul.f32 %v1398, %v1456
        %v1473 = vmul.f32 %v1400, %v1457
        %v1474 = vmul.f32 %v1402, %v1458
        %v1475 = vmul.f32 %v1404, %v1459
        %v1476 = vmul.f32 %v1406, %v1460
        %v1477 = vmul.f32 %v1408, %v1461
        %v1478 = vmul.f32 %v1410, %v1462
        %v1479 = vmul.f32 %v1412, %v1463
        %v1480 = vmul.f32 %v1414, %v1464
        %v1481 = vmul.f32 %v1416, %v1465
        %v1482 = vmul.f32 %v1418, %v1466
        %1483 = vrot.lane.b32.xlu0 %v599, 56
        %v1484 = vpop.permute.xlu0 %1483
        %1485 = vrot.lane.b32.xlu0 %v602, 56
        %v1486 = vpop.permute.xlu0 %1485
        %1487 = vrot.lane.b32.xlu0 %v605, 56
        %v1488 = vpop.permute.xlu0 %1487
        %1489 = vrot.lane.b32.xlu0 %v608, 56
        %v1490 = vpop.permute.xlu0 %1489
        %1491 = vrot.lane.b32.xlu0 %v611, 56
        %v1492 = vpop.permute.xlu0 %1491
        %1493 = vrot.lane.b32.xlu0 %v614, 56
        %v1494 = vpop.permute.xlu0 %1493
        %1495 = vrot.lane.b32.xlu0 %v617, 56
        %v1496 = vpop.permute.xlu0 %1495
        %1497 = vrot.lane.b32.xlu0 %v620, 56
        %v1498 = vpop.permute.xlu0 %1497
        %1499 = vrot.lane.b32.xlu0 %v623, 56
        %v1500 = vpop.permute.xlu0 %1499
        %1501 = vrot.lane.b32.xlu0 %v626, 56
        %v1502 = vpop.permute.xlu0 %1501
        %1503 = vrot.lane.b32.xlu0 %v629, 56
        %v1504 = vpop.permute.xlu0 %1503
        %1505 = vrot.lane.b32.xlu0 %v632, 56
        %v1506 = vpop.permute.xlu0 %1505
        %1507 = vrot.lane.b32.xlu0 %v635, 56
        %v1508 = vpop.permute.xlu0 %1507
        %1509 = vrot.lane.b32.xlu0 %v638, 56
        %v1510 = vpop.permute.xlu0 %1509
        %1511 = vrot.lane.b32.xlu0 %v641, 56
        %v1512 = vpop.permute.xlu0 %1511
        %1513 = vrot.lane.b32.xlu0 %v644, 56
        %v1514 = vpop.permute.xlu0 %1513
        %1531 = vmatpush.msra.mxu0 %v1514
        %1532 = vmatpush.msra.mxu0 %v1512
        %1533 = vmatpush.msra.mxu0 %v1510
        %1534 = vmatpush.msra.mxu0 %v1508
        %1535 = vmatpush.msra.mxu0 %v1506
        %1536 = vmatpush.msra.mxu0 %v1504
        %1537 = vmatpush.msra.mxu0 %v1502
        %1538 = vmatpush.msra.mxu0 %v1500
        %1539 = vmatpush.msra.mxu0 %v1498
        %1540 = vmatpush.msra.mxu0 %v1496
        %1541 = vmatpush.msra.mxu0 %v1494
        %1542 = vmatpush.msra.mxu0 %v1492
        %1543 = vmatpush.msra.mxu0 %v1490
        %1544 = vmatpush.msra.mxu0 %v1488
        %1545 = vmatpush.msra.mxu0 %v1486
        %1546 = vmatpush.msra.mxu0 %v1484
        %1547 = vmatmul.f32.gmra.mxu0 %v1467
        %v1548 = vpop.f32.mrf.mxu0
        %v1549 = vadd.f32 0.0, %v1548
        %1550 = vmatmul.f32.gmra.mxu0 %v1468
        %v1551 = vpop.f32.mrf.mxu0
        %v1552 = vadd.f32 0.0, %v1551
        %1553 = vmatmul.f32.gmra.mxu0 %v1469
        %v1554 = vpop.f32.mrf.mxu0
        %v1555 = vadd.f32 0.0, %v1554
        %1556 = vmatmul.f32.gmra.mxu0 %v1470
        %v1557 = vpop.f32.mrf.mxu0
        %v1558 = vadd.f32 0.0, %v1557
        %1559 = vmatmul.f32.gmra.mxu0 %v1471
        %v1560 = vpop.f32.mrf.mxu0
        %v1561 = vadd.f32 0.0, %v1560
        %1562 = vmatmul.f32.gmra.mxu0 %v1472
        %v1563 = vpop.f32.mrf.mxu0
        %v1564 = vadd.f32 0.0, %v1563
        %1565 = vmatmul.f32.gmra.mxu0 %v1473
        %v1566 = vpop.f32.mrf.mxu0
        %v1567 = vadd.f32 0.0, %v1566
        %1568 = vmatmul.f32.gmra.mxu0 %v1474
        %v1569 = vpop.f32.mrf.mxu0
        %v1570 = vadd.f32 0.0, %v1569
        %1571 = vmatmul.f32.gmra.mxu0 %v1475
        %v1572 = vpop.f32.mrf.mxu0
        %v1573 = vadd.f32 0.0, %v1572
        %1574 = vmatmul.f32.gmra.mxu0 %v1476
        %v1575 = vpop.f32.mrf.mxu0
        %v1576 = vadd.f32 0.0, %v1575
        %1577 = vmatmul.f32.gmra.mxu0 %v1477
        %v1578 = vpop.f32.mrf.mxu0
        %v1579 = vadd.f32 0.0, %v1578
        %1580 = vmatmul.f32.gmra.mxu0 %v1478
        %v1581 = vpop.f32.mrf.mxu0
        %v1582 = vadd.f32 0.0, %v1581
        %1583 = vmatmul.f32.gmra.mxu0 %v1479
        %v1584 = vpop.f32.mrf.mxu0
        %v1585 = vadd.f32 0.0, %v1584
        %1586 = vmatmul.f32.gmra.mxu0 %v1480
        %v1587 = vpop.f32.mrf.mxu0
        %v1588 = vadd.f32 0.0, %v1587
        %1589 = vmatmul.f32.gmra.mxu0 %v1481
        %v1590 = vpop.f32.mrf.mxu0
        %v1591 = vadd.f32 0.0, %v1590
        %1592 = vmatmul.f32.gmra.mxu0 %v1482
        %v1593 = vpop.f32.mrf.mxu0
        %v1594 = vadd.f32 0.0, %v1593
        %1595 = vdwg.mxu0
        %v1597 = vsel %vm726, %v1549, 0
        %v1600 = vsel %vm726, %v1552, 0
        %v1603 = vsel %vm726, %v1555, 0
        %v1606 = vsel %vm726, %v1558, 0
        %v1609 = vsel %vm726, %v1561, 0
        %v1612 = vsel %vm726, %v1564, 0
        %v1615 = vsel %vm726, %v1567, 0
        %v1618 = vsel %vm726, %v1570, 0
        %v1621 = vsel %vm726, %v1573, 0
        %v1624 = vsel %vm726, %v1576, 0
        %v1627 = vsel %vm726, %v1579, 0
        %v1630 = vsel %vm726, %v1582, 0
        %v1633 = vsel %vm726, %v1585, 0
        %v1636 = vsel %vm726, %v1588, 0
        %v1639 = vsel %vm726, %v1591, 0
        %v1642 = vsel %vm726, %v1594, 0
        %1644 = vmatpush.msra.mxu0 0.0
        %1645 = vmatpush.msra.mxu0 0.0
        %1646 = vmatpush.msra.mxu0 0.0
        %1647 = vmatpush.msra.mxu0 0.0
        %1648 = vmatpush.msra.mxu0 0.0
        %1649 = vmatpush.msra.mxu0 0.0
        %1650 = vmatpush.msra.mxu0 0.0
        %1651 = vmatpush.msra.mxu0 0.0
        %1652 = vmatpush.msra.mxu0 0.0
        %1653 = vmatpush.msra.mxu0 0.0
        %1654 = vmatpush.msra.mxu0 0.0
        %1655 = vmatpush.msra.mxu0 0.0
        %1656 = vmatpush.msra.mxu0 0.0
        %1657 = vmatpush.msra.mxu0 0.0
        %1658 = vmatpush.msra.mxu0 0.0
        %1659 = vmatpush.msra.mxu0 %v520
        %1660 = vmatmul.f32.gmra.mxu0 %v1597
        %v1661 = vpop.f32.mrf.mxu0
        %v1662 = vadd.f32 0.0, %v1661
        %1663 = vmatmul.f32.gmra.mxu0 %v1600
        %v1664 = vpop.f32.mrf.mxu0
        %v1665 = vadd.f32 0.0, %v1664
        %1666 = vmatmul.f32.gmra.mxu0 %v1603
        %v1667 = vpop.f32.mrf.mxu0
        %v1668 = vadd.f32 0.0, %v1667
        %1669 = vmatmul.f32.gmra.mxu0 %v1606
        %v1670 = vpop.f32.mrf.mxu0
        %v1671 = vadd.f32 0.0, %v1670
        %1672 = vmatmul.f32.gmra.mxu0 %v1609
        %v1673 = vpop.f32.mrf.mxu0
        %v1674 = vadd.f32 0.0, %v1673
        %1675 = vmatmul.f32.gmra.mxu0 %v1612
        %v1676 = vpop.f32.mrf.mxu0
        %v1677 = vadd.f32 0.0, %v1676
        %1678 = vmatmul.f32.gmra.mxu0 %v1615
        %v1679 = vpop.f32.mrf.mxu0
        %v1680 = vadd.f32 0.0, %v1679
        %1681 = vmatmul.f32.gmra.mxu0 %v1618
        %v1682 = vpop.f32.mrf.mxu0
        %v1683 = vadd.f32 0.0, %v1682
        %1684 = vmatmul.f32.gmra.mxu0 %v1621
        %v1685 = vpop.f32.mrf.mxu0
        %v1686 = vadd.f32 0.0, %v1685
        %1687 = vmatmul.f32.gmra.mxu0 %v1624
        %v1688 = vpop.f32.mrf.mxu0
        %v1689 = vadd.f32 0.0, %v1688
        %1690 = vmatmul.f32.gmra.mxu0 %v1627
        %v1691 = vpop.f32.mrf.mxu0
        %v1692 = vadd.f32 0.0, %v1691
        %1693 = vmatmul.f32.gmra.mxu0 %v1630
        %v1694 = vpop.f32.mrf.mxu0
        %v1695 = vadd.f32 0.0, %v1694
        %1696 = vmatmul.f32.gmra.mxu0 %v1633
        %v1697 = vpop.f32.mrf.mxu0
        %v1698 = vadd.f32 0.0, %v1697
        %1699 = vmatmul.f32.gmra.mxu0 %v1636
        %v1700 = vpop.f32.mrf.mxu0
        %v1701 = vadd.f32 0.0, %v1700
        %1702 = vmatmul.f32.gmra.mxu0 %v1639
        %v1703 = vpop.f32.mrf.mxu0
        %v1704 = vadd.f32 0.0, %v1703
        %1705 = vmatmul.f32.gmra.mxu0 %v1642
        %v1706 = vpop.f32.mrf.mxu0
        %v1707 = vadd.f32 0.0, %v1706
        %1708 = vdwg.mxu0
        %v1710 = vsel %vm726, %v1066, 0
        %v1713 = vsel %vm726, %v1069, 0
        %v1716 = vsel %vm726, %v1072, 0
        %v1719 = vsel %vm726, %v1075, 0
        %v1722 = vsel %vm726, %v1078, 0
        %v1725 = vsel %vm726, %v1081, 0
        %v1728 = vsel %vm726, %v1084, 0
        %v1731 = vsel %vm726, %v1087, 0
        %v1734 = vsel %vm726, %v1090, 0
        %v1737 = vsel %vm726, %v1093, 0
        %v1740 = vsel %vm726, %v1096, 0
        %v1743 = vsel %vm726, %v1099, 0
        %v1746 = vsel %vm726, %v1102, 0
        %v1749 = vsel %vm726, %v1105, 0
        %v1752 = vsel %vm726, %v1108, 0
        %v1755 = vsel %vm726, %v1111, 0
        %1757 = vmatpush.msra.mxu0 0.0
        %1758 = vmatpush.msra.mxu0 0.0
        %1759 = vmatpush.msra.mxu0 0.0
        %1760 = vmatpush.msra.mxu0 0.0
        %1761 = vmatpush.msra.mxu0 0.0
        %1762 = vmatpush.msra.mxu0 0.0
        %1763 = vmatpush.msra.mxu0 0.0
        %1764 = vmatpush.msra.mxu0 0.0
        %1765 = vmatpush.msra.mxu0 0.0
        %1766 = vmatpush.msra.mxu0 0.0
        %1767 = vmatpush.msra.mxu0 0.0
        %1768 = vmatpush.msra.mxu0 0.0
        %1769 = vmatpush.msra.mxu0 0.0
        %1770 = vmatpush.msra.mxu0 0.0
        %1771 = vmatpush.msra.mxu0 0.0
        %1772 = vmatpush.msra.mxu0 %v519
        %1773 = vmatmul.f32.gmra.mxu0 %v1710
        %v1774 = vpop.f32.mrf.mxu0
        %v1775 = vadd.f32 %v1662, %v1774
        %1776 = vmatmul.f32.gmra.mxu0 %v1713
        %v1777 = vpop.f32.mrf.mxu0
        %v1778 = vadd.f32 %v1665, %v1777
        %1779 = vmatmul.f32.gmra.mxu0 %v1716
        %v1780 = vpop.f32.mrf.mxu0
        %v1781 = vadd.f32 %v1668, %v1780
        %1782 = vmatmul.f32.gmra.mxu0 %v1719
        %v1783 = vpop.f32.mrf.mxu0
        %v1784 = vadd.f32 %v1671, %v1783
        %1785 = vmatmul.f32.gmra.mxu0 %v1722
        %v1786 = vpop.f32.mrf.mxu0
        %v1787 = vadd.f32 %v1674, %v1786
        %1788 = vmatmul.f32.gmra.mxu0 %v1725
        %v1789 = vpop.f32.mrf.mxu0
        %v1790 = vadd.f32 %v1677, %v1789
        %1791 = vmatmul.f32.gmra.mxu0 %v1728
        %v1792 = vpop.f32.mrf.mxu0
        %v1793 = vadd.f32 %v1680, %v1792
        %1794 = vmatmul.f32.gmra.mxu0 %v1731
        %v1795 = vpop.f32.mrf.mxu0
        %v1796 = vadd.f32 %v1683, %v1795
        %1797 = vmatmul.f32.gmra.mxu0 %v1734
        %v1798 = vpop.f32.mrf.mxu0
        %v1799 = vadd.f32 %v1686, %v1798
        %1800 = vmatmul.f32.gmra.mxu0 %v1737
        %v1801 = vpop.f32.mrf.mxu0
        %v1802 = vadd.f32 %v1689, %v1801
        %1803 = vmatmul.f32.gmra.mxu0 %v1740
        %v1804 = vpop.f32.mrf.mxu0
        %v1805 = vadd.f32 %v1692, %v1804
        %1806 = vmatmul.f32.gmra.mxu0 %v1743
        %v1807 = vpop.f32.mrf.mxu0
        %v1808 = vadd.f32 %v1695, %v1807
        %1809 = vmatmul.f32.gmra.mxu0 %v1746
        %v1810 = vpop.f32.mrf.mxu0
        %v1811 = vadd.f32 %v1698, %v1810
        %1812 = vmatmul.f32.gmra.mxu0 %v1749
        %v1813 = vpop.f32.mrf.mxu0
        %v1814 = vadd.f32 %v1701, %v1813
        %1815 = vmatmul.f32.gmra.mxu0 %v1752
        %v1816 = vpop.f32.mrf.mxu0
        %v1817 = vadd.f32 %v1704, %v1816
        %1818 = vmatmul.f32.gmra.mxu0 %v1755
        %v1819 = vpop.f32.mrf.mxu0
        %v1820 = vadd.f32 %v1707, %v1819
        %1821 = vdwg.mxu0
        %s1822 = scalar_lea.vmem %s1, 128
        %v1823 = vld [vmem:[%s1822] sm:$0xf]
        %v1824 = vld [vmem:[%s1822 + $0x4] sm:$0xf]
        %v1825 = vld [vmem:[%s1822 + $0x8] sm:$0xf]
        %v1826 = vld [vmem:[%s1822 + $0xc] sm:$0xf]
        %v1827 = vld [vmem:[%s1822 + $0x10] sm:$0xf]
        %v1828 = vld [vmem:[%s1822 + $0x14] sm:$0xf]
        %v1829 = vld [vmem:[%s1822 + $0x18] sm:$0xf]
        %v1830 = vld [vmem:[%s1822 + $0x1c] sm:$0xf]
        %v1831 = vld [vmem:[%s1822 + $0x20] sm:$0xf]
        %v1832 = vld [vmem:[%s1822 + $0x24] sm:$0xf]
        %v1833 = vld [vmem:[%s1822 + $0x28] sm:$0xf]
        %v1834 = vld [vmem:[%s1822 + $0x2c] sm:$0xf]
        %v1835 = vld [vmem:[%s1822 + $0x30] sm:$0xf]
        %v1836 = vld [vmem:[%s1822 + $0x34] sm:$0xf]
        %v1837 = vld [vmem:[%s1822 + $0x38] sm:$0xf]
        %v1838 = vld [vmem:[%s1822 + $0x3c] sm:$0xf]
        %v1839 = vunpack.c.l.bf16 %v1823
        %v1840 = vunpack.c.l.bf16 %v1824
        %v1841 = vunpack.c.l.bf16 %v1825
        %v1842 = vunpack.c.l.bf16 %v1826
        %v1843 = vunpack.c.l.bf16 %v1827
        %v1844 = vunpack.c.l.bf16 %v1828
        %v1845 = vunpack.c.l.bf16 %v1829
        %v1846 = vunpack.c.l.bf16 %v1830
        %v1847 = vunpack.c.l.bf16 %v1831
        %v1848 = vunpack.c.l.bf16 %v1832
        %v1849 = vunpack.c.l.bf16 %v1833
        %v1850 = vunpack.c.l.bf16 %v1834
        %v1851 = vunpack.c.l.bf16 %v1835
        %v1852 = vunpack.c.l.bf16 %v1836
        %v1853 = vunpack.c.l.bf16 %v1837
        %v1854 = vunpack.c.l.bf16 %v1838
        %1855 = vrot.lane.b32.xlu0 %v599, 112
        %v1856 = vpop.permute.xlu0 %1855
        %1857 = vrot.lane.b32.xlu0 %v602, 112
        %v1858 = vpop.permute.xlu0 %1857
        %1859 = vrot.lane.b32.xlu0 %v605, 112
        %v1860 = vpop.permute.xlu0 %1859
        %1861 = vrot.lane.b32.xlu0 %v608, 112
        %v1862 = vpop.permute.xlu0 %1861
        %1863 = vrot.lane.b32.xlu0 %v611, 112
        %v1864 = vpop.permute.xlu0 %1863
        %1865 = vrot.lane.b32.xlu0 %v614, 112
        %v1866 = vpop.permute.xlu0 %1865
        %1867 = vrot.lane.b32.xlu0 %v617, 112
        %v1868 = vpop.permute.xlu0 %1867
        %1869 = vrot.lane.b32.xlu0 %v620, 112
        %v1870 = vpop.permute.xlu0 %1869
        %1871 = vrot.lane.b32.xlu0 %v623, 112
        %v1872 = vpop.permute.xlu0 %1871
        %1873 = vrot.lane.b32.xlu0 %v626, 112
        %v1874 = vpop.permute.xlu0 %1873
        %1875 = vrot.lane.b32.xlu0 %v629, 112
        %v1876 = vpop.permute.xlu0 %1875
        %1877 = vrot.lane.b32.xlu0 %v632, 112
        %v1878 = vpop.permute.xlu0 %1877
        %1879 = vrot.lane.b32.xlu0 %v635, 112
        %v1880 = vpop.permute.xlu0 %1879
        %1881 = vrot.lane.b32.xlu0 %v638, 112
        %v1882 = vpop.permute.xlu0 %1881
        %1883 = vrot.lane.b32.xlu0 %v641, 112
        %v1884 = vpop.permute.xlu0 %1883
        %1885 = vrot.lane.b32.xlu0 %v644, 112
        %v1886 = vpop.permute.xlu0 %1885
        %1887 = vrot.lane.b32.xlu0 %v599, 80
        %v1888 = vpop.permute.xlu0 %1887
        %1889 = vrot.lane.b32.xlu0 %v602, 80
        %v1890 = vpop.permute.xlu0 %1889
        %1891 = vrot.lane.b32.xlu0 %v605, 80
        %v1892 = vpop.permute.xlu0 %1891
        %1893 = vrot.lane.b32.xlu0 %v608, 80
        %v1894 = vpop.permute.xlu0 %1893
        %1895 = vrot.lane.b32.xlu0 %v611, 80
        %v1896 = vpop.permute.xlu0 %1895
        %1897 = vrot.lane.b32.xlu0 %v614, 80
        %v1898 = vpop.permute.xlu0 %1897
        %1899 = vrot.lane.b32.xlu0 %v617, 80
        %v1900 = vpop.permute.xlu0 %1899
        %1901 = vrot.lane.b32.xlu0 %v620, 80
        %v1902 = vpop.permute.xlu0 %1901
        %1903 = vrot.lane.b32.xlu0 %v623, 80
        %v1904 = vpop.permute.xlu0 %1903
        %1905 = vrot.lane.b32.xlu0 %v626, 80
        %v1906 = vpop.permute.xlu0 %1905
        %1907 = vrot.lane.b32.xlu0 %v629, 80
        %v1908 = vpop.permute.xlu0 %1907
        %1909 = vrot.lane.b32.xlu0 %v632, 80
        %v1910 = vpop.permute.xlu0 %1909
        %1911 = vrot.lane.b32.xlu0 %v635, 80
        %v1912 = vpop.permute.xlu0 %1911
        %1913 = vrot.lane.b32.xlu0 %v638, 80
        %v1914 = vpop.permute.xlu0 %1913
        %1915 = vrot.lane.b32.xlu0 %v641, 80
        %v1916 = vpop.permute.xlu0 %1915
        %1917 = vrot.lane.b32.xlu0 %v644, 80
        %v1918 = vpop.permute.xlu0 %1917
        %v1919 = vsel %vm726, %v1856, 0
        %v1921 = vsel %vm726, %v1858, 0
        %v1923 = vsel %vm726, %v1860, 0
        %v1925 = vsel %vm726, %v1862, 0
        %v1927 = vsel %vm726, %v1864, 0
        %v1929 = vsel %vm726, %v1866, 0
        %v1931 = vsel %vm726, %v1868, 0
        %v1933 = vsel %vm726, %v1870, 0
        %v1935 = vsel %vm726, %v1872, 0
        %v1937 = vsel %vm726, %v1874, 0
        %v1939 = vsel %vm726, %v1876, 0
        %v1941 = vsel %vm726, %v1878, 0
        %v1943 = vsel %vm726, %v1880, 0
        %v1945 = vsel %vm726, %v1882, 0
        %v1947 = vsel %vm726, %v1884, 0
        %v1949 = vsel %vm726, %v1886, 0
        %v1951 = vsel %vm726, %v1888, 0
        %v1953 = vsel %vm726, %v1890, 0
        %v1955 = vsel %vm726, %v1892, 0
        %v1957 = vsel %vm726, %v1894, 0
        %v1959 = vsel %vm726, %v1896, 0
        %v1961 = vsel %vm726, %v1898, 0
        %v1963 = vsel %vm726, %v1900, 0
        %v1965 = vsel %vm726, %v1902, 0
        %v1967 = vsel %vm726, %v1904, 0
        %v1969 = vsel %vm726, %v1906, 0
        %v1971 = vsel %vm726, %v1908, 0
        %v1973 = vsel %vm726, %v1910, 0
        %v1975 = vsel %vm726, %v1912, 0
        %v1977 = vsel %vm726, %v1914, 0
        %v1979 = vsel %vm726, %v1916, 0
        %v1981 = vsel %vm726, %v1918, 0
        %1983 = vmatpush.xpose.msra.mxu0 %v1981
        %1984 = vmatpush.xpose.msra.mxu0 %v1979
        %1985 = vmatpush.xpose.msra.mxu0 %v1977
        %1986 = vmatpush.xpose.msra.mxu0 %v1975
        %1987 = vmatpush.xpose.msra.mxu0 %v1973
        %1988 = vmatpush.xpose.msra.mxu0 %v1971
        %1989 = vmatpush.xpose.msra.mxu0 %v1969
        %1990 = vmatpush.xpose.msra.mxu0 %v1967
        %1991 = vmatpush.xpose.msra.mxu0 %v1965
        %1992 = vmatpush.xpose.msra.mxu0 %v1963
        %1993 = vmatpush.xpose.msra.mxu0 %v1961
        %1994 = vmatpush.xpose.msra.mxu0 %v1959
        %1995 = vmatpush.xpose.msra.mxu0 %v1957
        %1996 = vmatpush.xpose.msra.mxu0 %v1955
        %1997 = vmatpush.xpose.msra.mxu0 %v1953
        %1998 = vmatpush.xpose.msra.mxu0 %v1951
        %1999 = vmatmul.f32.gmra.mxu0 %v1919
        %v2000 = vpop.f32.mrf.mxu0
        %v2001 = vadd.f32 %v1839, %v2000
        %2002 = vmatmul.f32.gmra.mxu0 %v1921
        %v2003 = vpop.f32.mrf.mxu0
        %v2004 = vadd.f32 %v1840, %v2003
        %2005 = vmatmul.f32.gmra.mxu0 %v1923
        %v2006 = vpop.f32.mrf.mxu0
        %v2007 = vadd.f32 %v1841, %v2006
        %2008 = vmatmul.f32.gmra.mxu0 %v1925
        %v2009 = vpop.f32.mrf.mxu0
        %v2010 = vadd.f32 %v1842, %v2009
        %2011 = vmatmul.f32.gmra.mxu0 %v1927
        %v2012 = vpop.f32.mrf.mxu0
        %v2013 = vadd.f32 %v1843, %v2012
        %2014 = vmatmul.f32.gmra.mxu0 %v1929
        %v2015 = vpop.f32.mrf.mxu0
        %v2016 = vadd.f32 %v1844, %v2015
        %2017 = vmatmul.f32.gmra.mxu0 %v1931
        %v2018 = vpop.f32.mrf.mxu0
        %v2019 = vadd.f32 %v1845, %v2018
        %2020 = vmatmul.f32.gmra.mxu0 %v1933
        %v2021 = vpop.f32.mrf.mxu0
        %v2022 = vadd.f32 %v1846, %v2021
        %2023 = vmatmul.f32.gmra.mxu0 %v1935
        %v2024 = vpop.f32.mrf.mxu0
        %v2025 = vadd.f32 %v1847, %v2024
        %2026 = vmatmul.f32.gmra.mxu0 %v1937
        %v2027 = vpop.f32.mrf.mxu0
        %v2028 = vadd.f32 %v1848, %v2027
        %2029 = vmatmul.f32.gmra.mxu0 %v1939
        %v2030 = vpop.f32.mrf.mxu0
        %v2031 = vadd.f32 %v1849, %v2030
        %2032 = vmatmul.f32.gmra.mxu0 %v1941
        %v2033 = vpop.f32.mrf.mxu0
        %v2034 = vadd.f32 %v1850, %v2033
        %2035 = vmatmul.f32.gmra.mxu0 %v1943
        %v2036 = vpop.f32.mrf.mxu0
        %v2037 = vadd.f32 %v1851, %v2036
        %2038 = vmatmul.f32.gmra.mxu0 %v1945
        %v2039 = vpop.f32.mrf.mxu0
        %v2040 = vadd.f32 %v1852, %v2039
        %2041 = vmatmul.f32.gmra.mxu0 %v1947
        %v2042 = vpop.f32.mrf.mxu0
        %v2043 = vadd.f32 %v1853, %v2042
        %2044 = vmatmul.f32.gmra.mxu0 %v1949
        %v2045 = vpop.f32.mrf.mxu0
        %v2046 = vadd.f32 %v1854, %v2045
        %2047 = vdwg.mxu0
        %2048 = vmax.xlane.f32.xlu0 %v2001
        %v2049 = vpop.xlane.xlu0 %2048
        %2050 = vmax.xlane.f32.xlu0 %v2004
        %v2051 = vpop.xlane.xlu0 %2050
        %2052 = vmax.xlane.f32.xlu0 %v2007
        %v2053 = vpop.xlane.xlu0 %2052
        %2054 = vmax.xlane.f32.xlu0 %v2010
        %v2055 = vpop.xlane.xlu0 %2054
        %2056 = vmax.xlane.f32.xlu0 %v2013
        %v2057 = vpop.xlane.xlu0 %2056
        %2058 = vmax.xlane.f32.xlu0 %v2016
        %v2059 = vpop.xlane.xlu0 %2058
        %2060 = vmax.xlane.f32.xlu0 %v2019
        %v2061 = vpop.xlane.xlu0 %2060
        %2062 = vmax.xlane.f32.xlu0 %v2022
        %v2063 = vpop.xlane.xlu0 %2062
        %2064 = vmax.xlane.f32.xlu0 %v2025
        %v2065 = vpop.xlane.xlu0 %2064
        %2066 = vmax.xlane.f32.xlu0 %v2028
        %v2067 = vpop.xlane.xlu0 %2066
        %2068 = vmax.xlane.f32.xlu0 %v2031
        %v2069 = vpop.xlane.xlu0 %2068
        %2070 = vmax.xlane.f32.xlu0 %v2034
        %v2071 = vpop.xlane.xlu0 %2070
        %2072 = vmax.xlane.f32.xlu0 %v2037
        %v2073 = vpop.xlane.xlu0 %2072
        %2074 = vmax.xlane.f32.xlu0 %v2040
        %v2075 = vpop.xlane.xlu0 %2074
        %2076 = vmax.xlane.f32.xlu0 %v2043
        %v2077 = vpop.xlane.xlu0 %2076
        %2078 = vmax.xlane.f32.xlu0 %v2046
        %v2079 = vpop.xlane.xlu0 %2078
        %v2080 = vsub.f32 %v2001, %v2049
        %v2081 = vsub.f32 %v2004, %v2051
        %v2082 = vsub.f32 %v2007, %v2053
        %v2083 = vsub.f32 %v2010, %v2055
        %v2084 = vsub.f32 %v2013, %v2057
        %v2085 = vsub.f32 %v2016, %v2059
        %v2086 = vsub.f32 %v2019, %v2061
        %v2087 = vsub.f32 %v2022, %v2063
        %v2088 = vsub.f32 %v2025, %v2065
        %v2089 = vsub.f32 %v2028, %v2067
        %v2090 = vsub.f32 %v2031, %v2069
        %v2091 = vsub.f32 %v2034, %v2071
        %v2092 = vsub.f32 %v2037, %v2073
        %v2093 = vsub.f32 %v2040, %v2075
        %v2094 = vsub.f32 %v2043, %v2077
        %v2095 = vsub.f32 %v2046, %v2079
        %v2096 = vmul.f32 %v2080, 1.442695
        %v2097 = vpow.pop %v2096
        %v2098 = vmul.f32 %v2081, 1.442695
        %v2099 = vpow.pop %v2098
        %v2100 = vmul.f32 %v2082, 1.442695
        %v2101 = vpow.pop %v2100
        %v2102 = vmul.f32 %v2083, 1.442695
        %v2103 = vpow.pop %v2102
        %v2104 = vmul.f32 %v2084, 1.442695
        %v2105 = vpow.pop %v2104
        %v2106 = vmul.f32 %v2085, 1.442695
        %v2107 = vpow.pop %v2106
        %v2108 = vmul.f32 %v2086, 1.442695
        %v2109 = vpow.pop %v2108
        %v2110 = vmul.f32 %v2087, 1.442695
        %v2111 = vpow.pop %v2110
        %v2112 = vmul.f32 %v2088, 1.442695
        %v2113 = vpow.pop %v2112
        %v2114 = vmul.f32 %v2089, 1.442695
        %v2115 = vpow.pop %v2114
        %v2116 = vmul.f32 %v2090, 1.442695
        %v2117 = vpow.pop %v2116
        %v2118 = vmul.f32 %v2091, 1.442695
        %v2119 = vpow.pop %v2118
        %v2120 = vmul.f32 %v2092, 1.442695
        %v2121 = vpow.pop %v2120
        %v2122 = vmul.f32 %v2093, 1.442695
        %v2123 = vpow.pop %v2122
        %v2124 = vmul.f32 %v2094, 1.442695
        %v2125 = vpow.pop %v2124
        %v2126 = vmul.f32 %v2095, 1.442695
        %v2127 = vpow.pop %v2126
        %2128 = vadd.xlane.f32.xlu0 %v2097
        %v2129 = vpop.xlane.xlu0 %2128
        %2130 = vadd.xlane.f32.xlu0 %v2099
        %v2131 = vpop.xlane.xlu0 %2130
        %2132 = vadd.xlane.f32.xlu0 %v2101
        %v2133 = vpop.xlane.xlu0 %2132
        %2134 = vadd.xlane.f32.xlu0 %v2103
        %v2135 = vpop.xlane.xlu0 %2134
        %2136 = vadd.xlane.f32.xlu0 %v2105
        %v2137 = vpop.xlane.xlu0 %2136
        %2138 = vadd.xlane.f32.xlu0 %v2107
        %v2139 = vpop.xlane.xlu0 %2138
        %2140 = vadd.xlane.f32.xlu0 %v2109
        %v2141 = vpop.xlane.xlu0 %2140
        %2142 = vadd.xlane.f32.xlu0 %v2111
        %v2143 = vpop.xlane.xlu0 %2142
        %2144 = vadd.xlane.f32.xlu0 %v2113
        %v2145 = vpop.xlane.xlu0 %2144
        %2146 = vadd.xlane.f32.xlu0 %v2115
        %v2147 = vpop.xlane.xlu0 %2146
        %2148 = vadd.xlane.f32.xlu0 %v2117
        %v2149 = vpop.xlane.xlu0 %2148
        %2150 = vadd.xlane.f32.xlu0 %v2119
        %v2151 = vpop.xlane.xlu0 %2150
        %2152 = vadd.xlane.f32.xlu0 %v2121
        %v2153 = vpop.xlane.xlu0 %2152
        %2154 = vadd.xlane.f32.xlu0 %v2123
        %v2155 = vpop.xlane.xlu0 %2154
        %2156 = vadd.xlane.f32.xlu0 %v2125
        %v2157 = vpop.xlane.xlu0 %2156
        %2158 = vadd.xlane.f32.xlu0 %v2127
        %v2159 = vpop.xlane.xlu0 %2158
        %v2160 = vrcp.pop %v2129
        %v2161 = vrcp.pop %v2131
        %v2162 = vrcp.pop %v2133
        %v2163 = vrcp.pop %v2135
        %v2164 = vrcp.pop %v2137
        %v2165 = vrcp.pop %v2139
        %v2166 = vrcp.pop %v2141
        %v2167 = vrcp.pop %v2143
        %v2168 = vrcp.pop %v2145
        %v2169 = vrcp.pop %v2147
        %v2170 = vrcp.pop %v2149
        %v2171 = vrcp.pop %v2151
        %v2172 = vrcp.pop %v2153
        %v2173 = vrcp.pop %v2155
        %v2174 = vrcp.pop %v2157
        %v2175 = vrcp.pop %v2159
        %v2176 = vmul.f32 %v2097, %v2160
        %v2177 = vmul.f32 %v2099, %v2161
        %v2178 = vmul.f32 %v2101, %v2162
        %v2179 = vmul.f32 %v2103, %v2163
        %v2180 = vmul.f32 %v2105, %v2164
        %v2181 = vmul.f32 %v2107, %v2165
        %v2182 = vmul.f32 %v2109, %v2166
        %v2183 = vmul.f32 %v2111, %v2167
        %v2184 = vmul.f32 %v2113, %v2168
        %v2185 = vmul.f32 %v2115, %v2169
        %v2186 = vmul.f32 %v2117, %v2170
        %v2187 = vmul.f32 %v2119, %v2171
        %v2188 = vmul.f32 %v2121, %v2172
        %v2189 = vmul.f32 %v2123, %v2173
        %v2190 = vmul.f32 %v2125, %v2174
        %v2191 = vmul.f32 %v2127, %v2175
        %2192 = vrot.lane.b32.xlu0 %v599, 48
        %v2193 = vpop.permute.xlu0 %2192
        %2194 = vrot.lane.b32.xlu0 %v602, 48
        %v2195 = vpop.permute.xlu0 %2194
        %2196 = vrot.lane.b32.xlu0 %v605, 48
        %v2197 = vpop.permute.xlu0 %2196
        %2198 = vrot.lane.b32.xlu0 %v608, 48
        %v2199 = vpop.permute.xlu0 %2198
        %2200 = vrot.lane.b32.xlu0 %v611, 48
        %v2201 = vpop.permute.xlu0 %2200
        %2202 = vrot.lane.b32.xlu0 %v614, 48
        %v2203 = vpop.permute.xlu0 %2202
        %2204 = vrot.lane.b32.xlu0 %v617, 48
        %v2205 = vpop.permute.xlu0 %2204
        %2206 = vrot.lane.b32.xlu0 %v620, 48
        %v2207 = vpop.permute.xlu0 %2206
        %2208 = vrot.lane.b32.xlu0 %v623, 48
        %v2209 = vpop.permute.xlu0 %2208
        %2210 = vrot.lane.b32.xlu0 %v626, 48
        %v2211 = vpop.permute.xlu0 %2210
        %2212 = vrot.lane.b32.xlu0 %v629, 48
        %v2213 = vpop.permute.xlu0 %2212
        %2214 = vrot.lane.b32.xlu0 %v632, 48
        %v2215 = vpop.permute.xlu0 %2214
        %2216 = vrot.lane.b32.xlu0 %v635, 48
        %v2217 = vpop.permute.xlu0 %2216
        %2218 = vrot.lane.b32.xlu0 %v638, 48
        %v2219 = vpop.permute.xlu0 %2218
        %2220 = vrot.lane.b32.xlu0 %v641, 48
        %v2221 = vpop.permute.xlu0 %2220
        %2222 = vrot.lane.b32.xlu0 %v644, 48
        %v2223 = vpop.permute.xlu0 %2222
        %2240 = vmatpush.msra.mxu0 %v2223
        %2241 = vmatpush.msra.mxu0 %v2221
        %2242 = vmatpush.msra.mxu0 %v2219
        %2243 = vmatpush.msra.mxu0 %v2217
        %2244 = vmatpush.msra.mxu0 %v2215
        %2245 = vmatpush.msra.mxu0 %v2213
        %2246 = vmatpush.msra.mxu0 %v2211
        %2247 = vmatpush.msra.mxu0 %v2209
        %2248 = vmatpush.msra.mxu0 %v2207
        %2249 = vmatpush.msra.mxu0 %v2205
        %2250 = vmatpush.msra.mxu0 %v2203
        %2251 = vmatpush.msra.mxu0 %v2201
        %2252 = vmatpush.msra.mxu0 %v2199
        %2253 = vmatpush.msra.mxu0 %v2197
        %2254 = vmatpush.msra.mxu0 %v2195
        %2255 = vmatpush.msra.mxu0 %v2193
        %2256 = vmatmul.f32.gmra.mxu0 %v2176
        %v2257 = vpop.f32.mrf.mxu0
        %v2258 = vadd.f32 0.0, %v2257
        %2259 = vmatmul.f32.gmra.mxu0 %v2177
        %v2260 = vpop.f32.mrf.mxu0
        %v2261 = vadd.f32 0.0, %v2260
        %2262 = vmatmul.f32.gmra.mxu0 %v2178
        %v2263 = vpop.f32.mrf.mxu0
        %v2264 = vadd.f32 0.0, %v2263
        %2265 = vmatmul.f32.gmra.mxu0 %v2179
        %v2266 = vpop.f32.mrf.mxu0
        %v2267 = vadd.f32 0.0, %v2266
        %2268 = vmatmul.f32.gmra.mxu0 %v2180
        %v2269 = vpop.f32.mrf.mxu0
        %v2270 = vadd.f32 0.0, %v2269
        %2271 = vmatmul.f32.gmra.mxu0 %v2181
        %v2272 = vpop.f32.mrf.mxu0
        %v2273 = vadd.f32 0.0, %v2272
        %2274 = vmatmul.f32.gmra.mxu0 %v2182
        %v2275 = vpop.f32.mrf.mxu0
        %v2276 = vadd.f32 0.0, %v2275
        %2277 = vmatmul.f32.gmra.mxu0 %v2183
        %v2278 = vpop.f32.mrf.mxu0
        %v2279 = vadd.f32 0.0, %v2278
        %2280 = vmatmul.f32.gmra.mxu0 %v2184
        %v2281 = vpop.f32.mrf.mxu0
        %v2282 = vadd.f32 0.0, %v2281
        %2283 = vmatmul.f32.gmra.mxu0 %v2185
        %v2284 = vpop.f32.mrf.mxu0
        %v2285 = vadd.f32 0.0, %v2284
        %2286 = vmatmul.f32.gmra.mxu0 %v2186
        %v2287 = vpop.f32.mrf.mxu0
        %v2288 = vadd.f32 0.0, %v2287
        %2289 = vmatmul.f32.gmra.mxu0 %v2187
        %v2290 = vpop.f32.mrf.mxu0
        %v2291 = vadd.f32 0.0, %v2290
        %2292 = vmatmul.f32.gmra.mxu0 %v2188
        %v2293 = vpop.f32.mrf.mxu0
        %v2294 = vadd.f32 0.0, %v2293
        %2295 = vmatmul.f32.gmra.mxu0 %v2189
        %v2296 = vpop.f32.mrf.mxu0
        %v2297 = vadd.f32 0.0, %v2296
        %2298 = vmatmul.f32.gmra.mxu0 %v2190
        %v2299 = vpop.f32.mrf.mxu0
        %v2300 = vadd.f32 0.0, %v2299
        %2301 = vmatmul.f32.gmra.mxu0 %v2191
        %v2302 = vpop.f32.mrf.mxu0
        %v2303 = vadd.f32 0.0, %v2302
        %2304 = vdwg.mxu0
        %v2306 = vsel %vm726, %v2258, 0
        %v2309 = vsel %vm726, %v2261, 0
        %v2312 = vsel %vm726, %v2264, 0
        %v2315 = vsel %vm726, %v2267, 0
        %v2318 = vsel %vm726, %v2270, 0
        %v2321 = vsel %vm726, %v2273, 0
        %v2324 = vsel %vm726, %v2276, 0
        %v2327 = vsel %vm726, %v2279, 0
        %v2330 = vsel %vm726, %v2282, 0
        %v2333 = vsel %vm726, %v2285, 0
        %v2336 = vsel %vm726, %v2288, 0
        %v2339 = vsel %vm726, %v2291, 0
        %v2342 = vsel %vm726, %v2294, 0
        %v2345 = vsel %vm726, %v2297, 0
        %v2348 = vsel %vm726, %v2300, 0
        %v2351 = vsel %vm726, %v2303, 0
        %2353 = vmatpush.msra.mxu0 0.0
        %2354 = vmatpush.msra.mxu0 0.0
        %2355 = vmatpush.msra.mxu0 0.0
        %2356 = vmatpush.msra.mxu0 0.0
        %2357 = vmatpush.msra.mxu0 0.0
        %2358 = vmatpush.msra.mxu0 0.0
        %2359 = vmatpush.msra.mxu0 0.0
        %2360 = vmatpush.msra.mxu0 0.0
        %2361 = vmatpush.msra.mxu0 0.0
        %2362 = vmatpush.msra.mxu0 0.0
        %2363 = vmatpush.msra.mxu0 0.0
        %2364 = vmatpush.msra.mxu0 0.0
        %2365 = vmatpush.msra.mxu0 0.0
        %2366 = vmatpush.msra.mxu0 0.0
        %2367 = vmatpush.msra.mxu0 0.0
        %2368 = vmatpush.msra.mxu0 %v521
        %2369 = vmatmul.f32.gmra.mxu0 %v2306
        %v2370 = vpop.f32.mrf.mxu0
        %v2371 = vadd.f32 0.0, %v2370
        %2372 = vmatmul.f32.gmra.mxu0 %v2309
        %v2373 = vpop.f32.mrf.mxu0
        %v2374 = vadd.f32 0.0, %v2373
        %2375 = vmatmul.f32.gmra.mxu0 %v2312
        %v2376 = vpop.f32.mrf.mxu0
        %v2377 = vadd.f32 0.0, %v2376
        %2378 = vmatmul.f32.gmra.mxu0 %v2315
        %v2379 = vpop.f32.mrf.mxu0
        %v2380 = vadd.f32 0.0, %v2379
        %2381 = vmatmul.f32.gmra.mxu0 %v2318
        %v2382 = vpop.f32.mrf.mxu0
        %v2383 = vadd.f32 0.0, %v2382
        %2384 = vmatmul.f32.gmra.mxu0 %v2321
        %v2385 = vpop.f32.mrf.mxu0
        %v2386 = vadd.f32 0.0, %v2385
        %2387 = vmatmul.f32.gmra.mxu0 %v2324
        %v2388 = vpop.f32.mrf.mxu0
        %v2389 = vadd.f32 0.0, %v2388
        %2390 = vmatmul.f32.gmra.mxu0 %v2327
        %v2391 = vpop.f32.mrf.mxu0
        %v2392 = vadd.f32 0.0, %v2391
        %2393 = vmatmul.f32.gmra.mxu0 %v2330
        %v2394 = vpop.f32.mrf.mxu0
        %v2395 = vadd.f32 0.0, %v2394
        %2396 = vmatmul.f32.gmra.mxu0 %v2333
        %v2397 = vpop.f32.mrf.mxu0
        %v2398 = vadd.f32 0.0, %v2397
        %2399 = vmatmul.f32.gmra.mxu0 %v2336
        %v2400 = vpop.f32.mrf.mxu0
        %v2401 = vadd.f32 0.0, %v2400
        %2402 = vmatmul.f32.gmra.mxu0 %v2339
        %v2403 = vpop.f32.mrf.mxu0
        %v2404 = vadd.f32 0.0, %v2403
        %2405 = vmatmul.f32.gmra.mxu0 %v2342
        %v2406 = vpop.f32.mrf.mxu0
        %v2407 = vadd.f32 0.0, %v2406
        %2408 = vmatmul.f32.gmra.mxu0 %v2345
        %v2409 = vpop.f32.mrf.mxu0
        %v2410 = vadd.f32 0.0, %v2409
        %2411 = vmatmul.f32.gmra.mxu0 %v2348
        %v2412 = vpop.f32.mrf.mxu0
        %v2413 = vadd.f32 0.0, %v2412
        %2414 = vmatmul.f32.gmra.mxu0 %v2351
        %v2415 = vpop.f32.mrf.mxu0
        %v2416 = vadd.f32 0.0, %v2415
        %2417 = vdwg.mxu0
        %v2418 = vadd.f32 %v1775, %v2371
        %v2419 = vadd.f32 %v1778, %v2374
        %v2420 = vadd.f32 %v1781, %v2377
        %v2421 = vadd.f32 %v1784, %v2380
        %v2422 = vadd.f32 %v1787, %v2383
        %v2423 = vadd.f32 %v1790, %v2386
        %v2424 = vadd.f32 %v1793, %v2389
        %v2425 = vadd.f32 %v1796, %v2392
        %v2426 = vadd.f32 %v1799, %v2395
        %v2427 = vadd.f32 %v1802, %v2398
        %v2428 = vadd.f32 %v1805, %v2401
        %v2429 = vadd.f32 %v1808, %v2404
        %v2430 = vadd.f32 %v1811, %v2407
        %v2431 = vadd.f32 %v1814, %v2410
        %v2432 = vadd.f32 %v1817, %v2413
        %v2433 = vadd.f32 %v1820, %v2416
        %s2434 = scalar_lea.vmem %s1, 192
        %v2435 = vld [vmem:[%s2434] sm:$0xf]
        %v2436 = vld [vmem:[%s2434 + $0x4] sm:$0xf]
        %v2437 = vld [vmem:[%s2434 + $0x8] sm:$0xf]
        %v2438 = vld [vmem:[%s2434 + $0xc] sm:$0xf]
        %v2439 = vld [vmem:[%s2434 + $0x10] sm:$0xf]
        %v2440 = vld [vmem:[%s2434 + $0x14] sm:$0xf]
        %v2441 = vld [vmem:[%s2434 + $0x18] sm:$0xf]
        %v2442 = vld [vmem:[%s2434 + $0x1c] sm:$0xf]
        %v2443 = vld [vmem:[%s2434 + $0x20] sm:$0xf]
        %v2444 = vld [vmem:[%s2434 + $0x24] sm:$0xf]
        %v2445 = vld [vmem:[%s2434 + $0x28] sm:$0xf]
        %v2446 = vld [vmem:[%s2434 + $0x2c] sm:$0xf]
        %v2447 = vld [vmem:[%s2434 + $0x30] sm:$0xf]
        %v2448 = vld [vmem:[%s2434 + $0x34] sm:$0xf]
        %v2449 = vld [vmem:[%s2434 + $0x38] sm:$0xf]
        %v2450 = vld [vmem:[%s2434 + $0x3c] sm:$0xf]
        %v2451 = vunpack.c.l.bf16 %v2435
        %v2452 = vunpack.c.l.bf16 %v2436
        %v2453 = vunpack.c.l.bf16 %v2437
        %v2454 = vunpack.c.l.bf16 %v2438
        %v2455 = vunpack.c.l.bf16 %v2439
        %v2456 = vunpack.c.l.bf16 %v2440
        %v2457 = vunpack.c.l.bf16 %v2441
        %v2458 = vunpack.c.l.bf16 %v2442
        %v2459 = vunpack.c.l.bf16 %v2443
        %v2460 = vunpack.c.l.bf16 %v2444
        %v2461 = vunpack.c.l.bf16 %v2445
        %v2462 = vunpack.c.l.bf16 %v2446
        %v2463 = vunpack.c.l.bf16 %v2447
        %v2464 = vunpack.c.l.bf16 %v2448
        %v2465 = vunpack.c.l.bf16 %v2449
        %v2466 = vunpack.c.l.bf16 %v2450
        %2467 = vrot.lane.b32.xlu0 %v599, 104
        %v2468 = vpop.permute.xlu0 %2467
        %2469 = vrot.lane.b32.xlu0 %v602, 104
        %v2470 = vpop.permute.xlu0 %2469
        %2471 = vrot.lane.b32.xlu0 %v605, 104
        %v2472 = vpop.permute.xlu0 %2471
        %2473 = vrot.lane.b32.xlu0 %v608, 104
        %v2474 = vpop.permute.xlu0 %2473
        %2475 = vrot.lane.b32.xlu0 %v611, 104
        %v2476 = vpop.permute.xlu0 %2475
        %2477 = vrot.lane.b32.xlu0 %v614, 104
        %v2478 = vpop.permute.xlu0 %2477
        %2479 = vrot.lane.b32.xlu0 %v617, 104
        %v2480 = vpop.permute.xlu0 %2479
        %2481 = vrot.lane.b32.xlu0 %v620, 104
        %v2482 = vpop.permute.xlu0 %2481
        %2483 = vrot.lane.b32.xlu0 %v623, 104
        %v2484 = vpop.permute.xlu0 %2483
        %2485 = vrot.lane.b32.xlu0 %v626, 104
        %v2486 = vpop.permute.xlu0 %2485
        %2487 = vrot.lane.b32.xlu0 %v629, 104
        %v2488 = vpop.permute.xlu0 %2487
        %2489 = vrot.lane.b32.xlu0 %v632, 104
        %v2490 = vpop.permute.xlu0 %2489
        %2491 = vrot.lane.b32.xlu0 %v635, 104
        %v2492 = vpop.permute.xlu0 %2491
        %2493 = vrot.lane.b32.xlu0 %v638, 104
        %v2494 = vpop.permute.xlu0 %2493
        %2495 = vrot.lane.b32.xlu0 %v641, 104
        %v2496 = vpop.permute.xlu0 %2495
        %2497 = vrot.lane.b32.xlu0 %v644, 104
        %v2498 = vpop.permute.xlu0 %2497
        %2499 = vrot.lane.b32.xlu0 %v599, 72
        %v2500 = vpop.permute.xlu0 %2499
        %2501 = vrot.lane.b32.xlu0 %v602, 72
        %v2502 = vpop.permute.xlu0 %2501
        %2503 = vrot.lane.b32.xlu0 %v605, 72
        %v2504 = vpop.permute.xlu0 %2503
        %2505 = vrot.lane.b32.xlu0 %v608, 72
        %v2506 = vpop.permute.xlu0 %2505
        %2507 = vrot.lane.b32.xlu0 %v611, 72
        %v2508 = vpop.permute.xlu0 %2507
        %2509 = vrot.lane.b32.xlu0 %v614, 72
        %v2510 = vpop.permute.xlu0 %2509
        %2511 = vrot.lane.b32.xlu0 %v617, 72
        %v2512 = vpop.permute.xlu0 %2511
        %2513 = vrot.lane.b32.xlu0 %v620, 72
        %v2514 = vpop.permute.xlu0 %2513
        %2515 = vrot.lane.b32.xlu0 %v623, 72
        %v2516 = vpop.permute.xlu0 %2515
        %2517 = vrot.lane.b32.xlu0 %v626, 72
        %v2518 = vpop.permute.xlu0 %2517
        %2519 = vrot.lane.b32.xlu0 %v629, 72
        %v2520 = vpop.permute.xlu0 %2519
        %2521 = vrot.lane.b32.xlu0 %v632, 72
        %v2522 = vpop.permute.xlu0 %2521
        %2523 = vrot.lane.b32.xlu0 %v635, 72
        %v2524 = vpop.permute.xlu0 %2523
        %2525 = vrot.lane.b32.xlu0 %v638, 72
        %v2526 = vpop.permute.xlu0 %2525
        %2527 = vrot.lane.b32.xlu0 %v641, 72
        %v2528 = vpop.permute.xlu0 %2527
        %2529 = vrot.lane.b32.xlu0 %v644, 72
        %v2530 = vpop.permute.xlu0 %2529
        %v2531 = vsel %vm726, %v2468, 0
        %v2533 = vsel %vm726, %v2470, 0
        %v2535 = vsel %vm726, %v2472, 0
        %v2537 = vsel %vm726, %v2474, 0
        %v2539 = vsel %vm726, %v2476, 0
        %v2541 = vsel %vm726, %v2478, 0
        %v2543 = vsel %vm726, %v2480, 0
        %v2545 = vsel %vm726, %v2482, 0
        %v2547 = vsel %vm726, %v2484, 0
        %v2549 = vsel %vm726, %v2486, 0
        %v2551 = vsel %vm726, %v2488, 0
        %v2553 = vsel %vm726, %v2490, 0
        %v2555 = vsel %vm726, %v2492, 0
        %v2557 = vsel %vm726, %v2494, 0
        %v2559 = vsel %vm726, %v2496, 0
        %v2561 = vsel %vm726, %v2498, 0
        %v2563 = vsel %vm726, %v2500, 0
        %v2565 = vsel %vm726, %v2502, 0
        %v2567 = vsel %vm726, %v2504, 0
        %v2569 = vsel %vm726, %v2506, 0
        %v2571 = vsel %vm726, %v2508, 0
        %v2573 = vsel %vm726, %v2510, 0
        %v2575 = vsel %vm726, %v2512, 0
        %v2577 = vsel %vm726, %v2514, 0
        %v2579 = vsel %vm726, %v2516, 0
        %v2581 = vsel %vm726, %v2518, 0
        %v2583 = vsel %vm726, %v2520, 0
        %v2585 = vsel %vm726, %v2522, 0
        %v2587 = vsel %vm726, %v2524, 0
        %v2589 = vsel %vm726, %v2526, 0
        %v2591 = vsel %vm726, %v2528, 0
        %v2593 = vsel %vm726, %v2530, 0
        %2595 = vmatpush.xpose.msra.mxu0 %v2593
        %2596 = vmatpush.xpose.msra.mxu0 %v2591
        %2597 = vmatpush.xpose.msra.mxu0 %v2589
        %2598 = vmatpush.xpose.msra.mxu0 %v2587
        %2599 = vmatpush.xpose.msra.mxu0 %v2585
        %2600 = vmatpush.xpose.msra.mxu0 %v2583
        %2601 = vmatpush.xpose.msra.mxu0 %v2581
        %2602 = vmatpush.xpose.msra.mxu0 %v2579
        %2603 = vmatpush.xpose.msra.mxu0 %v2577
        %2604 = vmatpush.xpose.msra.mxu0 %v2575
        %2605 = vmatpush.xpose.msra.mxu0 %v2573
        %2606 = vmatpush.xpose.msra.mxu0 %v2571
        %2607 = vmatpush.xpose.msra.mxu0 %v2569
        %2608 = vmatpush.xpose.msra.mxu0 %v2567
        %2609 = vmatpush.xpose.msra.mxu0 %v2565
        %2610 = vmatpush.xpose.msra.mxu0 %v2563
        %2611 = vmatmul.f32.gmra.mxu0 %v2531
        %v2612 = vpop.f32.mrf.mxu0
        %v2613 = vadd.f32 %v2451, %v2612
        %2614 = vmatmul.f32.gmra.mxu0 %v2533
        %v2615 = vpop.f32.mrf.mxu0
        %v2616 = vadd.f32 %v2452, %v2615
        %2617 = vmatmul.f32.gmra.mxu0 %v2535
        %v2618 = vpop.f32.mrf.mxu0
        %v2619 = vadd.f32 %v2453, %v2618
        %2620 = vmatmul.f32.gmra.mxu0 %v2537
        %v2621 = vpop.f32.mrf.mxu0
        %v2622 = vadd.f32 %v2454, %v2621
        %2623 = vmatmul.f32.gmra.mxu0 %v2539
        %v2624 = vpop.f32.mrf.mxu0
        %v2625 = vadd.f32 %v2455, %v2624
        %2626 = vmatmul.f32.gmra.mxu0 %v2541
        %v2627 = vpop.f32.mrf.mxu0
        %v2628 = vadd.f32 %v2456, %v2627
        %2629 = vmatmul.f32.gmra.mxu0 %v2543
        %v2630 = vpop.f32.mrf.mxu0
        %v2631 = vadd.f32 %v2457, %v2630
        %2632 = vmatmul.f32.gmra.mxu0 %v2545
        %v2633 = vpop.f32.mrf.mxu0
        %v2634 = vadd.f32 %v2458, %v2633
        %2635 = vmatmul.f32.gmra.mxu0 %v2547
        %v2636 = vpop.f32.mrf.mxu0
        %v2637 = vadd.f32 %v2459, %v2636
        %2638 = vmatmul.f32.gmra.mxu0 %v2549
        %v2639 = vpop.f32.mrf.mxu0
        %v2640 = vadd.f32 %v2460, %v2639
        %2641 = vmatmul.f32.gmra.mxu0 %v2551
        %v2642 = vpop.f32.mrf.mxu0
        %v2643 = vadd.f32 %v2461, %v2642
        %2644 = vmatmul.f32.gmra.mxu0 %v2553
        %v2645 = vpop.f32.mrf.mxu0
        %v2646 = vadd.f32 %v2462, %v2645
        %2647 = vmatmul.f32.gmra.mxu0 %v2555
        %v2648 = vpop.f32.mrf.mxu0
        %v2649 = vadd.f32 %v2463, %v2648
        %2650 = vmatmul.f32.gmra.mxu0 %v2557
        %v2651 = vpop.f32.mrf.mxu0
        %v2652 = vadd.f32 %v2464, %v2651
        %2653 = vmatmul.f32.gmra.mxu0 %v2559
        %v2654 = vpop.f32.mrf.mxu0
        %v2655 = vadd.f32 %v2465, %v2654
        %2656 = vmatmul.f32.gmra.mxu0 %v2561
        %v2657 = vpop.f32.mrf.mxu0
        %v2658 = vadd.f32 %v2466, %v2657
        %2659 = vdwg.mxu0
        %2660 = vmax.xlane.f32.xlu0 %v2613
        %v2661 = vpop.xlane.xlu0 %2660
        %2662 = vmax.xlane.f32.xlu0 %v2616
        %v2663 = vpop.xlane.xlu0 %2662
        %2664 = vmax.xlane.f32.xlu0 %v2619
        %v2665 = vpop.xlane.xlu0 %2664
        %2666 = vmax.xlane.f32.xlu0 %v2622
        %v2667 = vpop.xlane.xlu0 %2666
        %2668 = vmax.xlane.f32.xlu0 %v2625
        %v2669 = vpop.xlane.xlu0 %2668
        %2670 = vmax.xlane.f32.xlu0 %v2628
        %v2671 = vpop.xlane.xlu0 %2670
        %2672 = vmax.xlane.f32.xlu0 %v2631
        %v2673 = vpop.xlane.xlu0 %2672
        %2674 = vmax.xlane.f32.xlu0 %v2634
        %v2675 = vpop.xlane.xlu0 %2674
        %2676 = vmax.xlane.f32.xlu0 %v2637
        %v2677 = vpop.xlane.xlu0 %2676
        %2678 = vmax.xlane.f32.xlu0 %v2640
        %v2679 = vpop.xlane.xlu0 %2678
        %2680 = vmax.xlane.f32.xlu0 %v2643
        %v2681 = vpop.xlane.xlu0 %2680
        %2682 = vmax.xlane.f32.xlu0 %v2646
        %v2683 = vpop.xlane.xlu0 %2682
        %2684 = vmax.xlane.f32.xlu0 %v2649
        %v2685 = vpop.xlane.xlu0 %2684
        %2686 = vmax.xlane.f32.xlu0 %v2652
        %v2687 = vpop.xlane.xlu0 %2686
        %2688 = vmax.xlane.f32.xlu0 %v2655
        %v2689 = vpop.xlane.xlu0 %2688
        %2690 = vmax.xlane.f32.xlu0 %v2658
        %v2691 = vpop.xlane.xlu0 %2690
        %v2692 = vsub.f32 %v2613, %v2661
        %v2693 = vsub.f32 %v2616, %v2663
        %v2694 = vsub.f32 %v2619, %v2665
        %v2695 = vsub.f32 %v2622, %v2667
        %v2696 = vsub.f32 %v2625, %v2669
        %v2697 = vsub.f32 %v2628, %v2671
        %v2698 = vsub.f32 %v2631, %v2673
        %v2699 = vsub.f32 %v2634, %v2675
        %v2700 = vsub.f32 %v2637, %v2677
        %v2701 = vsub.f32 %v2640, %v2679
        %v2702 = vsub.f32 %v2643, %v2681
        %v2703 = vsub.f32 %v2646, %v2683
        %v2704 = vsub.f32 %v2649, %v2685
        %v2705 = vsub.f32 %v2652, %v2687
        %v2706 = vsub.f32 %v2655, %v2689
        %v2707 = vsub.f32 %v2658, %v2691
        %v2708 = vmul.f32 %v2692, 1.442695
        %v2709 = vpow.pop %v2708
        %v2710 = vmul.f32 %v2693, 1.442695
        %v2711 = vpow.pop %v2710
        %v2712 = vmul.f32 %v2694, 1.442695
        %v2713 = vpow.pop %v2712
        %v2714 = vmul.f32 %v2695, 1.442695
        %v2715 = vpow.pop %v2714
        %v2716 = vmul.f32 %v2696, 1.442695
        %v2717 = vpow.pop %v2716
        %v2718 = vmul.f32 %v2697, 1.442695
        %v2719 = vpow.pop %v2718
        %v2720 = vmul.f32 %v2698, 1.442695
        %v2721 = vpow.pop %v2720
        %v2722 = vmul.f32 %v2699, 1.442695
        %v2723 = vpow.pop %v2722
        %v2724 = vmul.f32 %v2700, 1.442695
        %v2725 = vpow.pop %v2724
        %v2726 = vmul.f32 %v2701, 1.442695
        %v2727 = vpow.pop %v2726
        %v2728 = vmul.f32 %v2702, 1.442695
        %v2729 = vpow.pop %v2728
        %v2730 = vmul.f32 %v2703, 1.442695
        %v2731 = vpow.pop %v2730
        %v2732 = vmul.f32 %v2704, 1.442695
        %v2733 = vpow.pop %v2732
        %v2734 = vmul.f32 %v2705, 1.442695
        %v2735 = vpow.pop %v2734
        %v2736 = vmul.f32 %v2706, 1.442695
        %v2737 = vpow.pop %v2736
        %v2738 = vmul.f32 %v2707, 1.442695
        %v2739 = vpow.pop %v2738
        %2740 = vadd.xlane.f32.xlu0 %v2709
        %v2741 = vpop.xlane.xlu0 %2740
        %2742 = vadd.xlane.f32.xlu0 %v2711
        %v2743 = vpop.xlane.xlu0 %2742
        %2744 = vadd.xlane.f32.xlu0 %v2713
        %v2745 = vpop.xlane.xlu0 %2744
        %2746 = vadd.xlane.f32.xlu0 %v2715
        %v2747 = vpop.xlane.xlu0 %2746
        %2748 = vadd.xlane.f32.xlu0 %v2717
        %v2749 = vpop.xlane.xlu0 %2748
        %2750 = vadd.xlane.f32.xlu0 %v2719
        %v2751 = vpop.xlane.xlu0 %2750
        %2752 = vadd.xlane.f32.xlu0 %v2721
        %v2753 = vpop.xlane.xlu0 %2752
        %2754 = vadd.xlane.f32.xlu0 %v2723
        %v2755 = vpop.xlane.xlu0 %2754
        %2756 = vadd.xlane.f32.xlu0 %v2725
        %v2757 = vpop.xlane.xlu0 %2756
        %2758 = vadd.xlane.f32.xlu0 %v2727
        %v2759 = vpop.xlane.xlu0 %2758
        %2760 = vadd.xlane.f32.xlu0 %v2729
        %v2761 = vpop.xlane.xlu0 %2760
        %2762 = vadd.xlane.f32.xlu0 %v2731
        %v2763 = vpop.xlane.xlu0 %2762
        %2764 = vadd.xlane.f32.xlu0 %v2733
        %v2765 = vpop.xlane.xlu0 %2764
        %2766 = vadd.xlane.f32.xlu0 %v2735
        %v2767 = vpop.xlane.xlu0 %2766
        %2768 = vadd.xlane.f32.xlu0 %v2737
        %v2769 = vpop.xlane.xlu0 %2768
        %2770 = vadd.xlane.f32.xlu0 %v2739
        %v2771 = vpop.xlane.xlu0 %2770
        %v2772 = vrcp.pop %v2741
        %v2773 = vrcp.pop %v2743
        %v2774 = vrcp.pop %v2745
        %v2775 = vrcp.pop %v2747
        %v2776 = vrcp.pop %v2749
        %v2777 = vrcp.pop %v2751
        %v2778 = vrcp.pop %v2753
        %v2779 = vrcp.pop %v2755
        %v2780 = vrcp.pop %v2757
        %v2781 = vrcp.pop %v2759
        %v2782 = vrcp.pop %v2761
        %v2783 = vrcp.pop %v2763
        %v2784 = vrcp.pop %v2765
        %v2785 = vrcp.pop %v2767
        %v2786 = vrcp.pop %v2769
        %v2787 = vrcp.pop %v2771
        %v2788 = vmul.f32 %v2709, %v2772
        %v2789 = vmul.f32 %v2711, %v2773
        %v2790 = vmul.f32 %v2713, %v2774
        %v2791 = vmul.f32 %v2715, %v2775
        %v2792 = vmul.f32 %v2717, %v2776
        %v2793 = vmul.f32 %v2719, %v2777
        %v2794 = vmul.f32 %v2721, %v2778
        %v2795 = vmul.f32 %v2723, %v2779
        %v2796 = vmul.f32 %v2725, %v2780
        %v2797 = vmul.f32 %v2727, %v2781
        %v2798 = vmul.f32 %v2729, %v2782
        %v2799 = vmul.f32 %v2731, %v2783
        %v2800 = vmul.f32 %v2733, %v2784
        %v2801 = vmul.f32 %v2735, %v2785
        %v2802 = vmul.f32 %v2737, %v2786
        %v2803 = vmul.f32 %v2739, %v2787
        %2804 = vrot.lane.b32.xlu0 %v599, 40
        %v2805 = vpop.permute.xlu0 %2804
        %2806 = vrot.lane.b32.xlu0 %v602, 40
        %v2807 = vpop.permute.xlu0 %2806
        %2808 = vrot.lane.b32.xlu0 %v605, 40
        %v2809 = vpop.permute.xlu0 %2808
        %2810 = vrot.lane.b32.xlu0 %v608, 40
        %v2811 = vpop.permute.xlu0 %2810
        %2812 = vrot.lane.b32.xlu0 %v611, 40
        %v2813 = vpop.permute.xlu0 %2812
        %2814 = vrot.lane.b32.xlu0 %v614, 40
        %v2815 = vpop.permute.xlu0 %2814
        %2816 = vrot.lane.b32.xlu0 %v617, 40
        %v2817 = vpop.permute.xlu0 %2816
        %2818 = vrot.lane.b32.xlu0 %v620, 40
        %v2819 = vpop.permute.xlu0 %2818
        %2820 = vrot.lane.b32.xlu0 %v623, 40
        %v2821 = vpop.permute.xlu0 %2820
        %2822 = vrot.lane.b32.xlu0 %v626, 40
        %v2823 = vpop.permute.xlu0 %2822
        %2824 = vrot.lane.b32.xlu0 %v629, 40
        %v2825 = vpop.permute.xlu0 %2824
        %2826 = vrot.lane.b32.xlu0 %v632, 40
        %v2827 = vpop.permute.xlu0 %2826
        %2828 = vrot.lane.b32.xlu0 %v635, 40
        %v2829 = vpop.permute.xlu0 %2828
        %2830 = vrot.lane.b32.xlu0 %v638, 40
        %v2831 = vpop.permute.xlu0 %2830
        %2832 = vrot.lane.b32.xlu0 %v641, 40
        %v2833 = vpop.permute.xlu0 %2832
        %2834 = vrot.lane.b32.xlu0 %v644, 40
        %v2835 = vpop.permute.xlu0 %2834
        %2852 = vmatpush.msra.mxu0 %v2835
        %2853 = vmatpush.msra.mxu0 %v2833
        %2854 = vmatpush.msra.mxu0 %v2831
        %2855 = vmatpush.msra.mxu0 %v2829
        %2856 = vmatpush.msra.mxu0 %v2827
        %2857 = vmatpush.msra.mxu0 %v2825
        %2858 = vmatpush.msra.mxu0 %v2823
        %2859 = vmatpush.msra.mxu0 %v2821
        %2860 = vmatpush.msra.mxu0 %v2819
        %2861 = vmatpush.msra.mxu0 %v2817
        %2862 = vmatpush.msra.mxu0 %v2815
        %2863 = vmatpush.msra.mxu0 %v2813
        %2864 = vmatpush.msra.mxu0 %v2811
        %2865 = vmatpush.msra.mxu0 %v2809
        %2866 = vmatpush.msra.mxu0 %v2807
        %2867 = vmatpush.msra.mxu0 %v2805
        %2868 = vmatmul.f32.gmra.mxu0 %v2788
        %v2869 = vpop.f32.mrf.mxu0
        %v2870 = vadd.f32 0.0, %v2869
        %2871 = vmatmul.f32.gmra.mxu0 %v2789
        %v2872 = vpop.f32.mrf.mxu0
        %v2873 = vadd.f32 0.0, %v2872
        %2874 = vmatmul.f32.gmra.mxu0 %v2790
        %v2875 = vpop.f32.mrf.mxu0
        %v2876 = vadd.f32 0.0, %v2875
        %2877 = vmatmul.f32.gmra.mxu0 %v2791
        %v2878 = vpop.f32.mrf.mxu0
        %v2879 = vadd.f32 0.0, %v2878
        %2880 = vmatmul.f32.gmra.mxu0 %v2792
        %v2881 = vpop.f32.mrf.mxu0
        %v2882 = vadd.f32 0.0, %v2881
        %2883 = vmatmul.f32.gmra.mxu0 %v2793
        %v2884 = vpop.f32.mrf.mxu0
        %v2885 = vadd.f32 0.0, %v2884
        %2886 = vmatmul.f32.gmra.mxu0 %v2794
        %v2887 = vpop.f32.mrf.mxu0
        %v2888 = vadd.f32 0.0, %v2887
        %2889 = vmatmul.f32.gmra.mxu0 %v2795
        %v2890 = vpop.f32.mrf.mxu0
        %v2891 = vadd.f32 0.0, %v2890
        %2892 = vmatmul.f32.gmra.mxu0 %v2796
        %v2893 = vpop.f32.mrf.mxu0
        %v2894 = vadd.f32 0.0, %v2893
        %2895 = vmatmul.f32.gmra.mxu0 %v2797
        %v2896 = vpop.f32.mrf.mxu0
        %v2897 = vadd.f32 0.0, %v2896
        %2898 = vmatmul.f32.gmra.mxu0 %v2798
        %v2899 = vpop.f32.mrf.mxu0
        %v2900 = vadd.f32 0.0, %v2899
        %2901 = vmatmul.f32.gmra.mxu0 %v2799
        %v2902 = vpop.f32.mrf.mxu0
        %v2903 = vadd.f32 0.0, %v2902
        %2904 = vmatmul.f32.gmra.mxu0 %v2800
        %v2905 = vpop.f32.mrf.mxu0
        %v2906 = vadd.f32 0.0, %v2905
        %2907 = vmatmul.f32.gmra.mxu0 %v2801
        %v2908 = vpop.f32.mrf.mxu0
        %v2909 = vadd.f32 0.0, %v2908
        %2910 = vmatmul.f32.gmra.mxu0 %v2802
        %v2911 = vpop.f32.mrf.mxu0
        %v2912 = vadd.f32 0.0, %v2911
        %2913 = vmatmul.f32.gmra.mxu0 %v2803
        %v2914 = vpop.f32.mrf.mxu0
        %v2915 = vadd.f32 0.0, %v2914
        %2916 = vdwg.mxu0
        %v2918 = vsel %vm726, %v2870, 0
        %v2921 = vsel %vm726, %v2873, 0
        %v2924 = vsel %vm726, %v2876, 0
        %v2927 = vsel %vm726, %v2879, 0
        %v2930 = vsel %vm726, %v2882, 0
        %v2933 = vsel %vm726, %v2885, 0
        %v2936 = vsel %vm726, %v2888, 0
        %v2939 = vsel %vm726, %v2891, 0
        %v2942 = vsel %vm726, %v2894, 0
        %v2945 = vsel %vm726, %v2897, 0
        %v2948 = vsel %vm726, %v2900, 0
        %v2951 = vsel %vm726, %v2903, 0
        %v2954 = vsel %vm726, %v2906, 0
        %v2957 = vsel %vm726, %v2909, 0
        %v2960 = vsel %vm726, %v2912, 0
        %v2963 = vsel %vm726, %v2915, 0
        %2965 = vmatpush.msra.mxu0 0.0
        %2966 = vmatpush.msra.mxu0 0.0
        %2967 = vmatpush.msra.mxu0 0.0
        %2968 = vmatpush.msra.mxu0 0.0
        %2969 = vmatpush.msra.mxu0 0.0
        %2970 = vmatpush.msra.mxu0 0.0
        %2971 = vmatpush.msra.mxu0 0.0
        %2972 = vmatpush.msra.mxu0 0.0
        %2973 = vmatpush.msra.mxu0 0.0
        %2974 = vmatpush.msra.mxu0 0.0
        %2975 = vmatpush.msra.mxu0 0.0
        %2976 = vmatpush.msra.mxu0 0.0
        %2977 = vmatpush.msra.mxu0 0.0
        %2978 = vmatpush.msra.mxu0 0.0
        %2979 = vmatpush.msra.mxu0 0.0
        %2980 = vmatpush.msra.mxu0 %v522
        %2981 = vmatmul.f32.gmra.mxu0 %v2918
        %v2982 = vpop.f32.mrf.mxu0
        %v2983 = vadd.f32 0.0, %v2982
        %2984 = vmatmul.f32.gmra.mxu0 %v2921
        %v2985 = vpop.f32.mrf.mxu0
        %v2986 = vadd.f32 0.0, %v2985
        %2987 = vmatmul.f32.gmra.mxu0 %v2924
        %v2988 = vpop.f32.mrf.mxu0
        %v2989 = vadd.f32 0.0, %v2988
        %2990 = vmatmul.f32.gmra.mxu0 %v2927
        %v2991 = vpop.f32.mrf.mxu0
        %v2992 = vadd.f32 0.0, %v2991
        %2993 = vmatmul.f32.gmra.mxu0 %v2930
        %v2994 = vpop.f32.mrf.mxu0
        %v2995 = vadd.f32 0.0, %v2994
        %2996 = vmatmul.f32.gmra.mxu0 %v2933
        %v2997 = vpop.f32.mrf.mxu0
        %v2998 = vadd.f32 0.0, %v2997
        %2999 = vmatmul.f32.gmra.mxu0 %v2936
        %v3000 = vpop.f32.mrf.mxu0
        %v3001 = vadd.f32 0.0, %v3000
        %3002 = vmatmul.f32.gmra.mxu0 %v2939
        %v3003 = vpop.f32.mrf.mxu0
        %v3004 = vadd.f32 0.0, %v3003
        %3005 = vmatmul.f32.gmra.mxu0 %v2942
        %v3006 = vpop.f32.mrf.mxu0
        %v3007 = vadd.f32 0.0, %v3006
        %3008 = vmatmul.f32.gmra.mxu0 %v2945
        %v3009 = vpop.f32.mrf.mxu0
        %v3010 = vadd.f32 0.0, %v3009
        %3011 = vmatmul.f32.gmra.mxu0 %v2948
        %v3012 = vpop.f32.mrf.mxu0
        %v3013 = vadd.f32 0.0, %v3012
        %3014 = vmatmul.f32.gmra.mxu0 %v2951
        %v3015 = vpop.f32.mrf.mxu0
        %v3016 = vadd.f32 0.0, %v3015
        %3017 = vmatmul.f32.gmra.mxu0 %v2954
        %v3018 = vpop.f32.mrf.mxu0
        %v3019 = vadd.f32 0.0, %v3018
        %3020 = vmatmul.f32.gmra.mxu0 %v2957
        %v3021 = vpop.f32.mrf.mxu0
        %v3022 = vadd.f32 0.0, %v3021
        %3023 = vmatmul.f32.gmra.mxu0 %v2960
        %v3024 = vpop.f32.mrf.mxu0
        %v3025 = vadd.f32 0.0, %v3024
        %3026 = vmatmul.f32.gmra.mxu0 %v2963
        %v3027 = vpop.f32.mrf.mxu0
        %v3028 = vadd.f32 0.0, %v3027
        %3029 = vdwg.mxu0
        %v3030 = vadd.f32 %v2418, %v2983
        %v3031 = vadd.f32 %v2419, %v2986
        %v3032 = vadd.f32 %v2420, %v2989
        %v3033 = vadd.f32 %v2421, %v2992
        %v3034 = vadd.f32 %v2422, %v2995
        %v3035 = vadd.f32 %v2423, %v2998
        %v3036 = vadd.f32 %v2424, %v3001
        %v3037 = vadd.f32 %v2425, %v3004
        %v3038 = vadd.f32 %v2426, %v3007
        %v3039 = vadd.f32 %v2427, %v3010
        %v3040 = vadd.f32 %v2428, %v3013
        %v3041 = vadd.f32 %v2429, %v3016
        %v3042 = vadd.f32 %v2430, %v3019
        %v3043 = vadd.f32 %v2431, %v3022
        %v3044 = vadd.f32 %v2432, %v3025
        %v3045 = vadd.f32 %v2433, %v3028
        %v3046 = vld [vmem:[#allocation6] sm:$0x1]
        %v3048 = vperm.slane %v3046, 0
        %v3050 = vadd.f32 %v3030, %v3048
        %v3051 = vadd.f32 %v3031, %v3048
        %v3052 = vadd.f32 %v3032, %v3048
        %v3053 = vadd.f32 %v3033, %v3048
        %v3054 = vadd.f32 %v3034, %v3048
        %v3055 = vadd.f32 %v3035, %v3048
        %v3056 = vadd.f32 %v3036, %v3048
        %v3057 = vadd.f32 %v3037, %v3048
        %v3058 = vadd.f32 %v3038, %v3048
        %v3059 = vadd.f32 %v3039, %v3048
        %v3060 = vadd.f32 %v3040, %v3048
        %v3061 = vadd.f32 %v3041, %v3048
        %v3062 = vadd.f32 %v3042, %v3048
        %v3063 = vadd.f32 %v3043, %v3048
        %v3064 = vadd.f32 %v3044, %v3048
        %v3065 = vadd.f32 %v3045, %v3048
        %v3066 = vsel %vm532, %v3050, 0.0
        %3067 = vadd.xlane.f32.xlu0 %v3066
        %v3068 = vpop.xlane.xlu0 %3067
        %v3069 = vsel %vm532, %v3051, 0.0
        %3070 = vadd.xlane.f32.xlu0 %v3069
        %v3071 = vpop.xlane.xlu0 %3070
        %v3072 = vsel %vm532, %v3052, 0.0
        %3073 = vadd.xlane.f32.xlu0 %v3072
        %v3074 = vpop.xlane.xlu0 %3073
        %v3075 = vsel %vm532, %v3053, 0.0
        %3076 = vadd.xlane.f32.xlu0 %v3075
        %v3077 = vpop.xlane.xlu0 %3076
        %v3078 = vsel %vm532, %v3054, 0.0
        %3079 = vadd.xlane.f32.xlu0 %v3078
        %v3080 = vpop.xlane.xlu0 %3079
        %v3081 = vsel %vm532, %v3055, 0.0
        %3082 = vadd.xlane.f32.xlu0 %v3081
        %v3083 = vpop.xlane.xlu0 %3082
        %v3084 = vsel %vm532, %v3056, 0.0
        %3085 = vadd.xlane.f32.xlu0 %v3084
        %v3086 = vpop.xlane.xlu0 %3085
        %v3087 = vsel %vm532, %v3057, 0.0
        %3088 = vadd.xlane.f32.xlu0 %v3087
        %v3089 = vpop.xlane.xlu0 %3088
        %v3090 = vsel %vm532, %v3058, 0.0
        %3091 = vadd.xlane.f32.xlu0 %v3090
        %v3092 = vpop.xlane.xlu0 %3091
        %v3093 = vsel %vm532, %v3059, 0.0
        %3094 = vadd.xlane.f32.xlu0 %v3093
        %v3095 = vpop.xlane.xlu0 %3094
        %v3096 = vsel %vm532, %v3060, 0.0
        %3097 = vadd.xlane.f32.xlu0 %v3096
        %v3098 = vpop.xlane.xlu0 %3097
        %v3099 = vsel %vm532, %v3061, 0.0
        %3100 = vadd.xlane.f32.xlu0 %v3099
        %v3101 = vpop.xlane.xlu0 %3100
        %v3102 = vsel %vm532, %v3062, 0.0
        %3103 = vadd.xlane.f32.xlu0 %v3102
        %v3104 = vpop.xlane.xlu0 %3103
        %v3105 = vsel %vm532, %v3063, 0.0
        %3106 = vadd.xlane.f32.xlu0 %v3105
        %v3107 = vpop.xlane.xlu0 %3106
        %v3108 = vsel %vm532, %v3064, 0.0
        %3109 = vadd.xlane.f32.xlu0 %v3108
        %v3110 = vpop.xlane.xlu0 %3109
        %v3111 = vsel %vm532, %v3065, 0.0
        %3112 = vadd.xlane.f32.xlu0 %v3111
        %v3113 = vpop.xlane.xlu0 %3112
        %v3114 = vrcp.pop 32.0
        %v3115 = vmul.f32 32.0, %v3114
        %v3116 = vsub.f32 1.0, %v3115
        %v3117 = vmul.f32 %v3114, %v3116
        %v3118 = vadd.f32 %v3114, %v3117
        %vm3119 = vweird.f32 %v3114
        %v3120 = vsel %vm3119, %v3114, %v3118
        %v3121 = vmul.f32 %v3068, %v3120
        %v3122 = vmul.f32 %v3071, %v3120
        %v3123 = vmul.f32 %v3074, %v3120
        %v3124 = vmul.f32 %v3077, %v3120
        %v3125 = vmul.f32 %v3080, %v3120
        %v3126 = vmul.f32 %v3083, %v3120
        %v3127 = vmul.f32 %v3086, %v3120
        %v3128 = vmul.f32 %v3089, %v3120
        %v3129 = vmul.f32 %v3092, %v3120
        %v3130 = vmul.f32 %v3095, %v3120
        %v3131 = vmul.f32 %v3098, %v3120
        %v3132 = vmul.f32 %v3101, %v3120
        %v3133 = vmul.f32 %v3104, %v3120
        %v3134 = vmul.f32 %v3107, %v3120
        %v3135 = vmul.f32 %v3110, %v3120
        %v3136 = vmul.f32 %v3113, %v3120
        %v3137 = vsub.f32 %v3050, %v3121
        %v3138 = vsub.f32 %v3051, %v3122
        %v3139 = vsub.f32 %v3052, %v3123
        %v3140 = vsub.f32 %v3053, %v3124
        %v3141 = vsub.f32 %v3054, %v3125
        %v3142 = vsub.f32 %v3055, %v3126
        %v3143 = vsub.f32 %v3056, %v3127
        %v3144 = vsub.f32 %v3057, %v3128
        %v3145 = vsub.f32 %v3058, %v3129
        %v3146 = vsub.f32 %v3059, %v3130
        %v3147 = vsub.f32 %v3060, %v3131
        %v3148 = vsub.f32 %v3061, %v3132
        %v3149 = vsub.f32 %v3062, %v3133
        %v3150 = vsub.f32 %v3063, %v3134
        %v3151 = vsub.f32 %v3064, %v3135
        %v3152 = vsub.f32 %v3065, %v3136
        %v3153 = vmul.f32 %v3137, %v3137
        %v3154 = vmul.f32 %v3138, %v3138
        %v3155 = vmul.f32 %v3139, %v3139
        %v3156 = vmul.f32 %v3140, %v3140
        %v3157 = vmul.f32 %v3141, %v3141
        %v3158 = vmul.f32 %v3142, %v3142
        %v3159 = vmul.f32 %v3143, %v3143
        %v3160 = vmul.f32 %v3144, %v3144
        %v3161 = vmul.f32 %v3145, %v3145
        %v3162 = vmul.f32 %v3146, %v3146
        %v3163 = vmul.f32 %v3147, %v3147
        %v3164 = vmul.f32 %v3148, %v3148
        %v3165 = vmul.f32 %v3149, %v3149
        %v3166 = vmul.f32 %v3150, %v3150
        %v3167 = vmul.f32 %v3151, %v3151
        %v3168 = vmul.f32 %v3152, %v3152
        %v3169 = vsel %vm532, %v3153, 0.0
        %3170 = vadd.xlane.f32.xlu0 %v3169
        %v3171 = vpop.xlane.xlu0 %3170
        %v3172 = vsel %vm532, %v3154, 0.0
        %3173 = vadd.xlane.f32.xlu0 %v3172
        %v3174 = vpop.xlane.xlu0 %3173
        %v3175 = vsel %vm532, %v3155, 0.0
        %3176 = vadd.xlane.f32.xlu0 %v3175
        %v3177 = vpop.xlane.xlu0 %3176
        %v3178 = vsel %vm532, %v3156, 0.0
        %3179 = vadd.xlane.f32.xlu0 %v3178
        %v3180 = vpop.xlane.xlu0 %3179
        %v3181 = vsel %vm532, %v3157, 0.0
        %3182 = vadd.xlane.f32.xlu0 %v3181
        %v3183 = vpop.xlane.xlu0 %3182
        %v3184 = vsel %vm532, %v3158, 0.0
        %3185 = vadd.xlane.f32.xlu0 %v3184
        %v3186 = vpop.xlane.xlu0 %3185
        %v3187 = vsel %vm532, %v3159, 0.0
        %3188 = vadd.xlane.f32.xlu0 %v3187
        %v3189 = vpop.xlane.xlu0 %3188
        %v3190 = vsel %vm532, %v3160, 0.0
        %3191 = vadd.xlane.f32.xlu0 %v3190
        %v3192 = vpop.xlane.xlu0 %3191
        %v3193 = vsel %vm532, %v3161, 0.0
        %3194 = vadd.xlane.f32.xlu0 %v3193
        %v3195 = vpop.xlane.xlu0 %3194
        %v3196 = vsel %vm532, %v3162, 0.0
        %3197 = vadd.xlane.f32.xlu0 %v3196
        %v3198 = vpop.xlane.xlu0 %3197
        %v3199 = vsel %vm532, %v3163, 0.0
        %3200 = vadd.xlane.f32.xlu0 %v3199
        %v3201 = vpop.xlane.xlu0 %3200
        %v3202 = vsel %vm532, %v3164, 0.0
        %3203 = vadd.xlane.f32.xlu0 %v3202
        %v3204 = vpop.xlane.xlu0 %3203
        %v3205 = vsel %vm532, %v3165, 0.0
        %3206 = vadd.xlane.f32.xlu0 %v3205
        %v3207 = vpop.xlane.xlu0 %3206
        %v3208 = vsel %vm532, %v3166, 0.0
        %3209 = vadd.xlane.f32.xlu0 %v3208
        %v3210 = vpop.xlane.xlu0 %3209
        %v3211 = vsel %vm532, %v3167, 0.0
        %3212 = vadd.xlane.f32.xlu0 %v3211
        %v3213 = vpop.xlane.xlu0 %3212
        %v3214 = vsel %vm532, %v3168, 0.0
        %3215 = vadd.xlane.f32.xlu0 %v3214
        %v3216 = vpop.xlane.xlu0 %3215
        %v3217 = vmul.f32 %v3171, %v3120
        %v3218 = vmul.f32 %v3174, %v3120
        %v3219 = vmul.f32 %v3177, %v3120
        %v3220 = vmul.f32 %v3180, %v3120
        %v3221 = vmul.f32 %v3183, %v3120
        %v3222 = vmul.f32 %v3186, %v3120
        %v3223 = vmul.f32 %v3189, %v3120
        %v3224 = vmul.f32 %v3192, %v3120
        %v3225 = vmul.f32 %v3195, %v3120
        %v3226 = vmul.f32 %v3198, %v3120
        %v3227 = vmul.f32 %v3201, %v3120
        %v3228 = vmul.f32 %v3204, %v3120
        %v3229 = vmul.f32 %v3207, %v3120
        %v3230 = vmul.f32 %v3210, %v3120
        %v3231 = vmul.f32 %v3213, %v3120
        %v3232 = vmul.f32 %v3216, %v3120
        %v3233 = vadd.f32 %v3217, 1e-05
        %v3234 = vadd.f32 %v3218, 1e-05
        %v3235 = vadd.f32 %v3219, 1e-05
        %v3236 = vadd.f32 %v3220, 1e-05
        %v3237 = vadd.f32 %v3221, 1e-05
        %v3238 = vadd.f32 %v3222, 1e-05
        %v3239 = vadd.f32 %v3223, 1e-05
        %v3240 = vadd.f32 %v3224, 1e-05
        %v3241 = vadd.f32 %v3225, 1e-05
        %v3242 = vadd.f32 %v3226, 1e-05
        %v3243 = vadd.f32 %v3227, 1e-05
        %v3244 = vadd.f32 %v3228, 1e-05
        %v3245 = vadd.f32 %v3229, 1e-05
        %v3246 = vadd.f32 %v3230, 1e-05
        %v3247 = vadd.f32 %v3231, 1e-05
        %v3248 = vadd.f32 %v3232, 1e-05
        %v3249 = vrsqrt.pop %v3233
        %v3250 = vmul.f32 %v3249, %v3233
        %v3251 = vmul.f32 %v3250, %v3249
        %v3252 = vmul.f32 0.5, %v3251
        %v3253 = vsub.f32 1.5, %v3252
        %v3254 = vmul.f32 %v3249, %v3253
        %vm3255 = vweird.f32 %v3233
        %vm3256 = vweird.f32 %v3249
        %vm3257 = vmor %vm3255, %vm3256
        %v3258 = vsel %vm3257, %v3249, %v3254
        %v3259 = vrsqrt.pop %v3234
        %v3260 = vmul.f32 %v3259, %v3234
        %v3261 = vmul.f32 %v3260, %v3259
        %v3262 = vmul.f32 0.5, %v3261
        %v3263 = vsub.f32 1.5, %v3262
        %v3264 = vmul.f32 %v3259, %v3263
        %vm3265 = vweird.f32 %v3234
        %vm3266 = vweird.f32 %v3259
        %vm3267 = vmor %vm3265, %vm3266
        %v3268 = vsel %vm3267, %v3259, %v3264
        %v3269 = vrsqrt.pop %v3235
        %v3270 = vmul.f32 %v3269, %v3235
        %v3271 = vmul.f32 %v3270, %v3269
        %v3272 = vmul.f32 0.5, %v3271
        %v3273 = vsub.f32 1.5, %v3272
        %v3274 = vmul.f32 %v3269, %v3273
        %vm3275 = vweird.f32 %v3235
        %vm3276 = vweird.f32 %v3269
        %vm3277 = vmor %vm3275, %vm3276
        %v3278 = vsel %vm3277, %v3269, %v3274
        %v3279 = vrsqrt.pop %v3236
        %v3280 = vmul.f32 %v3279, %v3236
        %v3281 = vmul.f32 %v3280, %v3279
        %v3282 = vmul.f32 0.5, %v3281
        %v3283 = vsub.f32 1.5, %v3282
        %v3284 = vmul.f32 %v3279, %v3283
        %vm3285 = vweird.f32 %v3236
        %vm3286 = vweird.f32 %v3279
        %vm3287 = vmor %vm3285, %vm3286
        %v3288 = vsel %vm3287, %v3279, %v3284
        %v3289 = vrsqrt.pop %v3237
        %v3290 = vmul.f32 %v3289, %v3237
        %v3291 = vmul.f32 %v3290, %v3289
        %v3292 = vmul.f32 0.5, %v3291
        %v3293 = vsub.f32 1.5, %v3292
        %v3294 = vmul.f32 %v3289, %v3293
        %vm3295 = vweird.f32 %v3237
        %vm3296 = vweird.f32 %v3289
        %vm3297 = vmor %vm3295, %vm3296
        %v3298 = vsel %vm3297, %v3289, %v3294
        %v3299 = vrsqrt.pop %v3238
        %v3300 = vmul.f32 %v3299, %v3238
        %v3301 = vmul.f32 %v3300, %v3299
        %v3302 = vmul.f32 0.5, %v3301
        %v3303 = vsub.f32 1.5, %v3302
        %v3304 = vmul.f32 %v3299, %v3303
        %vm3305 = vweird.f32 %v3238
        %vm3306 = vweird.f32 %v3299
        %vm3307 = vmor %vm3305, %vm3306
        %v3308 = vsel %vm3307, %v3299, %v3304
        %v3309 = vrsqrt.pop %v3239
        %v3310 = vmul.f32 %v3309, %v3239
        %v3311 = vmul.f32 %v3310, %v3309
        %v3312 = vmul.f32 0.5, %v3311
        %v3313 = vsub.f32 1.5, %v3312
        %v3314 = vmul.f32 %v3309, %v3313
        %vm3315 = vweird.f32 %v3239
        %vm3316 = vweird.f32 %v3309
        %vm3317 = vmor %vm3315, %vm3316
        %v3318 = vsel %vm3317, %v3309, %v3314
        %v3319 = vrsqrt.pop %v3240
        %v3320 = vmul.f32 %v3319, %v3240
        %v3321 = vmul.f32 %v3320, %v3319
        %v3322 = vmul.f32 0.5, %v3321
        %v3323 = vsub.f32 1.5, %v3322
        %v3324 = vmul.f32 %v3319, %v3323
        %vm3325 = vweird.f32 %v3240
        %vm3326 = vweird.f32 %v3319
        %vm3327 = vmor %vm3325, %vm3326
        %v3328 = vsel %vm3327, %v3319, %v3324
        %v3329 = vrsqrt.pop %v3241
        %v3330 = vmul.f32 %v3329, %v3241
        %v3331 = vmul.f32 %v3330, %v3329
        %v3332 = vmul.f32 0.5, %v3331
        %v3333 = vsub.f32 1.5, %v3332
        %v3334 = vmul.f32 %v3329, %v3333
        %vm3335 = vweird.f32 %v3241
        %vm3336 = vweird.f32 %v3329
        %vm3337 = vmor %vm3335, %vm3336
        %v3338 = vsel %vm3337, %v3329, %v3334
        %v3339 = vrsqrt.pop %v3242
        %v3340 = vmul.f32 %v3339, %v3242
        %v3341 = vmul.f32 %v3340, %v3339
        %v3342 = vmul.f32 0.5, %v3341
        %v3343 = vsub.f32 1.5, %v3342
        %v3344 = vmul.f32 %v3339, %v3343
        %vm3345 = vweird.f32 %v3242
        %vm3346 = vweird.f32 %v3339
        %vm3347 = vmor %vm3345, %vm3346
        %v3348 = vsel %vm3347, %v3339, %v3344
        %v3349 = vrsqrt.pop %v3243
        %v3350 = vmul.f32 %v3349, %v3243
        %v3351 = vmul.f32 %v3350, %v3349
        %v3352 = vmul.f32 0.5, %v3351
        %v3353 = vsub.f32 1.5, %v3352
        %v3354 = vmul.f32 %v3349, %v3353
        %vm3355 = vweird.f32 %v3243
        %vm3356 = vweird.f32 %v3349
        %vm3357 = vmor %vm3355, %vm3356
        %v3358 = vsel %vm3357, %v3349, %v3354
        %v3359 = vrsqrt.pop %v3244
        %v3360 = vmul.f32 %v3359, %v3244
        %v3361 = vmul.f32 %v3360, %v3359
        %v3362 = vmul.f32 0.5, %v3361
        %v3363 = vsub.f32 1.5, %v3362
        %v3364 = vmul.f32 %v3359, %v3363
        %vm3365 = vweird.f32 %v3244
        %vm3366 = vweird.f32 %v3359
        %vm3367 = vmor %vm3365, %vm3366
        %v3368 = vsel %vm3367, %v3359, %v3364
        %v3369 = vrsqrt.pop %v3245
        %v3370 = vmul.f32 %v3369, %v3245
        %v3371 = vmul.f32 %v3370, %v3369
        %v3372 = vmul.f32 0.5, %v3371
        %v3373 = vsub.f32 1.5, %v3372
        %v3374 = vmul.f32 %v3369, %v3373
        %vm3375 = vweird.f32 %v3245
        %vm3376 = vweird.f32 %v3369
        %vm3377 = vmor %vm3375, %vm3376
        %v3378 = vsel %vm3377, %v3369, %v3374
        %v3379 = vrsqrt.pop %v3246
        %v3380 = vmul.f32 %v3379, %v3246
        %v3381 = vmul.f32 %v3380, %v3379
        %v3382 = vmul.f32 0.5, %v3381
        %v3383 = vsub.f32 1.5, %v3382
        %v3384 = vmul.f32 %v3379, %v3383
        %vm3385 = vweird.f32 %v3246
        %vm3386 = vweird.f32 %v3379
        %vm3387 = vmor %vm3385, %vm3386
        %v3388 = vsel %vm3387, %v3379, %v3384
        %v3389 = vrsqrt.pop %v3247
        %v3390 = vmul.f32 %v3389, %v3247
        %v3391 = vmul.f32 %v3390, %v3389
        %v3392 = vmul.f32 0.5, %v3391
        %v3393 = vsub.f32 1.5, %v3392
        %v3394 = vmul.f32 %v3389, %v3393
        %vm3395 = vweird.f32 %v3247
        %vm3396 = vweird.f32 %v3389
        %vm3397 = vmor %vm3395, %vm3396
        %v3398 = vsel %vm3397, %v3389, %v3394
        %v3399 = vrsqrt.pop %v3248
        %v3400 = vmul.f32 %v3399, %v3248
        %v3401 = vmul.f32 %v3400, %v3399
        %v3402 = vmul.f32 0.5, %v3401
        %v3403 = vsub.f32 1.5, %v3402
        %v3404 = vmul.f32 %v3399, %v3403
        %vm3405 = vweird.f32 %v3248
        %vm3406 = vweird.f32 %v3399
        %vm3407 = vmor %vm3405, %vm3406
        %v3408 = vsel %vm3407, %v3399, %v3404
        %v3409 = vmul.f32 %v3137, %v3258
        %v3410 = vmul.f32 %v3138, %v3268
        %v3411 = vmul.f32 %v3139, %v3278
        %v3412 = vmul.f32 %v3140, %v3288
        %v3413 = vmul.f32 %v3141, %v3298
        %v3414 = vmul.f32 %v3142, %v3308
        %v3415 = vmul.f32 %v3143, %v3318
        %v3416 = vmul.f32 %v3144, %v3328
        %v3417 = vmul.f32 %v3145, %v3338
        %v3418 = vmul.f32 %v3146, %v3348
        %v3419 = vmul.f32 %v3147, %v3358
        %v3420 = vmul.f32 %v3148, %v3368
        %v3421 = vmul.f32 %v3149, %v3378
        %v3422 = vmul.f32 %v3150, %v3388
        %v3423 = vmul.f32 %v3151, %v3398
        %v3424 = vmul.f32 %v3152, %v3408
        %v3425 = vperm.slane %v523, 0
        %v3426 = vmul.f32 %v3409, %v3425
        %v3427 = vmul.f32 %v3410, %v3425
        %v3428 = vmul.f32 %v3411, %v3425
        %v3429 = vmul.f32 %v3412, %v3425
        %v3430 = vmul.f32 %v3413, %v3425
        %v3431 = vmul.f32 %v3414, %v3425
        %v3432 = vmul.f32 %v3415, %v3425
        %v3433 = vmul.f32 %v3416, %v3425
        %v3434 = vmul.f32 %v3417, %v3425
        %v3435 = vmul.f32 %v3418, %v3425
        %v3436 = vmul.f32 %v3419, %v3425
        %v3437 = vmul.f32 %v3420, %v3425
        %v3438 = vmul.f32 %v3421, %v3425
        %v3439 = vmul.f32 %v3422, %v3425
        %v3440 = vmul.f32 %v3423, %v3425
        %v3441 = vmul.f32 %v3424, %v3425
        %v3442 = vperm.slane %v523, 1
        %v3443 = vadd.f32 %v3426, %v3442
        %v3444 = vadd.f32 %v3427, %v3442
        %v3445 = vadd.f32 %v3428, %v3442
        %v3446 = vadd.f32 %v3429, %v3442
        %v3447 = vadd.f32 %v3430, %v3442
        %v3448 = vadd.f32 %v3431, %v3442
        %v3449 = vadd.f32 %v3432, %v3442
        %v3450 = vadd.f32 %v3433, %v3442
        %v3451 = vadd.f32 %v3434, %v3442
        %v3452 = vadd.f32 %v3435, %v3442
        %v3453 = vadd.f32 %v3436, %v3442
        %v3454 = vadd.f32 %v3437, %v3442
        %v3455 = vadd.f32 %v3438, %v3442
        %v3456 = vadd.f32 %v3439, %v3442
        %v3457 = vadd.f32 %v3440, %v3442
        %v3458 = vadd.f32 %v3441, %v3442
        %v3459 = vadd.f32 %v503, %v3443
        %v3460 = vadd.f32 %v504, %v3444
        %v3461 = vadd.f32 %v505, %v3445
        %v3462 = vadd.f32 %v506, %v3446
        %v3463 = vadd.f32 %v507, %v3447
        %v3464 = vadd.f32 %v508, %v3448
        %v3465 = vadd.f32 %v509, %v3449
        %v3466 = vadd.f32 %v510, %v3450
        %v3467 = vadd.f32 %v511, %v3451
        %v3468 = vadd.f32 %v512, %v3452
        %v3469 = vadd.f32 %v513, %v3453
        %v3470 = vadd.f32 %v514, %v3454
        %v3471 = vadd.f32 %v515, %v3455
        %v3472 = vadd.f32 %v516, %v3456
        %v3473 = vadd.f32 %v517, %v3457
        %v3474 = vadd.f32 %v518, %v3458
        %v3475 = vld [vmem:[#allocation7] sm:$0xff]
        %v3476 = vld [vmem:[#allocation7 + $0x8] sm:$0xff]
        %v3477 = vld [vmem:[#allocation7 + $0x10] sm:$0xff]
        %v3478 = vld [vmem:[#allocation7 + $0x18] sm:$0xff]
        %v3479 = vld [vmem:[#allocation9] sm:$0x1]
        %v3481 = vperm.slane %v3479, 0
        %v3484 = vsel %vm532, %v3459, 0
        %v3487 = vsel %vm532, %v3460, 0
        %v3490 = vsel %vm532, %v3461, 0
        %v3493 = vsel %vm532, %v3462, 0
        %v3496 = vsel %vm532, %v3463, 0
        %v3499 = vsel %vm532, %v3464, 0
        %v3502 = vsel %vm532, %v3465, 0
        %v3505 = vsel %vm532, %v3466, 0
        %v3508 = vsel %vm532, %v3467, 0
        %v3511 = vsel %vm532, %v3468, 0
        %v3514 = vsel %vm532, %v3469, 0
        %v3517 = vsel %vm532, %v3470, 0
        %v3520 = vsel %vm532, %v3471, 0
        %v3523 = vsel %vm532, %v3472, 0
        %v3526 = vsel %vm532, %v3473, 0
        %v3529 = vsel %vm532, %v3474, 0
        %3531 = vmatpush.msra.mxu0 0.0
        %3532 = vmatpush.msra.mxu0 0.0
        %3533 = vmatpush.msra.mxu0 0.0
        %3534 = vmatpush.msra.mxu0 0.0
        %3535 = vmatpush.msra.mxu0 0.0
        %3536 = vmatpush.msra.mxu0 0.0
        %3537 = vmatpush.msra.mxu0 0.0
        %3538 = vmatpush.msra.mxu0 0.0
        %3539 = vmatpush.msra.mxu0 0.0
        %3540 = vmatpush.msra.mxu0 0.0
        %3541 = vmatpush.msra.mxu0 0.0
        %3542 = vmatpush.msra.mxu0 0.0
        %3543 = vmatpush.msra.mxu0 %v3478
        %3544 = vmatpush.msra.mxu0 %v3477
        %3545 = vmatpush.msra.mxu0 %v3476
        %3546 = vmatpush.msra.mxu0 %v3475
        %3547 = vmatmul.f32.gmra.mxu0 %v3484
        %v3548 = vpop.f32.mrf.mxu0
        %v3549 = vadd.f32 %v3481, %v3548
        %3550 = vmatmul.f32.gmra.mxu0 %v3487
        %v3551 = vpop.f32.mrf.mxu0
        %v3552 = vadd.f32 %v3481, %v3551
        %3553 = vmatmul.f32.gmra.mxu0 %v3490
        %v3554 = vpop.f32.mrf.mxu0
        %v3555 = vadd.f32 %v3481, %v3554
        %3556 = vmatmul.f32.gmra.mxu0 %v3493
        %v3557 = vpop.f32.mrf.mxu0
        %v3558 = vadd.f32 %v3481, %v3557
        %3559 = vmatmul.f32.gmra.mxu0 %v3496
        %v3560 = vpop.f32.mrf.mxu0
        %v3561 = vadd.f32 %v3481, %v3560
        %3562 = vmatmul.f32.gmra.mxu0 %v3499
        %v3563 = vpop.f32.mrf.mxu0
        %v3564 = vadd.f32 %v3481, %v3563
        %3565 = vmatmul.f32.gmra.mxu0 %v3502
        %v3566 = vpop.f32.mrf.mxu0
        %v3567 = vadd.f32 %v3481, %v3566
        %3568 = vmatmul.f32.gmra.mxu0 %v3505
        %v3569 = vpop.f32.mrf.mxu0
        %v3570 = vadd.f32 %v3481, %v3569
        %3571 = vmatmul.f32.gmra.mxu0 %v3508
        %v3572 = vpop.f32.mrf.mxu0
        %v3573 = vadd.f32 %v3481, %v3572
        %3574 = vmatmul.f32.gmra.mxu0 %v3511
        %v3575 = vpop.f32.mrf.mxu0
        %v3576 = vadd.f32 %v3481, %v3575
        %3577 = vmatmul.f32.gmra.mxu0 %v3514
        %v3578 = vpop.f32.mrf.mxu0
        %v3579 = vadd.f32 %v3481, %v3578
        %3580 = vmatmul.f32.gmra.mxu0 %v3517
        %v3581 = vpop.f32.mrf.mxu0
        %v3582 = vadd.f32 %v3481, %v3581
        %3583 = vmatmul.f32.gmra.mxu0 %v3520
        %v3584 = vpop.f32.mrf.mxu0
        %v3585 = vadd.f32 %v3481, %v3584
        %3586 = vmatmul.f32.gmra.mxu0 %v3523
        %v3587 = vpop.f32.mrf.mxu0
        %v3588 = vadd.f32 %v3481, %v3587
        %3589 = vmatmul.f32.gmra.mxu0 %v3526
        %v3590 = vpop.f32.mrf.mxu0
        %v3591 = vadd.f32 %v3481, %v3590
        %3592 = vmatmul.f32.gmra.mxu0 %v3529
        %v3593 = vpop.f32.mrf.mxu0
        %v3594 = vadd.f32 %v3481, %v3593
        %3595 = vdwg.mxu0
        %v3596 = vmul.f32 %v3549, 0.5
        %v3597 = vmul.f32 %v3552, 0.5
        %v3598 = vmul.f32 %v3555, 0.5
        %v3599 = vmul.f32 %v3558, 0.5
        %v3600 = vmul.f32 %v3561, 0.5
        %v3601 = vmul.f32 %v3564, 0.5
        %v3602 = vmul.f32 %v3567, 0.5
        %v3603 = vmul.f32 %v3570, 0.5
        %v3604 = vmul.f32 %v3573, 0.5
        %v3605 = vmul.f32 %v3576, 0.5
        %v3606 = vmul.f32 %v3579, 0.5
        %v3607 = vmul.f32 %v3582, 0.5
        %v3608 = vmul.f32 %v3585, 0.5
        %v3609 = vmul.f32 %v3588, 0.5
        %v3610 = vmul.f32 %v3591, 0.5
        %v3611 = vmul.f32 %v3594, 0.5
        %v3612 = vmul.f32 %v3549, 0.044715
        %v3613 = vmul.f32 %v3552, 0.044715
        %v3614 = vmul.f32 %v3555, 0.044715
        %v3615 = vmul.f32 %v3558, 0.044715
        %v3616 = vmul.f32 %v3561, 0.044715
        %v3617 = vmul.f32 %v3564, 0.044715
        %v3618 = vmul.f32 %v3567, 0.044715
        %v3619 = vmul.f32 %v3570, 0.044715
        %v3620 = vmul.f32 %v3573, 0.044715
        %v3621 = vmul.f32 %v3576, 0.044715
        %v3622 = vmul.f32 %v3579, 0.044715
        %v3623 = vmul.f32 %v3582, 0.044715
        %v3624 = vmul.f32 %v3585, 0.044715
        %v3625 = vmul.f32 %v3588, 0.044715
        %v3626 = vmul.f32 %v3591, 0.044715
        %v3627 = vmul.f32 %v3594, 0.044715
        %v3628 = vmul.f32 %v3612, %v3549
        %v3629 = vmul.f32 %v3613, %v3552
        %v3630 = vmul.f32 %v3614, %v3555
        %v3631 = vmul.f32 %v3615, %v3558
        %v3632 = vmul.f32 %v3616, %v3561
        %v3633 = vmul.f32 %v3617, %v3564
        %v3634 = vmul.f32 %v3618, %v3567
        %v3635 = vmul.f32 %v3619, %v3570
        %v3636 = vmul.f32 %v3620, %v3573
        %v3637 = vmul.f32 %v3621, %v3576
        %v3638 = vmul.f32 %v3622, %v3579
        %v3639 = vmul.f32 %v3623, %v3582
        %v3640 = vmul.f32 %v3624, %v3585
        %v3641 = vmul.f32 %v3625, %v3588
        %v3642 = vmul.f32 %v3626, %v3591
        %v3643 = vmul.f32 %v3627, %v3594
        %v3644 = vmul.f32 %v3628, %v3549
        %v3645 = vmul.f32 %v3629, %v3552
        %v3646 = vmul.f32 %v3630, %v3555
        %v3647 = vmul.f32 %v3631, %v3558
        %v3648 = vmul.f32 %v3632, %v3561
        %v3649 = vmul.f32 %v3633, %v3564
        %v3650 = vmul.f32 %v3634, %v3567
        %v3651 = vmul.f32 %v3635, %v3570
        %v3652 = vmul.f32 %v3636, %v3573
        %v3653 = vmul.f32 %v3637, %v3576
        %v3654 = vmul.f32 %v3638, %v3579
        %v3655 = vmul.f32 %v3639, %v3582
        %v3656 = vmul.f32 %v3640, %v3585
        %v3657 = vmul.f32 %v3641, %v3588
        %v3658 = vmul.f32 %v3642, %v3591
        %v3659 = vmul.f32 %v3643, %v3594
        %v3660 = vadd.f32 %v3549, %v3644
        %v3661 = vadd.f32 %v3552, %v3645
        %v3662 = vadd.f32 %v3555, %v3646
        %v3663 = vadd.f32 %v3558, %v3647
        %v3664 = vadd.f32 %v3561, %v3648
        %v3665 = vadd.f32 %v3564, %v3649
        %v3666 = vadd.f32 %v3567, %v3650
        %v3667 = vadd.f32 %v3570, %v3651
        %v3668 = vadd.f32 %v3573, %v3652
        %v3669 = vadd.f32 %v3576, %v3653
        %v3670 = vadd.f32 %v3579, %v3654
        %v3671 = vadd.f32 %v3582, %v3655
        %v3672 = vadd.f32 %v3585, %v3656
        %v3673 = vadd.f32 %v3588, %v3657
        %v3674 = vadd.f32 %v3591, %v3658
        %v3675 = vadd.f32 %v3594, %v3659
        %v3676 = vmul.f32 %v3660, 0.7978846
        %v3677 = vmul.f32 %v3661, 0.7978846
        %v3678 = vmul.f32 %v3662, 0.7978846
        %v3679 = vmul.f32 %v3663, 0.7978846
        %v3680 = vmul.f32 %v3664, 0.7978846
        %v3681 = vmul.f32 %v3665, 0.7978846
        %v3682 = vmul.f32 %v3666, 0.7978846
        %v3683 = vmul.f32 %v3667, 0.7978846
        %v3684 = vmul.f32 %v3668, 0.7978846
        %v3685 = vmul.f32 %v3669, 0.7978846
        %v3686 = vmul.f32 %v3670, 0.7978846
        %v3687 = vmul.f32 %v3671, 0.7978846
        %v3688 = vmul.f32 %v3672, 0.7978846
        %v3689 = vmul.f32 %v3673, 0.7978846
        %v3690 = vmul.f32 %v3674, 0.7978846
        %v3691 = vmul.f32 %v3675, 0.7978846
        %v3692 = vtanh.pop %v3676
        %v3693 = vtanh.pop %v3677
        %v3694 = vtanh.pop %v3678
        %v3695 = vtanh.pop %v3679
        %v3696 = vtanh.pop %v3680
        %v3697 = vtanh.pop %v3681
        %v3698 = vtanh.pop %v3682
        %v3699 = vtanh.pop %v3683
        %v3700 = vtanh.pop %v3684
        %v3701 = vtanh.pop %v3685
        %v3702 = vtanh.pop %v3686
        %v3703 = vtanh.pop %v3687
        %v3704 = vtanh.pop %v3688
        %v3705 = vtanh.pop %v3689
        %v3706 = vtanh.pop %v3690
        %v3707 = vtanh.pop %v3691
        %v3708 = vadd.f32 %v3692, 1.0
        %v3709 = vadd.f32 %v3693, 1.0
        %v3710 = vadd.f32 %v3694, 1.0
        %v3711 = vadd.f32 %v3695, 1.0
        %v3712 = vadd.f32 %v3696, 1.0
        %v3713 = vadd.f32 %v3697, 1.0
        %v3714 = vadd.f32 %v3698, 1.0
        %v3715 = vadd.f32 %v3699, 1.0
        %v3716 = vadd.f32 %v3700, 1.0
        %v3717 = vadd.f32 %v3701, 1.0
        %v3718 = vadd.f32 %v3702, 1.0
        %v3719 = vadd.f32 %v3703, 1.0
        %v3720 = vadd.f32 %v3704, 1.0
        %v3721 = vadd.f32 %v3705, 1.0
        %v3722 = vadd.f32 %v3706, 1.0
        %v3723 = vadd.f32 %v3707, 1.0
        %v3724 = vmul.f32 %v3596, %v3708
        %v3725 = vmul.f32 %v3597, %v3709
        %v3726 = vmul.f32 %v3598, %v3710
        %v3727 = vmul.f32 %v3599, %v3711
        %v3728 = vmul.f32 %v3600, %v3712
        %v3729 = vmul.f32 %v3601, %v3713
        %v3730 = vmul.f32 %v3602, %v3714
        %v3731 = vmul.f32 %v3603, %v3715
        %v3732 = vmul.f32 %v3604, %v3716
        %v3733 = vmul.f32 %v3605, %v3717
        %v3734 = vmul.f32 %v3606, %v3718
        %v3735 = vmul.f32 %v3607, %v3719
        %v3736 = vmul.f32 %v3608, %v3720
        %v3737 = vmul.f32 %v3609, %v3721
        %v3738 = vmul.f32 %v3610, %v3722
        %v3739 = vmul.f32 %v3611, %v3723
        %v3740 = vld [vmem:[%s8] sm:$0xff]
        %v3741 = vld [vmem:[%s8 + $0x8] sm:$0xff]
        %v3742 = vld [vmem:[%s8 + $0x10] sm:$0xff]
        %v3743 = vld [vmem:[%s8 + $0x18] sm:$0xff]
        %v3744 = vld [vmem:[%s8 + $0x20] sm:$0xff]
        %v3745 = vld [vmem:[%s8 + $0x28] sm:$0xff]
        %v3746 = vld [vmem:[%s8 + $0x30] sm:$0xff]
        %v3747 = vld [vmem:[%s8 + $0x38] sm:$0xff]
        %v3748 = vld [vmem:[%s8 + $0x40] sm:$0xff]
        %v3749 = vld [vmem:[%s8 + $0x48] sm:$0xff]
        %v3750 = vld [vmem:[%s8 + $0x50] sm:$0xff]
        %v3751 = vld [vmem:[%s8 + $0x58] sm:$0xff]
        %v3752 = vld [vmem:[%s8 + $0x60] sm:$0xff]
        %v3753 = vld [vmem:[%s8 + $0x68] sm:$0xff]
        %v3754 = vld [vmem:[%s8 + $0x70] sm:$0xff]
        %v3755 = vld [vmem:[%s8 + $0x78] sm:$0xff]
        %v3756 = vld [vmem:[#allocation10] sm:$0x1]
        %v3758 = vperm.slane %v3756, 0
        %3760 = vmatpush.msra.mxu0 %v3755
        %3761 = vmatpush.msra.mxu0 %v3754
        %3762 = vmatpush.msra.mxu0 %v3753
        %3763 = vmatpush.msra.mxu0 %v3752
        %3764 = vmatpush.msra.mxu0 %v3751
        %3765 = vmatpush.msra.mxu0 %v3750
        %3766 = vmatpush.msra.mxu0 %v3749
        %3767 = vmatpush.msra.mxu0 %v3748
        %3768 = vmatpush.msra.mxu0 %v3747
        %3769 = vmatpush.msra.mxu0 %v3746
        %3770 = vmatpush.msra.mxu0 %v3745
        %3771 = vmatpush.msra.mxu0 %v3744
        %3772 = vmatpush.msra.mxu0 %v3743
        %3773 = vmatpush.msra.mxu0 %v3742
        %3774 = vmatpush.msra.mxu0 %v3741
        %3775 = vmatpush.msra.mxu0 %v3740
        %3776 = vmatmul.f32.gmra.mxu0 %v3724
        %v3777 = vpop.f32.mrf.mxu0
        %v3778 = vadd.f32 %v3758, %v3777
        %3779 = vmatmul.f32.gmra.mxu0 %v3725
        %v3780 = vpop.f32.mrf.mxu0
        %v3781 = vadd.f32 %v3758, %v3780
        %3782 = vmatmul.f32.gmra.mxu0 %v3726
        %v3783 = vpop.f32.mrf.mxu0
        %v3784 = vadd.f32 %v3758, %v3783
        %3785 = vmatmul.f32.gmra.mxu0 %v3727
        %v3786 = vpop.f32.mrf.mxu0
        %v3787 = vadd.f32 %v3758, %v3786
        %3788 = vmatmul.f32.gmra.mxu0 %v3728
        %v3789 = vpop.f32.mrf.mxu0
        %v3790 = vadd.f32 %v3758, %v3789
        %3791 = vmatmul.f32.gmra.mxu0 %v3729
        %v3792 = vpop.f32.mrf.mxu0
        %v3793 = vadd.f32 %v3758, %v3792
        %3794 = vmatmul.f32.gmra.mxu0 %v3730
        %v3795 = vpop.f32.mrf.mxu0
        %v3796 = vadd.f32 %v3758, %v3795
        %3797 = vmatmul.f32.gmra.mxu0 %v3731
        %v3798 = vpop.f32.mrf.mxu0
        %v3799 = vadd.f32 %v3758, %v3798
        %3800 = vmatmul.f32.gmra.mxu0 %v3732
        %v3801 = vpop.f32.mrf.mxu0
        %v3802 = vadd.f32 %v3758, %v3801
        %3803 = vmatmul.f32.gmra.mxu0 %v3733
        %v3804 = vpop.f32.mrf.mxu0
        %v3805 = vadd.f32 %v3758, %v3804
        %3806 = vmatmul.f32.gmra.mxu0 %v3734
        %v3807 = vpop.f32.mrf.mxu0
        %v3808 = vadd.f32 %v3758, %v3807
        %3809 = vmatmul.f32.gmra.mxu0 %v3735
        %v3810 = vpop.f32.mrf.mxu0
        %v3811 = vadd.f32 %v3758, %v3810
        %3812 = vmatmul.f32.gmra.mxu0 %v3736
        %v3813 = vpop.f32.mrf.mxu0
        %v3814 = vadd.f32 %v3758, %v3813
        %3815 = vmatmul.f32.gmra.mxu0 %v3737
        %v3816 = vpop.f32.mrf.mxu0
        %v3817 = vadd.f32 %v3758, %v3816
        %3818 = vmatmul.f32.gmra.mxu0 %v3738
        %v3819 = vpop.f32.mrf.mxu0
        %v3820 = vadd.f32 %v3758, %v3819
        %3821 = vmatmul.f32.gmra.mxu0 %v3739
        %v3822 = vpop.f32.mrf.mxu0
        %v3823 = vadd.f32 %v3758, %v3822
        %3824 = vdwg.mxu0
        %v3825 = vsel %vm532, %v3778, 0.0
        %3826 = vadd.xlane.f32.xlu0 %v3825
        %v3827 = vpop.xlane.xlu0 %3826
        %v3828 = vsel %vm532, %v3781, 0.0
        %3829 = vadd.xlane.f32.xlu0 %v3828
        %v3830 = vpop.xlane.xlu0 %3829
        %v3831 = vsel %vm532, %v3784, 0.0
        %3832 = vadd.xlane.f32.xlu0 %v3831
        %v3833 = vpop.xlane.xlu0 %3832
        %v3834 = vsel %vm532, %v3787, 0.0
        %3835 = vadd.xlane.f32.xlu0 %v3834
        %v3836 = vpop.xlane.xlu0 %3835
        %v3837 = vsel %vm532, %v3790, 0.0
        %3838 = vadd.xlane.f32.xlu0 %v3837
        %v3839 = vpop.xlane.xlu0 %3838
        %v3840 = vsel %vm532, %v3793, 0.0
        %3841 = vadd.xlane.f32.xlu0 %v3840
        %v3842 = vpop.xlane.xlu0 %3841
        %v3843 = vsel %vm532, %v3796, 0.0
        %3844 = vadd.xlane.f32.xlu0 %v3843
        %v3845 = vpop.xlane.xlu0 %3844
        %v3846 = vsel %vm532, %v3799, 0.0
        %3847 = vadd.xlane.f32.xlu0 %v3846
        %v3848 = vpop.xlane.xlu0 %3847
        %v3849 = vsel %vm532, %v3802, 0.0
        %3850 = vadd.xlane.f32.xlu0 %v3849
        %v3851 = vpop.xlane.xlu0 %3850
        %v3852 = vsel %vm532, %v3805, 0.0
        %3853 = vadd.xlane.f32.xlu0 %v3852
        %v3854 = vpop.xlane.xlu0 %3853
        %v3855 = vsel %vm532, %v3808, 0.0
        %3856 = vadd.xlane.f32.xlu0 %v3855
        %v3857 = vpop.xlane.xlu0 %3856
        %v3858 = vsel %vm532, %v3811, 0.0
        %3859 = vadd.xlane.f32.xlu0 %v3858
        %v3860 = vpop.xlane.xlu0 %3859
        %v3861 = vsel %vm532, %v3814, 0.0
        %3862 = vadd.xlane.f32.xlu0 %v3861
        %v3863 = vpop.xlane.xlu0 %3862
        %v3864 = vsel %vm532, %v3817, 0.0
        %3865 = vadd.xlane.f32.xlu0 %v3864
        %v3866 = vpop.xlane.xlu0 %3865
        %v3867 = vsel %vm532, %v3820, 0.0
        %3868 = vadd.xlane.f32.xlu0 %v3867
        %v3869 = vpop.xlane.xlu0 %3868
        %v3870 = vsel %vm532, %v3823, 0.0
        %3871 = vadd.xlane.f32.xlu0 %v3870
        %v3872 = vpop.xlane.xlu0 %3871
        %v3873 = vmul.f32 %v3827, %v3120
        %v3874 = vmul.f32 %v3830, %v3120
        %v3875 = vmul.f32 %v3833, %v3120
        %v3876 = vmul.f32 %v3836, %v3120
        %v3877 = vmul.f32 %v3839, %v3120
        %v3878 = vmul.f32 %v3842, %v3120
        %v3879 = vmul.f32 %v3845, %v3120
        %v3880 = vmul.f32 %v3848, %v3120
        %v3881 = vmul.f32 %v3851, %v3120
        %v3882 = vmul.f32 %v3854, %v3120
        %v3883 = vmul.f32 %v3857, %v3120
        %v3884 = vmul.f32 %v3860, %v3120
        %v3885 = vmul.f32 %v3863, %v3120
        %v3886 = vmul.f32 %v3866, %v3120
        %v3887 = vmul.f32 %v3869, %v3120
        %v3888 = vmul.f32 %v3872, %v3120
        %v3889 = vsub.f32 %v3778, %v3873
        %v3890 = vsub.f32 %v3781, %v3874
        %v3891 = vsub.f32 %v3784, %v3875
        %v3892 = vsub.f32 %v3787, %v3876
        %v3893 = vsub.f32 %v3790, %v3877
        %v3894 = vsub.f32 %v3793, %v3878
        %v3895 = vsub.f32 %v3796, %v3879
        %v3896 = vsub.f32 %v3799, %v3880
        %v3897 = vsub.f32 %v3802, %v3881
        %v3898 = vsub.f32 %v3805, %v3882
        %v3899 = vsub.f32 %v3808, %v3883
        %v3900 = vsub.f32 %v3811, %v3884
        %v3901 = vsub.f32 %v3814, %v3885
        %v3902 = vsub.f32 %v3817, %v3886
        %v3903 = vsub.f32 %v3820, %v3887
        %v3904 = vsub.f32 %v3823, %v3888
        %v3905 = vmul.f32 %v3889, %v3889
        %v3906 = vmul.f32 %v3890, %v3890
        %v3907 = vmul.f32 %v3891, %v3891
        %v3908 = vmul.f32 %v3892, %v3892
        %v3909 = vmul.f32 %v3893, %v3893
        %v3910 = vmul.f32 %v3894, %v3894
        %v3911 = vmul.f32 %v3895, %v3895
        %v3912 = vmul.f32 %v3896, %v3896
        %v3913 = vmul.f32 %v3897, %v3897
        %v3914 = vmul.f32 %v3898, %v3898
        %v3915 = vmul.f32 %v3899, %v3899
        %v3916 = vmul.f32 %v3900, %v3900
        %v3917 = vmul.f32 %v3901, %v3901
        %v3918 = vmul.f32 %v3902, %v3902
        %v3919 = vmul.f32 %v3903, %v3903
        %v3920 = vmul.f32 %v3904, %v3904
        %v3921 = vsel %vm532, %v3905, 0.0
        %3922 = vadd.xlane.f32.xlu0 %v3921
        %v3923 = vpop.xlane.xlu0 %3922
        %v3924 = vsel %vm532, %v3906, 0.0
        %3925 = vadd.xlane.f32.xlu0 %v3924
        %v3926 = vpop.xlane.xlu0 %3925
        %v3927 = vsel %vm532, %v3907, 0.0
        %3928 = vadd.xlane.f32.xlu0 %v3927
        %v3929 = vpop.xlane.xlu0 %3928
        %v3930 = vsel %vm532, %v3908, 0.0
        %3931 = vadd.xlane.f32.xlu0 %v3930
        %v3932 = vpop.xlane.xlu0 %3931
        %v3933 = vsel %vm532, %v3909, 0.0
        %3934 = vadd.xlane.f32.xlu0 %v3933
        %v3935 = vpop.xlane.xlu0 %3934
        %v3936 = vsel %vm532, %v3910, 0.0
        %3937 = vadd.xlane.f32.xlu0 %v3936
        %v3938 = vpop.xlane.xlu0 %3937
        %v3939 = vsel %vm532, %v3911, 0.0
        %3940 = vadd.xlane.f32.xlu0 %v3939
        %v3941 = vpop.xlane.xlu0 %3940
        %v3942 = vsel %vm532, %v3912, 0.0
        %3943 = vadd.xlane.f32.xlu0 %v3942
        %v3944 = vpop.xlane.xlu0 %3943
        %v3945 = vsel %vm532, %v3913, 0.0
        %3946 = vadd.xlane.f32.xlu0 %v3945
        %v3947 = vpop.xlane.xlu0 %3946
        %v3948 = vsel %vm532, %v3914, 0.0
        %3949 = vadd.xlane.f32.xlu0 %v3948
        %v3950 = vpop.xlane.xlu0 %3949
        %v3951 = vsel %vm532, %v3915, 0.0
        %3952 = vadd.xlane.f32.xlu0 %v3951
        %v3953 = vpop.xlane.xlu0 %3952
        %v3954 = vsel %vm532, %v3916, 0.0
        %3955 = vadd.xlane.f32.xlu0 %v3954
        %v3956 = vpop.xlane.xlu0 %3955
        %v3957 = vsel %vm532, %v3917, 0.0
        %3958 = vadd.xlane.f32.xlu0 %v3957
        %v3959 = vpop.xlane.xlu0 %3958
        %v3960 = vsel %vm532, %v3918, 0.0
        %3961 = vadd.xlane.f32.xlu0 %v3960
        %v3962 = vpop.xlane.xlu0 %3961
        %v3963 = vsel %vm532, %v3919, 0.0
        %3964 = vadd.xlane.f32.xlu0 %v3963
        %v3965 = vpop.xlane.xlu0 %3964
        %v3966 = vsel %vm532, %v3920, 0.0
        %3967 = vadd.xlane.f32.xlu0 %v3966
        %v3968 = vpop.xlane.xlu0 %3967
        %v3969 = vmul.f32 %v3923, %v3120
        %v3970 = vmul.f32 %v3926, %v3120
        %v3971 = vmul.f32 %v3929, %v3120
        %v3972 = vmul.f32 %v3932, %v3120
        %v3973 = vmul.f32 %v3935, %v3120
        %v3974 = vmul.f32 %v3938, %v3120
        %v3975 = vmul.f32 %v3941, %v3120
        %v3976 = vmul.f32 %v3944, %v3120
        %v3977 = vmul.f32 %v3947, %v3120
        %v3978 = vmul.f32 %v3950, %v3120
        %v3979 = vmul.f32 %v3953, %v3120
        %v3980 = vmul.f32 %v3956, %v3120
        %v3981 = vmul.f32 %v3959, %v3120
        %v3982 = vmul.f32 %v3962, %v3120
        %v3983 = vmul.f32 %v3965, %v3120
        %v3984 = vmul.f32 %v3968, %v3120
        %v3985 = vadd.f32 %v3969, 1e-05
        %v3986 = vadd.f32 %v3970, 1e-05
        %v3987 = vadd.f32 %v3971, 1e-05
        %v3988 = vadd.f32 %v3972, 1e-05
        %v3989 = vadd.f32 %v3973, 1e-05
        %v3990 = vadd.f32 %v3974, 1e-05
        %v3991 = vadd.f32 %v3975, 1e-05
        %v3992 = vadd.f32 %v3976, 1e-05
        %v3993 = vadd.f32 %v3977, 1e-05
        %v3994 = vadd.f32 %v3978, 1e-05
        %v3995 = vadd.f32 %v3979, 1e-05
        %v3996 = vadd.f32 %v3980, 1e-05
        %v3997 = vadd.f32 %v3981, 1e-05
        %v3998 = vadd.f32 %v3982, 1e-05
        %v3999 = vadd.f32 %v3983, 1e-05
        %v4000 = vadd.f32 %v3984, 1e-05
        %v4001 = vrsqrt.pop %v3985
        %v4002 = vmul.f32 %v4001, %v3985
        %v4003 = vmul.f32 %v4002, %v4001
        %v4004 = vmul.f32 0.5, %v4003
        %v4005 = vsub.f32 1.5, %v4004
        %v4006 = vmul.f32 %v4001, %v4005
        %vm4007 = vweird.f32 %v3985
        %vm4008 = vweird.f32 %v4001
        %vm4009 = vmor %vm4007, %vm4008
        %v4010 = vsel %vm4009, %v4001, %v4006
        %v4011 = vrsqrt.pop %v3986
        %v4012 = vmul.f32 %v4011, %v3986
        %v4013 = vmul.f32 %v4012, %v4011
        %v4014 = vmul.f32 0.5, %v4013
        %v4015 = vsub.f32 1.5, %v4014
        %v4016 = vmul.f32 %v4011, %v4015
        %vm4017 = vweird.f32 %v3986
        %vm4018 = vweird.f32 %v4011
        %vm4019 = vmor %vm4017, %vm4018
        %v4020 = vsel %vm4019, %v4011, %v4016
        %v4021 = vrsqrt.pop %v3987
        %v4022 = vmul.f32 %v4021, %v3987
        %v4023 = vmul.f32 %v4022, %v4021
        %v4024 = vmul.f32 0.5, %v4023
        %v4025 = vsub.f32 1.5, %v4024
        %v4026 = vmul.f32 %v4021, %v4025
        %vm4027 = vweird.f32 %v3987
        %vm4028 = vweird.f32 %v4021
        %vm4029 = vmor %vm4027, %vm4028
        %v4030 = vsel %vm4029, %v4021, %v4026
        %v4031 = vrsqrt.pop %v3988
        %v4032 = vmul.f32 %v4031, %v3988
        %v4033 = vmul.f32 %v4032, %v4031
        %v4034 = vmul.f32 0.5, %v4033
        %v4035 = vsub.f32 1.5, %v4034
        %v4036 = vmul.f32 %v4031, %v4035
        %vm4037 = vweird.f32 %v3988
        %vm4038 = vweird.f32 %v4031
        %vm4039 = vmor %vm4037, %vm4038
        %v4040 = vsel %vm4039, %v4031, %v4036
        %v4041 = vrsqrt.pop %v3989
        %v4042 = vmul.f32 %v4041, %v3989
        %v4043 = vmul.f32 %v4042, %v4041
        %v4044 = vmul.f32 0.5, %v4043
        %v4045 = vsub.f32 1.5, %v4044
        %v4046 = vmul.f32 %v4041, %v4045
        %vm4047 = vweird.f32 %v3989
        %vm4048 = vweird.f32 %v4041
        %vm4049 = vmor %vm4047, %vm4048
        %v4050 = vsel %vm4049, %v4041, %v4046
        %v4051 = vrsqrt.pop %v3990
        %v4052 = vmul.f32 %v4051, %v3990
        %v4053 = vmul.f32 %v4052, %v4051
        %v4054 = vmul.f32 0.5, %v4053
        %v4055 = vsub.f32 1.5, %v4054
        %v4056 = vmul.f32 %v4051, %v4055
        %vm4057 = vweird.f32 %v3990
        %vm4058 = vweird.f32 %v4051
        %vm4059 = vmor %vm4057, %vm4058
        %v4060 = vsel %vm4059, %v4051, %v4056
        %v4061 = vrsqrt.pop %v3991
        %v4062 = vmul.f32 %v4061, %v3991
        %v4063 = vmul.f32 %v4062, %v4061
        %v4064 = vmul.f32 0.5, %v4063
        %v4065 = vsub.f32 1.5, %v4064
        %v4066 = vmul.f32 %v4061, %v4065
        %vm4067 = vweird.f32 %v3991
        %vm4068 = vweird.f32 %v4061
        %vm4069 = vmor %vm4067, %vm4068
        %v4070 = vsel %vm4069, %v4061, %v4066
        %v4071 = vrsqrt.pop %v3992
        %v4072 = vmul.f32 %v4071, %v3992
        %v4073 = vmul.f32 %v4072, %v4071
        %v4074 = vmul.f32 0.5, %v4073
        %v4075 = vsub.f32 1.5, %v4074
        %v4076 = vmul.f32 %v4071, %v4075
        %vm4077 = vweird.f32 %v3992
        %vm4078 = vweird.f32 %v4071
        %vm4079 = vmor %vm4077, %vm4078
        %v4080 = vsel %vm4079, %v4071, %v4076
        %v4081 = vrsqrt.pop %v3993
        %v4082 = vmul.f32 %v4081, %v3993
        %v4083 = vmul.f32 %v4082, %v4081
        %v4084 = vmul.f32 0.5, %v4083
        %v4085 = vsub.f32 1.5, %v4084
        %v4086 = vmul.f32 %v4081, %v4085
        %vm4087 = vweird.f32 %v3993
        %vm4088 = vweird.f32 %v4081
        %vm4089 = vmor %vm4087, %vm4088
        %v4090 = vsel %vm4089, %v4081, %v4086
        %v4091 = vrsqrt.pop %v3994
        %v4092 = vmul.f32 %v4091, %v3994
        %v4093 = vmul.f32 %v4092, %v4091
        %v4094 = vmul.f32 0.5, %v4093
        %v4095 = vsub.f32 1.5, %v4094
        %v4096 = vmul.f32 %v4091, %v4095
        %vm4097 = vweird.f32 %v3994
        %vm4098 = vweird.f32 %v4091
        %vm4099 = vmor %vm4097, %vm4098
        %v4100 = vsel %vm4099, %v4091, %v4096
        %v4101 = vrsqrt.pop %v3995
        %v4102 = vmul.f32 %v4101, %v3995
        %v4103 = vmul.f32 %v4102, %v4101
        %v4104 = vmul.f32 0.5, %v4103
        %v4105 = vsub.f32 1.5, %v4104
        %v4106 = vmul.f32 %v4101, %v4105
        %vm4107 = vweird.f32 %v3995
        %vm4108 = vweird.f32 %v4101
        %vm4109 = vmor %vm4107, %vm4108
        %v4110 = vsel %vm4109, %v4101, %v4106
        %v4111 = vrsqrt.pop %v3996
        %v4112 = vmul.f32 %v4111, %v3996
        %v4113 = vmul.f32 %v4112, %v4111
        %v4114 = vmul.f32 0.5, %v4113
        %v4115 = vsub.f32 1.5, %v4114
        %v4116 = vmul.f32 %v4111, %v4115
        %vm4117 = vweird.f32 %v3996
        %vm4118 = vweird.f32 %v4111
        %vm4119 = vmor %vm4117, %vm4118
        %v4120 = vsel %vm4119, %v4111, %v4116
        %v4121 = vrsqrt.pop %v3997
        %v4122 = vmul.f32 %v4121, %v3997
        %v4123 = vmul.f32 %v4122, %v4121
        %v4124 = vmul.f32 0.5, %v4123
        %v4125 = vsub.f32 1.5, %v4124
        %v4126 = vmul.f32 %v4121, %v4125
        %vm4127 = vweird.f32 %v3997
        %vm4128 = vweird.f32 %v4121
        %vm4129 = vmor %vm4127, %vm4128
        %v4130 = vsel %vm4129, %v4121, %v4126
        %v4131 = vrsqrt.pop %v3998
        %v4132 = vmul.f32 %v4131, %v3998
        %v4133 = vmul.f32 %v4132, %v4131
        %v4134 = vmul.f32 0.5, %v4133
        %v4135 = vsub.f32 1.5, %v4134
        %v4136 = vmul.f32 %v4131, %v4135
        %vm4137 = vweird.f32 %v3998
        %vm4138 = vweird.f32 %v4131
        %vm4139 = vmor %vm4137, %vm4138
        %v4140 = vsel %vm4139, %v4131, %v4136
        %v4141 = vrsqrt.pop %v3999
        %v4142 = vmul.f32 %v4141, %v3999
        %v4143 = vmul.f32 %v4142, %v4141
        %v4144 = vmul.f32 0.5, %v4143
        %v4145 = vsub.f32 1.5, %v4144
        %v4146 = vmul.f32 %v4141, %v4145
        %vm4147 = vweird.f32 %v3999
        %vm4148 = vweird.f32 %v4141
        %vm4149 = vmor %vm4147, %vm4148
        %v4150 = vsel %vm4149, %v4141, %v4146
        %v4151 = vrsqrt.pop %v4000
        %v4152 = vmul.f32 %v4151, %v4000
        %v4153 = vmul.f32 %v4152, %v4151
        %v4154 = vmul.f32 0.5, %v4153
        %v4155 = vsub.f32 1.5, %v4154
        %v4156 = vmul.f32 %v4151, %v4155
        %vm4157 = vweird.f32 %v4000
        %vm4158 = vweird.f32 %v4151
        %vm4159 = vmor %vm4157, %vm4158
        %v4160 = vsel %vm4159, %v4151, %v4156
        %v4161 = vmul.f32 %v3889, %v4010
        %v4162 = vmul.f32 %v3890, %v4020
        %v4163 = vmul.f32 %v3891, %v4030
        %v4164 = vmul.f32 %v3892, %v4040
        %v4165 = vmul.f32 %v3893, %v4050
        %v4166 = vmul.f32 %v3894, %v4060
        %v4167 = vmul.f32 %v3895, %v4070
        %v4168 = vmul.f32 %v3896, %v4080
        %v4169 = vmul.f32 %v3897, %v4090
        %v4170 = vmul.f32 %v3898, %v4100
        %v4171 = vmul.f32 %v3899, %v4110
        %v4172 = vmul.f32 %v3900, %v4120
        %v4173 = vmul.f32 %v3901, %v4130
        %v4174 = vmul.f32 %v3902, %v4140
        %v4175 = vmul.f32 %v3903, %v4150
        %v4176 = vmul.f32 %v3904, %v4160
        %v4177 = vperm.slane %v523, 2
        %v4178 = vmul.f32 %v4161, %v4177
        %v4179 = vmul.f32 %v4162, %v4177
        %v4180 = vmul.f32 %v4163, %v4177
        %v4181 = vmul.f32 %v4164, %v4177
        %v4182 = vmul.f32 %v4165, %v4177
        %v4183 = vmul.f32 %v4166, %v4177
        %v4184 = vmul.f32 %v4167, %v4177
        %v4185 = vmul.f32 %v4168, %v4177
        %v4186 = vmul.f32 %v4169, %v4177
        %v4187 = vmul.f32 %v4170, %v4177
        %v4188 = vmul.f32 %v4171, %v4177
        %v4189 = vmul.f32 %v4172, %v4177
        %v4190 = vmul.f32 %v4173, %v4177
        %v4191 = vmul.f32 %v4174, %v4177
        %v4192 = vmul.f32 %v4175, %v4177
        %v4193 = vmul.f32 %v4176, %v4177
        %v4194 = vperm.slane %v523, 3
        %v4195 = vadd.f32 %v4178, %v4194
        %v4196 = vadd.f32 %v4179, %v4194
        %v4197 = vadd.f32 %v4180, %v4194
        %v4198 = vadd.f32 %v4181, %v4194
        %v4199 = vadd.f32 %v4182, %v4194
        %v4200 = vadd.f32 %v4183, %v4194
        %v4201 = vadd.f32 %v4184, %v4194
        %v4202 = vadd.f32 %v4185, %v4194
        %v4203 = vadd.f32 %v4186, %v4194
        %v4204 = vadd.f32 %v4187, %v4194
        %v4205 = vadd.f32 %v4188, %v4194
        %v4206 = vadd.f32 %v4189, %v4194
        %v4207 = vadd.f32 %v4190, %v4194
        %v4208 = vadd.f32 %v4191, %v4194
        %v4209 = vadd.f32 %v4192, %v4194
        %v4210 = vadd.f32 %v4193, %v4194
        %v4211 = vadd.f32 %v3459, %v4195
        %v4212 = vadd.f32 %v3460, %v4196
        %v4213 = vadd.f32 %v3461, %v4197
        %v4214 = vadd.f32 %v3462, %v4198
        %v4215 = vadd.f32 %v3463, %v4199
        %v4216 = vadd.f32 %v3464, %v4200
        %v4217 = vadd.f32 %v3465, %v4201
        %v4218 = vadd.f32 %v3466, %v4202
        %v4219 = vadd.f32 %v3467, %v4203
        %v4220 = vadd.f32 %v3468, %v4204
        %v4221 = vadd.f32 %v3469, %v4205
        %v4222 = vadd.f32 %v3470, %v4206
        %v4223 = vadd.f32 %v3471, %v4207
        %v4224 = vadd.f32 %v3472, %v4208
        %v4225 = vadd.f32 %v3473, %v4209
        %v4226 = vadd.f32 %v3474, %v4210
        %s4227 = scalar_lea.vmem [#allocation4], 32
        %v4228 = vld [vmem:[%s4227] sm:$0xff]
        %v4229 = vld [vmem:[%s4227 + $0x8] sm:$0xff]
        %v4230 = vld [vmem:[%s4227 + $0x10] sm:$0xff]
        %v4231 = vld [vmem:[%s4227 + $0x18] sm:$0xff]
        %s4232 = scalar_lea.vmem [#allocation12], 4
        %v4233 = vld [vmem:[%s4232] sm:$0xf]
        %s4234 = scalar_lea.vmem %s2, 32
        %v4235 = vld [vmem:[%s4234] sm:$0xff]
        %v4236 = vld [vmem:[%s4234 + $0x8] sm:$0xff]
        %v4237 = vld [vmem:[%s4234 + $0x10] sm:$0xff]
        %v4238 = vld [vmem:[%s4234 + $0x18] sm:$0xff]
        %s4239 = scalar_lea.vmem [#allocation2], 1
        %v4240 = vld [vmem:[%s4239] sm:$0x1]
        %v4242 = vperm.slane %v4240, 0
        %v4245 = vsel %vm532, %v4211, 0
        %v4248 = vsel %vm532, %v4212, 0
        %v4251 = vsel %vm532, %v4213, 0
        %v4254 = vsel %vm532, %v4214, 0
        %v4257 = vsel %vm532, %v4215, 0
        %v4260 = vsel %vm532, %v4216, 0
        %v4263 = vsel %vm532, %v4217, 0
        %v4266 = vsel %vm532, %v4218, 0
        %v4269 = vsel %vm532, %v4219, 0
        %v4272 = vsel %vm532, %v4220, 0
        %v4275 = vsel %vm532, %v4221, 0
        %v4278 = vsel %vm532, %v4222, 0
        %v4281 = vsel %vm532, %v4223, 0
        %v4284 = vsel %vm532, %v4224, 0
        %v4287 = vsel %vm532, %v4225, 0
        %v4290 = vsel %vm532, %v4226, 0
        %4292 = vmatpush.msra.mxu0 0.0
        %4293 = vmatpush.msra.mxu0 0.0
        %4294 = vmatpush.msra.mxu0 0.0
        %4295 = vmatpush.msra.mxu0 0.0
        %4296 = vmatpush.msra.mxu0 0.0
        %4297 = vmatpush.msra.mxu0 0.0
        %4298 = vmatpush.msra.mxu0 0.0
        %4299 = vmatpush.msra.mxu0 0.0
        %4300 = vmatpush.msra.mxu0 0.0
        %4301 = vmatpush.msra.mxu0 0.0
        %4302 = vmatpush.msra.mxu0 0.0
        %4303 = vmatpush.msra.mxu0 0.0
        %4304 = vmatpush.msra.mxu0 %v4238
        %4305 = vmatpush.msra.mxu0 %v4237
        %4306 = vmatpush.msra.mxu0 %v4236
        %4307 = vmatpush.msra.mxu0 %v4235
        %4308 = vmatmul.f32.gmra.mxu0 %v4245
        %v4309 = vpop.f32.mrf.mxu0
        %v4310 = vadd.f32 %v4242, %v4309
        %4311 = vmatmul.f32.gmra.mxu0 %v4248
        %v4312 = vpop.f32.mrf.mxu0
        %v4313 = vadd.f32 %v4242, %v4312
        %4314 = vmatmul.f32.gmra.mxu0 %v4251
        %v4315 = vpop.f32.mrf.mxu0
        %v4316 = vadd.f32 %v4242, %v4315
        %4317 = vmatmul.f32.gmra.mxu0 %v4254
        %v4318 = vpop.f32.mrf.mxu0
        %v4319 = vadd.f32 %v4242, %v4318
        %4320 = vmatmul.f32.gmra.mxu0 %v4257
        %v4321 = vpop.f32.mrf.mxu0
        %v4322 = vadd.f32 %v4242, %v4321
        %4323 = vmatmul.f32.gmra.mxu0 %v4260
        %v4324 = vpop.f32.mrf.mxu0
        %v4325 = vadd.f32 %v4242, %v4324
        %4326 = vmatmul.f32.gmra.mxu0 %v4263
        %v4327 = vpop.f32.mrf.mxu0
        %v4328 = vadd.f32 %v4242, %v4327
        %4329 = vmatmul.f32.gmra.mxu0 %v4266
        %v4330 = vpop.f32.mrf.mxu0
        %v4331 = vadd.f32 %v4242, %v4330
        %4332 = vmatmul.f32.gmra.mxu0 %v4269
        %v4333 = vpop.f32.mrf.mxu0
        %v4334 = vadd.f32 %v4242, %v4333
        %4335 = vmatmul.f32.gmra.mxu0 %v4272
        %v4336 = vpop.f32.mrf.mxu0
        %v4337 = vadd.f32 %v4242, %v4336
        %4338 = vmatmul.f32.gmra.mxu0 %v4275
        %v4339 = vpop.f32.mrf.mxu0
        %v4340 = vadd.f32 %v4242, %v4339
        %4341 = vmatmul.f32.gmra.mxu0 %v4278
        %v4342 = vpop.f32.mrf.mxu0
        %v4343 = vadd.f32 %v4242, %v4342
        %4344 = vmatmul.f32.gmra.mxu0 %v4281
        %v4345 = vpop.f32.mrf.mxu0
        %v4346 = vadd.f32 %v4242, %v4345
        %4347 = vmatmul.f32.gmra.mxu0 %v4284
        %v4348 = vpop.f32.mrf.mxu0
        %v4349 = vadd.f32 %v4242, %v4348
        %4350 = vmatmul.f32.gmra.mxu0 %v4287
        %v4351 = vpop.f32.mrf.mxu0
        %v4352 = vadd.f32 %v4242, %v4351
        %4353 = vmatmul.f32.gmra.mxu0 %v4290
        %v4354 = vpop.f32.mrf.mxu0
        %v4355 = vadd.f32 %v4242, %v4354
        %4356 = vdwg.mxu0
        %s4357 = scalar_lea.vmem %s1, 256
        %v4358 = vld [vmem:[%s4357] sm:$0xf]
        %v4359 = vld [vmem:[%s4357 + $0x4] sm:$0xf]
        %v4360 = vld [vmem:[%s4357 + $0x8] sm:$0xf]
        %v4361 = vld [vmem:[%s4357 + $0xc] sm:$0xf]
        %v4362 = vld [vmem:[%s4357 + $0x10] sm:$0xf]
        %v4363 = vld [vmem:[%s4357 + $0x14] sm:$0xf]
        %v4364 = vld [vmem:[%s4357 + $0x18] sm:$0xf]
        %v4365 = vld [vmem:[%s4357 + $0x1c] sm:$0xf]
        %v4366 = vld [vmem:[%s4357 + $0x20] sm:$0xf]
        %v4367 = vld [vmem:[%s4357 + $0x24] sm:$0xf]
        %v4368 = vld [vmem:[%s4357 + $0x28] sm:$0xf]
        %v4369 = vld [vmem:[%s4357 + $0x2c] sm:$0xf]
        %v4370 = vld [vmem:[%s4357 + $0x30] sm:$0xf]
        %v4371 = vld [vmem:[%s4357 + $0x34] sm:$0xf]
        %v4372 = vld [vmem:[%s4357 + $0x38] sm:$0xf]
        %v4373 = vld [vmem:[%s4357 + $0x3c] sm:$0xf]
        %v4374 = vunpack.c.l.bf16 %v4358
        %v4375 = vunpack.c.l.bf16 %v4359
        %v4376 = vunpack.c.l.bf16 %v4360
        %v4377 = vunpack.c.l.bf16 %v4361
        %v4378 = vunpack.c.l.bf16 %v4362
        %v4379 = vunpack.c.l.bf16 %v4363
        %v4380 = vunpack.c.l.bf16 %v4364
        %v4381 = vunpack.c.l.bf16 %v4365
        %v4382 = vunpack.c.l.bf16 %v4366
        %v4383 = vunpack.c.l.bf16 %v4367
        %v4384 = vunpack.c.l.bf16 %v4368
        %v4385 = vunpack.c.l.bf16 %v4369
        %v4386 = vunpack.c.l.bf16 %v4370
        %v4387 = vunpack.c.l.bf16 %v4371
        %v4388 = vunpack.c.l.bf16 %v4372
        %v4389 = vunpack.c.l.bf16 %v4373
        %4406 = vrot.lane.b32.xlu0 %v4310, 96
        %v4407 = vpop.permute.xlu0 %4406
        %4408 = vrot.lane.b32.xlu0 %v4313, 96
        %v4409 = vpop.permute.xlu0 %4408
        %4410 = vrot.lane.b32.xlu0 %v4316, 96
        %v4411 = vpop.permute.xlu0 %4410
        %4412 = vrot.lane.b32.xlu0 %v4319, 96
        %v4413 = vpop.permute.xlu0 %4412
        %4414 = vrot.lane.b32.xlu0 %v4322, 96
        %v4415 = vpop.permute.xlu0 %4414
        %4416 = vrot.lane.b32.xlu0 %v4325, 96
        %v4417 = vpop.permute.xlu0 %4416
        %4418 = vrot.lane.b32.xlu0 %v4328, 96
        %v4419 = vpop.permute.xlu0 %4418
        %4420 = vrot.lane.b32.xlu0 %v4331, 96
        %v4421 = vpop.permute.xlu0 %4420
        %4422 = vrot.lane.b32.xlu0 %v4334, 96
        %v4423 = vpop.permute.xlu0 %4422
        %4424 = vrot.lane.b32.xlu0 %v4337, 96
        %v4425 = vpop.permute.xlu0 %4424
        %4426 = vrot.lane.b32.xlu0 %v4340, 96
        %v4427 = vpop.permute.xlu0 %4426
        %4428 = vrot.lane.b32.xlu0 %v4343, 96
        %v4429 = vpop.permute.xlu0 %4428
        %4430 = vrot.lane.b32.xlu0 %v4346, 96
        %v4431 = vpop.permute.xlu0 %4430
        %4432 = vrot.lane.b32.xlu0 %v4349, 96
        %v4433 = vpop.permute.xlu0 %4432
        %4434 = vrot.lane.b32.xlu0 %v4352, 96
        %v4435 = vpop.permute.xlu0 %4434
        %4436 = vrot.lane.b32.xlu0 %v4355, 96
        %v4437 = vpop.permute.xlu0 %4436
        %v4438 = vsel %vm726, %v4310, 0
        %v4440 = vsel %vm726, %v4313, 0
        %v4442 = vsel %vm726, %v4316, 0
        %v4444 = vsel %vm726, %v4319, 0
        %v4446 = vsel %vm726, %v4322, 0
        %v4448 = vsel %vm726, %v4325, 0
        %v4450 = vsel %vm726, %v4328, 0
        %v4452 = vsel %vm726, %v4331, 0
        %v4454 = vsel %vm726, %v4334, 0
        %v4456 = vsel %vm726, %v4337, 0
        %v4458 = vsel %vm726, %v4340, 0
        %v4460 = vsel %vm726, %v4343, 0
        %v4462 = vsel %vm726, %v4346, 0
        %v4464 = vsel %vm726, %v4349, 0
        %v4466 = vsel %vm726, %v4352, 0
        %v4468 = vsel %vm726, %v4355, 0
        %v4470 = vsel %vm726, %v4407, 0
        %v4472 = vsel %vm726, %v4409, 0
        %v4474 = vsel %vm726, %v4411, 0
        %v4476 = vsel %vm726, %v4413, 0
        %v4478 = vsel %vm726, %v4415, 0
        %v4480 = vsel %vm726, %v4417, 0
        %v4482 = vsel %vm726, %v4419, 0
        %v4484 = vsel %vm726, %v4421, 0
        %v4486 = vsel %vm726, %v4423, 0
        %v4488 = vsel %vm726, %v4425, 0
        %v4490 = vsel %vm726, %v4427, 0
        %v4492 = vsel %vm726, %v4429, 0
        %v4494 = vsel %vm726, %v4431, 0
        %v4496 = vsel %vm726, %v4433, 0
        %v4498 = vsel %vm726, %v4435, 0
        %v4500 = vsel %vm726, %v4437, 0
        %4502 = vmatpush.xpose.msra.mxu0 %v4500
        %4503 = vmatpush.xpose.msra.mxu0 %v4498
        %4504 = vmatpush.xpose.msra.mxu0 %v4496
        %4505 = vmatpush.xpose.msra.mxu0 %v4494
        %4506 = vmatpush.xpose.msra.mxu0 %v4492
        %4507 = vmatpush.xpose.msra.mxu0 %v4490
        %4508 = vmatpush.xpose.msra.mxu0 %v4488
        %4509 = vmatpush.xpose.msra.mxu0 %v4486
        %4510 = vmatpush.xpose.msra.mxu0 %v4484
        %4511 = vmatpush.xpose.msra.mxu0 %v4482
        %4512 = vmatpush.xpose.msra.mxu0 %v4480
        %4513 = vmatpush.xpose.msra.mxu0 %v4478
        %4514 = vmatpush.xpose.msra.mxu0 %v4476
        %4515 = vmatpush.xpose.msra.mxu0 %v4474
        %4516 = vmatpush.xpose.msra.mxu0 %v4472
        %4517 = vmatpush.xpose.msra.mxu0 %v4470
        %4518 = vmatmul.f32.gmra.mxu0 %v4438
        %v4519 = vpop.f32.mrf.mxu0
        %v4520 = vadd.f32 %v4374, %v4519
        %4521 = vmatmul.f32.gmra.mxu0 %v4440
        %v4522 = vpop.f32.mrf.mxu0
        %v4523 = vadd.f32 %v4375, %v4522
        %4524 = vmatmul.f32.gmra.mxu0 %v4442
        %v4525 = vpop.f32.mrf.mxu0
        %v4526 = vadd.f32 %v4376, %v4525
        %4527 = vmatmul.f32.gmra.mxu0 %v4444
        %v4528 = vpop.f32.mrf.mxu0
        %v4529 = vadd.f32 %v4377, %v4528
        %4530 = vmatmul.f32.gmra.mxu0 %v4446
        %v4531 = vpop.f32.mrf.mxu0
        %v4532 = vadd.f32 %v4378, %v4531
        %4533 = vmatmul.f32.gmra.mxu0 %v4448
        %v4534 = vpop.f32.mrf.mxu0
        %v4535 = vadd.f32 %v4379, %v4534
        %4536 = vmatmul.f32.gmra.mxu0 %v4450
        %v4537 = vpop.f32.mrf.mxu0
        %v4538 = vadd.f32 %v4380, %v4537
        %4539 = vmatmul.f32.gmra.mxu0 %v4452
        %v4540 = vpop.f32.mrf.mxu0
        %v4541 = vadd.f32 %v4381, %v4540
        %4542 = vmatmul.f32.gmra.mxu0 %v4454
        %v4543 = vpop.f32.mrf.mxu0
        %v4544 = vadd.f32 %v4382, %v4543
        %4545 = vmatmul.f32.gmra.mxu0 %v4456
        %v4546 = vpop.f32.mrf.mxu0
        %v4547 = vadd.f32 %v4383, %v4546
        %4548 = vmatmul.f32.gmra.mxu0 %v4458
        %v4549 = vpop.f32.mrf.mxu0
        %v4550 = vadd.f32 %v4384, %v4549
        %4551 = vmatmul.f32.gmra.mxu0 %v4460
        %v4552 = vpop.f32.mrf.mxu0
        %v4553 = vadd.f32 %v4385, %v4552
        %4554 = vmatmul.f32.gmra.mxu0 %v4462
        %v4555 = vpop.f32.mrf.mxu0
        %v4556 = vadd.f32 %v4386, %v4555
        %4557 = vmatmul.f32.gmra.mxu0 %v4464
        %v4558 = vpop.f32.mrf.mxu0
        %v4559 = vadd.f32 %v4387, %v4558
        %4560 = vmatmul.f32.gmra.mxu0 %v4466
        %v4561 = vpop.f32.mrf.mxu0
        %v4562 = vadd.f32 %v4388, %v4561
        %4563 = vmatmul.f32.gmra.mxu0 %v4468
        %v4564 = vpop.f32.mrf.mxu0
        %v4565 = vadd.f32 %v4389, %v4564
        %4566 = vdwg.mxu0
        %4567 = vmax.xlane.f32.xlu0 %v4520
        %v4568 = vpop.xlane.xlu0 %4567
        %4569 = vmax.xlane.f32.xlu0 %v4523
        %v4570 = vpop.xlane.xlu0 %4569
        %4571 = vmax.xlane.f32.xlu0 %v4526
        %v4572 = vpop.xlane.xlu0 %4571
        %4573 = vmax.xlane.f32.xlu0 %v4529
        %v4574 = vpop.xlane.xlu0 %4573
        %4575 = vmax.xlane.f32.xlu0 %v4532
        %v4576 = vpop.xlane.xlu0 %4575
        %4577 = vmax.xlane.f32.xlu0 %v4535
        %v4578 = vpop.xlane.xlu0 %4577
        %4579 = vmax.xlane.f32.xlu0 %v4538
        %v4580 = vpop.xlane.xlu0 %4579
        %4581 = vmax.xlane.f32.xlu0 %v4541
        %v4582 = vpop.xlane.xlu0 %4581
        %4583 = vmax.xlane.f32.xlu0 %v4544
        %v4584 = vpop.xlane.xlu0 %4583
        %4585 = vmax.xlane.f32.xlu0 %v4547
        %v4586 = vpop.xlane.xlu0 %4585
        %4587 = vmax.xlane.f32.xlu0 %v4550
        %v4588 = vpop.xlane.xlu0 %4587
        %4589 = vmax.xlane.f32.xlu0 %v4553
        %v4590 = vpop.xlane.xlu0 %4589
        %4591 = vmax.xlane.f32.xlu0 %v4556
        %v4592 = vpop.xlane.xlu0 %4591
        %4593 = vmax.xlane.f32.xlu0 %v4559
        %v4594 = vpop.xlane.xlu0 %4593
        %4595 = vmax.xlane.f32.xlu0 %v4562
        %v4596 = vpop.xlane.xlu0 %4595
        %4597 = vmax.xlane.f32.xlu0 %v4565
        %v4598 = vpop.xlane.xlu0 %4597
        %v4599 = vsub.f32 %v4520, %v4568
        %v4600 = vsub.f32 %v4523, %v4570
        %v4601 = vsub.f32 %v4526, %v4572
        %v4602 = vsub.f32 %v4529, %v4574
        %v4603 = vsub.f32 %v4532, %v4576
        %v4604 = vsub.f32 %v4535, %v4578
        %v4605 = vsub.f32 %v4538, %v4580
        %v4606 = vsub.f32 %v4541, %v4582
        %v4607 = vsub.f32 %v4544, %v4584
        %v4608 = vsub.f32 %v4547, %v4586
        %v4609 = vsub.f32 %v4550, %v4588
        %v4610 = vsub.f32 %v4553, %v4590
        %v4611 = vsub.f32 %v4556, %v4592
        %v4612 = vsub.f32 %v4559, %v4594
        %v4613 = vsub.f32 %v4562, %v4596
        %v4614 = vsub.f32 %v4565, %v4598
        %v4615 = vmul.f32 %v4599, 1.442695
        %v4616 = vpow.pop %v4615
        %v4617 = vmul.f32 %v4600, 1.442695
        %v4618 = vpow.pop %v4617
        %v4619 = vmul.f32 %v4601, 1.442695
        %v4620 = vpow.pop %v4619
        %v4621 = vmul.f32 %v4602, 1.442695
        %v4622 = vpow.pop %v4621
        %v4623 = vmul.f32 %v4603, 1.442695
        %v4624 = vpow.pop %v4623
        %v4625 = vmul.f32 %v4604, 1.442695
        %v4626 = vpow.pop %v4625
        %v4627 = vmul.f32 %v4605, 1.442695
        %v4628 = vpow.pop %v4627
        %v4629 = vmul.f32 %v4606, 1.442695
        %v4630 = vpow.pop %v4629
        %v4631 = vmul.f32 %v4607, 1.442695
        %v4632 = vpow.pop %v4631
        %v4633 = vmul.f32 %v4608, 1.442695
        %v4634 = vpow.pop %v4633
        %v4635 = vmul.f32 %v4609, 1.442695
        %v4636 = vpow.pop %v4635
        %v4637 = vmul.f32 %v4610, 1.442695
        %v4638 = vpow.pop %v4637
        %v4639 = vmul.f32 %v4611, 1.442695
        %v4640 = vpow.pop %v4639
        %v4641 = vmul.f32 %v4612, 1.442695
        %v4642 = vpow.pop %v4641
        %v4643 = vmul.f32 %v4613, 1.442695
        %v4644 = vpow.pop %v4643
        %v4645 = vmul.f32 %v4614, 1.442695
        %v4646 = vpow.pop %v4645
        %4647 = vadd.xlane.f32.xlu0 %v4616
        %v4648 = vpop.xlane.xlu0 %4647
        %4649 = vadd.xlane.f32.xlu0 %v4618
        %v4650 = vpop.xlane.xlu0 %4649
        %4651 = vadd.xlane.f32.xlu0 %v4620
        %v4652 = vpop.xlane.xlu0 %4651
        %4653 = vadd.xlane.f32.xlu0 %v4622
        %v4654 = vpop.xlane.xlu0 %4653
        %4655 = vadd.xlane.f32.xlu0 %v4624
        %v4656 = vpop.xlane.xlu0 %4655
        %4657 = vadd.xlane.f32.xlu0 %v4626
        %v4658 = vpop.xlane.xlu0 %4657
        %4659 = vadd.xlane.f32.xlu0 %v4628
        %v4660 = vpop.xlane.xlu0 %4659
        %4661 = vadd.xlane.f32.xlu0 %v4630
        %v4662 = vpop.xlane.xlu0 %4661
        %4663 = vadd.xlane.f32.xlu0 %v4632
        %v4664 = vpop.xlane.xlu0 %4663
        %4665 = vadd.xlane.f32.xlu0 %v4634
        %v4666 = vpop.xlane.xlu0 %4665
        %4667 = vadd.xlane.f32.xlu0 %v4636
        %v4668 = vpop.xlane.xlu0 %4667
        %4669 = vadd.xlane.f32.xlu0 %v4638
        %v4670 = vpop.xlane.xlu0 %4669
        %4671 = vadd.xlane.f32.xlu0 %v4640
        %v4672 = vpop.xlane.xlu0 %4671
        %4673 = vadd.xlane.f32.xlu0 %v4642
        %v4674 = vpop.xlane.xlu0 %4673
        %4675 = vadd.xlane.f32.xlu0 %v4644
        %v4676 = vpop.xlane.xlu0 %4675
        %4677 = vadd.xlane.f32.xlu0 %v4646
        %v4678 = vpop.xlane.xlu0 %4677
        %v4679 = vrcp.pop %v4648
        %v4680 = vrcp.pop %v4650
        %v4681 = vrcp.pop %v4652
        %v4682 = vrcp.pop %v4654
        %v4683 = vrcp.pop %v4656
        %v4684 = vrcp.pop %v4658
        %v4685 = vrcp.pop %v4660
        %v4686 = vrcp.pop %v4662
        %v4687 = vrcp.pop %v4664
        %v4688 = vrcp.pop %v4666
        %v4689 = vrcp.pop %v4668
        %v4690 = vrcp.pop %v4670
        %v4691 = vrcp.pop %v4672
        %v4692 = vrcp.pop %v4674
        %v4693 = vrcp.pop %v4676
        %v4694 = vrcp.pop %v4678
        %v4695 = vmul.f32 %v4616, %v4679
        %v4696 = vmul.f32 %v4618, %v4680
        %v4697 = vmul.f32 %v4620, %v4681
        %v4698 = vmul.f32 %v4622, %v4682
        %v4699 = vmul.f32 %v4624, %v4683
        %v4700 = vmul.f32 %v4626, %v4684
        %v4701 = vmul.f32 %v4628, %v4685
        %v4702 = vmul.f32 %v4630, %v4686
        %v4703 = vmul.f32 %v4632, %v4687
        %v4704 = vmul.f32 %v4634, %v4688
        %v4705 = vmul.f32 %v4636, %v4689
        %v4706 = vmul.f32 %v4638, %v4690
        %v4707 = vmul.f32 %v4640, %v4691
        %v4708 = vmul.f32 %v4642, %v4692
        %v4709 = vmul.f32 %v4644, %v4693
        %v4710 = vmul.f32 %v4646, %v4694
        %4711 = vrot.lane.b32.xlu0 %v4310, 64
        %v4712 = vpop.permute.xlu0 %4711
        %4713 = vrot.lane.b32.xlu0 %v4313, 64
        %v4714 = vpop.permute.xlu0 %4713
        %4715 = vrot.lane.b32.xlu0 %v4316, 64
        %v4716 = vpop.permute.xlu0 %4715
        %4717 = vrot.lane.b32.xlu0 %v4319, 64
        %v4718 = vpop.permute.xlu0 %4717
        %4719 = vrot.lane.b32.xlu0 %v4322, 64
        %v4720 = vpop.permute.xlu0 %4719
        %4721 = vrot.lane.b32.xlu0 %v4325, 64
        %v4722 = vpop.permute.xlu0 %4721
        %4723 = vrot.lane.b32.xlu0 %v4328, 64
        %v4724 = vpop.permute.xlu0 %4723
        %4725 = vrot.lane.b32.xlu0 %v4331, 64
        %v4726 = vpop.permute.xlu0 %4725
        %4727 = vrot.lane.b32.xlu0 %v4334, 64
        %v4728 = vpop.permute.xlu0 %4727
        %4729 = vrot.lane.b32.xlu0 %v4337, 64
        %v4730 = vpop.permute.xlu0 %4729
        %4731 = vrot.lane.b32.xlu0 %v4340, 64
        %v4732 = vpop.permute.xlu0 %4731
        %4733 = vrot.lane.b32.xlu0 %v4343, 64
        %v4734 = vpop.permute.xlu0 %4733
        %4735 = vrot.lane.b32.xlu0 %v4346, 64
        %v4736 = vpop.permute.xlu0 %4735
        %4737 = vrot.lane.b32.xlu0 %v4349, 64
        %v4738 = vpop.permute.xlu0 %4737
        %4739 = vrot.lane.b32.xlu0 %v4352, 64
        %v4740 = vpop.permute.xlu0 %4739
        %4741 = vrot.lane.b32.xlu0 %v4355, 64
        %v4742 = vpop.permute.xlu0 %4741
        %4759 = vmatpush.msra.mxu0 %v4742
        %4760 = vmatpush.msra.mxu0 %v4740
        %4761 = vmatpush.msra.mxu0 %v4738
        %4762 = vmatpush.msra.mxu0 %v4736
        %4763 = vmatpush.msra.mxu0 %v4734
        %4764 = vmatpush.msra.mxu0 %v4732
        %4765 = vmatpush.msra.mxu0 %v4730
        %4766 = vmatpush.msra.mxu0 %v4728
        %4767 = vmatpush.msra.mxu0 %v4726
        %4768 = vmatpush.msra.mxu0 %v4724
        %4769 = vmatpush.msra.mxu0 %v4722
        %4770 = vmatpush.msra.mxu0 %v4720
        %4771 = vmatpush.msra.mxu0 %v4718
        %4772 = vmatpush.msra.mxu0 %v4716
        %4773 = vmatpush.msra.mxu0 %v4714
        %4774 = vmatpush.msra.mxu0 %v4712
        %4775 = vmatmul.f32.gmra.mxu0 %v4695
        %v4776 = vpop.f32.mrf.mxu0
        %v4777 = vadd.f32 0.0, %v4776
        %4778 = vmatmul.f32.gmra.mxu0 %v4696
        %v4779 = vpop.f32.mrf.mxu0
        %v4780 = vadd.f32 0.0, %v4779
        %4781 = vmatmul.f32.gmra.mxu0 %v4697
        %v4782 = vpop.f32.mrf.mxu0
        %v4783 = vadd.f32 0.0, %v4782
        %4784 = vmatmul.f32.gmra.mxu0 %v4698
        %v4785 = vpop.f32.mrf.mxu0
        %v4786 = vadd.f32 0.0, %v4785
        %4787 = vmatmul.f32.gmra.mxu0 %v4699
        %v4788 = vpop.f32.mrf.mxu0
        %v4789 = vadd.f32 0.0, %v4788
        %4790 = vmatmul.f32.gmra.mxu0 %v4700
        %v4791 = vpop.f32.mrf.mxu0
        %v4792 = vadd.f32 0.0, %v4791
        %4793 = vmatmul.f32.gmra.mxu0 %v4701
        %v4794 = vpop.f32.mrf.mxu0
        %v4795 = vadd.f32 0.0, %v4794
        %4796 = vmatmul.f32.gmra.mxu0 %v4702
        %v4797 = vpop.f32.mrf.mxu0
        %v4798 = vadd.f32 0.0, %v4797
        %4799 = vmatmul.f32.gmra.mxu0 %v4703
        %v4800 = vpop.f32.mrf.mxu0
        %v4801 = vadd.f32 0.0, %v4800
        %4802 = vmatmul.f32.gmra.mxu0 %v4704
        %v4803 = vpop.f32.mrf.mxu0
        %v4804 = vadd.f32 0.0, %v4803
        %4805 = vmatmul.f32.gmra.mxu0 %v4705
        %v4806 = vpop.f32.mrf.mxu0
        %v4807 = vadd.f32 0.0, %v4806
        %4808 = vmatmul.f32.gmra.mxu0 %v4706
        %v4809 = vpop.f32.mrf.mxu0
        %v4810 = vadd.f32 0.0, %v4809
        %4811 = vmatmul.f32.gmra.mxu0 %v4707
        %v4812 = vpop.f32.mrf.mxu0
        %v4813 = vadd.f32 0.0, %v4812
        %4814 = vmatmul.f32.gmra.mxu0 %v4708
        %v4815 = vpop.f32.mrf.mxu0
        %v4816 = vadd.f32 0.0, %v4815
        %4817 = vmatmul.f32.gmra.mxu0 %v4709
        %v4818 = vpop.f32.mrf.mxu0
        %v4819 = vadd.f32 0.0, %v4818
        %4820 = vmatmul.f32.gmra.mxu0 %v4710
        %v4821 = vpop.f32.mrf.mxu0
        %v4822 = vadd.f32 0.0, %v4821
        %4823 = vdwg.mxu0
        %s4824 = scalar_lea.vmem %s1, 320
        %v4825 = vld [vmem:[%s4824] sm:$0xf]
        %v4826 = vld [vmem:[%s4824 + $0x4] sm:$0xf]
        %v4827 = vld [vmem:[%s4824 + $0x8] sm:$0xf]
        %v4828 = vld [vmem:[%s4824 + $0xc] sm:$0xf]
        %v4829 = vld [vmem:[%s4824 + $0x10] sm:$0xf]
        %v4830 = vld [vmem:[%s4824 + $0x14] sm:$0xf]
        %v4831 = vld [vmem:[%s4824 + $0x18] sm:$0xf]
        %v4832 = vld [vmem:[%s4824 + $0x1c] sm:$0xf]
        %v4833 = vld [vmem:[%s4824 + $0x20] sm:$0xf]
        %v4834 = vld [vmem:[%s4824 + $0x24] sm:$0xf]
        %v4835 = vld [vmem:[%s4824 + $0x28] sm:$0xf]
        %v4836 = vld [vmem:[%s4824 + $0x2c] sm:$0xf]
        %v4837 = vld [vmem:[%s4824 + $0x30] sm:$0xf]
        %v4838 = vld [vmem:[%s4824 + $0x34] sm:$0xf]
        %v4839 = vld [vmem:[%s4824 + $0x38] sm:$0xf]
        %v4840 = vld [vmem:[%s4824 + $0x3c] sm:$0xf]
        %v4841 = vunpack.c.l.bf16 %v4825
        %v4842 = vunpack.c.l.bf16 %v4826
        %v4843 = vunpack.c.l.bf16 %v4827
        %v4844 = vunpack.c.l.bf16 %v4828
        %v4845 = vunpack.c.l.bf16 %v4829
        %v4846 = vunpack.c.l.bf16 %v4830
        %v4847 = vunpack.c.l.bf16 %v4831
        %v4848 = vunpack.c.l.bf16 %v4832
        %v4849 = vunpack.c.l.bf16 %v4833
        %v4850 = vunpack.c.l.bf16 %v4834
        %v4851 = vunpack.c.l.bf16 %v4835
        %v4852 = vunpack.c.l.bf16 %v4836
        %v4853 = vunpack.c.l.bf16 %v4837
        %v4854 = vunpack.c.l.bf16 %v4838
        %v4855 = vunpack.c.l.bf16 %v4839
        %v4856 = vunpack.c.l.bf16 %v4840
        %4857 = vrot.lane.b32.xlu0 %v4310, 120
        %v4858 = vpop.permute.xlu0 %4857
        %4859 = vrot.lane.b32.xlu0 %v4313, 120
        %v4860 = vpop.permute.xlu0 %4859
        %4861 = vrot.lane.b32.xlu0 %v4316, 120
        %v4862 = vpop.permute.xlu0 %4861
        %4863 = vrot.lane.b32.xlu0 %v4319, 120
        %v4864 = vpop.permute.xlu0 %4863
        %4865 = vrot.lane.b32.xlu0 %v4322, 120
        %v4866 = vpop.permute.xlu0 %4865
        %4867 = vrot.lane.b32.xlu0 %v4325, 120
        %v4868 = vpop.permute.xlu0 %4867
        %4869 = vrot.lane.b32.xlu0 %v4328, 120
        %v4870 = vpop.permute.xlu0 %4869
        %4871 = vrot.lane.b32.xlu0 %v4331, 120
        %v4872 = vpop.permute.xlu0 %4871
        %4873 = vrot.lane.b32.xlu0 %v4334, 120
        %v4874 = vpop.permute.xlu0 %4873
        %4875 = vrot.lane.b32.xlu0 %v4337, 120
        %v4876 = vpop.permute.xlu0 %4875
        %4877 = vrot.lane.b32.xlu0 %v4340, 120
        %v4878 = vpop.permute.xlu0 %4877
        %4879 = vrot.lane.b32.xlu0 %v4343, 120
        %v4880 = vpop.permute.xlu0 %4879
        %4881 = vrot.lane.b32.xlu0 %v4346, 120
        %v4882 = vpop.permute.xlu0 %4881
        %4883 = vrot.lane.b32.xlu0 %v4349, 120
        %v4884 = vpop.permute.xlu0 %4883
        %4885 = vrot.lane.b32.xlu0 %v4352, 120
        %v4886 = vpop.permute.xlu0 %4885
        %4887 = vrot.lane.b32.xlu0 %v4355, 120
        %v4888 = vpop.permute.xlu0 %4887
        %4889 = vrot.lane.b32.xlu0 %v4310, 88
        %v4890 = vpop.permute.xlu0 %4889
        %4891 = vrot.lane.b32.xlu0 %v4313, 88
        %v4892 = vpop.permute.xlu0 %4891
        %4893 = vrot.lane.b32.xlu0 %v4316, 88
        %v4894 = vpop.permute.xlu0 %4893
        %4895 = vrot.lane.b32.xlu0 %v4319, 88
        %v4896 = vpop.permute.xlu0 %4895
        %4897 = vrot.lane.b32.xlu0 %v4322, 88
        %v4898 = vpop.permute.xlu0 %4897
        %4899 = vrot.lane.b32.xlu0 %v4325, 88
        %v4900 = vpop.permute.xlu0 %4899
        %4901 = vrot.lane.b32.xlu0 %v4328, 88
        %v4902 = vpop.permute.xlu0 %4901
        %4903 = vrot.lane.b32.xlu0 %v4331, 88
        %v4904 = vpop.permute.xlu0 %4903
        %4905 = vrot.lane.b32.xlu0 %v4334, 88
        %v4906 = vpop.permute.xlu0 %4905
        %4907 = vrot.lane.b32.xlu0 %v4337, 88
        %v4908 = vpop.permute.xlu0 %4907
        %4909 = vrot.lane.b32.xlu0 %v4340, 88
        %v4910 = vpop.permute.xlu0 %4909
        %4911 = vrot.lane.b32.xlu0 %v4343, 88
        %v4912 = vpop.permute.xlu0 %4911
        %4913 = vrot.lane.b32.xlu0 %v4346, 88
        %v4914 = vpop.permute.xlu0 %4913
        %4915 = vrot.lane.b32.xlu0 %v4349, 88
        %v4916 = vpop.permute.xlu0 %4915
        %4917 = vrot.lane.b32.xlu0 %v4352, 88
        %v4918 = vpop.permute.xlu0 %4917
        %4919 = vrot.lane.b32.xlu0 %v4355, 88
        %v4920 = vpop.permute.xlu0 %4919
        %v4921 = vsel %vm726, %v4858, 0
        %v4923 = vsel %vm726, %v4860, 0
        %v4925 = vsel %vm726, %v4862, 0
        %v4927 = vsel %vm726, %v4864, 0
        %v4929 = vsel %vm726, %v4866, 0
        %v4931 = vsel %vm726, %v4868, 0
        %v4933 = vsel %vm726, %v4870, 0
        %v4935 = vsel %vm726, %v4872, 0
        %v4937 = vsel %vm726, %v4874, 0
        %v4939 = vsel %vm726, %v4876, 0
        %v4941 = vsel %vm726, %v4878, 0
        %v4943 = vsel %vm726, %v4880, 0
        %v4945 = vsel %vm726, %v4882, 0
        %v4947 = vsel %vm726, %v4884, 0
        %v4949 = vsel %vm726, %v4886, 0
        %v4951 = vsel %vm726, %v4888, 0
        %v4953 = vsel %vm726, %v4890, 0
        %v4955 = vsel %vm726, %v4892, 0
        %v4957 = vsel %vm726, %v4894, 0
        %v4959 = vsel %vm726, %v4896, 0
        %v4961 = vsel %vm726, %v4898, 0
        %v4963 = vsel %vm726, %v4900, 0
        %v4965 = vsel %vm726, %v4902, 0
        %v4967 = vsel %vm726, %v4904, 0
        %v4969 = vsel %vm726, %v4906, 0
        %v4971 = vsel %vm726, %v4908, 0
        %v4973 = vsel %vm726, %v4910, 0
        %v4975 = vsel %vm726, %v4912, 0
        %v4977 = vsel %vm726, %v4914, 0
        %v4979 = vsel %vm726, %v4916, 0
        %v4981 = vsel %vm726, %v4918, 0
        %v4983 = vsel %vm726, %v4920, 0
        %4985 = vmatpush.xpose.msra.mxu0 %v4983
        %4986 = vmatpush.xpose.msra.mxu0 %v4981
        %4987 = vmatpush.xpose.msra.mxu0 %v4979
        %4988 = vmatpush.xpose.msra.mxu0 %v4977
        %4989 = vmatpush.xpose.msra.mxu0 %v4975
        %4990 = vmatpush.xpose.msra.mxu0 %v4973
        %4991 = vmatpush.xpose.msra.mxu0 %v4971
        %4992 = vmatpush.xpose.msra.mxu0 %v4969
        %4993 = vmatpush.xpose.msra.mxu0 %v4967
        %4994 = vmatpush.xpose.msra.mxu0 %v4965
        %4995 = vmatpush.xpose.msra.mxu0 %v4963
        %4996 = vmatpush.xpose.msra.mxu0 %v4961
        %4997 = vmatpush.xpose.msra.mxu0 %v4959
        %4998 = vmatpush.xpose.msra.mxu0 %v4957
        %4999 = vmatpush.xpose.msra.mxu0 %v4955
        %5000 = vmatpush.xpose.msra.mxu0 %v4953
        %5001 = vmatmul.f32.gmra.mxu0 %v4921
        %v5002 = vpop.f32.mrf.mxu0
        %v5003 = vadd.f32 %v4841, %v5002
        %5004 = vmatmul.f32.gmra.mxu0 %v4923
        %v5005 = vpop.f32.mrf.mxu0
        %v5006 = vadd.f32 %v4842, %v5005
        %5007 = vmatmul.f32.gmra.mxu0 %v4925
        %v5008 = vpop.f32.mrf.mxu0
        %v5009 = vadd.f32 %v4843, %v5008
        %5010 = vmatmul.f32.gmra.mxu0 %v4927
        %v5011 = vpop.f32.mrf.mxu0
        %v5012 = vadd.f32 %v4844, %v5011
        %5013 = vmatmul.f32.gmra.mxu0 %v4929
        %v5014 = vpop.f32.mrf.mxu0
        %v5015 = vadd.f32 %v4845, %v5014
        %5016 = vmatmul.f32.gmra.mxu0 %v4931
        %v5017 = vpop.f32.mrf.mxu0
        %v5018 = vadd.f32 %v4846, %v5017
        %5019 = vmatmul.f32.gmra.mxu0 %v4933
        %v5020 = vpop.f32.mrf.mxu0
        %v5021 = vadd.f32 %v4847, %v5020
        %5022 = vmatmul.f32.gmra.mxu0 %v4935
        %v5023 = vpop.f32.mrf.mxu0
        %v5024 = vadd.f32 %v4848, %v5023
        %5025 = vmatmul.f32.gmra.mxu0 %v4937
        %v5026 = vpop.f32.mrf.mxu0
        %v5027 = vadd.f32 %v4849, %v5026
        %5028 = vmatmul.f32.gmra.mxu0 %v4939
        %v5029 = vpop.f32.mrf.mxu0
        %v5030 = vadd.f32 %v4850, %v5029
        %5031 = vmatmul.f32.gmra.mxu0 %v4941
        %v5032 = vpop.f32.mrf.mxu0
        %v5033 = vadd.f32 %v4851, %v5032
        %5034 = vmatmul.f32.gmra.mxu0 %v4943
        %v5035 = vpop.f32.mrf.mxu0
        %v5036 = vadd.f32 %v4852, %v5035
        %5037 = vmatmul.f32.gmra.mxu0 %v4945
        %v5038 = vpop.f32.mrf.mxu0
        %v5039 = vadd.f32 %v4853, %v5038
        %5040 = vmatmul.f32.gmra.mxu0 %v4947
        %v5041 = vpop.f32.mrf.mxu0
        %v5042 = vadd.f32 %v4854, %v5041
        %5043 = vmatmul.f32.gmra.mxu0 %v4949
        %v5044 = vpop.f32.mrf.mxu0
        %v5045 = vadd.f32 %v4855, %v5044
        %5046 = vmatmul.f32.gmra.mxu0 %v4951
        %v5047 = vpop.f32.mrf.mxu0
        %v5048 = vadd.f32 %v4856, %v5047
        %5049 = vdwg.mxu0
        %5050 = vmax.xlane.f32.xlu0 %v5003
        %v5051 = vpop.xlane.xlu0 %5050
        %5052 = vmax.xlane.f32.xlu0 %v5006
        %v5053 = vpop.xlane.xlu0 %5052
        %5054 = vmax.xlane.f32.xlu0 %v5009
        %v5055 = vpop.xlane.xlu0 %5054
        %5056 = vmax.xlane.f32.xlu0 %v5012
        %v5057 = vpop.xlane.xlu0 %5056
        %5058 = vmax.xlane.f32.xlu0 %v5015
        %v5059 = vpop.xlane.xlu0 %5058
        %5060 = vmax.xlane.f32.xlu0 %v5018
        %v5061 = vpop.xlane.xlu0 %5060
        %5062 = vmax.xlane.f32.xlu0 %v5021
        %v5063 = vpop.xlane.xlu0 %5062
        %5064 = vmax.xlane.f32.xlu0 %v5024
        %v5065 = vpop.xlane.xlu0 %5064
        %5066 = vmax.xlane.f32.xlu0 %v5027
        %v5067 = vpop.xlane.xlu0 %5066
        %5068 = vmax.xlane.f32.xlu0 %v5030
        %v5069 = vpop.xlane.xlu0 %5068
        %5070 = vmax.xlane.f32.xlu0 %v5033
        %v5071 = vpop.xlane.xlu0 %5070
        %5072 = vmax.xlane.f32.xlu0 %v5036
        %v5073 = vpop.xlane.xlu0 %5072
        %5074 = vmax.xlane.f32.xlu0 %v5039
        %v5075 = vpop.xlane.xlu0 %5074
        %5076 = vmax.xlane.f32.xlu0 %v5042
        %v5077 = vpop.xlane.xlu0 %5076
        %5078 = vmax.xlane.f32.xlu0 %v5045
        %v5079 = vpop.xlane.xlu0 %5078
        %5080 = vmax.xlane.f32.xlu0 %v5048
        %v5081 = vpop.xlane.xlu0 %5080
        %v5082 = vsub.f32 %v5003, %v5051
        %v5083 = vsub.f32 %v5006, %v5053
        %v5084 = vsub.f32 %v5009, %v5055
        %v5085 = vsub.f32 %v5012, %v5057
        %v5086 = vsub.f32 %v5015, %v5059
        %v5087 = vsub.f32 %v5018, %v5061
        %v5088 = vsub.f32 %v5021, %v5063
        %v5089 = vsub.f32 %v5024, %v5065
        %v5090 = vsub.f32 %v5027, %v5067
        %v5091 = vsub.f32 %v5030, %v5069
        %v5092 = vsub.f32 %v5033, %v5071
        %v5093 = vsub.f32 %v5036, %v5073
        %v5094 = vsub.f32 %v5039, %v5075
        %v5095 = vsub.f32 %v5042, %v5077
        %v5096 = vsub.f32 %v5045, %v5079
        %v5097 = vsub.f32 %v5048, %v5081
        %v5098 = vmul.f32 %v5082, 1.442695
        %v5099 = vpow.pop %v5098
        %v5100 = vmul.f32 %v5083, 1.442695
        %v5101 = vpow.pop %v5100
        %v5102 = vmul.f32 %v5084, 1.442695
        %v5103 = vpow.pop %v5102
        %v5104 = vmul.f32 %v5085, 1.442695
        %v5105 = vpow.pop %v5104
        %v5106 = vmul.f32 %v5086, 1.442695
        %v5107 = vpow.pop %v5106
        %v5108 = vmul.f32 %v5087, 1.442695
        %v5109 = vpow.pop %v5108
        %v5110 = vmul.f32 %v5088, 1.442695
        %v5111 = vpow.pop %v5110
        %v5112 = vmul.f32 %v5089, 1.442695
        %v5113 = vpow.pop %v5112
        %v5114 = vmul.f32 %v5090, 1.442695
        %v5115 = vpow.pop %v5114
        %v5116 = vmul.f32 %v5091, 1.442695
        %v5117 = vpow.pop %v5116
        %v5118 = vmul.f32 %v5092, 1.442695
        %v5119 = vpow.pop %v5118
        %v5120 = vmul.f32 %v5093, 1.442695
        %v5121 = vpow.pop %v5120
        %v5122 = vmul.f32 %v5094, 1.442695
        %v5123 = vpow.pop %v5122
        %v5124 = vmul.f32 %v5095, 1.442695
        %v5125 = vpow.pop %v5124
        %v5126 = vmul.f32 %v5096, 1.442695
        %v5127 = vpow.pop %v5126
        %v5128 = vmul.f32 %v5097, 1.442695
        %v5129 = vpow.pop %v5128
        %5130 = vadd.xlane.f32.xlu0 %v5099
        %v5131 = vpop.xlane.xlu0 %5130
        %5132 = vadd.xlane.f32.xlu0 %v5101
        %v5133 = vpop.xlane.xlu0 %5132
        %5134 = vadd.xlane.f32.xlu0 %v5103
        %v5135 = vpop.xlane.xlu0 %5134
        %5136 = vadd.xlane.f32.xlu0 %v5105
        %v5137 = vpop.xlane.xlu0 %5136
        %5138 = vadd.xlane.f32.xlu0 %v5107
        %v5139 = vpop.xlane.xlu0 %5138
        %5140 = vadd.xlane.f32.xlu0 %v5109
        %v5141 = vpop.xlane.xlu0 %5140
        %5142 = vadd.xlane.f32.xlu0 %v5111
        %v5143 = vpop.xlane.xlu0 %5142
        %5144 = vadd.xlane.f32.xlu0 %v5113
        %v5145 = vpop.xlane.xlu0 %5144
        %5146 = vadd.xlane.f32.xlu0 %v5115
        %v5147 = vpop.xlane.xlu0 %5146
        %5148 = vadd.xlane.f32.xlu0 %v5117
        %v5149 = vpop.xlane.xlu0 %5148
        %5150 = vadd.xlane.f32.xlu0 %v5119
        %v5151 = vpop.xlane.xlu0 %5150
        %5152 = vadd.xlane.f32.xlu0 %v5121
        %v5153 = vpop.xlane.xlu0 %5152
        %5154 = vadd.xlane.f32.xlu0 %v5123
        %v5155 = vpop.xlane.xlu0 %5154
        %5156 = vadd.xlane.f32.xlu0 %v5125
        %v5157 = vpop.xlane.xlu0 %5156
        %5158 = vadd.xlane.f32.xlu0 %v5127
        %v5159 = vpop.xlane.xlu0 %5158
        %5160 = vadd.xlane.f32.xlu0 %v5129
        %v5161 = vpop.xlane.xlu0 %5160
        %v5162 = vrcp.pop %v5131
        %v5163 = vrcp.pop %v5133
        %v5164 = vrcp.pop %v5135
        %v5165 = vrcp.pop %v5137
        %v5166 = vrcp.pop %v5139
        %v5167 = vrcp.pop %v5141
        %v5168 = vrcp.pop %v5143
        %v5169 = vrcp.pop %v5145
        %v5170 = vrcp.pop %v5147
        %v5171 = vrcp.pop %v5149
        %v5172 = vrcp.pop %v5151
        %v5173 = vrcp.pop %v5153
        %v5174 = vrcp.pop %v5155
        %v5175 = vrcp.pop %v5157
        %v5176 = vrcp.pop %v5159
        %v5177 = vrcp.pop %v5161
        %v5178 = vmul.f32 %v5099, %v5162
        %v5179 = vmul.f32 %v5101, %v5163
        %v5180 = vmul.f32 %v5103, %v5164
        %v5181 = vmul.f32 %v5105, %v5165
        %v5182 = vmul.f32 %v5107, %v5166
        %v5183 = vmul.f32 %v5109, %v5167
        %v5184 = vmul.f32 %v5111, %v5168
        %v5185 = vmul.f32 %v5113, %v5169
        %v5186 = vmul.f32 %v5115, %v5170
        %v5187 = vmul.f32 %v5117, %v5171
        %v5188 = vmul.f32 %v5119, %v5172
        %v5189 = vmul.f32 %v5121, %v5173
        %v5190 = vmul.f32 %v5123, %v5174
        %v5191 = vmul.f32 %v5125, %v5175
        %v5192 = vmul.f32 %v5127, %v5176
        %v5193 = vmul.f32 %v5129, %v5177
        %5194 = vrot.lane.b32.xlu0 %v4310, 56
        %v5195 = vpop.permute.xlu0 %5194
        %5196 = vrot.lane.b32.xlu0 %v4313, 56
        %v5197 = vpop.permute.xlu0 %5196
        %5198 = vrot.lane.b32.xlu0 %v4316, 56
        %v5199 = vpop.permute.xlu0 %5198
        %5200 = vrot.lane.b32.xlu0 %v4319, 56
        %v5201 = vpop.permute.xlu0 %5200
        %5202 = vrot.lane.b32.xlu0 %v4322, 56
        %v5203 = vpop.permute.xlu0 %5202
        %5204 = vrot.lane.b32.xlu0 %v4325, 56
        %v5205 = vpop.permute.xlu0 %5204
        %5206 = vrot.lane.b32.xlu0 %v4328, 56
        %v5207 = vpop.permute.xlu0 %5206
        %5208 = vrot.lane.b32.xlu0 %v4331, 56
        %v5209 = vpop.permute.xlu0 %5208
        %5210 = vrot.lane.b32.xlu0 %v4334, 56
        %v5211 = vpop.permute.xlu0 %5210
        %5212 = vrot.lane.b32.xlu0 %v4337, 56
        %v5213 = vpop.permute.xlu0 %5212
        %5214 = vrot.lane.b32.xlu0 %v4340, 56
        %v5215 = vpop.permute.xlu0 %5214
        %5216 = vrot.lane.b32.xlu0 %v4343, 56
        %v5217 = vpop.permute.xlu0 %5216
        %5218 = vrot.lane.b32.xlu0 %v4346, 56
        %v5219 = vpop.permute.xlu0 %5218
        %5220 = vrot.lane.b32.xlu0 %v4349, 56
        %v5221 = vpop.permute.xlu0 %5220
        %5222 = vrot.lane.b32.xlu0 %v4352, 56
        %v5223 = vpop.permute.xlu0 %5222
        %5224 = vrot.lane.b32.xlu0 %v4355, 56
        %v5225 = vpop.permute.xlu0 %5224
        %5242 = vmatpush.msra.mxu0 %v5225
        %5243 = vmatpush.msra.mxu0 %v5223
        %5244 = vmatpush.msra.mxu0 %v5221
        %5245 = vmatpush.msra.mxu0 %v5219
        %5246 = vmatpush.msra.mxu0 %v5217
        %5247 = vmatpush.msra.mxu0 %v5215
        %5248 = vmatpush.msra.mxu0 %v5213
        %5249 = vmatpush.msra.mxu0 %v5211
        %5250 = vmatpush.msra.mxu0 %v5209
        %5251 = vmatpush.msra.mxu0 %v5207
        %5252 = vmatpush.msra.mxu0 %v5205
        %5253 = vmatpush.msra.mxu0 %v5203
        %5254 = vmatpush.msra.mxu0 %v5201
        %5255 = vmatpush.msra.mxu0 %v5199
        %5256 = vmatpush.msra.mxu0 %v5197
        %5257 = vmatpush.msra.mxu0 %v5195
        %5258 = vmatmul.f32.gmra.mxu0 %v5178
        %v5259 = vpop.f32.mrf.mxu0
        %v5260 = vadd.f32 0.0, %v5259
        %5261 = vmatmul.f32.gmra.mxu0 %v5179
        %v5262 = vpop.f32.mrf.mxu0
        %v5263 = vadd.f32 0.0, %v5262
        %5264 = vmatmul.f32.gmra.mxu0 %v5180
        %v5265 = vpop.f32.mrf.mxu0
        %v5266 = vadd.f32 0.0, %v5265
        %5267 = vmatmul.f32.gmra.mxu0 %v5181
        %v5268 = vpop.f32.mrf.mxu0
        %v5269 = vadd.f32 0.0, %v5268
        %5270 = vmatmul.f32.gmra.mxu0 %v5182
        %v5271 = vpop.f32.mrf.mxu0
        %v5272 = vadd.f32 0.0, %v5271
        %5273 = vmatmul.f32.gmra.mxu0 %v5183
        %v5274 = vpop.f32.mrf.mxu0
        %v5275 = vadd.f32 0.0, %v5274
        %5276 = vmatmul.f32.gmra.mxu0 %v5184
        %v5277 = vpop.f32.mrf.mxu0
        %v5278 = vadd.f32 0.0, %v5277
        %5279 = vmatmul.f32.gmra.mxu0 %v5185
        %v5280 = vpop.f32.mrf.mxu0
        %v5281 = vadd.f32 0.0, %v5280
        %5282 = vmatmul.f32.gmra.mxu0 %v5186
        %v5283 = vpop.f32.mrf.mxu0
        %v5284 = vadd.f32 0.0, %v5283
        %5285 = vmatmul.f32.gmra.mxu0 %v5187
        %v5286 = vpop.f32.mrf.mxu0
        %v5287 = vadd.f32 0.0, %v5286
        %5288 = vmatmul.f32.gmra.mxu0 %v5188
        %v5289 = vpop.f32.mrf.mxu0
        %v5290 = vadd.f32 0.0, %v5289
        %5291 = vmatmul.f32.gmra.mxu0 %v5189
        %v5292 = vpop.f32.mrf.mxu0
        %v5293 = vadd.f32 0.0, %v5292
        %5294 = vmatmul.f32.gmra.mxu0 %v5190
        %v5295 = vpop.f32.mrf.mxu0
        %v5296 = vadd.f32 0.0, %v5295
        %5297 = vmatmul.f32.gmra.mxu0 %v5191
        %v5298 = vpop.f32.mrf.mxu0
        %v5299 = vadd.f32 0.0, %v5298
        %5300 = vmatmul.f32.gmra.mxu0 %v5192
        %v5301 = vpop.f32.mrf.mxu0
        %v5302 = vadd.f32 0.0, %v5301
        %5303 = vmatmul.f32.gmra.mxu0 %v5193
        %v5304 = vpop.f32.mrf.mxu0
        %v5305 = vadd.f32 0.0, %v5304
        %5306 = vdwg.mxu0
        %v5308 = vsel %vm726, %v5260, 0
        %v5311 = vsel %vm726, %v5263, 0
        %v5314 = vsel %vm726, %v5266, 0
        %v5317 = vsel %vm726, %v5269, 0
        %v5320 = vsel %vm726, %v5272, 0
        %v5323 = vsel %vm726, %v5275, 0
        %v5326 = vsel %vm726, %v5278, 0
        %v5329 = vsel %vm726, %v5281, 0
        %v5332 = vsel %vm726, %v5284, 0
        %v5335 = vsel %vm726, %v5287, 0
        %v5338 = vsel %vm726, %v5290, 0
        %v5341 = vsel %vm726, %v5293, 0
        %v5344 = vsel %vm726, %v5296, 0
        %v5347 = vsel %vm726, %v5299, 0
        %v5350 = vsel %vm726, %v5302, 0
        %v5353 = vsel %vm726, %v5305, 0
        %5355 = vmatpush.msra.mxu0 0.0
        %5356 = vmatpush.msra.mxu0 0.0
        %5357 = vmatpush.msra.mxu0 0.0
        %5358 = vmatpush.msra.mxu0 0.0
        %5359 = vmatpush.msra.mxu0 0.0
        %5360 = vmatpush.msra.mxu0 0.0
        %5361 = vmatpush.msra.mxu0 0.0
        %5362 = vmatpush.msra.mxu0 0.0
        %5363 = vmatpush.msra.mxu0 0.0
        %5364 = vmatpush.msra.mxu0 0.0
        %5365 = vmatpush.msra.mxu0 0.0
        %5366 = vmatpush.msra.mxu0 0.0
        %5367 = vmatpush.msra.mxu0 0.0
        %5368 = vmatpush.msra.mxu0 0.0
        %5369 = vmatpush.msra.mxu0 0.0
        %5370 = vmatpush.msra.mxu0 %v4229
        %5371 = vmatmul.f32.gmra.mxu0 %v5308
        %v5372 = vpop.f32.mrf.mxu0
        %v5373 = vadd.f32 0.0, %v5372
        %5374 = vmatmul.f32.gmra.mxu0 %v5311
        %v5375 = vpop.f32.mrf.mxu0
        %v5376 = vadd.f32 0.0, %v5375
        %5377 = vmatmul.f32.gmra.mxu0 %v5314
        %v5378 = vpop.f32.mrf.mxu0
        %v5379 = vadd.f32 0.0, %v5378
        %5380 = vmatmul.f32.gmra.mxu0 %v5317
        %v5381 = vpop.f32.mrf.mxu0
        %v5382 = vadd.f32 0.0, %v5381
        %5383 = vmatmul.f32.gmra.mxu0 %v5320
        %v5384 = vpop.f32.mrf.mxu0
        %v5385 = vadd.f32 0.0, %v5384
        %5386 = vmatmul.f32.gmra.mxu0 %v5323
        %v5387 = vpop.f32.mrf.mxu0
        %v5388 = vadd.f32 0.0, %v5387
        %5389 = vmatmul.f32.gmra.mxu0 %v5326
        %v5390 = vpop.f32.mrf.mxu0
        %v5391 = vadd.f32 0.0, %v5390
        %5392 = vmatmul.f32.gmra.mxu0 %v5329
        %v5393 = vpop.f32.mrf.mxu0
        %v5394 = vadd.f32 0.0, %v5393
        %5395 = vmatmul.f32.gmra.mxu0 %v5332
        %v5396 = vpop.f32.mrf.mxu0
        %v5397 = vadd.f32 0.0, %v5396
        %5398 = vmatmul.f32.gmra.mxu0 %v5335
        %v5399 = vpop.f32.mrf.mxu0
        %v5400 = vadd.f32 0.0, %v5399
        %5401 = vmatmul.f32.gmra.mxu0 %v5338
        %v5402 = vpop.f32.mrf.mxu0
        %v5403 = vadd.f32 0.0, %v5402
        %5404 = vmatmul.f32.gmra.mxu0 %v5341
        %v5405 = vpop.f32.mrf.mxu0
        %v5406 = vadd.f32 0.0, %v5405
        %5407 = vmatmul.f32.gmra.mxu0 %v5344
        %v5408 = vpop.f32.mrf.mxu0
        %v5409 = vadd.f32 0.0, %v5408
        %5410 = vmatmul.f32.gmra.mxu0 %v5347
        %v5411 = vpop.f32.mrf.mxu0
        %v5412 = vadd.f32 0.0, %v5411
        %5413 = vmatmul.f32.gmra.mxu0 %v5350
        %v5414 = vpop.f32.mrf.mxu0
        %v5415 = vadd.f32 0.0, %v5414
        %5416 = vmatmul.f32.gmra.mxu0 %v5353
        %v5417 = vpop.f32.mrf.mxu0
        %v5418 = vadd.f32 0.0, %v5417
        %5419 = vdwg.mxu0
        %v5421 = vsel %vm726, %v4777, 0
        %v5424 = vsel %vm726, %v4780, 0
        %v5427 = vsel %vm726, %v4783, 0
        %v5430 = vsel %vm726, %v4786, 0
        %v5433 = vsel %vm726, %v4789, 0
        %v5436 = vsel %vm726, %v4792, 0
        %v5439 = vsel %vm726, %v4795, 0
        %v5442 = vsel %vm726, %v4798, 0
        %v5445 = vsel %vm726, %v4801, 0
        %v5448 = vsel %vm726, %v4804, 0
        %v5451 = vsel %vm726, %v4807, 0
        %v5454 = vsel %vm726, %v4810, 0
        %v5457 = vsel %vm726, %v4813, 0
        %v5460 = vsel %vm726, %v4816, 0
        %v5463 = vsel %vm726, %v4819, 0
        %v5466 = vsel %vm726, %v4822, 0
        %5468 = vmatpush.msra.mxu0 0.0
        %5469 = vmatpush.msra.mxu0 0.0
        %5470 = vmatpush.msra.mxu0 0.0
        %5471 = vmatpush.msra.mxu0 0.0
        %5472 = vmatpush.msra.mxu0 0.0
        %5473 = vmatpush.msra.mxu0 0.0
        %5474 = vmatpush.msra.mxu0 0.0
        %5475 = vmatpush.msra.mxu0 0.0
        %5476 = vmatpush.msra.mxu0 0.0
        %5477 = vmatpush.msra.mxu0 0.0
        %5478 = vmatpush.msra.mxu0 0.0
        %5479 = vmatpush.msra.mxu0 0.0
        %5480 = vmatpush.msra.mxu0 0.0
        %5481 = vmatpush.msra.mxu0 0.0
        %5482 = vmatpush.msra.mxu0 0.0
        %5483 = vmatpush.msra.mxu0 %v4228
        %5484 = vmatmul.f32.gmra.mxu0 %v5421
        %v5485 = vpop.f32.mrf.mxu0
        %v5486 = vadd.f32 %v5373, %v5485
        %5487 = vmatmul.f32.gmra.mxu0 %v5424
        %v5488 = vpop.f32.mrf.mxu0
        %v5489 = vadd.f32 %v5376, %v5488
        %5490 = vmatmul.f32.gmra.mxu0 %v5427
        %v5491 = vpop.f32.mrf.mxu0
        %v5492 = vadd.f32 %v5379, %v5491
        %5493 = vmatmul.f32.gmra.mxu0 %v5430
        %v5494 = vpop.f32.mrf.mxu0
        %v5495 = vadd.f32 %v5382, %v5494
        %5496 = vmatmul.f32.gmra.mxu0 %v5433
        %v5497 = vpop.f32.mrf.mxu0
        %v5498 = vadd.f32 %v5385, %v5497
        %5499 = vmatmul.f32.gmra.mxu0 %v5436
        %v5500 = vpop.f32.mrf.mxu0
        %v5501 = vadd.f32 %v5388, %v5500
        %5502 = vmatmul.f32.gmra.mxu0 %v5439
        %v5503 = vpop.f32.mrf.mxu0
        %v5504 = vadd.f32 %v5391, %v5503
        %5505 = vmatmul.f32.gmra.mxu0 %v5442
        %v5506 = vpop.f32.mrf.mxu0
        %v5507 = vadd.f32 %v5394, %v5506
        %5508 = vmatmul.f32.gmra.mxu0 %v5445
        %v5509 = vpop.f32.mrf.mxu0
        %v5510 = vadd.f32 %v5397, %v5509
        %5511 = vmatmul.f32.gmra.mxu0 %v5448
        %v5512 = vpop.f32.mrf.mxu0
        %v5513 = vadd.f32 %v5400, %v5512
        %5514 = vmatmul.f32.gmra.mxu0 %v5451
        %v5515 = vpop.f32.mrf.mxu0
        %v5516 = vadd.f32 %v5403, %v5515
        %5517 = vmatmul.f32.gmra.mxu0 %v5454
        %v5518 = vpop.f32.mrf.mxu0
        %v5519 = vadd.f32 %v5406, %v5518
        %5520 = vmatmul.f32.gmra.mxu0 %v5457
        %v5521 = vpop.f32.mrf.mxu0
        %v5522 = vadd.f32 %v5409, %v5521
        %5523 = vmatmul.f32.gmra.mxu0 %v5460
        %v5524 = vpop.f32.mrf.mxu0
        %v5525 = vadd.f32 %v5412, %v5524
        %5526 = vmatmul.f32.gmra.mxu0 %v5463
        %v5527 = vpop.f32.mrf.mxu0
        %v5528 = vadd.f32 %v5415, %v5527
        %5529 = vmatmul.f32.gmra.mxu0 %v5466
        %v5530 = vpop.f32.mrf.mxu0
        %v5531 = vadd.f32 %v5418, %v5530
        %5532 = vdwg.mxu0
        %s5533 = scalar_lea.vmem %s1, 384
        %v5534 = vld [vmem:[%s5533] sm:$0xf]
        %v5535 = vld [vmem:[%s5533 + $0x4] sm:$0xf]
        %v5536 = vld [vmem:[%s5533 + $0x8] sm:$0xf]
        %v5537 = vld [vmem:[%s5533 + $0xc] sm:$0xf]
        %v5538 = vld [vmem:[%s5533 + $0x10] sm:$0xf]
        %v5539 = vld [vmem:[%s5533 + $0x14] sm:$0xf]
        %v5540 = vld [vmem:[%s5533 + $0x18] sm:$0xf]
        %v5541 = vld [vmem:[%s5533 + $0x1c] sm:$0xf]
        %v5542 = vld [vmem:[%s5533 + $0x20] sm:$0xf]
        %v5543 = vld [vmem:[%s5533 + $0x24] sm:$0xf]
        %v5544 = vld [vmem:[%s5533 + $0x28] sm:$0xf]
        %v5545 = vld [vmem:[%s5533 + $0x2c] sm:$0xf]
        %v5546 = vld [vmem:[%s5533 + $0x30] sm:$0xf]
        %v5547 = vld [vmem:[%s5533 + $0x34] sm:$0xf]
        %v5548 = vld [vmem:[%s5533 + $0x38] sm:$0xf]
        %v5549 = vld [vmem:[%s5533 + $0x3c] sm:$0xf]
        %v5550 = vunpack.c.l.bf16 %v5534
        %v5551 = vunpack.c.l.bf16 %v5535
        %v5552 = vunpack.c.l.bf16 %v5536
        %v5553 = vunpack.c.l.bf16 %v5537
        %v5554 = vunpack.c.l.bf16 %v5538
        %v5555 = vunpack.c.l.bf16 %v5539
        %v5556 = vunpack.c.l.bf16 %v5540
        %v5557 = vunpack.c.l.bf16 %v5541
        %v5558 = vunpack.c.l.bf16 %v5542
        %v5559 = vunpack.c.l.bf16 %v5543
        %v5560 = vunpack.c.l.bf16 %v5544
        %v5561 = vunpack.c.l.bf16 %v5545
        %v5562 = vunpack.c.l.bf16 %v5546
        %v5563 = vunpack.c.l.bf16 %v5547
        %v5564 = vunpack.c.l.bf16 %v5548
        %v5565 = vunpack.c.l.bf16 %v5549
        %5566 = vrot.lane.b32.xlu0 %v4310, 112
        %v5567 = vpop.permute.xlu0 %5566
        %5568 = vrot.lane.b32.xlu0 %v4313, 112
        %v5569 = vpop.permute.xlu0 %5568
        %5570 = vrot.lane.b32.xlu0 %v4316, 112
        %v5571 = vpop.permute.xlu0 %5570
        %5572 = vrot.lane.b32.xlu0 %v4319, 112
        %v5573 = vpop.permute.xlu0 %5572
        %5574 = vrot.lane.b32.xlu0 %v4322, 112
        %v5575 = vpop.permute.xlu0 %5574
        %5576 = vrot.lane.b32.xlu0 %v4325, 112
        %v5577 = vpop.permute.xlu0 %5576
        %5578 = vrot.lane.b32.xlu0 %v4328, 112
        %v5579 = vpop.permute.xlu0 %5578
        %5580 = vrot.lane.b32.xlu0 %v4331, 112
        %v5581 = vpop.permute.xlu0 %5580
        %5582 = vrot.lane.b32.xlu0 %v4334, 112
        %v5583 = vpop.permute.xlu0 %5582
        %5584 = vrot.lane.b32.xlu0 %v4337, 112
        %v5585 = vpop.permute.xlu0 %5584
        %5586 = vrot.lane.b32.xlu0 %v4340, 112
        %v5587 = vpop.permute.xlu0 %5586
        %5588 = vrot.lane.b32.xlu0 %v4343, 112
        %v5589 = vpop.permute.xlu0 %5588
        %5590 = vrot.lane.b32.xlu0 %v4346, 112
        %v5591 = vpop.permute.xlu0 %5590
        %5592 = vrot.lane.b32.xlu0 %v4349, 112
        %v5593 = vpop.permute.xlu0 %5592
        %5594 = vrot.lane.b32.xlu0 %v4352, 112
        %v5595 = vpop.permute.xlu0 %5594
        %5596 = vrot.lane.b32.xlu0 %v4355, 112
        %v5597 = vpop.permute.xlu0 %5596
        %5598 = vrot.lane.b32.xlu0 %v4310, 80
        %v5599 = vpop.permute.xlu0 %5598
        %5600 = vrot.lane.b32.xlu0 %v4313, 80
        %v5601 = vpop.permute.xlu0 %5600
        %5602 = vrot.lane.b32.xlu0 %v4316, 80
        %v5603 = vpop.permute.xlu0 %5602
        %5604 = vrot.lane.b32.xlu0 %v4319, 80
        %v5605 = vpop.permute.xlu0 %5604
        %5606 = vrot.lane.b32.xlu0 %v4322, 80
        %v5607 = vpop.permute.xlu0 %5606
        %5608 = vrot.lane.b32.xlu0 %v4325, 80
        %v5609 = vpop.permute.xlu0 %5608
        %5610 = vrot.lane.b32.xlu0 %v4328, 80
        %v5611 = vpop.permute.xlu0 %5610
        %5612 = vrot.lane.b32.xlu0 %v4331, 80
        %v5613 = vpop.permute.xlu0 %5612
        %5614 = vrot.lane.b32.xlu0 %v4334, 80
        %v5615 = vpop.permute.xlu0 %5614
        %5616 = vrot.lane.b32.xlu0 %v4337, 80
        %v5617 = vpop.permute.xlu0 %5616
        %5618 = vrot.lane.b32.xlu0 %v4340, 80
        %v5619 = vpop.permute.xlu0 %5618
        %5620 = vrot.lane.b32.xlu0 %v4343, 80
        %v5621 = vpop.permute.xlu0 %5620
        %5622 = vrot.lane.b32.xlu0 %v4346, 80
        %v5623 = vpop.permute.xlu0 %5622
        %5624 = vrot.lane.b32.xlu0 %v4349, 80
        %v5625 = vpop.permute.xlu0 %5624
        %5626 = vrot.lane.b32.xlu0 %v4352, 80
        %v5627 = vpop.permute.xlu0 %5626
        %5628 = vrot.lane.b32.xlu0 %v4355, 80
        %v5629 = vpop.permute.xlu0 %5628
        %v5630 = vsel %vm726, %v5567, 0
        %v5632 = vsel %vm726, %v5569, 0
        %v5634 = vsel %vm726, %v5571, 0
        %v5636 = vsel %vm726, %v5573, 0
        %v5638 = vsel %vm726, %v5575, 0
        %v5640 = vsel %vm726, %v5577, 0
        %v5642 = vsel %vm726, %v5579, 0
        %v5644 = vsel %vm726, %v5581, 0
        %v5646 = vsel %vm726, %v5583, 0
        %v5648 = vsel %vm726, %v5585, 0
        %v5650 = vsel %vm726, %v5587, 0
        %v5652 = vsel %vm726, %v5589, 0
        %v5654 = vsel %vm726, %v5591, 0
        %v5656 = vsel %vm726, %v5593, 0
        %v5658 = vsel %vm726, %v5595, 0
        %v5660 = vsel %vm726, %v5597, 0
        %v5662 = vsel %vm726, %v5599, 0
        %v5664 = vsel %vm726, %v5601, 0
        %v5666 = vsel %vm726, %v5603, 0
        %v5668 = vsel %vm726, %v5605, 0
        %v5670 = vsel %vm726, %v5607, 0
        %v5672 = vsel %vm726, %v5609, 0
        %v5674 = vsel %vm726, %v5611, 0
        %v5676 = vsel %vm726, %v5613, 0
        %v5678 = vsel %vm726, %v5615, 0
        %v5680 = vsel %vm726, %v5617, 0
        %v5682 = vsel %vm726, %v5619, 0
        %v5684 = vsel %vm726, %v5621, 0
        %v5686 = vsel %vm726, %v5623, 0
        %v5688 = vsel %vm726, %v5625, 0
        %v5690 = vsel %vm726, %v5627, 0
        %v5692 = vsel %vm726, %v5629, 0
        %5694 = vmatpush.xpose.msra.mxu0 %v5692
        %5695 = vmatpush.xpose.msra.mxu0 %v5690
        %5696 = vmatpush.xpose.msra.mxu0 %v5688
        %5697 = vmatpush.xpose.msra.mxu0 %v5686
        %5698 = vmatpush.xpose.msra.mxu0 %v5684
        %5699 = vmatpush.xpose.msra.mxu0 %v5682
        %5700 = vmatpush.xpose.msra.mxu0 %v5680
        %5701 = vmatpush.xpose.msra.mxu0 %v5678
        %5702 = vmatpush.xpose.msra.mxu0 %v5676
        %5703 = vmatpush.xpose.msra.mxu0 %v5674
        %5704 = vmatpush.xpose.msra.mxu0 %v5672
        %5705 = vmatpush.xpose.msra.mxu0 %v5670
        %5706 = vmatpush.xpose.msra.mxu0 %v5668
        %5707 = vmatpush.xpose.msra.mxu0 %v5666
        %5708 = vmatpush.xpose.msra.mxu0 %v5664
        %5709 = vmatpush.xpose.msra.mxu0 %v5662
        %5710 = vmatmul.f32.gmra.mxu0 %v5630
        %v5711 = vpop.f32.mrf.mxu0
        %v5712 = vadd.f32 %v5550, %v5711
        %5713 = vmatmul.f32.gmra.mxu0 %v5632
        %v5714 = vpop.f32.mrf.mxu0
        %v5715 = vadd.f32 %v5551, %v5714
        %5716 = vmatmul.f32.gmra.mxu0 %v5634
        %v5717 = vpop.f32.mrf.mxu0
        %v5718 = vadd.f32 %v5552, %v5717
        %5719 = vmatmul.f32.gmra.mxu0 %v5636
        %v5720 = vpop.f32.mrf.mxu0
        %v5721 = vadd.f32 %v5553, %v5720
        %5722 = vmatmul.f32.gmra.mxu0 %v5638
        %v5723 = vpop.f32.mrf.mxu0
        %v5724 = vadd.f32 %v5554, %v5723
        %5725 = vmatmul.f32.gmra.mxu0 %v5640
        %v5726 = vpop.f32.mrf.mxu0
        %v5727 = vadd.f32 %v5555, %v5726
        %5728 = vmatmul.f32.gmra.mxu0 %v5642
        %v5729 = vpop.f32.mrf.mxu0
        %v5730 = vadd.f32 %v5556, %v5729
        %5731 = vmatmul.f32.gmra.mxu0 %v5644
        %v5732 = vpop.f32.mrf.mxu0
        %v5733 = vadd.f32 %v5557, %v5732
        %5734 = vmatmul.f32.gmra.mxu0 %v5646
        %v5735 = vpop.f32.mrf.mxu0
        %v5736 = vadd.f32 %v5558, %v5735
        %5737 = vmatmul.f32.gmra.mxu0 %v5648
        %v5738 = vpop.f32.mrf.mxu0
        %v5739 = vadd.f32 %v5559, %v5738
        %5740 = vmatmul.f32.gmra.mxu0 %v5650
        %v5741 = vpop.f32.mrf.mxu0
        %v5742 = vadd.f32 %v5560, %v5741
        %5743 = vmatmul.f32.gmra.mxu0 %v5652
        %v5744 = vpop.f32.mrf.mxu0
        %v5745 = vadd.f32 %v5561, %v5744
        %5746 = vmatmul.f32.gmra.mxu0 %v5654
        %v5747 = vpop.f32.mrf.mxu0
        %v5748 = vadd.f32 %v5562, %v5747
        %5749 = vmatmul.f32.gmra.mxu0 %v5656
        %v5750 = vpop.f32.mrf.mxu0
        %v5751 = vadd.f32 %v5563, %v5750
        %5752 = vmatmul.f32.gmra.mxu0 %v5658
        %v5753 = vpop.f32.mrf.mxu0
        %v5754 = vadd.f32 %v5564, %v5753
        %5755 = vmatmul.f32.gmra.mxu0 %v5660
        %v5756 = vpop.f32.mrf.mxu0
        %v5757 = vadd.f32 %v5565, %v5756
        %5758 = vdwg.mxu0
        %5759 = vmax.xlane.f32.xlu0 %v5712
        %v5760 = vpop.xlane.xlu0 %5759
        %5761 = vmax.xlane.f32.xlu0 %v5715
        %v5762 = vpop.xlane.xlu0 %5761
        %5763 = vmax.xlane.f32.xlu0 %v5718
        %v5764 = vpop.xlane.xlu0 %5763
        %5765 = vmax.xlane.f32.xlu0 %v5721
        %v5766 = vpop.xlane.xlu0 %5765
        %5767 = vmax.xlane.f32.xlu0 %v5724
        %v5768 = vpop.xlane.xlu0 %5767
        %5769 = vmax.xlane.f32.xlu0 %v5727
        %v5770 = vpop.xlane.xlu0 %5769
        %5771 = vmax.xlane.f32.xlu0 %v5730
        %v5772 = vpop.xlane.xlu0 %5771
        %5773 = vmax.xlane.f32.xlu0 %v5733
        %v5774 = vpop.xlane.xlu0 %5773
        %5775 = vmax.xlane.f32.xlu0 %v5736
        %v5776 = vpop.xlane.xlu0 %5775
        %5777 = vmax.xlane.f32.xlu0 %v5739
        %v5778 = vpop.xlane.xlu0 %5777
        %5779 = vmax.xlane.f32.xlu0 %v5742
        %v5780 = vpop.xlane.xlu0 %5779
        %5781 = vmax.xlane.f32.xlu0 %v5745
        %v5782 = vpop.xlane.xlu0 %5781
        %5783 = vmax.xlane.f32.xlu0 %v5748
        %v5784 = vpop.xlane.xlu0 %5783
        %5785 = vmax.xlane.f32.xlu0 %v5751
        %v5786 = vpop.xlane.xlu0 %5785
        %5787 = vmax.xlane.f32.xlu0 %v5754
        %v5788 = vpop.xlane.xlu0 %5787
        %5789 = vmax.xlane.f32.xlu0 %v5757
        %v5790 = vpop.xlane.xlu0 %5789
        %v5791 = vsub.f32 %v5712, %v5760
        %v5792 = vsub.f32 %v5715, %v5762
        %v5793 = vsub.f32 %v5718, %v5764
        %v5794 = vsub.f32 %v5721, %v5766
        %v5795 = vsub.f32 %v5724, %v5768
        %v5796 = vsub.f32 %v5727, %v5770
        %v5797 = vsub.f32 %v5730, %v5772
        %v5798 = vsub.f32 %v5733, %v5774
        %v5799 = vsub.f32 %v5736, %v5776
        %v5800 = vsub.f32 %v5739, %v5778
        %v5801 = vsub.f32 %v5742, %v5780
        %v5802 = vsub.f32 %v5745, %v5782
        %v5803 = vsub.f32 %v5748, %v5784
        %v5804 = vsub.f32 %v5751, %v5786
        %v5805 = vsub.f32 %v5754, %v5788
        %v5806 = vsub.f32 %v5757, %v5790
        %v5807 = vmul.f32 %v5791, 1.442695
        %v5808 = vpow.pop %v5807
        %v5809 = vmul.f32 %v5792, 1.442695
        %v5810 = vpow.pop %v5809
        %v5811 = vmul.f32 %v5793, 1.442695
        %v5812 = vpow.pop %v5811
        %v5813 = vmul.f32 %v5794, 1.442695
        %v5814 = vpow.pop %v5813
        %v5815 = vmul.f32 %v5795, 1.442695
        %v5816 = vpow.pop %v5815
        %v5817 = vmul.f32 %v5796, 1.442695
        %v5818 = vpow.pop %v5817
        %v5819 = vmul.f32 %v5797, 1.442695
        %v5820 = vpow.pop %v5819
        %v5821 = vmul.f32 %v5798, 1.442695
        %v5822 = vpow.pop %v5821
        %v5823 = vmul.f32 %v5799, 1.442695
        %v5824 = vpow.pop %v5823
        %v5825 = vmul.f32 %v5800, 1.442695
        %v5826 = vpow.pop %v5825
        %v5827 = vmul.f32 %v5801, 1.442695
        %v5828 = vpow.pop %v5827
        %v5829 = vmul.f32 %v5802, 1.442695
        %v5830 = vpow.pop %v5829
        %v5831 = vmul.f32 %v5803, 1.442695
        %v5832 = vpow.pop %v5831
        %v5833 = vmul.f32 %v5804, 1.442695
        %v5834 = vpow.pop %v5833
        %v5835 = vmul.f32 %v5805, 1.442695
        %v5836 = vpow.pop %v5835
        %v5837 = vmul.f32 %v5806, 1.442695
        %v5838 = vpow.pop %v5837
        %5839 = vadd.xlane.f32.xlu0 %v5808
        %v5840 = vpop.xlane.xlu0 %5839
        %5841 = vadd.xlane.f32.xlu0 %v5810
        %v5842 = vpop.xlane.xlu0 %5841
        %5843 = vadd.xlane.f32.xlu0 %v5812
        %v5844 = vpop.xlane.xlu0 %5843
        %5845 = vadd.xlane.f32.xlu0 %v5814
        %v5846 = vpop.xlane.xlu0 %5845
        %5847 = vadd.xlane.f32.xlu0 %v5816
        %v5848 = vpop.xlane.xlu0 %5847
        %5849 = vadd.xlane.f32.xlu0 %v5818
        %v5850 = vpop.xlane.xlu0 %5849
        %5851 = vadd.xlane.f32.xlu0 %v5820
        %v5852 = vpop.xlane.xlu0 %5851
        %5853 = vadd.xlane.f32.xlu0 %v5822
        %v5854 = vpop.xlane.xlu0 %5853
        %5855 = vadd.xlane.f32.xlu0 %v5824
        %v5856 = vpop.xlane.xlu0 %5855
        %5857 = vadd.xlane.f32.xlu0 %v5826
        %v5858 = vpop.xlane.xlu0 %5857
        %5859 = vadd.xlane.f32.xlu0 %v5828
        %v5860 = vpop.xlane.xlu0 %5859
        %5861 = vadd.xlane.f32.xlu0 %v5830
        %v5862 = vpop.xlane.xlu0 %5861
        %5863 = vadd.xlane.f32.xlu0 %v5832
        %v5864 = vpop.xlane.xlu0 %5863
        %5865 = vadd.xlane.f32.xlu0 %v5834
        %v5866 = vpop.xlane.xlu0 %5865
        %5867 = vadd.xlane.f32.xlu0 %v5836
        %v5868 = vpop.xlane.xlu0 %5867
        %5869 = vadd.xlane.f32.xlu0 %v5838
        %v5870 = vpop.xlane.xlu0 %5869
        %v5871 = vrcp.pop %v5840
        %v5872 = vrcp.pop %v5842
        %v5873 = vrcp.pop %v5844
        %v5874 = vrcp.pop %v5846
        %v5875 = vrcp.pop %v5848
        %v5876 = vrcp.pop %v5850
        %v5877 = vrcp.pop %v5852
        %v5878 = vrcp.pop %v5854
        %v5879 = vrcp.pop %v5856
        %v5880 = vrcp.pop %v5858
        %v5881 = vrcp.pop %v5860
        %v5882 = vrcp.pop %v5862
        %v5883 = vrcp.pop %v5864
        %v5884 = vrcp.pop %v5866
        %v5885 = vrcp.pop %v5868
        %v5886 = vrcp.pop %v5870
        %v5887 = vmul.f32 %v5808, %v5871
        %v5888 = vmul.f32 %v5810, %v5872
        %v5889 = vmul.f32 %v5812, %v5873
        %v5890 = vmul.f32 %v5814, %v5874
        %v5891 = vmul.f32 %v5816, %v5875
        %v5892 = vmul.f32 %v5818, %v5876
        %v5893 = vmul.f32 %v5820, %v5877
        %v5894 = vmul.f32 %v5822, %v5878
        %v5895 = vmul.f32 %v5824, %v5879
        %v5896 = vmul.f32 %v5826, %v5880
        %v5897 = vmul.f32 %v5828, %v5881
        %v5898 = vmul.f32 %v5830, %v5882
        %v5899 = vmul.f32 %v5832, %v5883
        %v5900 = vmul.f32 %v5834, %v5884
        %v5901 = vmul.f32 %v5836, %v5885
        %v5902 = vmul.f32 %v5838, %v5886
        %5903 = vrot.lane.b32.xlu0 %v4310, 48
        %v5904 = vpop.permute.xlu0 %5903
        %5905 = vrot.lane.b32.xlu0 %v4313, 48
        %v5906 = vpop.permute.xlu0 %5905
        %5907 = vrot.lane.b32.xlu0 %v4316, 48
        %v5908 = vpop.permute.xlu0 %5907
        %5909 = vrot.lane.b32.xlu0 %v4319, 48
        %v5910 = vpop.permute.xlu0 %5909
        %5911 = vrot.lane.b32.xlu0 %v4322, 48
        %v5912 = vpop.permute.xlu0 %5911
        %5913 = vrot.lane.b32.xlu0 %v4325, 48
        %v5914 = vpop.permute.xlu0 %5913
        %5915 = vrot.lane.b32.xlu0 %v4328, 48
        %v5916 = vpop.permute.xlu0 %5915
        %5917 = vrot.lane.b32.xlu0 %v4331, 48
        %v5918 = vpop.permute.xlu0 %5917
        %5919 = vrot.lane.b32.xlu0 %v4334, 48
        %v5920 = vpop.permute.xlu0 %5919
        %5921 = vrot.lane.b32.xlu0 %v4337, 48
        %v5922 = vpop.permute.xlu0 %5921
        %5923 = vrot.lane.b32.xlu0 %v4340, 48
        %v5924 = vpop.permute.xlu0 %5923
        %5925 = vrot.lane.b32.xlu0 %v4343, 48
        %v5926 = vpop.permute.xlu0 %5925
        %5927 = vrot.lane.b32.xlu0 %v4346, 48
        %v5928 = vpop.permute.xlu0 %5927
        %5929 = vrot.lane.b32.xlu0 %v4349, 48
        %v5930 = vpop.permute.xlu0 %5929
        %5931 = vrot.lane.b32.xlu0 %v4352, 48
        %v5932 = vpop.permute.xlu0 %5931
        %5933 = vrot.lane.b32.xlu0 %v4355, 48
        %v5934 = vpop.permute.xlu0 %5933
        %5951 = vmatpush.msra.mxu0 %v5934
        %5952 = vmatpush.msra.mxu0 %v5932
        %5953 = vmatpush.msra.mxu0 %v5930
        %5954 = vmatpush.msra.mxu0 %v5928
        %5955 = vmatpush.msra.mxu0 %v5926
        %5956 = vmatpush.msra.mxu0 %v5924
        %5957 = vmatpush.msra.mxu0 %v5922
        %5958 = vmatpush.msra.mxu0 %v5920
        %5959 = vmatpush.msra.mxu0 %v5918
        %5960 = vmatpush.msra.mxu0 %v5916
        %5961 = vmatpush.msra.mxu0 %v5914
        %5962 = vmatpush.msra.mxu0 %v5912
        %5963 = vmatpush.msra.mxu0 %v5910
        %5964 = vmatpush.msra.mxu0 %v5908
        %5965 = vmatpush.msra.mxu0 %v5906
        %5966 = vmatpush.msra.mxu0 %v5904
        %5967 = vmatmul.f32.gmra.mxu0 %v5887
        %v5968 = vpop.f32.mrf.mxu0
        %v5969 = vadd.f32 0.0, %v5968
        %5970 = vmatmul.f32.gmra.mxu0 %v5888
        %v5971 = vpop.f32.mrf.mxu0
        %v5972 = vadd.f32 0.0, %v5971
        %5973 = vmatmul.f32.gmra.mxu0 %v5889
        %v5974 = vpop.f32.mrf.mxu0
        %v5975 = vadd.f32 0.0, %v5974
        %5976 = vmatmul.f32.gmra.mxu0 %v5890
        %v5977 = vpop.f32.mrf.mxu0
        %v5978 = vadd.f32 0.0, %v5977
        %5979 = vmatmul.f32.gmra.mxu0 %v5891
        %v5980 = vpop.f32.mrf.mxu0
        %v5981 = vadd.f32 0.0, %v5980
        %5982 = vmatmul.f32.gmra.mxu0 %v5892
        %v5983 = vpop.f32.mrf.mxu0
        %v5984 = vadd.f32 0.0, %v5983
        %5985 = vmatmul.f32.gmra.mxu0 %v5893
        %v5986 = vpop.f32.mrf.mxu0
        %v5987 = vadd.f32 0.0, %v5986
        %5988 = vmatmul.f32.gmra.mxu0 %v5894
        %v5989 = vpop.f32.mrf.mxu0
        %v5990 = vadd.f32 0.0, %v5989
        %5991 = vmatmul.f32.gmra.mxu0 %v5895
        %v5992 = vpop.f32.mrf.mxu0
        %v5993 = vadd.f32 0.0, %v5992
        %5994 = vmatmul.f32.gmra.mxu0 %v5896
        %v5995 = vpop.f32.mrf.mxu0
        %v5996 = vadd.f32 0.0, %v5995
        %5997 = vmatmul.f32.gmra.mxu0 %v5897
        %v5998 = vpop.f32.mrf.mxu0
        %v5999 = vadd.f32 0.0, %v5998
        %6000 = vmatmul.f32.gmra.mxu0 %v5898
        %v6001 = vpop.f32.mrf.mxu0
        %v6002 = vadd.f32 0.0, %v6001
        %6003 = vmatmul.f32.gmra.mxu0 %v5899
        %v6004 = vpop.f32.mrf.mxu0
        %v6005 = vadd.f32 0.0, %v6004
        %6006 = vmatmul.f32.gmra.mxu0 %v5900
        %v6007 = vpop.f32.mrf.mxu0
        %v6008 = vadd.f32 0.0, %v6007
        %6009 = vmatmul.f32.gmra.mxu0 %v5901
        %v6010 = vpop.f32.mrf.mxu0
        %v6011 = vadd.f32 0.0, %v6010
        %6012 = vmatmul.f32.gmra.mxu0 %v5902
        %v6013 = vpop.f32.mrf.mxu0
        %v6014 = vadd.f32 0.0, %v6013
        %6015 = vdwg.mxu0
        %v6017 = vsel %vm726, %v5969, 0
        %v6020 = vsel %vm726, %v5972, 0
        %v6023 = vsel %vm726, %v5975, 0
        %v6026 = vsel %vm726, %v5978, 0
        %v6029 = vsel %vm726, %v5981, 0
        %v6032 = vsel %vm726, %v5984, 0
        %v6035 = vsel %vm726, %v5987, 0
        %v6038 = vsel %vm726, %v5990, 0
        %v6041 = vsel %vm726, %v5993, 0
        %v6044 = vsel %vm726, %v5996, 0
        %v6047 = vsel %vm726, %v5999, 0
        %v6050 = vsel %vm726, %v6002, 0
        %v6053 = vsel %vm726, %v6005, 0
        %v6056 = vsel %vm726, %v6008, 0
        %v6059 = vsel %vm726, %v6011, 0
        %v6062 = vsel %vm726, %v6014, 0
        %6064 = vmatpush.msra.mxu0 0.0
        %6065 = vmatpush.msra.mxu0 0.0
        %6066 = vmatpush.msra.mxu0 0.0
        %6067 = vmatpush.msra.mxu0 0.0
        %6068 = vmatpush.msra.mxu0 0.0
        %6069 = vmatpush.msra.mxu0 0.0
        %6070 = vmatpush.msra.mxu0 0.0
        %6071 = vmatpush.msra.mxu0 0.0
        %6072 = vmatpush.msra.mxu0 0.0
        %6073 = vmatpush.msra.mxu0 0.0
        %6074 = vmatpush.msra.mxu0 0.0
        %6075 = vmatpush.msra.mxu0 0.0
        %6076 = vmatpush.msra.mxu0 0.0
        %6077 = vmatpush.msra.mxu0 0.0
        %6078 = vmatpush.msra.mxu0 0.0
        %6079 = vmatpush.msra.mxu0 %v4230
        %6080 = vmatmul.f32.gmra.mxu0 %v6017
        %v6081 = vpop.f32.mrf.mxu0
        %v6082 = vadd.f32 0.0, %v6081
        %6083 = vmatmul.f32.gmra.mxu0 %v6020
        %v6084 = vpop.f32.mrf.mxu0
        %v6085 = vadd.f32 0.0, %v6084
        %6086 = vmatmul.f32.gmra.mxu0 %v6023
        %v6087 = vpop.f32.mrf.mxu0
        %v6088 = vadd.f32 0.0, %v6087
        %6089 = vmatmul.f32.gmra.mxu0 %v6026
        %v6090 = vpop.f32.mrf.mxu0
        %v6091 = vadd.f32 0.0, %v6090
        %6092 = vmatmul.f32.gmra.mxu0 %v6029
        %v6093 = vpop.f32.mrf.mxu0
        %v6094 = vadd.f32 0.0, %v6093
        %6095 = vmatmul.f32.gmra.mxu0 %v6032
        %v6096 = vpop.f32.mrf.mxu0
        %v6097 = vadd.f32 0.0, %v6096
        %6098 = vmatmul.f32.gmra.mxu0 %v6035
        %v6099 = vpop.f32.mrf.mxu0
        %v6100 = vadd.f32 0.0, %v6099
        %6101 = vmatmul.f32.gmra.mxu0 %v6038
        %v6102 = vpop.f32.mrf.mxu0
        %v6103 = vadd.f32 0.0, %v6102
        %6104 = vmatmul.f32.gmra.mxu0 %v6041
        %v6105 = vpop.f32.mrf.mxu0
        %v6106 = vadd.f32 0.0, %v6105
        %6107 = vmatmul.f32.gmra.mxu0 %v6044
        %v6108 = vpop.f32.mrf.mxu0
        %v6109 = vadd.f32 0.0, %v6108
        %6110 = vmatmul.f32.gmra.mxu0 %v6047
        %v6111 = vpop.f32.mrf.mxu0
        %v6112 = vadd.f32 0.0, %v6111
        %6113 = vmatmul.f32.gmra.mxu0 %v6050
        %v6114 = vpop.f32.mrf.mxu0
        %v6115 = vadd.f32 0.0, %v6114
        %6116 = vmatmul.f32.gmra.mxu0 %v6053
        %v6117 = vpop.f32.mrf.mxu0
        %v6118 = vadd.f32 0.0, %v6117
        %6119 = vmatmul.f32.gmra.mxu0 %v6056
        %v6120 = vpop.f32.mrf.mxu0
        %v6121 = vadd.f32 0.0, %v6120
        %6122 = vmatmul.f32.gmra.mxu0 %v6059
        %v6123 = vpop.f32.mrf.mxu0
        %v6124 = vadd.f32 0.0, %v6123
        %6125 = vmatmul.f32.gmra.mxu0 %v6062
        %v6126 = vpop.f32.mrf.mxu0
        %v6127 = vadd.f32 0.0, %v6126
        %6128 = vdwg.mxu0
        %v6129 = vadd.f32 %v5486, %v6082
        %v6130 = vadd.f32 %v5489, %v6085
        %v6131 = vadd.f32 %v5492, %v6088
        %v6132 = vadd.f32 %v5495, %v6091
        %v6133 = vadd.f32 %v5498, %v6094
        %v6134 = vadd.f32 %v5501, %v6097
        %v6135 = vadd.f32 %v5504, %v6100
        %v6136 = vadd.f32 %v5507, %v6103
        %v6137 = vadd.f32 %v5510, %v6106
        %v6138 = vadd.f32 %v5513, %v6109
        %v6139 = vadd.f32 %v5516, %v6112
        %v6140 = vadd.f32 %v5519, %v6115
        %v6141 = vadd.f32 %v5522, %v6118
        %v6142 = vadd.f32 %v5525, %v6121
        %v6143 = vadd.f32 %v5528, %v6124
        %v6144 = vadd.f32 %v5531, %v6127
        %s6145 = scalar_lea.vmem %s1, 448
        %v6146 = vld [vmem:[%s6145] sm:$0xf]
        %v6147 = vld [vmem:[%s6145 + $0x4] sm:$0xf]
        %v6148 = vld [vmem:[%s6145 + $0x8] sm:$0xf]
        %v6149 = vld [vmem:[%s6145 + $0xc] sm:$0xf]
        %v6150 = vld [vmem:[%s6145 + $0x10] sm:$0xf]
        %v6151 = vld [vmem:[%s6145 + $0x14] sm:$0xf]
        %v6152 = vld [vmem:[%s6145 + $0x18] sm:$0xf]
        %v6153 = vld [vmem:[%s6145 + $0x1c] sm:$0xf]
        %v6154 = vld [vmem:[%s6145 + $0x20] sm:$0xf]
        %v6155 = vld [vmem:[%s6145 + $0x24] sm:$0xf]
        %v6156 = vld [vmem:[%s6145 + $0x28] sm:$0xf]
        %v6157 = vld [vmem:[%s6145 + $0x2c] sm:$0xf]
        %v6158 = vld [vmem:[%s6145 + $0x30] sm:$0xf]
        %v6159 = vld [vmem:[%s6145 + $0x34] sm:$0xf]
        %v6160 = vld [vmem:[%s6145 + $0x38] sm:$0xf]
        %v6161 = vld [vmem:[%s6145 + $0x3c] sm:$0xf]
        %v6162 = vunpack.c.l.bf16 %v6146
        %v6163 = vunpack.c.l.bf16 %v6147
        %v6164 = vunpack.c.l.bf16 %v6148
        %v6165 = vunpack.c.l.bf16 %v6149
        %v6166 = vunpack.c.l.bf16 %v6150
        %v6167 = vunpack.c.l.bf16 %v6151
        %v6168 = vunpack.c.l.bf16 %v6152
        %v6169 = vunpack.c.l.bf16 %v6153
        %v6170 = vunpack.c.l.bf16 %v6154
        %v6171 = vunpack.c.l.bf16 %v6155
        %v6172 = vunpack.c.l.bf16 %v6156
        %v6173 = vunpack.c.l.bf16 %v6157
        %v6174 = vunpack.c.l.bf16 %v6158
        %v6175 = vunpack.c.l.bf16 %v6159
        %v6176 = vunpack.c.l.bf16 %v6160
        %v6177 = vunpack.c.l.bf16 %v6161
        %6178 = vrot.lane.b32.xlu0 %v4310, 104
        %v6179 = vpop.permute.xlu0 %6178
        %6180 = vrot.lane.b32.xlu0 %v4313, 104
        %v6181 = vpop.permute.xlu0 %6180
        %6182 = vrot.lane.b32.xlu0 %v4316, 104
        %v6183 = vpop.permute.xlu0 %6182
        %6184 = vrot.lane.b32.xlu0 %v4319, 104
        %v6185 = vpop.permute.xlu0 %6184
        %6186 = vrot.lane.b32.xlu0 %v4322, 104
        %v6187 = vpop.permute.xlu0 %6186
        %6188 = vrot.lane.b32.xlu0 %v4325, 104
        %v6189 = vpop.permute.xlu0 %6188
        %6190 = vrot.lane.b32.xlu0 %v4328, 104
        %v6191 = vpop.permute.xlu0 %6190
        %6192 = vrot.lane.b32.xlu0 %v4331, 104
        %v6193 = vpop.permute.xlu0 %6192
        %6194 = vrot.lane.b32.xlu0 %v4334, 104
        %v6195 = vpop.permute.xlu0 %6194
        %6196 = vrot.lane.b32.xlu0 %v4337, 104
        %v6197 = vpop.permute.xlu0 %6196
        %6198 = vrot.lane.b32.xlu0 %v4340, 104
        %v6199 = vpop.permute.xlu0 %6198
        %6200 = vrot.lane.b32.xlu0 %v4343, 104
        %v6201 = vpop.permute.xlu0 %6200
        %6202 = vrot.lane.b32.xlu0 %v4346, 104
        %v6203 = vpop.permute.xlu0 %6202
        %6204 = vrot.lane.b32.xlu0 %v4349, 104
        %v6205 = vpop.permute.xlu0 %6204
        %6206 = vrot.lane.b32.xlu0 %v4352, 104
        %v6207 = vpop.permute.xlu0 %6206
        %6208 = vrot.lane.b32.xlu0 %v4355, 104
        %v6209 = vpop.permute.xlu0 %6208
        %6210 = vrot.lane.b32.xlu0 %v4310, 72
        %v6211 = vpop.permute.xlu0 %6210
        %6212 = vrot.lane.b32.xlu0 %v4313, 72
        %v6213 = vpop.permute.xlu0 %6212
        %6214 = vrot.lane.b32.xlu0 %v4316, 72
        %v6215 = vpop.permute.xlu0 %6214
        %6216 = vrot.lane.b32.xlu0 %v4319, 72
        %v6217 = vpop.permute.xlu0 %6216
        %6218 = vrot.lane.b32.xlu0 %v4322, 72
        %v6219 = vpop.permute.xlu0 %6218
        %6220 = vrot.lane.b32.xlu0 %v4325, 72
        %v6221 = vpop.permute.xlu0 %6220
        %6222 = vrot.lane.b32.xlu0 %v4328, 72
        %v6223 = vpop.permute.xlu0 %6222
        %6224 = vrot.lane.b32.xlu0 %v4331, 72
        %v6225 = vpop.permute.xlu0 %6224
        %6226 = vrot.lane.b32.xlu0 %v4334, 72
        %v6227 = vpop.permute.xlu0 %6226
        %6228 = vrot.lane.b32.xlu0 %v4337, 72
        %v6229 = vpop.permute.xlu0 %6228
        %6230 = vrot.lane.b32.xlu0 %v4340, 72
        %v6231 = vpop.permute.xlu0 %6230
        %6232 = vrot.lane.b32.xlu0 %v4343, 72
        %v6233 = vpop.permute.xlu0 %6232
        %6234 = vrot.lane.b32.xlu0 %v4346, 72
        %v6235 = vpop.permute.xlu0 %6234
        %6236 = vrot.lane.b32.xlu0 %v4349, 72
        %v6237 = vpop.permute.xlu0 %6236
        %6238 = vrot.lane.b32.xlu0 %v4352, 72
        %v6239 = vpop.permute.xlu0 %6238
        %6240 = vrot.lane.b32.xlu0 %v4355, 72
        %v6241 = vpop.permute.xlu0 %6240
        %v6242 = vsel %vm726, %v6179, 0
        %v6244 = vsel %vm726, %v6181, 0
        %v6246 = vsel %vm726, %v6183, 0
        %v6248 = vsel %vm726, %v6185, 0
        %v6250 = vsel %vm726, %v6187, 0
        %v6252 = vsel %vm726, %v6189, 0
        %v6254 = vsel %vm726, %v6191, 0
        %v6256 = vsel %vm726, %v6193, 0
        %v6258 = vsel %vm726, %v6195, 0
        %v6260 = vsel %vm726, %v6197, 0
        %v6262 = vsel %vm726, %v6199, 0
        %v6264 = vsel %vm726, %v6201, 0
        %v6266 = vsel %vm726, %v6203, 0
        %v6268 = vsel %vm726, %v6205, 0
        %v6270 = vsel %vm726, %v6207, 0
        %v6272 = vsel %vm726, %v6209, 0
        %v6274 = vsel %vm726, %v6211, 0
        %v6276 = vsel %vm726, %v6213, 0
        %v6278 = vsel %vm726, %v6215, 0
        %v6280 = vsel %vm726, %v6217, 0
        %v6282 = vsel %vm726, %v6219, 0
        %v6284 = vsel %vm726, %v6221, 0
        %v6286 = vsel %vm726, %v6223, 0
        %v6288 = vsel %vm726, %v6225, 0
        %v6290 = vsel %vm726, %v6227, 0
        %v6292 = vsel %vm726, %v6229, 0
        %v6294 = vsel %vm726, %v6231, 0
        %v6296 = vsel %vm726, %v6233, 0
        %v6298 = vsel %vm726, %v6235, 0
        %v6300 = vsel %vm726, %v6237, 0
        %v6302 = vsel %vm726, %v6239, 0
        %v6304 = vsel %vm726, %v6241, 0
        %6306 = vmatpush.xpose.msra.mxu0 %v6304
        %6307 = vmatpush.xpose.msra.mxu0 %v6302
        %6308 = vmatpush.xpose.msra.mxu0 %v6300
        %6309 = vmatpush.xpose.msra.mxu0 %v6298
        %6310 = vmatpush.xpose.msra.mxu0 %v6296
        %6311 = vmatpush.xpose.msra.mxu0 %v6294
        %6312 = vmatpush.xpose.msra.mxu0 %v6292
        %6313 = vmatpush.xpose.msra.mxu0 %v6290
        %6314 = vmatpush.xpose.msra.mxu0 %v6288
        %6315 = vmatpush.xpose.msra.mxu0 %v6286
        %6316 = vmatpush.xpose.msra.mxu0 %v6284
        %6317 = vmatpush.xpose.msra.mxu0 %v6282
        %6318 = vmatpush.xpose.msra.mxu0 %v6280
        %6319 = vmatpush.xpose.msra.mxu0 %v6278
        %6320 = vmatpush.xpose.msra.mxu0 %v6276
        %6321 = vmatpush.xpose.msra.mxu0 %v6274
        %6322 = vmatmul.f32.gmra.mxu0 %v6242
        %v6323 = vpop.f32.mrf.mxu0
        %v6324 = vadd.f32 %v6162, %v6323
        %6325 = vmatmul.f32.gmra.mxu0 %v6244
        %v6326 = vpop.f32.mrf.mxu0
        %v6327 = vadd.f32 %v6163, %v6326
        %6328 = vmatmul.f32.gmra.mxu0 %v6246
        %v6329 = vpop.f32.mrf.mxu0
        %v6330 = vadd.f32 %v6164, %v6329
        %6331 = vmatmul.f32.gmra.mxu0 %v6248
        %v6332 = vpop.f32.mrf.mxu0
        %v6333 = vadd.f32 %v6165, %v6332
        %6334 = vmatmul.f32.gmra.mxu0 %v6250
        %v6335 = vpop.f32.mrf.mxu0
        %v6336 = vadd.f32 %v6166, %v6335
        %6337 = vmatmul.f32.gmra.mxu0 %v6252
        %v6338 = vpop.f32.mrf.mxu0
        %v6339 = vadd.f32 %v6167, %v6338
        %6340 = vmatmul.f32.gmra.mxu0 %v6254
        %v6341 = vpop.f32.mrf.mxu0
        %v6342 = vadd.f32 %v6168, %v6341
        %6343 = vmatmul.f32.gmra.mxu0 %v6256
        %v6344 = vpop.f32.mrf.mxu0
        %v6345 = vadd.f32 %v6169, %v6344
        %6346 = vmatmul.f32.gmra.mxu0 %v6258
        %v6347 = vpop.f32.mrf.mxu0
        %v6348 = vadd.f32 %v6170, %v6347
        %6349 = vmatmul.f32.gmra.mxu0 %v6260
        %v6350 = vpop.f32.mrf.mxu0
        %v6351 = vadd.f32 %v6171, %v6350
        %6352 = vmatmul.f32.gmra.mxu0 %v6262
        %v6353 = vpop.f32.mrf.mxu0
        %v6354 = vadd.f32 %v6172, %v6353
        %6355 = vmatmul.f32.gmra.mxu0 %v6264
        %v6356 = vpop.f32.mrf.mxu0
        %v6357 = vadd.f32 %v6173, %v6356
        %6358 = vmatmul.f32.gmra.mxu0 %v6266
        %v6359 = vpop.f32.mrf.mxu0
        %v6360 = vadd.f32 %v6174, %v6359
        %6361 = vmatmul.f32.gmra.mxu0 %v6268
        %v6362 = vpop.f32.mrf.mxu0
        %v6363 = vadd.f32 %v6175, %v6362
        %6364 = vmatmul.f32.gmra.mxu0 %v6270
        %v6365 = vpop.f32.mrf.mxu0
        %v6366 = vadd.f32 %v6176, %v6365
        %6367 = vmatmul.f32.gmra.mxu0 %v6272
        %v6368 = vpop.f32.mrf.mxu0
        %v6369 = vadd.f32 %v6177, %v6368
        %6370 = vdwg.mxu0
        %6371 = vmax.xlane.f32.xlu0 %v6324
        %v6372 = vpop.xlane.xlu0 %6371
        %6373 = vmax.xlane.f32.xlu0 %v6327
        %v6374 = vpop.xlane.xlu0 %6373
        %6375 = vmax.xlane.f32.xlu0 %v6330
        %v6376 = vpop.xlane.xlu0 %6375
        %6377 = vmax.xlane.f32.xlu0 %v6333
        %v6378 = vpop.xlane.xlu0 %6377
        %6379 = vmax.xlane.f32.xlu0 %v6336
        %v6380 = vpop.xlane.xlu0 %6379
        %6381 = vmax.xlane.f32.xlu0 %v6339
        %v6382 = vpop.xlane.xlu0 %6381
        %6383 = vmax.xlane.f32.xlu0 %v6342
        %v6384 = vpop.xlane.xlu0 %6383
        %6385 = vmax.xlane.f32.xlu0 %v6345
        %v6386 = vpop.xlane.xlu0 %6385
        %6387 = vmax.xlane.f32.xlu0 %v6348
        %v6388 = vpop.xlane.xlu0 %6387
        %6389 = vmax.xlane.f32.xlu0 %v6351
        %v6390 = vpop.xlane.xlu0 %6389
        %6391 = vmax.xlane.f32.xlu0 %v6354
        %v6392 = vpop.xlane.xlu0 %6391
        %6393 = vmax.xlane.f32.xlu0 %v6357
        %v6394 = vpop.xlane.xlu0 %6393
        %6395 = vmax.xlane.f32.xlu0 %v6360
        %v6396 = vpop.xlane.xlu0 %6395
        %6397 = vmax.xlane.f32.xlu0 %v6363
        %v6398 = vpop.xlane.xlu0 %6397
        %6399 = vmax.xlane.f32.xlu0 %v6366
        %v6400 = vpop.xlane.xlu0 %6399
        %6401 = vmax.xlane.f32.xlu0 %v6369
        %v6402 = vpop.xlane.xlu0 %6401
        %v6403 = vsub.f32 %v6324, %v6372
        %v6404 = vsub.f32 %v6327, %v6374
        %v6405 = vsub.f32 %v6330, %v6376
        %v6406 = vsub.f32 %v6333, %v6378
        %v6407 = vsub.f32 %v6336, %v6380
        %v6408 = vsub.f32 %v6339, %v6382
        %v6409 = vsub.f32 %v6342, %v6384
        %v6410 = vsub.f32 %v6345, %v6386
        %v6411 = vsub.f32 %v6348, %v6388
        %v6412 = vsub.f32 %v6351, %v6390
        %v6413 = vsub.f32 %v6354, %v6392
        %v6414 = vsub.f32 %v6357, %v6394
        %v6415 = vsub.f32 %v6360, %v6396
        %v6416 = vsub.f32 %v6363, %v6398
        %v6417 = vsub.f32 %v6366, %v6400
        %v6418 = vsub.f32 %v6369, %v6402
        %v6419 = vmul.f32 %v6403, 1.442695
        %v6420 = vpow.pop %v6419
        %v6421 = vmul.f32 %v6404, 1.442695
        %v6422 = vpow.pop %v6421
        %v6423 = vmul.f32 %v6405, 1.442695
        %v6424 = vpow.pop %v6423
        %v6425 = vmul.f32 %v6406, 1.442695
        %v6426 = vpow.pop %v6425
        %v6427 = vmul.f32 %v6407, 1.442695
        %v6428 = vpow.pop %v6427
        %v6429 = vmul.f32 %v6408, 1.442695
        %v6430 = vpow.pop %v6429
        %v6431 = vmul.f32 %v6409, 1.442695
        %v6432 = vpow.pop %v6431
        %v6433 = vmul.f32 %v6410, 1.442695
        %v6434 = vpow.pop %v6433
        %v6435 = vmul.f32 %v6411, 1.442695
        %v6436 = vpow.pop %v6435
        %v6437 = vmul.f32 %v6412, 1.442695
        %v6438 = vpow.pop %v6437
        %v6439 = vmul.f32 %v6413, 1.442695
        %v6440 = vpow.pop %v6439
        %v6441 = vmul.f32 %v6414, 1.442695
        %v6442 = vpow.pop %v6441
        %v6443 = vmul.f32 %v6415, 1.442695
        %v6444 = vpow.pop %v6443
        %v6445 = vmul.f32 %v6416, 1.442695
        %v6446 = vpow.pop %v6445
        %v6447 = vmul.f32 %v6417, 1.442695
        %v6448 = vpow.pop %v6447
        %v6449 = vmul.f32 %v6418, 1.442695
        %v6450 = vpow.pop %v6449
        %6451 = vadd.xlane.f32.xlu0 %v6420
        %v6452 = vpop.xlane.xlu0 %6451
        %6453 = vadd.xlane.f32.xlu0 %v6422
        %v6454 = vpop.xlane.xlu0 %6453
        %6455 = vadd.xlane.f32.xlu0 %v6424
        %v6456 = vpop.xlane.xlu0 %6455
        %6457 = vadd.xlane.f32.xlu0 %v6426
        %v6458 = vpop.xlane.xlu0 %6457
        %6459 = vadd.xlane.f32.xlu0 %v6428
        %v6460 = vpop.xlane.xlu0 %6459
        %6461 = vadd.xlane.f32.xlu0 %v6430
        %v6462 = vpop.xlane.xlu0 %6461
        %6463 = vadd.xlane.f32.xlu0 %v6432
        %v6464 = vpop.xlane.xlu0 %6463
        %6465 = vadd.xlane.f32.xlu0 %v6434
        %v6466 = vpop.xlane.xlu0 %6465
        %6467 = vadd.xlane.f32.xlu0 %v6436
        %v6468 = vpop.xlane.xlu0 %6467
        %6469 = vadd.xlane.f32.xlu0 %v6438
        %v6470 = vpop.xlane.xlu0 %6469
        %6471 = vadd.xlane.f32.xlu0 %v6440
        %v6472 = vpop.xlane.xlu0 %6471
        %6473 = vadd.xlane.f32.xlu0 %v6442
        %v6474 = vpop.xlane.xlu0 %6473
        %6475 = vadd.xlane.f32.xlu0 %v6444
        %v6476 = vpop.xlane.xlu0 %6475
        %6477 = vadd.xlane.f32.xlu0 %v6446
        %v6478 = vpop.xlane.xlu0 %6477
        %6479 = vadd.xlane.f32.xlu0 %v6448
        %v6480 = vpop.xlane.xlu0 %6479
        %6481 = vadd.xlane.f32.xlu0 %v6450
        %v6482 = vpop.xlane.xlu0 %6481
        %v6483 = vrcp.pop %v6452
        %v6484 = vrcp.pop %v6454
        %v6485 = vrcp.pop %v6456
        %v6486 = vrcp.pop %v6458
        %v6487 = vrcp.pop %v6460
        %v6488 = vrcp.pop %v6462
        %v6489 = vrcp.pop %v6464
        %v6490 = vrcp.pop %v6466
        %v6491 = vrcp.pop %v6468
        %v6492 = vrcp.pop %v6470
        %v6493 = vrcp.pop %v6472
        %v6494 = vrcp.pop %v6474
        %v6495 = vrcp.pop %v6476
        %v6496 = vrcp.pop %v6478
        %v6497 = vrcp.pop %v6480
        %v6498 = vrcp.pop %v6482
        %v6499 = vmul.f32 %v6420, %v6483
        %v6500 = vmul.f32 %v6422, %v6484
        %v6501 = vmul.f32 %v6424, %v6485
        %v6502 = vmul.f32 %v6426, %v6486
        %v6503 = vmul.f32 %v6428, %v6487
        %v6504 = vmul.f32 %v6430, %v6488
        %v6505 = vmul.f32 %v6432, %v6489
        %v6506 = vmul.f32 %v6434, %v6490
        %v6507 = vmul.f32 %v6436, %v6491
        %v6508 = vmul.f32 %v6438, %v6492
        %v6509 = vmul.f32 %v6440, %v6493
        %v6510 = vmul.f32 %v6442, %v6494
        %v6511 = vmul.f32 %v6444, %v6495
        %v6512 = vmul.f32 %v6446, %v6496
        %v6513 = vmul.f32 %v6448, %v6497
        %v6514 = vmul.f32 %v6450, %v6498
        %6515 = vrot.lane.b32.xlu0 %v4310, 40
        %v6516 = vpop.permute.xlu0 %6515
        %6517 = vrot.lane.b32.xlu0 %v4313, 40
        %v6518 = vpop.permute.xlu0 %6517
        %6519 = vrot.lane.b32.xlu0 %v4316, 40
        %v6520 = vpop.permute.xlu0 %6519
        %6521 = vrot.lane.b32.xlu0 %v4319, 40
        %v6522 = vpop.permute.xlu0 %6521
        %6523 = vrot.lane.b32.xlu0 %v4322, 40
        %v6524 = vpop.permute.xlu0 %6523
        %6525 = vrot.lane.b32.xlu0 %v4325, 40
        %v6526 = vpop.permute.xlu0 %6525
        %6527 = vrot.lane.b32.xlu0 %v4328, 40
        %v6528 = vpop.permute.xlu0 %6527
        %6529 = vrot.lane.b32.xlu0 %v4331, 40
        %v6530 = vpop.permute.xlu0 %6529
        %6531 = vrot.lane.b32.xlu0 %v4334, 40
        %v6532 = vpop.permute.xlu0 %6531
        %6533 = vrot.lane.b32.xlu0 %v4337, 40
        %v6534 = vpop.permute.xlu0 %6533
        %6535 = vrot.lane.b32.xlu0 %v4340, 40
        %v6536 = vpop.permute.xlu0 %6535
        %6537 = vrot.lane.b32.xlu0 %v4343, 40
        %v6538 = vpop.permute.xlu0 %6537
        %6539 = vrot.lane.b32.xlu0 %v4346, 40
        %v6540 = vpop.permute.xlu0 %6539
        %6541 = vrot.lane.b32.xlu0 %v4349, 40
        %v6542 = vpop.permute.xlu0 %6541
        %6543 = vrot.lane.b32.xlu0 %v4352, 40
        %v6544 = vpop.permute.xlu0 %6543
        %6545 = vrot.lane.b32.xlu0 %v4355, 40
        %v6546 = vpop.permute.xlu0 %6545
        %6563 = vmatpush.msra.mxu0 %v6546
        %6564 = vmatpush.msra.mxu0 %v6544
        %6565 = vmatpush.msra.mxu0 %v6542
        %6566 = vmatpush.msra.mxu0 %v6540
        %6567 = vmatpush.msra.mxu0 %v6538
        %6568 = vmatpush.msra.mxu0 %v6536
        %6569 = vmatpush.msra.mxu0 %v6534
        %6570 = vmatpush.msra.mxu0 %v6532
        %6571 = vmatpush.msra.mxu0 %v6530
        %6572 = vmatpush.msra.mxu0 %v6528
        %6573 = vmatpush.msra.mxu0 %v6526
        %6574 = vmatpush.msra.mxu0 %v6524
        %6575 = vmatpush.msra.mxu0 %v6522
        %6576 = vmatpush.msra.mxu0 %v6520
        %6577 = vmatpush.msra.mxu0 %v6518
        %6578 = vmatpush.msra.mxu0 %v6516
        %6579 = vmatmul.f32.gmra.mxu0 %v6499
        %v6580 = vpop.f32.mrf.mxu0
        %v6581 = vadd.f32 0.0, %v6580
        %6582 = vmatmul.f32.gmra.mxu0 %v6500
        %v6583 = vpop.f32.mrf.mxu0
        %v6584 = vadd.f32 0.0, %v6583
        %6585 = vmatmul.f32.gmra.mxu0 %v6501
        %v6586 = vpop.f32.mrf.mxu0
        %v6587 = vadd.f32 0.0, %v6586
        %6588 = vmatmul.f32.gmra.mxu0 %v6502
        %v6589 = vpop.f32.mrf.mxu0
        %v6590 = vadd.f32 0.0, %v6589
        %6591 = vmatmul.f32.gmra.mxu0 %v6503
        %v6592 = vpop.f32.mrf.mxu0
        %v6593 = vadd.f32 0.0, %v6592
        %6594 = vmatmul.f32.gmra.mxu0 %v6504
        %v6595 = vpop.f32.mrf.mxu0
        %v6596 = vadd.f32 0.0, %v6595
        %6597 = vmatmul.f32.gmra.mxu0 %v6505
        %v6598 = vpop.f32.mrf.mxu0
        %v6599 = vadd.f32 0.0, %v6598
        %6600 = vmatmul.f32.gmra.mxu0 %v6506
        %v6601 = vpop.f32.mrf.mxu0
        %v6602 = vadd.f32 0.0, %v6601
        %6603 = vmatmul.f32.gmra.mxu0 %v6507
        %v6604 = vpop.f32.mrf.mxu0
        %v6605 = vadd.f32 0.0, %v6604
        %6606 = vmatmul.f32.gmra.mxu0 %v6508
        %v6607 = vpop.f32.mrf.mxu0
        %v6608 = vadd.f32 0.0, %v6607
        %6609 = vmatmul.f32.gmra.mxu0 %v6509
        %v6610 = vpop.f32.mrf.mxu0
        %v6611 = vadd.f32 0.0, %v6610
        %6612 = vmatmul.f32.gmra.mxu0 %v6510
        %v6613 = vpop.f32.mrf.mxu0
        %v6614 = vadd.f32 0.0, %v6613
        %6615 = vmatmul.f32.gmra.mxu0 %v6511
        %v6616 = vpop.f32.mrf.mxu0
        %v6617 = vadd.f32 0.0, %v6616
        %6618 = vmatmul.f32.gmra.mxu0 %v6512
        %v6619 = vpop.f32.mrf.mxu0
        %v6620 = vadd.f32 0.0, %v6619
        %6621 = vmatmul.f32.gmra.mxu0 %v6513
        %v6622 = vpop.f32.mrf.mxu0
        %v6623 = vadd.f32 0.0, %v6622
        %6624 = vmatmul.f32.gmra.mxu0 %v6514
        %v6625 = vpop.f32.mrf.mxu0
        %v6626 = vadd.f32 0.0, %v6625
        %6627 = vdwg.mxu0
        %v6629 = vsel %vm726, %v6581, 0
        %v6632 = vsel %vm726, %v6584, 0
        %v6635 = vsel %vm726, %v6587, 0
        %v6638 = vsel %vm726, %v6590, 0
        %v6641 = vsel %vm726, %v6593, 0
        %v6644 = vsel %vm726, %v6596, 0
        %v6647 = vsel %vm726, %v6599, 0
        %v6650 = vsel %vm726, %v6602, 0
        %v6653 = vsel %vm726, %v6605, 0
        %v6656 = vsel %vm726, %v6608, 0
        %v6659 = vsel %vm726, %v6611, 0
        %v6662 = vsel %vm726, %v6614, 0
        %v6665 = vsel %vm726, %v6617, 0
        %v6668 = vsel %vm726, %v6620, 0
        %v6671 = vsel %vm726, %v6623, 0
        %v6674 = vsel %vm726, %v6626, 0
        %6676 = vmatpush.msra.mxu0 0.0
        %6677 = vmatpush.msra.mxu0 0.0
        %6678 = vmatpush.msra.mxu0 0.0
        %6679 = vmatpush.msra.mxu0 0.0
        %6680 = vmatpush.msra.mxu0 0.0
        %6681 = vmatpush.msra.mxu0 0.0
        %6682 = vmatpush.msra.mxu0 0.0
        %6683 = vmatpush.msra.mxu0 0.0
        %6684 = vmatpush.msra.mxu0 0.0
        %6685 = vmatpush.msra.mxu0 0.0
        %6686 = vmatpush.msra.mxu0 0.0
        %6687 = vmatpush.msra.mxu0 0.0
        %6688 = vmatpush.msra.mxu0 0.0
        %6689 = vmatpush.msra.mxu0 0.0
        %6690 = vmatpush.msra.mxu0 0.0
        %6691 = vmatpush.msra.mxu0 %v4231
        %6692 = vmatmul.f32.gmra.mxu0 %v6629
        %v6693 = vpop.f32.mrf.mxu0
        %v6694 = vadd.f32 0.0, %v6693
        %6695 = vmatmul.f32.gmra.mxu0 %v6632
        %v6696 = vpop.f32.mrf.mxu0
        %v6697 = vadd.f32 0.0, %v6696
        %6698 = vmatmul.f32.gmra.mxu0 %v6635
        %v6699 = vpop.f32.mrf.mxu0
        %v6700 = vadd.f32 0.0, %v6699
        %6701 = vmatmul.f32.gmra.mxu0 %v6638
        %v6702 = vpop.f32.mrf.mxu0
        %v6703 = vadd.f32 0.0, %v6702
        %6704 = vmatmul.f32.gmra.mxu0 %v6641
        %v6705 = vpop.f32.mrf.mxu0
        %v6706 = vadd.f32 0.0, %v6705
        %6707 = vmatmul.f32.gmra.mxu0 %v6644
        %v6708 = vpop.f32.mrf.mxu0
        %v6709 = vadd.f32 0.0, %v6708
        %6710 = vmatmul.f32.gmra.mxu0 %v6647
        %v6711 = vpop.f32.mrf.mxu0
        %v6712 = vadd.f32 0.0, %v6711
        %6713 = vmatmul.f32.gmra.mxu0 %v6650
        %v6714 = vpop.f32.mrf.mxu0
        %v6715 = vadd.f32 0.0, %v6714
        %6716 = vmatmul.f32.gmra.mxu0 %v6653
        %v6717 = vpop.f32.mrf.mxu0
        %v6718 = vadd.f32 0.0, %v6717
        %6719 = vmatmul.f32.gmra.mxu0 %v6656
        %v6720 = vpop.f32.mrf.mxu0
        %v6721 = vadd.f32 0.0, %v6720
        %6722 = vmatmul.f32.gmra.mxu0 %v6659
        %v6723 = vpop.f32.mrf.mxu0
        %v6724 = vadd.f32 0.0, %v6723
        %6725 = vmatmul.f32.gmra.mxu0 %v6662
        %v6726 = vpop.f32.mrf.mxu0
        %v6727 = vadd.f32 0.0, %v6726
        %6728 = vmatmul.f32.gmra.mxu0 %v6665
        %v6729 = vpop.f32.mrf.mxu0
        %v6730 = vadd.f32 0.0, %v6729
        %6731 = vmatmul.f32.gmra.mxu0 %v6668
        %v6732 = vpop.f32.mrf.mxu0
        %v6733 = vadd.f32 0.0, %v6732
        %6734 = vmatmul.f32.gmra.mxu0 %v6671
        %v6735 = vpop.f32.mrf.mxu0
        %v6736 = vadd.f32 0.0, %v6735
        %6737 = vmatmul.f32.gmra.mxu0 %v6674
        %v6738 = vpop.f32.mrf.mxu0
        %v6739 = vadd.f32 0.0, %v6738
        %6740 = vdwg.mxu0
        %v6741 = vadd.f32 %v6129, %v6694
        %v6742 = vadd.f32 %v6130, %v6697
        %v6743 = vadd.f32 %v6131, %v6700
        %v6744 = vadd.f32 %v6132, %v6703
        %v6745 = vadd.f32 %v6133, %v6706
        %v6746 = vadd.f32 %v6134, %v6709
        %v6747 = vadd.f32 %v6135, %v6712
        %v6748 = vadd.f32 %v6136, %v6715
        %v6749 = vadd.f32 %v6137, %v6718
        %v6750 = vadd.f32 %v6138, %v6721
        %v6751 = vadd.f32 %v6139, %v6724
        %v6752 = vadd.f32 %v6140, %v6727
        %v6753 = vadd.f32 %v6141, %v6730
        %v6754 = vadd.f32 %v6142, %v6733
        %v6755 = vadd.f32 %v6143, %v6736
        %v6756 = vadd.f32 %v6144, %v6739
        %s6757 = scalar_lea.vmem [#allocation6], 1
        %v6758 = vld [vmem:[%s6757] sm:$0x1]
        %v6760 = vperm.slane %v6758, 0
        %v6762 = vadd.f32 %v6741, %v6760
        %v6763 = vadd.f32 %v6742, %v6760
        %v6764 = vadd.f32 %v6743, %v6760
        %v6765 = vadd.f32 %v6744, %v6760
        %v6766 = vadd.f32 %v6745, %v6760
        %v6767 = vadd.f32 %v6746, %v6760
        %v6768 = vadd.f32 %v6747, %v6760
        %v6769 = vadd.f32 %v6748, %v6760
        %v6770 = vadd.f32 %v6749, %v6760
        %v6771 = vadd.f32 %v6750, %v6760
        %v6772 = vadd.f32 %v6751, %v6760
        %v6773 = vadd.f32 %v6752, %v6760
        %v6774 = vadd.f32 %v6753, %v6760
        %v6775 = vadd.f32 %v6754, %v6760
        %v6776 = vadd.f32 %v6755, %v6760
        %v6777 = vadd.f32 %v6756, %v6760
        %v6778 = vsel %vm532, %v6762, 0.0
        %6779 = vadd.xlane.f32.xlu0 %v6778
        %v6780 = vpop.xlane.xlu0 %6779
        %v6781 = vsel %vm532, %v6763, 0.0
        %6782 = vadd.xlane.f32.xlu0 %v6781
        %v6783 = vpop.xlane.xlu0 %6782
        %v6784 = vsel %vm532, %v6764, 0.0
        %6785 = vadd.xlane.f32.xlu0 %v6784
        %v6786 = vpop.xlane.xlu0 %6785
        %v6787 = vsel %vm532, %v6765, 0.0
        %6788 = vadd.xlane.f32.xlu0 %v6787
        %v6789 = vpop.xlane.xlu0 %6788
        %v6790 = vsel %vm532, %v6766, 0.0
        %6791 = vadd.xlane.f32.xlu0 %v6790
        %v6792 = vpop.xlane.xlu0 %6791
        %v6793 = vsel %vm532, %v6767, 0.0
        %6794 = vadd.xlane.f32.xlu0 %v6793
        %v6795 = vpop.xlane.xlu0 %6794
        %v6796 = vsel %vm532, %v6768, 0.0
        %6797 = vadd.xlane.f32.xlu0 %v6796
        %v6798 = vpop.xlane.xlu0 %6797
        %v6799 = vsel %vm532, %v6769, 0.0
        %6800 = vadd.xlane.f32.xlu0 %v6799
        %v6801 = vpop.xlane.xlu0 %6800
        %v6802 = vsel %vm532, %v6770, 0.0
        %6803 = vadd.xlane.f32.xlu0 %v6802
        %v6804 = vpop.xlane.xlu0 %6803
        %v6805 = vsel %vm532, %v6771, 0.0
        %6806 = vadd.xlane.f32.xlu0 %v6805
        %v6807 = vpop.xlane.xlu0 %6806
        %v6808 = vsel %vm532, %v6772, 0.0
        %6809 = vadd.xlane.f32.xlu0 %v6808
        %v6810 = vpop.xlane.xlu0 %6809
        %v6811 = vsel %vm532, %v6773, 0.0
        %6812 = vadd.xlane.f32.xlu0 %v6811
        %v6813 = vpop.xlane.xlu0 %6812
        %v6814 = vsel %vm532, %v6774, 0.0
        %6815 = vadd.xlane.f32.xlu0 %v6814
        %v6816 = vpop.xlane.xlu0 %6815
        %v6817 = vsel %vm532, %v6775, 0.0
        %6818 = vadd.xlane.f32.xlu0 %v6817
        %v6819 = vpop.xlane.xlu0 %6818
        %v6820 = vsel %vm532, %v6776, 0.0
        %6821 = vadd.xlane.f32.xlu0 %v6820
        %v6822 = vpop.xlane.xlu0 %6821
        %v6823 = vsel %vm532, %v6777, 0.0
        %6824 = vadd.xlane.f32.xlu0 %v6823
        %v6825 = vpop.xlane.xlu0 %6824
        %v6826 = vmul.f32 %v6780, %v3120
        %v6827 = vmul.f32 %v6783, %v3120
        %v6828 = vmul.f32 %v6786, %v3120
        %v6829 = vmul.f32 %v6789, %v3120
        %v6830 = vmul.f32 %v6792, %v3120
        %v6831 = vmul.f32 %v6795, %v3120
        %v6832 = vmul.f32 %v6798, %v3120
        %v6833 = vmul.f32 %v6801, %v3120
        %v6834 = vmul.f32 %v6804, %v3120
        %v6835 = vmul.f32 %v6807, %v3120
        %v6836 = vmul.f32 %v6810, %v3120
        %v6837 = vmul.f32 %v6813, %v3120
        %v6838 = vmul.f32 %v6816, %v3120
        %v6839 = vmul.f32 %v6819, %v3120
        %v6840 = vmul.f32 %v6822, %v3120
        %v6841 = vmul.f32 %v6825, %v3120
        %v6842 = vsub.f32 %v6762, %v6826
        %v6843 = vsub.f32 %v6763, %v6827
        %v6844 = vsub.f32 %v6764, %v6828
        %v6845 = vsub.f32 %v6765, %v6829
        %v6846 = vsub.f32 %v6766, %v6830
        %v6847 = vsub.f32 %v6767, %v6831
        %v6848 = vsub.f32 %v6768, %v6832
        %v6849 = vsub.f32 %v6769, %v6833
        %v6850 = vsub.f32 %v6770, %v6834
        %v6851 = vsub.f32 %v6771, %v6835
        %v6852 = vsub.f32 %v6772, %v6836
        %v6853 = vsub.f32 %v6773, %v6837
        %v6854 = vsub.f32 %v6774, %v6838
        %v6855 = vsub.f32 %v6775, %v6839
        %v6856 = vsub.f32 %v6776, %v6840
        %v6857 = vsub.f32 %v6777, %v6841
        %v6858 = vmul.f32 %v6842, %v6842
        %v6859 = vmul.f32 %v6843, %v6843
        %v6860 = vmul.f32 %v6844, %v6844
        %v6861 = vmul.f32 %v6845, %v6845
        %v6862 = vmul.f32 %v6846, %v6846
        %v6863 = vmul.f32 %v6847, %v6847
        %v6864 = vmul.f32 %v6848, %v6848
        %v6865 = vmul.f32 %v6849, %v6849
        %v6866 = vmul.f32 %v6850, %v6850
        %v6867 = vmul.f32 %v6851, %v6851
        %v6868 = vmul.f32 %v6852, %v6852
        %v6869 = vmul.f32 %v6853, %v6853
        %v6870 = vmul.f32 %v6854, %v6854
        %v6871 = vmul.f32 %v6855, %v6855
        %v6872 = vmul.f32 %v6856, %v6856
        %v6873 = vmul.f32 %v6857, %v6857
        %v6874 = vsel %vm532, %v6858, 0.0
        %6875 = vadd.xlane.f32.xlu0 %v6874
        %v6876 = vpop.xlane.xlu0 %6875
        %v6877 = vsel %vm532, %v6859, 0.0
        %6878 = vadd.xlane.f32.xlu0 %v6877
        %v6879 = vpop.xlane.xlu0 %6878
        %v6880 = vsel %vm532, %v6860, 0.0
        %6881 = vadd.xlane.f32.xlu0 %v6880
        %v6882 = vpop.xlane.xlu0 %6881
        %v6883 = vsel %vm532, %v6861, 0.0
        %6884 = vadd.xlane.f32.xlu0 %v6883
        %v6885 = vpop.xlane.xlu0 %6884
        %v6886 = vsel %vm532, %v6862, 0.0
        %6887 = vadd.xlane.f32.xlu0 %v6886
        %v6888 = vpop.xlane.xlu0 %6887
        %v6889 = vsel %vm532, %v6863, 0.0
        %6890 = vadd.xlane.f32.xlu0 %v6889
        %v6891 = vpop.xlane.xlu0 %6890
        %v6892 = vsel %vm532, %v6864, 0.0
        %6893 = vadd.xlane.f32.xlu0 %v6892
        %v6894 = vpop.xlane.xlu0 %6893
        %v6895 = vsel %vm532, %v6865, 0.0
        %6896 = vadd.xlane.f32.xlu0 %v6895
        %v6897 = vpop.xlane.xlu0 %6896
        %v6898 = vsel %vm532, %v6866, 0.0
        %6899 = vadd.xlane.f32.xlu0 %v6898
        %v6900 = vpop.xlane.xlu0 %6899
        %v6901 = vsel %vm532, %v6867, 0.0
        %6902 = vadd.xlane.f32.xlu0 %v6901
        %v6903 = vpop.xlane.xlu0 %6902
        %v6904 = vsel %vm532, %v6868, 0.0
        %6905 = vadd.xlane.f32.xlu0 %v6904
        %v6906 = vpop.xlane.xlu0 %6905
        %v6907 = vsel %vm532, %v6869, 0.0
        %6908 = vadd.xlane.f32.xlu0 %v6907
        %v6909 = vpop.xlane.xlu0 %6908
        %v6910 = vsel %vm532, %v6870, 0.0
        %6911 = vadd.xlane.f32.xlu0 %v6910
        %v6912 = vpop.xlane.xlu0 %6911
        %v6913 = vsel %vm532, %v6871, 0.0
        %6914 = vadd.xlane.f32.xlu0 %v6913
        %v6915 = vpop.xlane.xlu0 %6914
        %v6916 = vsel %vm532, %v6872, 0.0
        %6917 = vadd.xlane.f32.xlu0 %v6916
        %v6918 = vpop.xlane.xlu0 %6917
        %v6919 = vsel %vm532, %v6873, 0.0
        %6920 = vadd.xlane.f32.xlu0 %v6919
        %v6921 = vpop.xlane.xlu0 %6920
        %v6922 = vmul.f32 %v6876, %v3120
        %v6923 = vmul.f32 %v6879, %v3120
        %v6924 = vmul.f32 %v6882, %v3120
        %v6925 = vmul.f32 %v6885, %v3120
        %v6926 = vmul.f32 %v6888, %v3120
        %v6927 = vmul.f32 %v6891, %v3120
        %v6928 = vmul.f32 %v6894, %v3120
        %v6929 = vmul.f32 %v6897, %v3120
        %v6930 = vmul.f32 %v6900, %v3120
        %v6931 = vmul.f32 %v6903, %v3120
        %v6932 = vmul.f32 %v6906, %v3120
        %v6933 = vmul.f32 %v6909, %v3120
        %v6934 = vmul.f32 %v6912, %v3120
        %v6935 = vmul.f32 %v6915, %v3120
        %v6936 = vmul.f32 %v6918, %v3120
        %v6937 = vmul.f32 %v6921, %v3120
        %v6938 = vadd.f32 %v6922, 1e-05
        %v6939 = vadd.f32 %v6923, 1e-05
        %v6940 = vadd.f32 %v6924, 1e-05
        %v6941 = vadd.f32 %v6925, 1e-05
        %v6942 = vadd.f32 %v6926, 1e-05
        %v6943 = vadd.f32 %v6927, 1e-05
        %v6944 = vadd.f32 %v6928, 1e-05
        %v6945 = vadd.f32 %v6929, 1e-05
        %v6946 = vadd.f32 %v6930, 1e-05
        %v6947 = vadd.f32 %v6931, 1e-05
        %v6948 = vadd.f32 %v6932, 1e-05
        %v6949 = vadd.f32 %v6933, 1e-05
        %v6950 = vadd.f32 %v6934, 1e-05
        %v6951 = vadd.f32 %v6935, 1e-05
        %v6952 = vadd.f32 %v6936, 1e-05
        %v6953 = vadd.f32 %v6937, 1e-05
        %v6954 = vrsqrt.pop %v6938
        %v6955 = vmul.f32 %v6954, %v6938
        %v6956 = vmul.f32 %v6955, %v6954
        %v6957 = vmul.f32 0.5, %v6956
        %v6958 = vsub.f32 1.5, %v6957
        %v6959 = vmul.f32 %v6954, %v6958
        %vm6960 = vweird.f32 %v6938
        %vm6961 = vweird.f32 %v6954
        %vm6962 = vmor %vm6960, %vm6961
        %v6963 = vsel %vm6962, %v6954, %v6959
        %v6964 = vrsqrt.pop %v6939
        %v6965 = vmul.f32 %v6964, %v6939
        %v6966 = vmul.f32 %v6965, %v6964
        %v6967 = vmul.f32 0.5, %v6966
        %v6968 = vsub.f32 1.5, %v6967
        %v6969 = vmul.f32 %v6964, %v6968
        %vm6970 = vweird.f32 %v6939
        %vm6971 = vweird.f32 %v6964
        %vm6972 = vmor %vm6970, %vm6971
        %v6973 = vsel %vm6972, %v6964, %v6969
        %v6974 = vrsqrt.pop %v6940
        %v6975 = vmul.f32 %v6974, %v6940
        %v6976 = vmul.f32 %v6975, %v6974
        %v6977 = vmul.f32 0.5, %v6976
        %v6978 = vsub.f32 1.5, %v6977
        %v6979 = vmul.f32 %v6974, %v6978
        %vm6980 = vweird.f32 %v6940
        %vm6981 = vweird.f32 %v6974
        %vm6982 = vmor %vm6980, %vm6981
        %v6983 = vsel %vm6982, %v6974, %v6979
        %v6984 = vrsqrt.pop %v6941
        %v6985 = vmul.f32 %v6984, %v6941
        %v6986 = vmul.f32 %v6985, %v6984
        %v6987 = vmul.f32 0.5, %v6986
        %v6988 = vsub.f32 1.5, %v6987
        %v6989 = vmul.f32 %v6984, %v6988
        %vm6990 = vweird.f32 %v6941
        %vm6991 = vweird.f32 %v6984
        %vm6992 = vmor %vm6990, %vm6991
        %v6993 = vsel %vm6992, %v6984, %v6989
        %v6994 = vrsqrt.pop %v6942
        %v6995 = vmul.f32 %v6994, %v6942
        %v6996 = vmul.f32 %v6995, %v6994
        %v6997 = vmul.f32 0.5, %v6996
        %v6998 = vsub.f32 1.5, %v6997
        %v6999 = vmul.f32 %v6994, %v6998
        %vm7000 = vweird.f32 %v6942
        %vm7001 = vweird.f32 %v6994
        %vm7002 = vmor %vm7000, %vm7001
        %v7003 = vsel %vm7002, %v6994, %v6999
        %v7004 = vrsqrt.pop %v6943
        %v7005 = vmul.f32 %v7004, %v6943
        %v7006 = vmul.f32 %v7005, %v7004
        %v7007 = vmul.f32 0.5, %v7006
        %v7008 = vsub.f32 1.5, %v7007
        %v7009 = vmul.f32 %v7004, %v7008
        %vm7010 = vweird.f32 %v6943
        %vm7011 = vweird.f32 %v7004
        %vm7012 = vmor %vm7010, %vm7011
        %v7013 = vsel %vm7012, %v7004, %v7009
        %v7014 = vrsqrt.pop %v6944
        %v7015 = vmul.f32 %v7014, %v6944
        %v7016 = vmul.f32 %v7015, %v7014
        %v7017 = vmul.f32 0.5, %v7016
        %v7018 = vsub.f32 1.5, %v7017
        %v7019 = vmul.f32 %v7014, %v7018
        %vm7020 = vweird.f32 %v6944
        %vm7021 = vweird.f32 %v7014
        %vm7022 = vmor %vm7020, %vm7021
        %v7023 = vsel %vm7022, %v7014, %v7019
        %v7024 = vrsqrt.pop %v6945
        %v7025 = vmul.f32 %v7024, %v6945
        %v7026 = vmul.f32 %v7025, %v7024
        %v7027 = vmul.f32 0.5, %v7026
        %v7028 = vsub.f32 1.5, %v7027
        %v7029 = vmul.f32 %v7024, %v7028
        %vm7030 = vweird.f32 %v6945
        %vm7031 = vweird.f32 %v7024
        %vm7032 = vmor %vm7030, %vm7031
        %v7033 = vsel %vm7032, %v7024, %v7029
        %v7034 = vrsqrt.pop %v6946
        %v7035 = vmul.f32 %v7034, %v6946
        %v7036 = vmul.f32 %v7035, %v7034
        %v7037 = vmul.f32 0.5, %v7036
        %v7038 = vsub.f32 1.5, %v7037
        %v7039 = vmul.f32 %v7034, %v7038
        %vm7040 = vweird.f32 %v6946
        %vm7041 = vweird.f32 %v7034
        %vm7042 = vmor %vm7040, %vm7041
        %v7043 = vsel %vm7042, %v7034, %v7039
        %v7044 = vrsqrt.pop %v6947
        %v7045 = vmul.f32 %v7044, %v6947
        %v7046 = vmul.f32 %v7045, %v7044
        %v7047 = vmul.f32 0.5, %v7046
        %v7048 = vsub.f32 1.5, %v7047
        %v7049 = vmul.f32 %v7044, %v7048
        %vm7050 = vweird.f32 %v6947
        %vm7051 = vweird.f32 %v7044
        %vm7052 = vmor %vm7050, %vm7051
        %v7053 = vsel %vm7052, %v7044, %v7049
        %v7054 = vrsqrt.pop %v6948
        %v7055 = vmul.f32 %v7054, %v6948
        %v7056 = vmul.f32 %v7055, %v7054
        %v7057 = vmul.f32 0.5, %v7056
        %v7058 = vsub.f32 1.5, %v7057
        %v7059 = vmul.f32 %v7054, %v7058
        %vm7060 = vweird.f32 %v6948
        %vm7061 = vweird.f32 %v7054
        %vm7062 = vmor %vm7060, %vm7061
        %v7063 = vsel %vm7062, %v7054, %v7059
        %v7064 = vrsqrt.pop %v6949
        %v7065 = vmul.f32 %v7064, %v6949
        %v7066 = vmul.f32 %v7065, %v7064
        %v7067 = vmul.f32 0.5, %v7066
        %v7068 = vsub.f32 1.5, %v7067
        %v7069 = vmul.f32 %v7064, %v7068
        %vm7070 = vweird.f32 %v6949
        %vm7071 = vweird.f32 %v7064
        %vm7072 = vmor %vm7070, %vm7071
        %v7073 = vsel %vm7072, %v7064, %v7069
        %v7074 = vrsqrt.pop %v6950
        %v7075 = vmul.f32 %v7074, %v6950
        %v7076 = vmul.f32 %v7075, %v7074
        %v7077 = vmul.f32 0.5, %v7076
        %v7078 = vsub.f32 1.5, %v7077
        %v7079 = vmul.f32 %v7074, %v7078
        %vm7080 = vweird.f32 %v6950
        %vm7081 = vweird.f32 %v7074
        %vm7082 = vmor %vm7080, %vm7081
        %v7083 = vsel %vm7082, %v7074, %v7079
        %v7084 = vrsqrt.pop %v6951
        %v7085 = vmul.f32 %v7084, %v6951
        %v7086 = vmul.f32 %v7085, %v7084
        %v7087 = vmul.f32 0.5, %v7086
        %v7088 = vsub.f32 1.5, %v7087
        %v7089 = vmul.f32 %v7084, %v7088
        %vm7090 = vweird.f32 %v6951
        %vm7091 = vweird.f32 %v7084
        %vm7092 = vmor %vm7090, %vm7091
        %v7093 = vsel %vm7092, %v7084, %v7089
        %v7094 = vrsqrt.pop %v6952
        %v7095 = vmul.f32 %v7094, %v6952
        %v7096 = vmul.f32 %v7095, %v7094
        %v7097 = vmul.f32 0.5, %v7096
        %v7098 = vsub.f32 1.5, %v7097
        %v7099 = vmul.f32 %v7094, %v7098
        %vm7100 = vweird.f32 %v6952
        %vm7101 = vweird.f32 %v7094
        %vm7102 = vmor %vm7100, %vm7101
        %v7103 = vsel %vm7102, %v7094, %v7099
        %v7104 = vrsqrt.pop %v6953
        %v7105 = vmul.f32 %v7104, %v6953
        %v7106 = vmul.f32 %v7105, %v7104
        %v7107 = vmul.f32 0.5, %v7106
        %v7108 = vsub.f32 1.5, %v7107
        %v7109 = vmul.f32 %v7104, %v7108
        %vm7110 = vweird.f32 %v6953
        %vm7111 = vweird.f32 %v7104
        %vm7112 = vmor %vm7110, %vm7111
        %v7113 = vsel %vm7112, %v7104, %v7109
        %v7114 = vmul.f32 %v6842, %v6963
        %v7115 = vmul.f32 %v6843, %v6973
        %v7116 = vmul.f32 %v6844, %v6983
        %v7117 = vmul.f32 %v6845, %v6993
        %v7118 = vmul.f32 %v6846, %v7003
        %v7119 = vmul.f32 %v6847, %v7013
        %v7120 = vmul.f32 %v6848, %v7023
        %v7121 = vmul.f32 %v6849, %v7033
        %v7122 = vmul.f32 %v6850, %v7043
        %v7123 = vmul.f32 %v6851, %v7053
        %v7124 = vmul.f32 %v6852, %v7063
        %v7125 = vmul.f32 %v6853, %v7073
        %v7126 = vmul.f32 %v6854, %v7083
        %v7127 = vmul.f32 %v6855, %v7093
        %v7128 = vmul.f32 %v6856, %v7103
        %v7129 = vmul.f32 %v6857, %v7113
        %v7130 = vperm.slane %v4233, 0
        %v7131 = vmul.f32 %v7114, %v7130
        %v7132 = vmul.f32 %v7115, %v7130
        %v7133 = vmul.f32 %v7116, %v7130
        %v7134 = vmul.f32 %v7117, %v7130
        %v7135 = vmul.f32 %v7118, %v7130
        %v7136 = vmul.f32 %v7119, %v7130
        %v7137 = vmul.f32 %v7120, %v7130
        %v7138 = vmul.f32 %v7121, %v7130
        %v7139 = vmul.f32 %v7122, %v7130
        %v7140 = vmul.f32 %v7123, %v7130
        %v7141 = vmul.f32 %v7124, %v7130
        %v7142 = vmul.f32 %v7125, %v7130
        %v7143 = vmul.f32 %v7126, %v7130
        %v7144 = vmul.f32 %v7127, %v7130
        %v7145 = vmul.f32 %v7128, %v7130
        %v7146 = vmul.f32 %v7129, %v7130
        %v7147 = vperm.slane %v4233, 1
        %v7148 = vadd.f32 %v7131, %v7147
        %v7149 = vadd.f32 %v7132, %v7147
        %v7150 = vadd.f32 %v7133, %v7147
        %v7151 = vadd.f32 %v7134, %v7147
        %v7152 = vadd.f32 %v7135, %v7147
        %v7153 = vadd.f32 %v7136, %v7147
        %v7154 = vadd.f32 %v7137, %v7147
        %v7155 = vadd.f32 %v7138, %v7147
        %v7156 = vadd.f32 %v7139, %v7147
        %v7157 = vadd.f32 %v7140, %v7147
        %v7158 = vadd.f32 %v7141, %v7147
        %v7159 = vadd.f32 %v7142, %v7147
        %v7160 = vadd.f32 %v7143, %v7147
        %v7161 = vadd.f32 %v7144, %v7147
        %v7162 = vadd.f32 %v7145, %v7147
        %v7163 = vadd.f32 %v7146, %v7147
        %v7164 = vadd.f32 %v4211, %v7148
        %v7165 = vadd.f32 %v4212, %v7149
        %v7166 = vadd.f32 %v4213, %v7150
        %v7167 = vadd.f32 %v4214, %v7151
        %v7168 = vadd.f32 %v4215, %v7152
        %v7169 = vadd.f32 %v4216, %v7153
        %v7170 = vadd.f32 %v4217, %v7154
        %v7171 = vadd.f32 %v4218, %v7155
        %v7172 = vadd.f32 %v4219, %v7156
        %v7173 = vadd.f32 %v4220, %v7157
        %v7174 = vadd.f32 %v4221, %v7158
        %v7175 = vadd.f32 %v4222, %v7159
        %v7176 = vadd.f32 %v4223, %v7160
        %v7177 = vadd.f32 %v4224, %v7161
        %v7178 = vadd.f32 %v4225, %v7162
        %v7179 = vadd.f32 %v4226, %v7163
        %s7180 = scalar_lea.vmem [#allocation7], 32
        %v7181 = vld [vmem:[%s7180] sm:$0xff]
        %v7182 = vld [vmem:[%s7180 + $0x8] sm:$0xff]
        %v7183 = vld [vmem:[%s7180 + $0x10] sm:$0xff]
        %v7184 = vld [vmem:[%s7180 + $0x18] sm:$0xff]
        %s7185 = scalar_lea.vmem [#allocation9], 1
        %v7186 = vld [vmem:[%s7185] sm:$0x1]
        %v7188 = vperm.slane %v7186, 0
        %v7191 = vsel %vm532, %v7164, 0
        %v7194 = vsel %vm532, %v7165, 0
        %v7197 = vsel %vm532, %v7166, 0
        %v7200 = vsel %vm532, %v7167, 0
        %v7203 = vsel %vm532, %v7168, 0
        %v7206 = vsel %vm532, %v7169, 0
        %v7209 = vsel %vm532, %v7170, 0
        %v7212 = vsel %vm532, %v7171, 0
        %v7215 = vsel %vm532, %v7172, 0
        %v7218 = vsel %vm532, %v7173, 0
        %v7221 = vsel %vm532, %v7174, 0
        %v7224 = vsel %vm532, %v7175, 0
        %v7227 = vsel %vm532, %v7176, 0
        %v7230 = vsel %vm532, %v7177, 0
        %v7233 = vsel %vm532, %v7178, 0
        %v7236 = vsel %vm532, %v7179, 0
        %7238 = vmatpush.msra.mxu0 0.0
        %7239 = vmatpush.msra.mxu0 0.0
        %7240 = vmatpush.msra.mxu0 0.0
        %7241 = vmatpush.msra.mxu0 0.0
        %7242 = vmatpush.msra.mxu0 0.0
        %7243 = vmatpush.msra.mxu0 0.0
        %7244 = vmatpush.msra.mxu0 0.0
        %7245 = vmatpush.msra.mxu0 0.0
        %7246 = vmatpush.msra.mxu0 0.0
        %7247 = vmatpush.msra.mxu0 0.0
        %7248 = vmatpush.msra.mxu0 0.0
        %7249 = vmatpush.msra.mxu0 0.0
        %7250 = vmatpush.msra.mxu0 %v7184
        %7251 = vmatpush.msra.mxu0 %v7183
        %7252 = vmatpush.msra.mxu0 %v7182
        %7253 = vmatpush.msra.mxu0 %v7181
        %7254 = vmatmul.f32.gmra.mxu0 %v7191
        %v7255 = vpop.f32.mrf.mxu0
        %v7256 = vadd.f32 %v7188, %v7255
        %7257 = vmatmul.f32.gmra.mxu0 %v7194
        %v7258 = vpop.f32.mrf.mxu0
        %v7259 = vadd.f32 %v7188, %v7258
        %7260 = vmatmul.f32.gmra.mxu0 %v7197
        %v7261 = vpop.f32.mrf.mxu0
        %v7262 = vadd.f32 %v7188, %v7261
        %7263 = vmatmul.f32.gmra.mxu0 %v7200
        %v7264 = vpop.f32.mrf.mxu0
        %v7265 = vadd.f32 %v7188, %v7264
        %7266 = vmatmul.f32.gmra.mxu0 %v7203
        %v7267 = vpop.f32.mrf.mxu0
        %v7268 = vadd.f32 %v7188, %v7267
        %7269 = vmatmul.f32.gmra.mxu0 %v7206
        %v7270 = vpop.f32.mrf.mxu0
        %v7271 = vadd.f32 %v7188, %v7270
        %7272 = vmatmul.f32.gmra.mxu0 %v7209
        %v7273 = vpop.f32.mrf.mxu0
        %v7274 = vadd.f32 %v7188, %v7273
        %7275 = vmatmul.f32.gmra.mxu0 %v7212
        %v7276 = vpop.f32.mrf.mxu0
        %v7277 = vadd.f32 %v7188, %v7276
        %7278 = vmatmul.f32.gmra.mxu0 %v7215
        %v7279 = vpop.f32.mrf.mxu0
        %v7280 = vadd.f32 %v7188, %v7279
        %7281 = vmatmul.f32.gmra.mxu0 %v7218
        %v7282 = vpop.f32.mrf.mxu0
        %v7283 = vadd.f32 %v7188, %v7282
        %7284 = vmatmul.f32.gmra.mxu0 %v7221
        %v7285 = vpop.f32.mrf.mxu0
        %v7286 = vadd.f32 %v7188, %v7285
        %7287 = vmatmul.f32.gmra.mxu0 %v7224
        %v7288 = vpop.f32.mrf.mxu0
        %v7289 = vadd.f32 %v7188, %v7288
        %7290 = vmatmul.f32.gmra.mxu0 %v7227
        %v7291 = vpop.f32.mrf.mxu0
        %v7292 = vadd.f32 %v7188, %v7291
        %7293 = vmatmul.f32.gmra.mxu0 %v7230
        %v7294 = vpop.f32.mrf.mxu0
        %v7295 = vadd.f32 %v7188, %v7294
        %7296 = vmatmul.f32.gmra.mxu0 %v7233
        %v7297 = vpop.f32.mrf.mxu0
        %v7298 = vadd.f32 %v7188, %v7297
        %7299 = vmatmul.f32.gmra.mxu0 %v7236
        %v7300 = vpop.f32.mrf.mxu0
        %v7301 = vadd.f32 %v7188, %v7300
        %7302 = vdwg.mxu0
        %v7303 = vmul.f32 %v7256, 0.5
        %v7304 = vmul.f32 %v7259, 0.5
        %v7305 = vmul.f32 %v7262, 0.5
        %v7306 = vmul.f32 %v7265, 0.5
        %v7307 = vmul.f32 %v7268, 0.5
        %v7308 = vmul.f32 %v7271, 0.5
        %v7309 = vmul.f32 %v7274, 0.5
        %v7310 = vmul.f32 %v7277, 0.5
        %v7311 = vmul.f32 %v7280, 0.5
        %v7312 = vmul.f32 %v7283, 0.5
        %v7313 = vmul.f32 %v7286, 0.5
        %v7314 = vmul.f32 %v7289, 0.5
        %v7315 = vmul.f32 %v7292, 0.5
        %v7316 = vmul.f32 %v7295, 0.5
        %v7317 = vmul.f32 %v7298, 0.5
        %v7318 = vmul.f32 %v7301, 0.5
        %v7319 = vmul.f32 %v7256, 0.044715
        %v7320 = vmul.f32 %v7259, 0.044715
        %v7321 = vmul.f32 %v7262, 0.044715
        %v7322 = vmul.f32 %v7265, 0.044715
        %v7323 = vmul.f32 %v7268, 0.044715
        %v7324 = vmul.f32 %v7271, 0.044715
        %v7325 = vmul.f32 %v7274, 0.044715
        %v7326 = vmul.f32 %v7277, 0.044715
        %v7327 = vmul.f32 %v7280, 0.044715
        %v7328 = vmul.f32 %v7283, 0.044715
        %v7329 = vmul.f32 %v7286, 0.044715
        %v7330 = vmul.f32 %v7289, 0.044715
        %v7331 = vmul.f32 %v7292, 0.044715
        %v7332 = vmul.f32 %v7295, 0.044715
        %v7333 = vmul.f32 %v7298, 0.044715
        %v7334 = vmul.f32 %v7301, 0.044715
        %v7335 = vmul.f32 %v7319, %v7256
        %v7336 = vmul.f32 %v7320, %v7259
        %v7337 = vmul.f32 %v7321, %v7262
        %v7338 = vmul.f32 %v7322, %v7265
        %v7339 = vmul.f32 %v7323, %v7268
        %v7340 = vmul.f32 %v7324, %v7271
        %v7341 = vmul.f32 %v7325, %v7274
        %v7342 = vmul.f32 %v7326, %v7277
        %v7343 = vmul.f32 %v7327, %v7280
        %v7344 = vmul.f32 %v7328, %v7283
        %v7345 = vmul.f32 %v7329, %v7286
        %v7346 = vmul.f32 %v7330, %v7289
        %v7347 = vmul.f32 %v7331, %v7292
        %v7348 = vmul.f32 %v7332, %v7295
        %v7349 = vmul.f32 %v7333, %v7298
        %v7350 = vmul.f32 %v7334, %v7301
        %v7351 = vmul.f32 %v7335, %v7256
        %v7352 = vmul.f32 %v7336, %v7259
        %v7353 = vmul.f32 %v7337, %v7262
        %v7354 = vmul.f32 %v7338, %v7265
        %v7355 = vmul.f32 %v7339, %v7268
        %v7356 = vmul.f32 %v7340, %v7271
        %v7357 = vmul.f32 %v7341, %v7274
        %v7358 = vmul.f32 %v7342, %v7277
        %v7359 = vmul.f32 %v7343, %v7280
        %v7360 = vmul.f32 %v7344, %v7283
        %v7361 = vmul.f32 %v7345, %v7286
        %v7362 = vmul.f32 %v7346, %v7289
        %v7363 = vmul.f32 %v7347, %v7292
        %v7364 = vmul.f32 %v7348, %v7295
        %v7365 = vmul.f32 %v7349, %v7298
        %v7366 = vmul.f32 %v7350, %v7301
        %v7367 = vadd.f32 %v7256, %v7351
        %v7368 = vadd.f32 %v7259, %v7352
        %v7369 = vadd.f32 %v7262, %v7353
        %v7370 = vadd.f32 %v7265, %v7354
        %v7371 = vadd.f32 %v7268, %v7355
        %v7372 = vadd.f32 %v7271, %v7356
        %v7373 = vadd.f32 %v7274, %v7357
        %v7374 = vadd.f32 %v7277, %v7358
        %v7375 = vadd.f32 %v7280, %v7359
        %v7376 = vadd.f32 %v7283, %v7360
        %v7377 = vadd.f32 %v7286, %v7361
        %v7378 = vadd.f32 %v7289, %v7362
        %v7379 = vadd.f32 %v7292, %v7363
        %v7380 = vadd.f32 %v7295, %v7364
        %v7381 = vadd.f32 %v7298, %v7365
        %v7382 = vadd.f32 %v7301, %v7366
        %v7383 = vmul.f32 %v7367, 0.7978846
        %v7384 = vmul.f32 %v7368, 0.7978846
        %v7385 = vmul.f32 %v7369, 0.7978846
        %v7386 = vmul.f32 %v7370, 0.7978846
        %v7387 = vmul.f32 %v7371, 0.7978846
        %v7388 = vmul.f32 %v7372, 0.7978846
        %v7389 = vmul.f32 %v7373, 0.7978846
        %v7390 = vmul.f32 %v7374, 0.7978846
        %v7391 = vmul.f32 %v7375, 0.7978846
        %v7392 = vmul.f32 %v7376, 0.7978846
        %v7393 = vmul.f32 %v7377, 0.7978846
        %v7394 = vmul.f32 %v7378, 0.7978846
        %v7395 = vmul.f32 %v7379, 0.7978846
        %v7396 = vmul.f32 %v7380, 0.7978846
        %v7397 = vmul.f32 %v7381, 0.7978846
        %v7398 = vmul.f32 %v7382, 0.7978846
        %v7399 = vtanh.pop %v7383
        %v7400 = vtanh.pop %v7384
        %v7401 = vtanh.pop %v7385
        %v7402 = vtanh.pop %v7386
        %v7403 = vtanh.pop %v7387
        %v7404 = vtanh.pop %v7388
        %v7405 = vtanh.pop %v7389
        %v7406 = vtanh.pop %v7390
        %v7407 = vtanh.pop %v7391
        %v7408 = vtanh.pop %v7392
        %v7409 = vtanh.pop %v7393
        %v7410 = vtanh.pop %v7394
        %v7411 = vtanh.pop %v7395
        %v7412 = vtanh.pop %v7396
        %v7413 = vtanh.pop %v7397
        %v7414 = vtanh.pop %v7398
        %v7415 = vadd.f32 %v7399, 1.0
        %v7416 = vadd.f32 %v7400, 1.0
        %v7417 = vadd.f32 %v7401, 1.0
        %v7418 = vadd.f32 %v7402, 1.0
        %v7419 = vadd.f32 %v7403, 1.0
        %v7420 = vadd.f32 %v7404, 1.0
        %v7421 = vadd.f32 %v7405, 1.0
        %v7422 = vadd.f32 %v7406, 1.0
        %v7423 = vadd.f32 %v7407, 1.0
        %v7424 = vadd.f32 %v7408, 1.0
        %v7425 = vadd.f32 %v7409, 1.0
        %v7426 = vadd.f32 %v7410, 1.0
        %v7427 = vadd.f32 %v7411, 1.0
        %v7428 = vadd.f32 %v7412, 1.0
        %v7429 = vadd.f32 %v7413, 1.0
        %v7430 = vadd.f32 %v7414, 1.0
        %v7431 = vmul.f32 %v7303, %v7415
        %v7432 = vmul.f32 %v7304, %v7416
        %v7433 = vmul.f32 %v7305, %v7417
        %v7434 = vmul.f32 %v7306, %v7418
        %v7435 = vmul.f32 %v7307, %v7419
        %v7436 = vmul.f32 %v7308, %v7420
        %v7437 = vmul.f32 %v7309, %v7421
        %v7438 = vmul.f32 %v7310, %v7422
        %v7439 = vmul.f32 %v7311, %v7423
        %v7440 = vmul.f32 %v7312, %v7424
        %v7441 = vmul.f32 %v7313, %v7425
        %v7442 = vmul.f32 %v7314, %v7426
        %v7443 = vmul.f32 %v7315, %v7427
        %v7444 = vmul.f32 %v7316, %v7428
        %v7445 = vmul.f32 %v7317, %v7429
        %v7446 = vmul.f32 %v7318, %v7430
        %s7447 = scalar_lea.vmem %s8, 128
        %v7448 = vld [vmem:[%s7447] sm:$0xff]
        %v7449 = vld [vmem:[%s7447 + $0x8] sm:$0xff]
        %v7450 = vld [vmem:[%s7447 + $0x10] sm:$0xff]
        %v7451 = vld [vmem:[%s7447 + $0x18] sm:$0xff]
        %v7452 = vld [vmem:[%s7447 + $0x20] sm:$0xff]
        %v7453 = vld [vmem:[%s7447 + $0x28] sm:$0xff]
        %v7454 = vld [vmem:[%s7447 + $0x30] sm:$0xff]
        %v7455 = vld [vmem:[%s7447 + $0x38] sm:$0xff]
        %v7456 = vld [vmem:[%s7447 + $0x40] sm:$0xff]
        %v7457 = vld [vmem:[%s7447 + $0x48] sm:$0xff]
        %v7458 = vld [vmem:[%s7447 + $0x50] sm:$0xff]
        %v7459 = vld [vmem:[%s7447 + $0x58] sm:$0xff]
        %v7460 = vld [vmem:[%s7447 + $0x60] sm:$0xff]
        %v7461 = vld [vmem:[%s7447 + $0x68] sm:$0xff]
        %v7462 = vld [vmem:[%s7447 + $0x70] sm:$0xff]
        %v7463 = vld [vmem:[%s7447 + $0x78] sm:$0xff]
        %s7464 = scalar_lea.vmem [#allocation10], 1
        %v7465 = vld [vmem:[%s7464] sm:$0x1]
        %v7467 = vperm.slane %v7465, 0
        %7469 = vmatpush.msra.mxu0 %v7463
        %7470 = vmatpush.msra.mxu0 %v7462
        %7471 = vmatpush.msra.mxu0 %v7461
        %7472 = vmatpush.msra.mxu0 %v7460
        %7473 = vmatpush.msra.mxu0 %v7459
        %7474 = vmatpush.msra.mxu0 %v7458
        %7475 = vmatpush.msra.mxu0 %v7457
        %7476 = vmatpush.msra.mxu0 %v7456
        %7477 = vmatpush.msra.mxu0 %v7455
        %7478 = vmatpush.msra.mxu0 %v7454
        %7479 = vmatpush.msra.mxu0 %v7453
        %7480 = vmatpush.msra.mxu0 %v7452
        %7481 = vmatpush.msra.mxu0 %v7451
        %7482 = vmatpush.msra.mxu0 %v7450
        %7483 = vmatpush.msra.mxu0 %v7449
        %7484 = vmatpush.msra.mxu0 %v7448
        %7485 = vmatmul.f32.gmra.mxu0 %v7431
        %v7486 = vpop.f32.mrf.mxu0
        %v7487 = vadd.f32 %v7467, %v7486
        %7488 = vmatmul.f32.gmra.mxu0 %v7432
        %v7489 = vpop.f32.mrf.mxu0
        %v7490 = vadd.f32 %v7467, %v7489
        %7491 = vmatmul.f32.gmra.mxu0 %v7433
        %v7492 = vpop.f32.mrf.mxu0
        %v7493 = vadd.f32 %v7467, %v7492
        %7494 = vmatmul.f32.gmra.mxu0 %v7434
        %v7495 = vpop.f32.mrf.mxu0
        %v7496 = vadd.f32 %v7467, %v7495
        %7497 = vmatmul.f32.gmra.mxu0 %v7435
        %v7498 = vpop.f32.mrf.mxu0
        %v7499 = vadd.f32 %v7467, %v7498
        %7500 = vmatmul.f32.gmra.mxu0 %v7436
        %v7501 = vpop.f32.mrf.mxu0
        %v7502 = vadd.f32 %v7467, %v7501
        %7503 = vmatmul.f32.gmra.mxu0 %v7437
        %v7504 = vpop.f32.mrf.mxu0
        %v7505 = vadd.f32 %v7467, %v7504
        %7506 = vmatmul.f32.gmra.mxu0 %v7438
        %v7507 = vpop.f32.mrf.mxu0
        %v7508 = vadd.f32 %v7467, %v7507
        %7509 = vmatmul.f32.gmra.mxu0 %v7439
        %v7510 = vpop.f32.mrf.mxu0
        %v7511 = vadd.f32 %v7467, %v7510
        %7512 = vmatmul.f32.gmra.mxu0 %v7440
        %v7513 = vpop.f32.mrf.mxu0
        %v7514 = vadd.f32 %v7467, %v7513
        %7515 = vmatmul.f32.gmra.mxu0 %v7441
        %v7516 = vpop.f32.mrf.mxu0
        %v7517 = vadd.f32 %v7467, %v7516
        %7518 = vmatmul.f32.gmra.mxu0 %v7442
        %v7519 = vpop.f32.mrf.mxu0
        %v7520 = vadd.f32 %v7467, %v7519
        %7521 = vmatmul.f32.gmra.mxu0 %v7443
        %v7522 = vpop.f32.mrf.mxu0
        %v7523 = vadd.f32 %v7467, %v7522
        %7524 = vmatmul.f32.gmra.mxu0 %v7444
        %v7525 = vpop.f32.mrf.mxu0
        %v7526 = vadd.f32 %v7467, %v7525
        %7527 = vmatmul.f32.gmra.mxu0 %v7445
        %v7528 = vpop.f32.mrf.mxu0
        %v7529 = vadd.f32 %v7467, %v7528
        %7530 = vmatmul.f32.gmra.mxu0 %v7446
        %v7531 = vpop.f32.mrf.mxu0
        %v7532 = vadd.f32 %v7467, %v7531
        %7533 = vdwg.mxu0
        %v7534 = vsel %vm532, %v7487, 0.0
        %7535 = vadd.xlane.f32.xlu0 %v7534
        %v7536 = vpop.xlane.xlu0 %7535
        %v7537 = vsel %vm532, %v7490, 0.0
        %7538 = vadd.xlane.f32.xlu0 %v7537
        %v7539 = vpop.xlane.xlu0 %7538
        %v7540 = vsel %vm532, %v7493, 0.0
        %7541 = vadd.xlane.f32.xlu0 %v7540
        %v7542 = vpop.xlane.xlu0 %7541
        %v7543 = vsel %vm532, %v7496, 0.0
        %7544 = vadd.xlane.f32.xlu0 %v7543
        %v7545 = vpop.xlane.xlu0 %7544
        %v7546 = vsel %vm532, %v7499, 0.0
        %7547 = vadd.xlane.f32.xlu0 %v7546
        %v7548 = vpop.xlane.xlu0 %7547
        %v7549 = vsel %vm532, %v7502, 0.0
        %7550 = vadd.xlane.f32.xlu0 %v7549
        %v7551 = vpop.xlane.xlu0 %7550
        %v7552 = vsel %vm532, %v7505, 0.0
        %7553 = vadd.xlane.f32.xlu0 %v7552
        %v7554 = vpop.xlane.xlu0 %7553
        %v7555 = vsel %vm532, %v7508, 0.0
        %7556 = vadd.xlane.f32.xlu0 %v7555
        %v7557 = vpop.xlane.xlu0 %7556
        %v7558 = vsel %vm532, %v7511, 0.0
        %7559 = vadd.xlane.f32.xlu0 %v7558
        %v7560 = vpop.xlane.xlu0 %7559
        %v7561 = vsel %vm532, %v7514, 0.0
        %7562 = vadd.xlane.f32.xlu0 %v7561
        %v7563 = vpop.xlane.xlu0 %7562
        %v7564 = vsel %vm532, %v7517, 0.0
        %7565 = vadd.xlane.f32.xlu0 %v7564
        %v7566 = vpop.xlane.xlu0 %7565
        %v7567 = vsel %vm532, %v7520, 0.0
        %7568 = vadd.xlane.f32.xlu0 %v7567
        %v7569 = vpop.xlane.xlu0 %7568
        %v7570 = vsel %vm532, %v7523, 0.0
        %7571 = vadd.xlane.f32.xlu0 %v7570
        %v7572 = vpop.xlane.xlu0 %7571
        %v7573 = vsel %vm532, %v7526, 0.0
        %7574 = vadd.xlane.f32.xlu0 %v7573
        %v7575 = vpop.xlane.xlu0 %7574
        %v7576 = vsel %vm532, %v7529, 0.0
        %7577 = vadd.xlane.f32.xlu0 %v7576
        %v7578 = vpop.xlane.xlu0 %7577
        %v7579 = vsel %vm532, %v7532, 0.0
        %7580 = vadd.xlane.f32.xlu0 %v7579
        %v7581 = vpop.xlane.xlu0 %7580
        %v7582 = vmul.f32 %v7536, %v3120
        %v7583 = vmul.f32 %v7539, %v3120
        %v7584 = vmul.f32 %v7542, %v3120
        %v7585 = vmul.f32 %v7545, %v3120
        %v7586 = vmul.f32 %v7548, %v3120
        %v7587 = vmul.f32 %v7551, %v3120
        %v7588 = vmul.f32 %v7554, %v3120
        %v7589 = vmul.f32 %v7557, %v3120
        %v7590 = vmul.f32 %v7560, %v3120
        %v7591 = vmul.f32 %v7563, %v3120
        %v7592 = vmul.f32 %v7566, %v3120
        %v7593 = vmul.f32 %v7569, %v3120
        %v7594 = vmul.f32 %v7572, %v3120
        %v7595 = vmul.f32 %v7575, %v3120
        %v7596 = vmul.f32 %v7578, %v3120
        %v7597 = vmul.f32 %v7581, %v3120
        %v7598 = vsub.f32 %v7487, %v7582
        %v7599 = vsub.f32 %v7490, %v7583
        %v7600 = vsub.f32 %v7493, %v7584
        %v7601 = vsub.f32 %v7496, %v7585
        %v7602 = vsub.f32 %v7499, %v7586
        %v7603 = vsub.f32 %v7502, %v7587
        %v7604 = vsub.f32 %v7505, %v7588
        %v7605 = vsub.f32 %v7508, %v7589
        %v7606 = vsub.f32 %v7511, %v7590
        %v7607 = vsub.f32 %v7514, %v7591
        %v7608 = vsub.f32 %v7517, %v7592
        %v7609 = vsub.f32 %v7520, %v7593
        %v7610 = vsub.f32 %v7523, %v7594
        %v7611 = vsub.f32 %v7526, %v7595
        %v7612 = vsub.f32 %v7529, %v7596
        %v7613 = vsub.f32 %v7532, %v7597
        %v7614 = vmul.f32 %v7598, %v7598
        %v7615 = vmul.f32 %v7599, %v7599
        %v7616 = vmul.f32 %v7600, %v7600
        %v7617 = vmul.f32 %v7601, %v7601
        %v7618 = vmul.f32 %v7602, %v7602
        %v7619 = vmul.f32 %v7603, %v7603
        %v7620 = vmul.f32 %v7604, %v7604
        %v7621 = vmul.f32 %v7605, %v7605
        %v7622 = vmul.f32 %v7606, %v7606
        %v7623 = vmul.f32 %v7607, %v7607
        %v7624 = vmul.f32 %v7608, %v7608
        %v7625 = vmul.f32 %v7609, %v7609
        %v7626 = vmul.f32 %v7610, %v7610
        %v7627 = vmul.f32 %v7611, %v7611
        %v7628 = vmul.f32 %v7612, %v7612
        %v7629 = vmul.f32 %v7613, %v7613
        %v7630 = vsel %vm532, %v7614, 0.0
        %7631 = vadd.xlane.f32.xlu0 %v7630
        %v7632 = vpop.xlane.xlu0 %7631
        %v7633 = vsel %vm532, %v7615, 0.0
        %7634 = vadd.xlane.f32.xlu0 %v7633
        %v7635 = vpop.xlane.xlu0 %7634
        %v7636 = vsel %vm532, %v7616, 0.0
        %7637 = vadd.xlane.f32.xlu0 %v7636
        %v7638 = vpop.xlane.xlu0 %7637
        %v7639 = vsel %vm532, %v7617, 0.0
        %7640 = vadd.xlane.f32.xlu0 %v7639
        %v7641 = vpop.xlane.xlu0 %7640
        %v7642 = vsel %vm532, %v7618, 0.0
        %7643 = vadd.xlane.f32.xlu0 %v7642
        %v7644 = vpop.xlane.xlu0 %7643
        %v7645 = vsel %vm532, %v7619, 0.0
        %7646 = vadd.xlane.f32.xlu0 %v7645
        %v7647 = vpop.xlane.xlu0 %7646
        %v7648 = vsel %vm532, %v7620, 0.0
        %7649 = vadd.xlane.f32.xlu0 %v7648
        %v7650 = vpop.xlane.xlu0 %7649
        %v7651 = vsel %vm532, %v7621, 0.0
        %7652 = vadd.xlane.f32.xlu0 %v7651
        %v7653 = vpop.xlane.xlu0 %7652
        %v7654 = vsel %vm532, %v7622, 0.0
        %7655 = vadd.xlane.f32.xlu0 %v7654
        %v7656 = vpop.xlane.xlu0 %7655
        %v7657 = vsel %vm532, %v7623, 0.0
        %7658 = vadd.xlane.f32.xlu0 %v7657
        %v7659 = vpop.xlane.xlu0 %7658
        %v7660 = vsel %vm532, %v7624, 0.0
        %7661 = vadd.xlane.f32.xlu0 %v7660
        %v7662 = vpop.xlane.xlu0 %7661
        %v7663 = vsel %vm532, %v7625, 0.0
        %7664 = vadd.xlane.f32.xlu0 %v7663
        %v7665 = vpop.xlane.xlu0 %7664
        %v7666 = vsel %vm532, %v7626, 0.0
        %7667 = vadd.xlane.f32.xlu0 %v7666
        %v7668 = vpop.xlane.xlu0 %7667
        %v7669 = vsel %vm532, %v7627, 0.0
        %7670 = vadd.xlane.f32.xlu0 %v7669
        %v7671 = vpop.xlane.xlu0 %7670
        %v7672 = vsel %vm532, %v7628, 0.0
        %7673 = vadd.xlane.f32.xlu0 %v7672
        %v7674 = vpop.xlane.xlu0 %7673
        %v7675 = vsel %vm532, %v7629, 0.0
        %7676 = vadd.xlane.f32.xlu0 %v7675
        %v7677 = vpop.xlane.xlu0 %7676
        %v7678 = vmul.f32 %v7632, %v3120
        %v7679 = vmul.f32 %v7635, %v3120
        %v7680 = vmul.f32 %v7638, %v3120
        %v7681 = vmul.f32 %v7641, %v3120
        %v7682 = vmul.f32 %v7644, %v3120
        %v7683 = vmul.f32 %v7647, %v3120
        %v7684 = vmul.f32 %v7650, %v3120
        %v7685 = vmul.f32 %v7653, %v3120
        %v7686 = vmul.f32 %v7656, %v3120
        %v7687 = vmul.f32 %v7659, %v3120
        %v7688 = vmul.f32 %v7662, %v3120
        %v7689 = vmul.f32 %v7665, %v3120
        %v7690 = vmul.f32 %v7668, %v3120
        %v7691 = vmul.f32 %v7671, %v3120
        %v7692 = vmul.f32 %v7674, %v3120
        %v7693 = vmul.f32 %v7677, %v3120
        %v7694 = vadd.f32 %v7678, 1e-05
        %v7695 = vadd.f32 %v7679, 1e-05
        %v7696 = vadd.f32 %v7680, 1e-05
        %v7697 = vadd.f32 %v7681, 1e-05
        %v7698 = vadd.f32 %v7682, 1e-05
        %v7699 = vadd.f32 %v7683, 1e-05
        %v7700 = vadd.f32 %v7684, 1e-05
        %v7701 = vadd.f32 %v7685, 1e-05
        %v7702 = vadd.f32 %v7686, 1e-05
        %v7703 = vadd.f32 %v7687, 1e-05
        %v7704 = vadd.f32 %v7688, 1e-05
        %v7705 = vadd.f32 %v7689, 1e-05
        %v7706 = vadd.f32 %v7690, 1e-05
        %v7707 = vadd.f32 %v7691, 1e-05
        %v7708 = vadd.f32 %v7692, 1e-05
        %v7709 = vadd.f32 %v7693, 1e-05
        %v7710 = vrsqrt.pop %v7694
        %v7711 = vmul.f32 %v7710, %v7694
        %v7712 = vmul.f32 %v7711, %v7710
        %v7713 = vmul.f32 0.5, %v7712
        %v7714 = vsub.f32 1.5, %v7713
        %v7715 = vmul.f32 %v7710, %v7714
        %vm7716 = vweird.f32 %v7694
        %vm7717 = vweird.f32 %v7710
        %vm7718 = vmor %vm7716, %vm7717
        %v7719 = vsel %vm7718, %v7710, %v7715
        %v7720 = vrsqrt.pop %v7695
        %v7721 = vmul.f32 %v7720, %v7695
        %v7722 = vmul.f32 %v7721, %v7720
        %v7723 = vmul.f32 0.5, %v7722
        %v7724 = vsub.f32 1.5, %v7723
        %v7725 = vmul.f32 %v7720, %v7724
        %vm7726 = vweird.f32 %v7695
        %vm7727 = vweird.f32 %v7720
        %vm7728 = vmor %vm7726, %vm7727
        %v7729 = vsel %vm7728, %v7720, %v7725
        %v7730 = vrsqrt.pop %v7696
        %v7731 = vmul.f32 %v7730, %v7696
        %v7732 = vmul.f32 %v7731, %v7730
        %v7733 = vmul.f32 0.5, %v7732
        %v7734 = vsub.f32 1.5, %v7733
        %v7735 = vmul.f32 %v7730, %v7734
        %vm7736 = vweird.f32 %v7696
        %vm7737 = vweird.f32 %v7730
        %vm7738 = vmor %vm7736, %vm7737
        %v7739 = vsel %vm7738, %v7730, %v7735
        %v7740 = vrsqrt.pop %v7697
        %v7741 = vmul.f32 %v7740, %v7697
        %v7742 = vmul.f32 %v7741, %v7740
        %v7743 = vmul.f32 0.5, %v7742
        %v7744 = vsub.f32 1.5, %v7743
        %v7745 = vmul.f32 %v7740, %v7744
        %vm7746 = vweird.f32 %v7697
        %vm7747 = vweird.f32 %v7740
        %vm7748 = vmor %vm7746, %vm7747
        %v7749 = vsel %vm7748, %v7740, %v7745
        %v7750 = vrsqrt.pop %v7698
        %v7751 = vmul.f32 %v7750, %v7698
        %v7752 = vmul.f32 %v7751, %v7750
        %v7753 = vmul.f32 0.5, %v7752
        %v7754 = vsub.f32 1.5, %v7753
        %v7755 = vmul.f32 %v7750, %v7754
        %vm7756 = vweird.f32 %v7698
        %vm7757 = vweird.f32 %v7750
        %vm7758 = vmor %vm7756, %vm7757
        %v7759 = vsel %vm7758, %v7750, %v7755
        %v7760 = vrsqrt.pop %v7699
        %v7761 = vmul.f32 %v7760, %v7699
        %v7762 = vmul.f32 %v7761, %v7760
        %v7763 = vmul.f32 0.5, %v7762
        %v7764 = vsub.f32 1.5, %v7763
        %v7765 = vmul.f32 %v7760, %v7764
        %vm7766 = vweird.f32 %v7699
        %vm7767 = vweird.f32 %v7760
        %vm7768 = vmor %vm7766, %vm7767
        %v7769 = vsel %vm7768, %v7760, %v7765
        %v7770 = vrsqrt.pop %v7700
        %v7771 = vmul.f32 %v7770, %v7700
        %v7772 = vmul.f32 %v7771, %v7770
        %v7773 = vmul.f32 0.5, %v7772
        %v7774 = vsub.f32 1.5, %v7773
        %v7775 = vmul.f32 %v7770, %v7774
        %vm7776 = vweird.f32 %v7700
        %vm7777 = vweird.f32 %v7770
        %vm7778 = vmor %vm7776, %vm7777
        %v7779 = vsel %vm7778, %v7770, %v7775
        %v7780 = vrsqrt.pop %v7701
        %v7781 = vmul.f32 %v7780, %v7701
        %v7782 = vmul.f32 %v7781, %v7780
        %v7783 = vmul.f32 0.5, %v7782
        %v7784 = vsub.f32 1.5, %v7783
        %v7785 = vmul.f32 %v7780, %v7784
        %vm7786 = vweird.f32 %v7701
        %vm7787 = vweird.f32 %v7780
        %vm7788 = vmor %vm7786, %vm7787
        %v7789 = vsel %vm7788, %v7780, %v7785
        %v7790 = vrsqrt.pop %v7702
        %v7791 = vmul.f32 %v7790, %v7702
        %v7792 = vmul.f32 %v7791, %v7790
        %v7793 = vmul.f32 0.5, %v7792
        %v7794 = vsub.f32 1.5, %v7793
        %v7795 = vmul.f32 %v7790, %v7794
        %vm7796 = vweird.f32 %v7702
        %vm7797 = vweird.f32 %v7790
        %vm7798 = vmor %vm7796, %vm7797
        %v7799 = vsel %vm7798, %v7790, %v7795
        %v7800 = vrsqrt.pop %v7703
        %v7801 = vmul.f32 %v7800, %v7703
        %v7802 = vmul.f32 %v7801, %v7800
        %v7803 = vmul.f32 0.5, %v7802
        %v7804 = vsub.f32 1.5, %v7803
        %v7805 = vmul.f32 %v7800, %v7804
        %vm7806 = vweird.f32 %v7703
        %vm7807 = vweird.f32 %v7800
        %vm7808 = vmor %vm7806, %vm7807
        %v7809 = vsel %vm7808, %v7800, %v7805
        %v7810 = vrsqrt.pop %v7704
        %v7811 = vmul.f32 %v7810, %v7704
        %v7812 = vmul.f32 %v7811, %v7810
        %v7813 = vmul.f32 0.5, %v7812
        %v7814 = vsub.f32 1.5, %v7813
        %v7815 = vmul.f32 %v7810, %v7814
        %vm7816 = vweird.f32 %v7704
        %vm7817 = vweird.f32 %v7810
        %vm7818 = vmor %vm7816, %vm7817
        %v7819 = vsel %vm7818, %v7810, %v7815
        %v7820 = vrsqrt.pop %v7705
        %v7821 = vmul.f32 %v7820, %v7705
        %v7822 = vmul.f32 %v7821, %v7820
        %v7823 = vmul.f32 0.5, %v7822
        %v7824 = vsub.f32 1.5, %v7823
        %v7825 = vmul.f32 %v7820, %v7824
        %vm7826 = vweird.f32 %v7705
        %vm7827 = vweird.f32 %v7820
        %vm7828 = vmor %vm7826, %vm7827
        %v7829 = vsel %vm7828, %v7820, %v7825
        %v7830 = vrsqrt.pop %v7706
        %v7831 = vmul.f32 %v7830, %v7706
        %v7832 = vmul.f32 %v7831, %v7830
        %v7833 = vmul.f32 0.5, %v7832
        %v7834 = vsub.f32 1.5, %v7833
        %v7835 = vmul.f32 %v7830, %v7834
        %vm7836 = vweird.f32 %v7706
        %vm7837 = vweird.f32 %v7830
        %vm7838 = vmor %vm7836, %vm7837
        %v7839 = vsel %vm7838, %v7830, %v7835
        %v7840 = vrsqrt.pop %v7707
        %v7841 = vmul.f32 %v7840, %v7707
        %v7842 = vmul.f32 %v7841, %v7840
        %v7843 = vmul.f32 0.5, %v7842
        %v7844 = vsub.f32 1.5, %v7843
        %v7845 = vmul.f32 %v7840, %v7844
        %vm7846 = vweird.f32 %v7707
        %vm7847 = vweird.f32 %v7840
        %vm7848 = vmor %vm7846, %vm7847
        %v7849 = vsel %vm7848, %v7840, %v7845
        %v7850 = vrsqrt.pop %v7708
        %v7851 = vmul.f32 %v7850, %v7708
        %v7852 = vmul.f32 %v7851, %v7850
        %v7853 = vmul.f32 0.5, %v7852
        %v7854 = vsub.f32 1.5, %v7853
        %v7855 = vmul.f32 %v7850, %v7854
        %vm7856 = vweird.f32 %v7708
        %vm7857 = vweird.f32 %v7850
        %vm7858 = vmor %vm7856, %vm7857
        %v7859 = vsel %vm7858, %v7850, %v7855
        %v7860 = vrsqrt.pop %v7709
        %v7861 = vmul.f32 %v7860, %v7709
        %v7862 = vmul.f32 %v7861, %v7860
        %v7863 = vmul.f32 0.5, %v7862
        %v7864 = vsub.f32 1.5, %v7863
        %v7865 = vmul.f32 %v7860, %v7864
        %vm7866 = vweird.f32 %v7709
        %vm7867 = vweird.f32 %v7860
        %vm7868 = vmor %vm7866, %vm7867
        %v7869 = vsel %vm7868, %v7860, %v7865
        %v7870 = vmul.f32 %v7598, %v7719
        %v7871 = vmul.f32 %v7599, %v7729
        %v7872 = vmul.f32 %v7600, %v7739
        %v7873 = vmul.f32 %v7601, %v7749
        %v7874 = vmul.f32 %v7602, %v7759
        %v7875 = vmul.f32 %v7603, %v7769
        %v7876 = vmul.f32 %v7604, %v7779
        %v7877 = vmul.f32 %v7605, %v7789
        %v7878 = vmul.f32 %v7606, %v7799
        %v7879 = vmul.f32 %v7607, %v7809
        %v7880 = vmul.f32 %v7608, %v7819
        %v7881 = vmul.f32 %v7609, %v7829
        %v7882 = vmul.f32 %v7610, %v7839
        %v7883 = vmul.f32 %v7611, %v7849
        %v7884 = vmul.f32 %v7612, %v7859
        %v7885 = vmul.f32 %v7613, %v7869
        %v7886 = vperm.slane %v4233, 2
        %v7887 = vmul.f32 %v7870, %v7886
        %v7888 = vmul.f32 %v7871, %v7886
        %v7889 = vmul.f32 %v7872, %v7886
        %v7890 = vmul.f32 %v7873, %v7886
        %v7891 = vmul.f32 %v7874, %v7886
        %v7892 = vmul.f32 %v7875, %v7886
        %v7893 = vmul.f32 %v7876, %v7886
        %v7894 = vmul.f32 %v7877, %v7886
        %v7895 = vmul.f32 %v7878, %v7886
        %v7896 = vmul.f32 %v7879, %v7886
        %v7897 = vmul.f32 %v7880, %v7886
        %v7898 = vmul.f32 %v7881, %v7886
        %v7899 = vmul.f32 %v7882, %v7886
        %v7900 = vmul.f32 %v7883, %v7886
        %v7901 = vmul.f32 %v7884, %v7886
        %v7902 = vmul.f32 %v7885, %v7886
        %v7903 = vperm.slane %v4233, 3
        %v7904 = vadd.f32 %v7887, %v7903
        %v7905 = vadd.f32 %v7888, %v7903
        %v7906 = vadd.f32 %v7889, %v7903
        %v7907 = vadd.f32 %v7890, %v7903
        %v7908 = vadd.f32 %v7891, %v7903
        %v7909 = vadd.f32 %v7892, %v7903
        %v7910 = vadd.f32 %v7893, %v7903
        %v7911 = vadd.f32 %v7894, %v7903
        %v7912 = vadd.f32 %v7895, %v7903
        %v7913 = vadd.f32 %v7896, %v7903
        %v7914 = vadd.f32 %v7897, %v7903
        %v7915 = vadd.f32 %v7898, %v7903
        %v7916 = vadd.f32 %v7899, %v7903
        %v7917 = vadd.f32 %v7900, %v7903
        %v7918 = vadd.f32 %v7901, %v7903
        %v7919 = vadd.f32 %v7902, %v7903
        %v7920 = vadd.f32 %v7164, %v7904
        %v7921 = vadd.f32 %v7165, %v7905
        %v7922 = vadd.f32 %v7166, %v7906
        %v7923 = vadd.f32 %v7167, %v7907
        %v7924 = vadd.f32 %v7168, %v7908
        %v7925 = vadd.f32 %v7169, %v7909
        %v7926 = vadd.f32 %v7170, %v7910
        %v7927 = vadd.f32 %v7171, %v7911
        %v7928 = vadd.f32 %v7172, %v7912
        %v7929 = vadd.f32 %v7173, %v7913
        %v7930 = vadd.f32 %v7174, %v7914
        %v7931 = vadd.f32 %v7175, %v7915
        %v7932 = vadd.f32 %v7176, %v7916
        %v7933 = vadd.f32 %v7177, %v7917
        %v7934 = vadd.f32 %v7178, %v7918
        %v7935 = vadd.f32 %v7179, %v7919
        %7936 = vst.msk [vmem:[%s502] sm:$0xff] %vm532, %v7920
        %7937 = vst.msk [vmem:[%s502 + $0x8] sm:$0xff] %vm532, %v7921
        %7938 = vst.msk [vmem:[%s502 + $0x10] sm:$0xff] %vm532, %v7922
        %7939 = vst.msk [vmem:[%s502 + $0x18] sm:$0xff] %vm532, %v7923
        %7940 = vst.msk [vmem:[%s502 + $0x20] sm:$0xff] %vm532, %v7924
        %7941 = vst.msk [vmem:[%s502 + $0x28] sm:$0xff] %vm532, %v7925
        %7942 = vst.msk [vmem:[%s502 + $0x30] sm:$0xff] %vm532, %v7926
        %7943 = vst.msk [vmem:[%s502 + $0x38] sm:$0xff] %vm532, %v7927
        %7944 = vst.msk [vmem:[%s502 + $0x40] sm:$0xff] %vm532, %v7928
        %7945 = vst.msk [vmem:[%s502 + $0x48] sm:$0xff] %vm532, %v7929
        %7946 = vst.msk [vmem:[%s502 + $0x50] sm:$0xff] %vm532, %v7930
        %7947 = vst.msk [vmem:[%s502 + $0x58] sm:$0xff] %vm532, %v7931
        %7948 = vst.msk [vmem:[%s502 + $0x60] sm:$0xff] %vm532, %v7932
        %7949 = vst.msk [vmem:[%s502 + $0x68] sm:$0xff] %vm532, %v7933
        %7950 = vst.msk [vmem:[%s502 + $0x70] sm:$0xff] %vm532, %v7934
        %7951 = vst.msk [vmem:[%s502 + $0x78] sm:$0xff] %vm532, %v7935
        %p7952 = scmp.lt.s32.totalorder %s26, 1
        %s7953 = scalar_select %p7952, %s26, 1
        %s7954 = smul.addr %s7953, 16
        %s7955 = smul.addr %s7954, 8
        %s7956 = scalar_lea.vmem %s11, %s7955
        // Predicated region
        $region93: #{layer_forward.1} parent=63 // pred_check
          %p7957 = pneg %p280
        $region94: #{layer_forward.1} parent=63 // pred_check_branch
          %7959 = sbr.rel (%p7957) target = $region96
        $region95: #{layer_forward.1} parent=63 // pred_region
          _
        $region96: #{layer_forward.1} parent=63 // pred_fallthru
          _
      $region64: #{layer_forward.1} parent=5 // pred_fallthru
        _
      %p7960 = scmp.le.s32.totalorder 2, %s21
      // Predicated region
      $region97: #{layer_forward.1} parent=5 // pred_check
        %p7961 = pneg %p7960
      $region98: #{layer_forward.1} parent=5 // pred_check_branch
        %7963 = sbr.rel (%p7961) target = $region100
      $region99: #{layer_forward.1} parent=5 // pred_region
        %s7964 = ssub.s32 %s21, 2
        // Predicated region
        $region101: #{layer_forward.1} parent=99 // pred_check
          %p7965 = pneg %p286
        $region102: #{layer_forward.1} parent=99 // pred_check_branch
          %7967 = sbr.rel (%p7965) target = $region104
        $region103: #{layer_forward.1} parent=99 // pred_region
          %p7968 = scmp.lt.s32.totalorder %s27, 1
          %s7969 = scalar_select %p7968, %s27, 1
          %s7970 = smul.addr %s7969, 16
          %s7971 = smul.addr %s7970, 8
          %s7972 = scalar_lea.vmem %s11, %s7971
        $region104: #{layer_forward.1} parent=99 // pred_fallthru
          _
      $region100: #{layer_forward.1} parent=5 // pred_fallthru
        _
    $region6: #{layer_forward.1} parent=1 // loop_footer
      %s25 = sadd.s32 1, %s21
    $region7: #{layer_forward.1} parent=1 // loop_footer_branch
      %20 = sbr.rel target = $region3
    $region8: #{layer_forward.1} parent=1 // loop_exit
      _
    %7973 = vsyncpa [#allocation3], 1
    %s7974 = scalar_lea.sflag [#allocation3], 1
    %7975 = vsyncpa %s7974, 1
    %7976 = vsyncpa [#allocation5], 1
    %7977 = vsyncpa [#allocation8], 1
    %7978 = vsyncpa [#allocation11], 1

</llo_original>
